<compile_context>
chip_gen: v5e
topology: v5e:2x2
jax: 0.10.0
libtpu: 0.0.40
codegen_flags: <defaults>
</compile_context>

<pallas_src>
import numpy as np
import jax
import jax.numpy as jnp
from jax.experimental import pallas as pl
from jax.experimental.pallas import tpu as pltpu

VMEM_SPEC = pl.BlockSpec(memory_space=pltpu.MemorySpace.VMEM)

# (cin, cout, kernel, stride, pad, bn_eps) -- conv1 then self.conv_layers.
CONV1_CFG = (9, 135, 6, 2, 1, 1e-5)
CONV_CFG = [
    (135,  94, 5, 2, 3,  94.0),
    ( 94,  97, 7, 2, 2,  97.0),
    ( 97,  86, 7, 1, 2,  86.0),
    ( 86, 111, 7, 1, 1, 111.0),
    (111, 112, 4, 2, 3, 112.0),
    (112,  18, 7, 1, 1,  18.0),
]
ALL_CFG = [CONV1_CFG] + CONV_CFG
FC8_OUT, FC9_OUT = 216, 17


def conv_out_len(L, k, s, p):
    return (L + 2 * p - k) // s + 1


def layer_plan(L_in):
    """Per conv layer: (cin, cout, K, stride, pad, L_in, L_out)."""
    plan, L = [], L_in
    for (cin, cout, k, s, p, _) in ALL_CFG:
        lo = conv_out_len(L, k, s, p)
        plan.append((cin, cout, k, s, p, L, lo))
        L = lo
    return plan, L                      # L = final spatial length (3 for L_in=128)


# ------------------------- fused Pallas kernel -------------------------

def _build_fused_call(B, L_in):
    plan, L_fin = layer_plan(L_in)
    n_conv = len(plan)

    def kernel(*refs):
        x_ref = refs[0]                                   # (B, L_in, 9) channels-last
        conv_refs = [refs[1 + 3 * i:4 + 3 * i] for i in range(n_conv)]
        fc_base = 1 + 3 * n_conv
        w8_ref, b8_ref, w9_ref, b9_ref = refs[fc_base:fc_base + 4]
        out_ref = refs[fc_base + 4]
        act_refs = refs[fc_base + 5:]                     # one padded slab per conv layer

        # Zero the padded activation slabs (this *is* the conv zero-padding).
        for a in act_refs:
            a[...] = jnp.zeros_like(a)

        # Stage the input into conv1's padded slab (one 3D store).
        p0 = plan[0][4]
        act_refs[0][:, p0:p0 + L_in, :] = x_ref[...]

        # Conv stack: y = relu( (s*W) * x + bias ) + shift   (BN folded host-side)
        last_vals = None
        for li, (cin, cout, K, s, p, Li, Lo) in enumerate(plan):
            w_ref, b_ref, sh_ref = conv_refs[li]          # (K,cin,cout), (1,cout), (1,cout)
            a_in = act_refs[li]
            Lp = Li + 2 * p
            Lfull = Lp - K + 1                             # stride-1 output length

            # Constant 0/1 row-selection matrix for stride>1 (Lo, Lfull):
            # sel[t, j] = 1 iff j == s*t.  Built from iota; lives in vregs.
            sel = None
            if s > 1:
                rows = jax.lax.broadcasted_iota(jnp.int32, (Lo, Lfull), 0)
                cols = jax.lax.broadcasted_iota(jnp.int32, (Lo, Lfull), 1)
                sel = jnp.where(cols == rows * s, 1.0, 0.0).astype(jnp.float32)

            outs = []
            for b in range(B):
                acc = None
                for k in range(K):                         # K accumulated MXU matmuls
                    xs = a_in[b, k:k + Lfull, :]           # contiguous (Lfull, cin)
                    part = jnp.dot(xs, w_ref[k],
                                   preferred_element_type=jnp.float32)
                    acc = part if acc is None else acc + part
                if sel is not None:                        # subsample rows via MXU
                    acc = jnp.dot(sel, acc, preferred_element_type=jnp.float32)
                y = jnp.maximum(acc + b_ref[...], 0.0) + sh_ref[...]
                outs.append(y)                             # (Lo, cout)
            if li + 1 < n_conv:
                p_next = plan[li + 1][4]
                for b in range(B):
                    act_refs[li + 1][b, p_next:p_next + Lo, :] = outs[b]
            else:
                last_vals = outs                           # (L_fin, 18) each

        # fc8 (flatten permutation folded into w8 layout) -> ReLU -> fc9.
        for b in range(B):
            lv = last_vals[b]                              # (L_fin, 18)
            h = b8_ref[...]                                # (1, 216)
            for t in range(L_fin):
                h = h + jnp.dot(lv[t:t + 1, :], w8_ref[t],
                                preferred_element_type=jnp.float32)
            h8 = jnp.maximum(h, 0.0)                       # (1, 216)
            o = jnp.dot(h8, w9_ref[...],
                        preferred_element_type=jnp.float32) + b9_ref[...]
            out_ref[b:b + 1, :] = o.astype(out_ref.dtype)

    scratch = [pltpu.VMEM((B, Li + 2 * p, cin), jnp.float32)
               for (cin, cout, K, s, p, Li, Lo) in plan]
    n_inputs = 1 + 3 * n_conv + 4

    return pl.pallas_call(
        kernel,
        out_shape=jax.ShapeDtypeStruct((B, FC9_OUT), jnp.float32),
        in_specs=[VMEM_SPEC] * n_inputs,
        out_specs=VMEM_SPEC,
        scratch_shapes=scratch,
    )


def forward(params, x):
    """x: (B, 9, L) float32, PyTorch NCL order."""
    B, _, L_in = x.shape
    x_cl = jnp.transpose(x, (0, 2, 1))   # NCL -> channels-last; only op outside the kernel
    return _build_fused_call(B, L_in)(x_cl, *params)


# -------------------- parameters (deterministic, PyTorch-default-style) --------------------

def _uniform(key, shape, bound):
    return jax.random.uniform(key, shape, jnp.float32, -bound, bound)


def _bn_fold(c, eps):
    # Fresh PyTorch BatchNorm1d in eval(): gamma=1, beta=0, running_mean=0, running_var=1.
    gamma = np.ones(c, np.float32); beta = np.zeros(c, np.float32)
    mean = np.zeros(c, np.float32);  var = np.ones(c, np.float32)
    scale = gamma / np.sqrt(var + eps)        # > 0, so ReLU commutes with the scale
    shift = beta - mean * scale
    return jnp.asarray(scale), jnp.asarray(shift)


def init_params(key, L_in):
    """Weights packed in the layout the fused kernel expects, with eval-mode BN folded in."""
    plan, L_fin = layer_plan(L_in)
    keys = jax.random.split(key, len(plan) + 2)
    params = []

    for li, (cin, cout, K, s, p, Li, Lo) in enumerate(plan):
        eps = ALL_CFG[li][5]
        kw, kb = jax.random.split(keys[li])
        if li == 0:
            # conv1: groups=9, 1 in-channel/group -> dense (cout, cin, K) weight
            # with exact zeros off-group (identical forward semantics).
            bound = 1.0 / np.sqrt(1 * K)
            wg = _uniform(kw, (cout, 1, K), bound)                  # (135, 1, 6)
            b = _uniform(kb, (cout,), bound)
            grp = jnp.arange(cout) // (cout // cin)
            mask = (grp[:, None] == jnp.arange(cin)[None, :]).astype(jnp.float32)
            w = mask[:, :, None] * wg                               # (135, 9, 6)
        else:
            bound = 1.0 / np.sqrt(cin * K)
            w = _uniform(kw, (cout, cin, K), bound)
            b = _uniform(kb, (cout,), bound)

        scale, shift = _bn_fold(cout, eps)
        w_f = scale[:, None, None] * w                              # fold BN scale into W
        if li == 0:            # conv -> BN -> ReLU : shift folds into the bias
            bias = scale * b + shift
            shift_row = jnp.zeros((1, cout), jnp.float32)
        else:                  # conv -> ReLU -> BN : relu(scale*(Wx+b)) + shift
            bias = scale * b
            shift_row = shift.reshape(1, cout)
        params += [jnp.transpose(w_f, (2, 1, 0)),                   # (K, cin, cout)
                   bias.reshape(1, cout), shift_row]

    # fc8: LazyLinear(flat_dim -> 216).  PyTorch flatten index is c*L_fin + t,
    # so fold that permutation into the weight: w8r[t, c, o].
    c_last = plan[-1][1]
    flat_dim = c_last * L_fin
    kw, kb = jax.random.split(keys[len(plan)])
    bound = 1.0 / np.sqrt(flat_dim)
    w8 = _uniform(kw, (FC8_OUT, flat_dim), bound)
    b8 = _uniform(kb, (FC8_OUT,), bound)
    params += [jnp.transpose(w8.reshape(FC8_OUT, c_last, L_fin), (2, 1, 0)),
               b8.reshape(1, FC8_OUT)]

    # fc9: Linear(216 -> 17)
    kw, kb = jax.random.split(keys[len(plan) + 1])
    bound = 1.0 / np.sqrt(FC8_OUT)
    w9 = _uniform(kw, (FC9_OUT, FC8_OUT), bound)
    b9 = _uniform(kb, (FC9_OUT,), bound)
    params += [w9.T, b9.reshape(1, FC9_OUT)]
    return params


if __name__ == "__main__":
    B, CIN, L = 2, 9, 128
    key = jax.random.PRNGKey(0)
    kx, kp = jax.random.split(key)
    x = jax.random.normal(kx, (B, CIN, L), jnp.float32)

    params = init_params(kp, L)
    out = jax.block_until_ready(jax.jit(forward)(params, x))
    assert out.shape == (B, FC9_OUT), out.shape
    assert bool(jnp.all(jnp.isfinite(out)))
    print("KERNEL_OK")
</pallas_src>

<mosaic_0001>
module attributes {stable_mosaic.version = 11 : i64} {
  func.func @kernel(%arg0: memref<2x128x9xf32, #tpu.memory_space<vmem>>, %arg1: memref<6x9x135xf32, #tpu.memory_space<vmem>>, %arg2: memref<1x135xf32, #tpu.memory_space<vmem>>, %arg3: memref<1x135xf32, #tpu.memory_space<vmem>>, %arg4: memref<5x135x94xf32, #tpu.memory_space<vmem>>, %arg5: memref<1x94xf32, #tpu.memory_space<vmem>>, %arg6: memref<1x94xf32, #tpu.memory_space<vmem>>, %arg7: memref<7x94x97xf32, #tpu.memory_space<vmem>>, %arg8: memref<1x97xf32, #tpu.memory_space<vmem>>, %arg9: memref<1x97xf32, #tpu.memory_space<vmem>>, %arg10: memref<7x97x86xf32, #tpu.memory_space<vmem>>, %arg11: memref<1x86xf32, #tpu.memory_space<vmem>>, %arg12: memref<1x86xf32, #tpu.memory_space<vmem>>, %arg13: memref<7x86x111xf32, #tpu.memory_space<vmem>>, %arg14: memref<1x111xf32, #tpu.memory_space<vmem>>, %arg15: memref<1x111xf32, #tpu.memory_space<vmem>>, %arg16: memref<4x111x112xf32, #tpu.memory_space<vmem>>, %arg17: memref<1x112xf32, #tpu.memory_space<vmem>>, %arg18: memref<1x112xf32, #tpu.memory_space<vmem>>, %arg19: memref<7x112x18xf32, #tpu.memory_space<vmem>>, %arg20: memref<1x18xf32, #tpu.memory_space<vmem>>, %arg21: memref<1x18xf32, #tpu.memory_space<vmem>>, %arg22: memref<3x18x216xf32, #tpu.memory_space<vmem>>, %arg23: memref<1x216xf32, #tpu.memory_space<vmem>>, %arg24: memref<216x17xf32, #tpu.memory_space<vmem>>, %arg25: memref<1x17xf32, #tpu.memory_space<vmem>>, %arg26: memref<2x17xf32, #tpu.memory_space<vmem>>, %arg27: memref<2x130x9xf32, #tpu.memory_space<vmem>>, %arg28: memref<2x69x135xf32, #tpu.memory_space<vmem>>, %arg29: memref<2x37x94xf32, #tpu.memory_space<vmem>>, %arg30: memref<2x20x97xf32, #tpu.memory_space<vmem>>, %arg31: memref<2x16x86xf32, #tpu.memory_space<vmem>>, %arg32: memref<2x16x111xf32, #tpu.memory_space<vmem>>, %arg33: memref<2x9x112xf32, #tpu.memory_space<vmem>>) attributes {dimension_semantics = [], scalar_prefetch = 0 : i64, scratch_operands = 7 : i64, tpu.core_type = #tpu.core_type<tc>} {
    %cst = arith.constant 0.000000e+00 : f32
    %0 = vector.broadcast %cst : f32 to vector<2x130x9xf32>
    %c0 = arith.constant 0 : index
    %c0_0 = arith.constant 0 : index
    %c0_1 = arith.constant 0 : index
    %1 = vector.load %arg27[%c0, %c0_0, %c0_1] : memref<2x130x9xf32, #tpu.memory_space<vmem>>, vector<2x130x9xf32>
    tpu.vector_store %arg27[%c0, %c0_0, %c0_1], %0 {strides = array<i32>} : memref<2x130x9xf32, #tpu.memory_space<vmem>>, vector<2x130x9xf32>,
    %cst_2 = arith.constant 0.000000e+00 : f32
    %2 = vector.broadcast %cst_2 : f32 to vector<2x69x135xf32>
    %c0_3 = arith.constant 0 : index
    %c0_4 = arith.constant 0 : index
    %c0_5 = arith.constant 0 : index
    %3 = vector.load %arg28[%c0_3, %c0_4, %c0_5] : memref<2x69x135xf32, #tpu.memory_space<vmem>>, vector<2x69x135xf32>
    tpu.vector_store %arg28[%c0_3, %c0_4, %c0_5], %2 {strides = array<i32>} : memref<2x69x135xf32, #tpu.memory_space<vmem>>, vector<2x69x135xf32>,
    %cst_6 = arith.constant 0.000000e+00 : f32
    %4 = vector.broadcast %cst_6 : f32 to vector<2x37x94xf32>
    %c0_7 = arith.constant 0 : index
    %c0_8 = arith.constant 0 : index
    %c0_9 = arith.constant 0 : index
    %5 = vector.load %arg29[%c0_7, %c0_8, %c0_9] : memref<2x37x94xf32, #tpu.memory_space<vmem>>, vector<2x37x94xf32>
    tpu.vector_store %arg29[%c0_7, %c0_8, %c0_9], %4 {strides = array<i32>} : memref<2x37x94xf32, #tpu.memory_space<vmem>>, vector<2x37x94xf32>,
    %cst_10 = arith.constant 0.000000e+00 : f32
    %6 = vector.broadcast %cst_10 : f32 to vector<2x20x97xf32>
    %c0_11 = arith.constant 0 : index
    %c0_12 = arith.constant 0 : index
    %c0_13 = arith.constant 0 : index
    %7 = vector.load %arg30[%c0_11, %c0_12, %c0_13] : memref<2x20x97xf32, #tpu.memory_space<vmem>>, vector<2x20x97xf32>
    tpu.vector_store %arg30[%c0_11, %c0_12, %c0_13], %6 {strides = array<i32>} : memref<2x20x97xf32, #tpu.memory_space<vmem>>, vector<2x20x97xf32>,
    %cst_14 = arith.constant 0.000000e+00 : f32
    %8 = vector.broadcast %cst_14 : f32 to vector<2x16x86xf32>
    %c0_15 = arith.constant 0 : index
    %c0_16 = arith.constant 0 : index
    %c0_17 = arith.constant 0 : index
    %9 = vector.load %arg31[%c0_15, %c0_16, %c0_17] : memref<2x16x86xf32, #tpu.memory_space<vmem>>, vector<2x16x86xf32>
    tpu.vector_store %arg31[%c0_15, %c0_16, %c0_17], %8 {strides = array<i32>} : memref<2x16x86xf32, #tpu.memory_space<vmem>>, vector<2x16x86xf32>,
    %cst_18 = arith.constant 0.000000e+00 : f32
    %10 = vector.broadcast %cst_18 : f32 to vector<2x16x111xf32>
    %c0_19 = arith.constant 0 : index
    %c0_20 = arith.constant 0 : index
    %c0_21 = arith.constant 0 : index
    %11 = vector.load %arg32[%c0_19, %c0_20, %c0_21] : memref<2x16x111xf32, #tpu.memory_space<vmem>>, vector<2x16x111xf32>
    tpu.vector_store %arg32[%c0_19, %c0_20, %c0_21], %10 {strides = array<i32>} : memref<2x16x111xf32, #tpu.memory_space<vmem>>, vector<2x16x111xf32>,
    %cst_22 = arith.constant 0.000000e+00 : f32
    %12 = vector.broadcast %cst_22 : f32 to vector<2x9x112xf32>
    %c0_23 = arith.constant 0 : index
    %c0_24 = arith.constant 0 : index
    %c0_25 = arith.constant 0 : index
    %13 = vector.load %arg33[%c0_23, %c0_24, %c0_25] : memref<2x9x112xf32, #tpu.memory_space<vmem>>, vector<2x9x112xf32>
    tpu.vector_store %arg33[%c0_23, %c0_24, %c0_25], %12 {strides = array<i32>} : memref<2x9x112xf32, #tpu.memory_space<vmem>>, vector<2x9x112xf32>,
    %c0_26 = arith.constant 0 : index
    %c0_27 = arith.constant 0 : index
    %c0_28 = arith.constant 0 : index
    %14 = vector.load %arg0[%c0_26, %c0_27, %c0_28] : memref<2x128x9xf32, #tpu.memory_space<vmem>>, vector<2x128x9xf32>
    %c0_29 = arith.constant 0 : index
    %c1 = arith.constant 1 : index
    %c0_30 = arith.constant 0 : index
    %15 = vector.load %arg27[%c0_29, %c1, %c0_30] : memref<2x130x9xf32, #tpu.memory_space<vmem>>, vector<2x128x9xf32>
    tpu.vector_store %arg27[%c0_29, %c1, %c0_30], %14 {strides = array<i32>} : memref<2x130x9xf32, #tpu.memory_space<vmem>>, vector<2x128x9xf32>,
    %16 = tpu.iota {dimensions = array<i32: 0>} : vector<63x125xi32>
    %17 = tpu.iota {dimensions = array<i32: 1>} : vector<63x125xi32>
    %c2_i32 = arith.constant 2 : i32
    %18 = vector.broadcast %c2_i32 : i32 to vector<63x125xi32>
    %19 = arith.muli %16, %18 : vector<63x125xi32>
    %20 = arith.cmpi eq, %17, %19 : vector<63x125xi32>
    %cst_31 = arith.constant 1.000000e+00 : f32
    %cst_32 = arith.constant 0.000000e+00 : f32
    %21 = vector.broadcast %cst_31 : f32 to vector<63x125xf32>
    %22 = vector.broadcast %cst_32 : f32 to vector<63x125xf32>
    %23 = arith.select %20, %21, %22 : vector<63x125xi1>, vector<63x125xf32>
    %c0_33 = arith.constant 0 : index
    %c0_34 = arith.constant 0 : index
    %c0_35 = arith.constant 0 : index
    %24 = vector.load %arg27[%c0_33, %c0_34, %c0_35] : memref<2x130x9xf32, #tpu.memory_space<vmem>>, vector<1x125x9xf32>
    %25 = vector.shape_cast %24 : vector<1x125x9xf32> to vector<125x9xf32>
    %c0_36 = arith.constant 0 : index
    %c0_37 = arith.constant 0 : index
    %c0_38 = arith.constant 0 : index
    %26 = vector.load %arg1[%c0_36, %c0_37, %c0_38] : memref<6x9x135xf32, #tpu.memory_space<vmem>>, vector<1x9x135xf32>
    %27 = vector.shape_cast %26 : vector<1x9x135xf32> to vector<9x135xf32>
    %cst_39 = arith.constant dense<0.000000e+00> : vector<125x135xf32>
    %28 = tpu.matmul %25, %27, %cst_39 {dimension_numbers = #tpu.dot_dimension_numbers<[1], [0], [0], [1], [0, 0, 1, 1], [], []>} : vector<125x9xf32>, vector<9x135xf32>, vector<125x135xf32> -> vector<125x135xf32>
    %c0_40 = arith.constant 0 : index
    %c1_41 = arith.constant 1 : index
    %c0_42 = arith.constant 0 : index
    %29 = vector.load %arg27[%c0_40, %c1_41, %c0_42] : memref<2x130x9xf32, #tpu.memory_space<vmem>>, vector<1x125x9xf32>
    %30 = vector.shape_cast %29 : vector<1x125x9xf32> to vector<125x9xf32>
    %c1_43 = arith.constant 1 : index
    %c0_44 = arith.constant 0 : index
    %c0_45 = arith.constant 0 : index
    %31 = vector.load %arg1[%c1_43, %c0_44, %c0_45] : memref<6x9x135xf32, #tpu.memory_space<vmem>>, vector<1x9x135xf32>
    %32 = vector.shape_cast %31 : vector<1x9x135xf32> to vector<9x135xf32>
    %cst_46 = arith.constant dense<0.000000e+00> : vector<125x135xf32>
    %33 = tpu.matmul %30, %32, %cst_46 {dimension_numbers = #tpu.dot_dimension_numbers<[1], [0], [0], [1], [0, 0, 1, 1], [], []>} : vector<125x9xf32>, vector<9x135xf32>, vector<125x135xf32> -> vector<125x135xf32>
    %34 = arith.addf %28, %33 : vector<125x135xf32>
    %c0_47 = arith.constant 0 : index
    %c2 = arith.constant 2 : index
    %c0_48 = arith.constant 0 : index
    %35 = vector.load %arg27[%c0_47, %c2, %c0_48] : memref<2x130x9xf32, #tpu.memory_space<vmem>>, vector<1x125x9xf32>
    %36 = vector.shape_cast %35 : vector<1x125x9xf32> to vector<125x9xf32>
    %c2_49 = arith.constant 2 : index
    %c0_50 = arith.constant 0 : index
    %c0_51 = arith.constant 0 : index
    %37 = vector.load %arg1[%c2_49, %c0_50, %c0_51] : memref<6x9x135xf32, #tpu.memory_space<vmem>>, vector<1x9x135xf32>
    %38 = vector.shape_cast %37 : vector<1x9x135xf32> to vector<9x135xf32>
    %cst_52 = arith.constant dense<0.000000e+00> : vector<125x135xf32>
    %39 = tpu.matmul %36, %38, %cst_52 {dimension_numbers = #tpu.dot_dimension_numbers<[1], [0], [0], [1], [0, 0, 1, 1], [], []>} : vector<125x9xf32>, vector<9x135xf32>, vector<125x135xf32> -> vector<125x135xf32>
    %40 = arith.addf %34, %39 : vector<125x135xf32>
    %c0_53 = arith.constant 0 : index
    %c3 = arith.constant 3 : index
    %c0_54 = arith.constant 0 : index
    %41 = vector.load %arg27[%c0_53, %c3, %c0_54] : memref<2x130x9xf32, #tpu.memory_space<vmem>>, vector<1x125x9xf32>
    %42 = vector.shape_cast %41 : vector<1x125x9xf32> to vector<125x9xf32>
    %c3_55 = arith.constant 3 : index
    %c0_56 = arith.constant 0 : index
    %c0_57 = arith.constant 0 : index
    %43 = vector.load %arg1[%c3_55, %c0_56, %c0_57] : memref<6x9x135xf32, #tpu.memory_space<vmem>>, vector<1x9x135xf32>
    %44 = vector.shape_cast %43 : vector<1x9x135xf32> to vector<9x135xf32>
    %cst_58 = arith.constant dense<0.000000e+00> : vector<125x135xf32>
    %45 = tpu.matmul %42, %44, %cst_58 {dimension_numbers = #tpu.dot_dimension_numbers<[1], [0], [0], [1], [0, 0, 1, 1], [], []>} : vector<125x9xf32>, vector<9x135xf32>, vector<125x135xf32> -> vector<125x135xf32>
    %46 = arith.addf %40, %45 : vector<125x135xf32>
    %c0_59 = arith.constant 0 : index
    %c4 = arith.constant 4 : index
    %c0_60 = arith.constant 0 : index
    %47 = vector.load %arg27[%c0_59, %c4, %c0_60] : memref<2x130x9xf32, #tpu.memory_space<vmem>>, vector<1x125x9xf32>
    %48 = vector.shape_cast %47 : vector<1x125x9xf32> to vector<125x9xf32>
    %c4_61 = arith.constant 4 : index
    %c0_62 = arith.constant 0 : index
    %c0_63 = arith.constant 0 : index
    %49 = vector.load %arg1[%c4_61, %c0_62, %c0_63] : memref<6x9x135xf32, #tpu.memory_space<vmem>>, vector<1x9x135xf32>
    %50 = vector.shape_cast %49 : vector<1x9x135xf32> to vector<9x135xf32>
    %cst_64 = arith.constant dense<0.000000e+00> : vector<125x135xf32>
    %51 = tpu.matmul %48, %50, %cst_64 {dimension_numbers = #tpu.dot_dimension_numbers<[1], [0], [0], [1], [0, 0, 1, 1], [], []>} : vector<125x9xf32>, vector<9x135xf32>, vector<125x135xf32> -> vector<125x135xf32>
    %52 = arith.addf %46, %51 : vector<125x135xf32>
    %c0_65 = arith.constant 0 : index
    %c5 = arith.constant 5 : index
    %c0_66 = arith.constant 0 : index
    %53 = vector.load %arg27[%c0_65, %c5, %c0_66] : memref<2x130x9xf32, #tpu.memory_space<vmem>>, vector<1x125x9xf32>
    %54 = vector.shape_cast %53 : vector<1x125x9xf32> to vector<125x9xf32>
    %c5_67 = arith.constant 5 : index
    %c0_68 = arith.constant 0 : index
    %c0_69 = arith.constant 0 : index
    %55 = vector.load %arg1[%c5_67, %c0_68, %c0_69] : memref<6x9x135xf32, #tpu.memory_space<vmem>>, vector<1x9x135xf32>
    %56 = vector.shape_cast %55 : vector<1x9x135xf32> to vector<9x135xf32>
    %cst_70 = arith.constant dense<0.000000e+00> : vector<125x135xf32>
    %57 = tpu.matmul %54, %56, %cst_70 {dimension_numbers = #tpu.dot_dimension_numbers<[1], [0], [0], [1], [0, 0, 1, 1], [], []>} : vector<125x9xf32>, vector<9x135xf32>, vector<125x135xf32> -> vector<125x135xf32>
    %58 = arith.addf %52, %57 : vector<125x135xf32>
    %cst_71 = arith.constant dense<0.000000e+00> : vector<63x135xf32>
    %59 = tpu.matmul %23, %58, %cst_71 {dimension_numbers = #tpu.dot_dimension_numbers<[1], [0], [0], [1], [0, 0, 1, 1], [], []>} : vector<63x125xf32>, vector<125x135xf32>, vector<63x135xf32> -> vector<63x135xf32>
    %c0_72 = arith.constant 0 : index
    %c0_73 = arith.constant 0 : index
    %60 = vector.load %arg2[%c0_72, %c0_73] : memref<1x135xf32, #tpu.memory_space<vmem>>, vector<1x135xf32>
    %61 = vector.broadcast %60 : vector<1x135xf32> to vector<63x135xf32>
    %62 = arith.addf %59, %61 : vector<63x135xf32>
    %cst_74 = arith.constant 0.000000e+00 : f32
    %63 = vector.broadcast %cst_74 : f32 to vector<63x135xf32>
    %64 = arith.maximumf %62, %63 : vector<63x135xf32>
    %c0_75 = arith.constant 0 : index
    %c0_76 = arith.constant 0 : index
    %65 = vector.load %arg3[%c0_75, %c0_76] : memref<1x135xf32, #tpu.memory_space<vmem>>, vector<1x135xf32>
    %66 = vector.broadcast %65 : vector<1x135xf32> to vector<63x135xf32>
    %67 = arith.addf %64, %66 : vector<63x135xf32>
    %c1_77 = arith.constant 1 : index
    %c0_78 = arith.constant 0 : index
    %c0_79 = arith.constant 0 : index
    %68 = vector.load %arg27[%c1_77, %c0_78, %c0_79] : memref<2x130x9xf32, #tpu.memory_space<vmem>>, vector<1x125x9xf32>
    %69 = vector.shape_cast %68 : vector<1x125x9xf32> to vector<125x9xf32>
    %c0_80 = arith.constant 0 : index
    %c0_81 = arith.constant 0 : index
    %c0_82 = arith.constant 0 : index
    %70 = vector.load %arg1[%c0_80, %c0_81, %c0_82] : memref<6x9x135xf32, #tpu.memory_space<vmem>>, vector<1x9x135xf32>
    %71 = vector.shape_cast %70 : vector<1x9x135xf32> to vector<9x135xf32>
    %cst_83 = arith.constant dense<0.000000e+00> : vector<125x135xf32>
    %72 = tpu.matmul %69, %71, %cst_83 {dimension_numbers = #tpu.dot_dimension_numbers<[1], [0], [0], [1], [0, 0, 1, 1], [], []>} : vector<125x9xf32>, vector<9x135xf32>, vector<125x135xf32> -> vector<125x135xf32>
    %c1_84 = arith.constant 1 : index
    %c1_85 = arith.constant 1 : index
    %c0_86 = arith.constant 0 : index
    %73 = vector.load %arg27[%c1_84, %c1_85, %c0_86] : memref<2x130x9xf32, #tpu.memory_space<vmem>>, vector<1x125x9xf32>
    %74 = vector.shape_cast %73 : vector<1x125x9xf32> to vector<125x9xf32>
    %c1_87 = arith.constant 1 : index
    %c0_88 = arith.constant 0 : index
    %c0_89 = arith.constant 0 : index
    %75 = vector.load %arg1[%c1_87, %c0_88, %c0_89] : memref<6x9x135xf32, #tpu.memory_space<vmem>>, vector<1x9x135xf32>
    %76 = vector.shape_cast %75 : vector<1x9x135xf32> to vector<9x135xf32>
    %cst_90 = arith.constant dense<0.000000e+00> : vector<125x135xf32>
    %77 = tpu.matmul %74, %76, %cst_90 {dimension_numbers = #tpu.dot_dimension_numbers<[1], [0], [0], [1], [0, 0, 1, 1], [], []>} : vector<125x9xf32>, vector<9x135xf32>, vector<125x135xf32> -> vector<125x135xf32>
    %78 = arith.addf %72, %77 : vector<125x135xf32>
    %c1_91 = arith.constant 1 : index
    %c2_92 = arith.constant 2 : index
    %c0_93 = arith.constant 0 : index
    %79 = vector.load %arg27[%c1_91, %c2_92, %c0_93] : memref<2x130x9xf32, #tpu.memory_space<vmem>>, vector<1x125x9xf32>
    %80 = vector.shape_cast %79 : vector<1x125x9xf32> to vector<125x9xf32>
    %c2_94 = arith.constant 2 : index
    %c0_95 = arith.constant 0 : index
    %c0_96 = arith.constant 0 : index
    %81 = vector.load %arg1[%c2_94, %c0_95, %c0_96] : memref<6x9x135xf32, #tpu.memory_space<vmem>>, vector<1x9x135xf32>
    %82 = vector.shape_cast %81 : vector<1x9x135xf32> to vector<9x135xf32>
    %cst_97 = arith.constant dense<0.000000e+00> : vector<125x135xf32>
    %83 = tpu.matmul %80, %82, %cst_97 {dimension_numbers = #tpu.dot_dimension_numbers<[1], [0], [0], [1], [0, 0, 1, 1], [], []>} : vector<125x9xf32>, vector<9x135xf32>, vector<125x135xf32> -> vector<125x135xf32>
    %84 = arith.addf %78, %83 : vector<125x135xf32>
    %c1_98 = arith.constant 1 : index
    %c3_99 = arith.constant 3 : index
    %c0_100 = arith.constant 0 : index
    %85 = vector.load %arg27[%c1_98, %c3_99, %c0_100] : memref<2x130x9xf32, #tpu.memory_space<vmem>>, vector<1x125x9xf32>
    %86 = vector.shape_cast %85 : vector<1x125x9xf32> to vector<125x9xf32>
    %c3_101 = arith.constant 3 : index
    %c0_102 = arith.constant 0 : index
    %c0_103 = arith.constant 0 : index
    %87 = vector.load %arg1[%c3_101, %c0_102, %c0_103] : memref<6x9x135xf32, #tpu.memory_space<vmem>>, vector<1x9x135xf32>
    %88 = vector.shape_cast %87 : vector<1x9x135xf32> to vector<9x135xf32>
    %cst_104 = arith.constant dense<0.000000e+00> : vector<125x135xf32>
    %89 = tpu.matmul %86, %88, %cst_104 {dimension_numbers = #tpu.dot_dimension_numbers<[1], [0], [0], [1], [0, 0, 1, 1], [], []>} : vector<125x9xf32>, vector<9x135xf32>, vector<125x135xf32> -> vector<125x135xf32>
    %90 = arith.addf %84, %89 : vector<125x135xf32>
    %c1_105 = arith.constant 1 : index
    %c4_106 = arith.constant 4 : index
    %c0_107 = arith.constant 0 : index
    %91 = vector.load %arg27[%c1_105, %c4_106, %c0_107] : memref<2x130x9xf32, #tpu.memory_space<vmem>>, vector<1x125x9xf32>
    %92 = vector.shape_cast %91 : vector<1x125x9xf32> to vector<125x9xf32>
    %c4_108 = arith.constant 4 : index
    %c0_109 = arith.constant 0 : index
    %c0_110 = arith.constant 0 : index
    %93 = vector.load %arg1[%c4_108, %c0_109, %c0_110] : memref<6x9x135xf32, #tpu.memory_space<vmem>>, vector<1x9x135xf32>
    %94 = vector.shape_cast %93 : vector<1x9x135xf32> to vector<9x135xf32>
    %cst_111 = arith.constant dense<0.000000e+00> : vector<125x135xf32>
    %95 = tpu.matmul %92, %94, %cst_111 {dimension_numbers = #tpu.dot_dimension_numbers<[1], [0], [0], [1], [0, 0, 1, 1], [], []>} : vector<125x9xf32>, vector<9x135xf32>, vector<125x135xf32> -> vector<125x135xf32>
    %96 = arith.addf %90, %95 : vector<125x135xf32>
    %c1_112 = arith.constant 1 : index
    %c5_113 = arith.constant 5 : index
    %c0_114 = arith.constant 0 : index
    %97 = vector.load %arg27[%c1_112, %c5_113, %c0_114] : memref<2x130x9xf32, #tpu.memory_space<vmem>>, vector<1x125x9xf32>
    %98 = vector.shape_cast %97 : vector<1x125x9xf32> to vector<125x9xf32>
    %c5_115 = arith.constant 5 : index
    %c0_116 = arith.constant 0 : index
    %c0_117 = arith.constant 0 : index
    %99 = vector.load %arg1[%c5_115, %c0_116, %c0_117] : memref<6x9x135xf32, #tpu.memory_space<vmem>>, vector<1x9x135xf32>
    %100 = vector.shape_cast %99 : vector<1x9x135xf32> to vector<9x135xf32>
    %cst_118 = arith.constant dense<0.000000e+00> : vector<125x135xf32>
    %101 = tpu.matmul %98, %100, %cst_118 {dimension_numbers = #tpu.dot_dimension_numbers<[1], [0], [0], [1], [0, 0, 1, 1], [], []>} : vector<125x9xf32>, vector<9x135xf32>, vector<125x135xf32> -> vector<125x135xf32>
    %102 = arith.addf %96, %101 : vector<125x135xf32>
    %cst_119 = arith.constant dense<0.000000e+00> : vector<63x135xf32>
    %103 = tpu.matmul %23, %102, %cst_119 {dimension_numbers = #tpu.dot_dimension_numbers<[1], [0], [0], [1], [0, 0, 1, 1], [], []>} : vector<63x125xf32>, vector<125x135xf32>, vector<63x135xf32> -> vector<63x135xf32>
    %c0_120 = arith.constant 0 : index
    %c0_121 = arith.constant 0 : index
    %104 = vector.load %arg2[%c0_120, %c0_121] : memref<1x135xf32, #tpu.memory_space<vmem>>, vector<1x135xf32>
    %105 = vector.broadcast %104 : vector<1x135xf32> to vector<63x135xf32>
    %106 = arith.addf %103, %105 : vector<63x135xf32>
    %cst_122 = arith.constant 0.000000e+00 : f32
    %107 = vector.broadcast %cst_122 : f32 to vector<63x135xf32>
    %108 = arith.maximumf %106, %107 : vector<63x135xf32>
    %c0_123 = arith.constant 0 : index
    %c0_124 = arith.constant 0 : index
    %109 = vector.load %arg3[%c0_123, %c0_124] : memref<1x135xf32, #tpu.memory_space<vmem>>, vector<1x135xf32>
    %110 = vector.broadcast %109 : vector<1x135xf32> to vector<63x135xf32>
    %111 = arith.addf %108, %110 : vector<63x135xf32>
    %c0_125 = arith.constant 0 : index
    %c3_126 = arith.constant 3 : index
    %c0_127 = arith.constant 0 : index
    %112 = vector.load %arg28[%c0_125, %c3_126, %c0_127] : memref<2x69x135xf32, #tpu.memory_space<vmem>>, vector<1x63x135xf32>
    %113 = vector.shape_cast %112 : vector<1x63x135xf32> to vector<63x135xf32>
    %114 = vector.shape_cast %67 : vector<63x135xf32> to vector<1x63x135xf32>
    tpu.vector_store %arg28[%c0_125, %c3_126, %c0_127], %114 {strides = array<i32>} : memref<2x69x135xf32, #tpu.memory_space<vmem>>, vector<1x63x135xf32>,
    %c1_128 = arith.constant 1 : index
    %c3_129 = arith.constant 3 : index
    %c0_130 = arith.constant 0 : index
    %115 = vector.load %arg28[%c1_128, %c3_129, %c0_130] : memref<2x69x135xf32, #tpu.memory_space<vmem>>, vector<1x63x135xf32>
    %116 = vector.shape_cast %115 : vector<1x63x135xf32> to vector<63x135xf32>
    %117 = vector.shape_cast %111 : vector<63x135xf32> to vector<1x63x135xf32>
    tpu.vector_store %arg28[%c1_128, %c3_129, %c0_130], %117 {strides = array<i32>} : memref<2x69x135xf32, #tpu.memory_space<vmem>>, vector<1x63x135xf32>,
    %118 = tpu.iota {dimensions = array<i32: 0>} : vector<33x65xi32>
    %119 = tpu.iota {dimensions = array<i32: 1>} : vector<33x65xi32>
    %c2_i32_131 = arith.constant 2 : i32
    %120 = vector.broadcast %c2_i32_131 : i32 to vector<33x65xi32>
    %121 = arith.muli %118, %120 : vector<33x65xi32>
    %122 = arith.cmpi eq, %119, %121 : vector<33x65xi32>
    %cst_132 = arith.constant 1.000000e+00 : f32
    %cst_133 = arith.constant 0.000000e+00 : f32
    %123 = vector.broadcast %cst_132 : f32 to vector<33x65xf32>
    %124 = vector.broadcast %cst_133 : f32 to vector<33x65xf32>
    %125 = arith.select %122, %123, %124 : vector<33x65xi1>, vector<33x65xf32>
    %c0_134 = arith.constant 0 : index
    %c0_135 = arith.constant 0 : index
    %c0_136 = arith.constant 0 : index
    %126 = vector.load %arg28[%c0_134, %c0_135, %c0_136] : memref<2x69x135xf32, #tpu.memory_space<vmem>>, vector<1x65x135xf32>
    %127 = vector.shape_cast %126 : vector<1x65x135xf32> to vector<65x135xf32>
    %c0_137 = arith.constant 0 : index
    %c0_138 = arith.constant 0 : index
    %c0_139 = arith.constant 0 : index
    %128 = vector.load %arg4[%c0_137, %c0_138, %c0_139] : memref<5x135x94xf32, #tpu.memory_space<vmem>>, vector<1x135x94xf32>
    %129 = vector.shape_cast %128 : vector<1x135x94xf32> to vector<135x94xf32>
    %cst_140 = arith.constant dense<0.000000e+00> : vector<65x94xf32>
    %130 = tpu.matmul %127, %129, %cst_140 {dimension_numbers = #tpu.dot_dimension_numbers<[1], [0], [0], [1], [0, 0, 1, 1], [], []>} : vector<65x135xf32>, vector<135x94xf32>, vector<65x94xf32> -> vector<65x94xf32>
    %c0_141 = arith.constant 0 : index
    %c1_142 = arith.constant 1 : index
    %c0_143 = arith.constant 0 : index
    %131 = vector.load %arg28[%c0_141, %c1_142, %c0_143] : memref<2x69x135xf32, #tpu.memory_space<vmem>>, vector<1x65x135xf32>
    %132 = vector.shape_cast %131 : vector<1x65x135xf32> to vector<65x135xf32>
    %c1_144 = arith.constant 1 : index
    %c0_145 = arith.constant 0 : index
    %c0_146 = arith.constant 0 : index
    %133 = vector.load %arg4[%c1_144, %c0_145, %c0_146] : memref<5x135x94xf32, #tpu.memory_space<vmem>>, vector<1x135x94xf32>
    %134 = vector.shape_cast %133 : vector<1x135x94xf32> to vector<135x94xf32>
    %cst_147 = arith.constant dense<0.000000e+00> : vector<65x94xf32>
    %135 = tpu.matmul %132, %134, %cst_147 {dimension_numbers = #tpu.dot_dimension_numbers<[1], [0], [0], [1], [0, 0, 1, 1], [], []>} : vector<65x135xf32>, vector<135x94xf32>, vector<65x94xf32> -> vector<65x94xf32>
    %136 = arith.addf %130, %135 : vector<65x94xf32>
    %c0_148 = arith.constant 0 : index
    %c2_149 = arith.constant 2 : index
    %c0_150 = arith.constant 0 : index
    %137 = vector.load %arg28[%c0_148, %c2_149, %c0_150] : memref<2x69x135xf32, #tpu.memory_space<vmem>>, vector<1x65x135xf32>
    %138 = vector.shape_cast %137 : vector<1x65x135xf32> to vector<65x135xf32>
    %c2_151 = arith.constant 2 : index
    %c0_152 = arith.constant 0 : index
    %c0_153 = arith.constant 0 : index
    %139 = vector.load %arg4[%c2_151, %c0_152, %c0_153] : memref<5x135x94xf32, #tpu.memory_space<vmem>>, vector<1x135x94xf32>
    %140 = vector.shape_cast %139 : vector<1x135x94xf32> to vector<135x94xf32>
    %cst_154 = arith.constant dense<0.000000e+00> : vector<65x94xf32>
    %141 = tpu.matmul %138, %140, %cst_154 {dimension_numbers = #tpu.dot_dimension_numbers<[1], [0], [0], [1], [0, 0, 1, 1], [], []>} : vector<65x135xf32>, vector<135x94xf32>, vector<65x94xf32> -> vector<65x94xf32>
    %142 = arith.addf %136, %141 : vector<65x94xf32>
    %c0_155 = arith.constant 0 : index
    %c3_156 = arith.constant 3 : index
    %c0_157 = arith.constant 0 : index
    %143 = vector.load %arg28[%c0_155, %c3_156, %c0_157] : memref<2x69x135xf32, #tpu.memory_space<vmem>>, vector<1x65x135xf32>
    %144 = vector.shape_cast %143 : vector<1x65x135xf32> to vector<65x135xf32>
    %c3_158 = arith.constant 3 : index
    %c0_159 = arith.constant 0 : index
    %c0_160 = arith.constant 0 : index
    %145 = vector.load %arg4[%c3_158, %c0_159, %c0_160] : memref<5x135x94xf32, #tpu.memory_space<vmem>>, vector<1x135x94xf32>
    %146 = vector.shape_cast %145 : vector<1x135x94xf32> to vector<135x94xf32>
    %cst_161 = arith.constant dense<0.000000e+00> : vector<65x94xf32>
    %147 = tpu.matmul %144, %146, %cst_161 {dimension_numbers = #tpu.dot_dimension_numbers<[1], [0], [0], [1], [0, 0, 1, 1], [], []>} : vector<65x135xf32>, vector<135x94xf32>, vector<65x94xf32> -> vector<65x94xf32>
    %148 = arith.addf %142, %147 : vector<65x94xf32>
    %c0_162 = arith.constant 0 : index
    %c4_163 = arith.constant 4 : index
    %c0_164 = arith.constant 0 : index
    %149 = vector.load %arg28[%c0_162, %c4_163, %c0_164] : memref<2x69x135xf32, #tpu.memory_space<vmem>>, vector<1x65x135xf32>
    %150 = vector.shape_cast %149 : vector<1x65x135xf32> to vector<65x135xf32>
    %c4_165 = arith.constant 4 : index
    %c0_166 = arith.constant 0 : index
    %c0_167 = arith.constant 0 : index
    %151 = vector.load %arg4[%c4_165, %c0_166, %c0_167] : memref<5x135x94xf32, #tpu.memory_space<vmem>>, vector<1x135x94xf32>
    %152 = vector.shape_cast %151 : vector<1x135x94xf32> to vector<135x94xf32>
    %cst_168 = arith.constant dense<0.000000e+00> : vector<65x94xf32>
    %153 = tpu.matmul %150, %152, %cst_168 {dimension_numbers = #tpu.dot_dimension_numbers<[1], [0], [0], [1], [0, 0, 1, 1], [], []>} : vector<65x135xf32>, vector<135x94xf32>, vector<65x94xf32> -> vector<65x94xf32>
    %154 = arith.addf %148, %153 : vector<65x94xf32>
    %cst_169 = arith.constant dense<0.000000e+00> : vector<33x94xf32>
    %155 = tpu.matmul %125, %154, %cst_169 {dimension_numbers = #tpu.dot_dimension_numbers<[1], [0], [0], [1], [0, 0, 1, 1], [], []>} : vector<33x65xf32>, vector<65x94xf32>, vector<33x94xf32> -> vector<33x94xf32>
    %c0_170 = arith.constant 0 : index
    %c0_171 = arith.constant 0 : index
    %156 = vector.load %arg5[%c0_170, %c0_171] : memref<1x94xf32, #tpu.memory_space<vmem>>, vector<1x94xf32>
    %157 = vector.broadcast %156 : vector<1x94xf32> to vector<33x94xf32>
    %158 = arith.addf %155, %157 : vector<33x94xf32>
    %cst_172 = arith.constant 0.000000e+00 : f32
    %159 = vector.broadcast %cst_172 : f32 to vector<33x94xf32>
    %160 = arith.maximumf %158, %159 : vector<33x94xf32>
    %c0_173 = arith.constant 0 : index
    %c0_174 = arith.constant 0 : index
    %161 = vector.load %arg6[%c0_173, %c0_174] : memref<1x94xf32, #tpu.memory_space<vmem>>, vector<1x94xf32>
    %162 = vector.broadcast %161 : vector<1x94xf32> to vector<33x94xf32>
    %163 = arith.addf %160, %162 : vector<33x94xf32>
    %c1_175 = arith.constant 1 : index
    %c0_176 = arith.constant 0 : index
    %c0_177 = arith.constant 0 : index
    %164 = vector.load %arg28[%c1_175, %c0_176, %c0_177] : memref<2x69x135xf32, #tpu.memory_space<vmem>>, vector<1x65x135xf32>
    %165 = vector.shape_cast %164 : vector<1x65x135xf32> to vector<65x135xf32>
    %c0_178 = arith.constant 0 : index
    %c0_179 = arith.constant 0 : index
    %c0_180 = arith.constant 0 : index
    %166 = vector.load %arg4[%c0_178, %c0_179, %c0_180] : memref<5x135x94xf32, #tpu.memory_space<vmem>>, vector<1x135x94xf32>
    %167 = vector.shape_cast %166 : vector<1x135x94xf32> to vector<135x94xf32>
    %cst_181 = arith.constant dense<0.000000e+00> : vector<65x94xf32>
    %168 = tpu.matmul %165, %167, %cst_181 {dimension_numbers = #tpu.dot_dimension_numbers<[1], [0], [0], [1], [0, 0, 1, 1], [], []>} : vector<65x135xf32>, vector<135x94xf32>, vector<65x94xf32> -> vector<65x94xf32>
    %c1_182 = arith.constant 1 : index
    %c1_183 = arith.constant 1 : index
    %c0_184 = arith.constant 0 : index
    %169 = vector.load %arg28[%c1_182, %c1_183, %c0_184] : memref<2x69x135xf32, #tpu.memory_space<vmem>>, vector<1x65x135xf32>
    %170 = vector.shape_cast %169 : vector<1x65x135xf32> to vector<65x135xf32>
    %c1_185 = arith.constant 1 : index
    %c0_186 = arith.constant 0 : index
    %c0_187 = arith.constant 0 : index
    %171 = vector.load %arg4[%c1_185, %c0_186, %c0_187] : memref<5x135x94xf32, #tpu.memory_space<vmem>>, vector<1x135x94xf32>
    %172 = vector.shape_cast %171 : vector<1x135x94xf32> to vector<135x94xf32>
    %cst_188 = arith.constant dense<0.000000e+00> : vector<65x94xf32>
    %173 = tpu.matmul %170, %172, %cst_188 {dimension_numbers = #tpu.dot_dimension_numbers<[1], [0], [0], [1], [0, 0, 1, 1], [], []>} : vector<65x135xf32>, vector<135x94xf32>, vector<65x94xf32> -> vector<65x94xf32>
    %174 = arith.addf %168, %173 : vector<65x94xf32>
    %c1_189 = arith.constant 1 : index
    %c2_190 = arith.constant 2 : index
    %c0_191 = arith.constant 0 : index
    %175 = vector.load %arg28[%c1_189, %c2_190, %c0_191] : memref<2x69x135xf32, #tpu.memory_space<vmem>>, vector<1x65x135xf32>
    %176 = vector.shape_cast %175 : vector<1x65x135xf32> to vector<65x135xf32>
    %c2_192 = arith.constant 2 : index
    %c0_193 = arith.constant 0 : index
    %c0_194 = arith.constant 0 : index
    %177 = vector.load %arg4[%c2_192, %c0_193, %c0_194] : memref<5x135x94xf32, #tpu.memory_space<vmem>>, vector<1x135x94xf32>
    %178 = vector.shape_cast %177 : vector<1x135x94xf32> to vector<135x94xf32>
    %cst_195 = arith.constant dense<0.000000e+00> : vector<65x94xf32>
    %179 = tpu.matmul %176, %178, %cst_195 {dimension_numbers = #tpu.dot_dimension_numbers<[1], [0], [0], [1], [0, 0, 1, 1], [], []>} : vector<65x135xf32>, vector<135x94xf32>, vector<65x94xf32> -> vector<65x94xf32>
    %180 = arith.addf %174, %179 : vector<65x94xf32>
    %c1_196 = arith.constant 1 : index
    %c3_197 = arith.constant 3 : index
    %c0_198 = arith.constant 0 : index
    %181 = vector.load %arg28[%c1_196, %c3_197, %c0_198] : memref<2x69x135xf32, #tpu.memory_space<vmem>>, vector<1x65x135xf32>
    %182 = vector.shape_cast %181 : vector<1x65x135xf32> to vector<65x135xf32>
    %c3_199 = arith.constant 3 : index
    %c0_200 = arith.constant 0 : index
    %c0_201 = arith.constant 0 : index
    %183 = vector.load %arg4[%c3_199, %c0_200, %c0_201] : memref<5x135x94xf32, #tpu.memory_space<vmem>>, vector<1x135x94xf32>
    %184 = vector.shape_cast %183 : vector<1x135x94xf32> to vector<135x94xf32>
    %cst_202 = arith.constant dense<0.000000e+00> : vector<65x94xf32>
    %185 = tpu.matmul %182, %184, %cst_202 {dimension_numbers = #tpu.dot_dimension_numbers<[1], [0], [0], [1], [0, 0, 1, 1], [], []>} : vector<65x135xf32>, vector<135x94xf32>, vector<65x94xf32> -> vector<65x94xf32>
    %186 = arith.addf %180, %185 : vector<65x94xf32>
    %c1_203 = arith.constant 1 : index
    %c4_204 = arith.constant 4 : index
    %c0_205 = arith.constant 0 : index
    %187 = vector.load %arg28[%c1_203, %c4_204, %c0_205] : memref<2x69x135xf32, #tpu.memory_space<vmem>>, vector<1x65x135xf32>
    %188 = vector.shape_cast %187 : vector<1x65x135xf32> to vector<65x135xf32>
    %c4_206 = arith.constant 4 : index
    %c0_207 = arith.constant 0 : index
    %c0_208 = arith.constant 0 : index
    %189 = vector.load %arg4[%c4_206, %c0_207, %c0_208] : memref<5x135x94xf32, #tpu.memory_space<vmem>>, vector<1x135x94xf32>
    %190 = vector.shape_cast %189 : vector<1x135x94xf32> to vector<135x94xf32>
    %cst_209 = arith.constant dense<0.000000e+00> : vector<65x94xf32>
    %191 = tpu.matmul %188, %190, %cst_209 {dimension_numbers = #tpu.dot_dimension_numbers<[1], [0], [0], [1], [0, 0, 1, 1], [], []>} : vector<65x135xf32>, vector<135x94xf32>, vector<65x94xf32> -> vector<65x94xf32>
    %192 = arith.addf %186, %191 : vector<65x94xf32>
    %cst_210 = arith.constant dense<0.000000e+00> : vector<33x94xf32>
    %193 = tpu.matmul %125, %192, %cst_210 {dimension_numbers = #tpu.dot_dimension_numbers<[1], [0], [0], [1], [0, 0, 1, 1], [], []>} : vector<33x65xf32>, vector<65x94xf32>, vector<33x94xf32> -> vector<33x94xf32>
    %c0_211 = arith.constant 0 : index
    %c0_212 = arith.constant 0 : index
    %194 = vector.load %arg5[%c0_211, %c0_212] : memref<1x94xf32, #tpu.memory_space<vmem>>, vector<1x94xf32>
    %195 = vector.broadcast %194 : vector<1x94xf32> to vector<33x94xf32>
    %196 = arith.addf %193, %195 : vector<33x94xf32>
    %cst_213 = arith.constant 0.000000e+00 : f32
    %197 = vector.broadcast %cst_213 : f32 to vector<33x94xf32>
    %198 = arith.maximumf %196, %197 : vector<33x94xf32>
    %c0_214 = arith.constant 0 : index
    %c0_215 = arith.constant 0 : index
    %199 = vector.load %arg6[%c0_214, %c0_215] : memref<1x94xf32, #tpu.memory_space<vmem>>, vector<1x94xf32>
    %200 = vector.broadcast %199 : vector<1x94xf32> to vector<33x94xf32>
    %201 = arith.addf %198, %200 : vector<33x94xf32>
    %c0_216 = arith.constant 0 : index
    %c2_217 = arith.constant 2 : index
    %c0_218 = arith.constant 0 : index
    %202 = vector.load %arg29[%c0_216, %c2_217, %c0_218] : memref<2x37x94xf32, #tpu.memory_space<vmem>>, vector<1x33x94xf32>
    %203 = vector.shape_cast %202 : vector<1x33x94xf32> to vector<33x94xf32>
    %204 = vector.shape_cast %163 : vector<33x94xf32> to vector<1x33x94xf32>
    tpu.vector_store %arg29[%c0_216, %c2_217, %c0_218], %204 {strides = array<i32>} : memref<2x37x94xf32, #tpu.memory_space<vmem>>, vector<1x33x94xf32>,
    %c1_219 = arith.constant 1 : index
    %c2_220 = arith.constant 2 : index
    %c0_221 = arith.constant 0 : index
    %205 = vector.load %arg29[%c1_219, %c2_220, %c0_221] : memref<2x37x94xf32, #tpu.memory_space<vmem>>, vector<1x33x94xf32>
    %206 = vector.shape_cast %205 : vector<1x33x94xf32> to vector<33x94xf32>
    %207 = vector.shape_cast %201 : vector<33x94xf32> to vector<1x33x94xf32>
    tpu.vector_store %arg29[%c1_219, %c2_220, %c0_221], %207 {strides = array<i32>} : memref<2x37x94xf32, #tpu.memory_space<vmem>>, vector<1x33x94xf32>,
    %208 = tpu.iota {dimensions = array<i32: 0>} : vector<16x31xi32>
    %209 = tpu.iota {dimensions = array<i32: 1>} : vector<16x31xi32>
    %c2_i32_222 = arith.constant 2 : i32
    %210 = vector.broadcast %c2_i32_222 : i32 to vector<16x31xi32>
    %211 = arith.muli %208, %210 : vector<16x31xi32>
    %212 = arith.cmpi eq, %209, %211 : vector<16x31xi32>
    %cst_223 = arith.constant 1.000000e+00 : f32
    %cst_224 = arith.constant 0.000000e+00 : f32
    %213 = vector.broadcast %cst_223 : f32 to vector<16x31xf32>
    %214 = vector.broadcast %cst_224 : f32 to vector<16x31xf32>
    %215 = arith.select %212, %213, %214 : vector<16x31xi1>, vector<16x31xf32>
    %c0_225 = arith.constant 0 : index
    %c0_226 = arith.constant 0 : index
    %c0_227 = arith.constant 0 : index
    %216 = vector.load %arg29[%c0_225, %c0_226, %c0_227] : memref<2x37x94xf32, #tpu.memory_space<vmem>>, vector<1x31x94xf32>
    %217 = vector.shape_cast %216 : vector<1x31x94xf32> to vector<31x94xf32>
    %c0_228 = arith.constant 0 : index
    %c0_229 = arith.constant 0 : index
    %c0_230 = arith.constant 0 : index
    %218 = vector.load %arg7[%c0_228, %c0_229, %c0_230] : memref<7x94x97xf32, #tpu.memory_space<vmem>>, vector<1x94x97xf32>
    %219 = vector.shape_cast %218 : vector<1x94x97xf32> to vector<94x97xf32>
    %cst_231 = arith.constant dense<0.000000e+00> : vector<31x97xf32>
    %220 = tpu.matmul %217, %219, %cst_231 {dimension_numbers = #tpu.dot_dimension_numbers<[1], [0], [0], [1], [0, 0, 1, 1], [], []>} : vector<31x94xf32>, vector<94x97xf32>, vector<31x97xf32> -> vector<31x97xf32>
    %c0_232 = arith.constant 0 : index
    %c1_233 = arith.constant 1 : index
    %c0_234 = arith.constant 0 : index
    %221 = vector.load %arg29[%c0_232, %c1_233, %c0_234] : memref<2x37x94xf32, #tpu.memory_space<vmem>>, vector<1x31x94xf32>
    %222 = vector.shape_cast %221 : vector<1x31x94xf32> to vector<31x94xf32>
    %c1_235 = arith.constant 1 : index
    %c0_236 = arith.constant 0 : index
    %c0_237 = arith.constant 0 : index
    %223 = vector.load %arg7[%c1_235, %c0_236, %c0_237] : memref<7x94x97xf32, #tpu.memory_space<vmem>>, vector<1x94x97xf32>
    %224 = vector.shape_cast %223 : vector<1x94x97xf32> to vector<94x97xf32>
    %cst_238 = arith.constant dense<0.000000e+00> : vector<31x97xf32>
    %225 = tpu.matmul %222, %224, %cst_238 {dimension_numbers = #tpu.dot_dimension_numbers<[1], [0], [0], [1], [0, 0, 1, 1], [], []>} : vector<31x94xf32>, vector<94x97xf32>, vector<31x97xf32> -> vector<31x97xf32>
    %226 = arith.addf %220, %225 : vector<31x97xf32>
    %c0_239 = arith.constant 0 : index
    %c2_240 = arith.constant 2 : index
    %c0_241 = arith.constant 0 : index
    %227 = vector.load %arg29[%c0_239, %c2_240, %c0_241] : memref<2x37x94xf32, #tpu.memory_space<vmem>>, vector<1x31x94xf32>
    %228 = vector.shape_cast %227 : vector<1x31x94xf32> to vector<31x94xf32>
    %c2_242 = arith.constant 2 : index
    %c0_243 = arith.constant 0 : index
    %c0_244 = arith.constant 0 : index
    %229 = vector.load %arg7[%c2_242, %c0_243, %c0_244] : memref<7x94x97xf32, #tpu.memory_space<vmem>>, vector<1x94x97xf32>
    %230 = vector.shape_cast %229 : vector<1x94x97xf32> to vector<94x97xf32>
    %cst_245 = arith.constant dense<0.000000e+00> : vector<31x97xf32>
    %231 = tpu.matmul %228, %230, %cst_245 {dimension_numbers = #tpu.dot_dimension_numbers<[1], [0], [0], [1], [0, 0, 1, 1], [], []>} : vector<31x94xf32>, vector<94x97xf32>, vector<31x97xf32> -> vector<31x97xf32>
    %232 = arith.addf %226, %231 : vector<31x97xf32>
    %c0_246 = arith.constant 0 : index
    %c3_247 = arith.constant 3 : index
    %c0_248 = arith.constant 0 : index
    %233 = vector.load %arg29[%c0_246, %c3_247, %c0_248] : memref<2x37x94xf32, #tpu.memory_space<vmem>>, vector<1x31x94xf32>
    %234 = vector.shape_cast %233 : vector<1x31x94xf32> to vector<31x94xf32>
    %c3_249 = arith.constant 3 : index
    %c0_250 = arith.constant 0 : index
    %c0_251 = arith.constant 0 : index
    %235 = vector.load %arg7[%c3_249, %c0_250, %c0_251] : memref<7x94x97xf32, #tpu.memory_space<vmem>>, vector<1x94x97xf32>
    %236 = vector.shape_cast %235 : vector<1x94x97xf32> to vector<94x97xf32>
    %cst_252 = arith.constant dense<0.000000e+00> : vector<31x97xf32>
    %237 = tpu.matmul %234, %236, %cst_252 {dimension_numbers = #tpu.dot_dimension_numbers<[1], [0], [0], [1], [0, 0, 1, 1], [], []>} : vector<31x94xf32>, vector<94x97xf32>, vector<31x97xf32> -> vector<31x97xf32>
    %238 = arith.addf %232, %237 : vector<31x97xf32>
    %c0_253 = arith.constant 0 : index
    %c4_254 = arith.constant 4 : index
    %c0_255 = arith.constant 0 : index
    %239 = vector.load %arg29[%c0_253, %c4_254, %c0_255] : memref<2x37x94xf32, #tpu.memory_space<vmem>>, vector<1x31x94xf32>
    %240 = vector.shape_cast %239 : vector<1x31x94xf32> to vector<31x94xf32>
    %c4_256 = arith.constant 4 : index
    %c0_257 = arith.constant 0 : index
    %c0_258 = arith.constant 0 : index
    %241 = vector.load %arg7[%c4_256, %c0_257, %c0_258] : memref<7x94x97xf32, #tpu.memory_space<vmem>>, vector<1x94x97xf32>
    %242 = vector.shape_cast %241 : vector<1x94x97xf32> to vector<94x97xf32>
    %cst_259 = arith.constant dense<0.000000e+00> : vector<31x97xf32>
    %243 = tpu.matmul %240, %242, %cst_259 {dimension_numbers = #tpu.dot_dimension_numbers<[1], [0], [0], [1], [0, 0, 1, 1], [], []>} : vector<31x94xf32>, vector<94x97xf32>, vector<31x97xf32> -> vector<31x97xf32>
    %244 = arith.addf %238, %243 : vector<31x97xf32>
    %c0_260 = arith.constant 0 : index
    %c5_261 = arith.constant 5 : index
    %c0_262 = arith.constant 0 : index
    %245 = vector.load %arg29[%c0_260, %c5_261, %c0_262] : memref<2x37x94xf32, #tpu.memory_space<vmem>>, vector<1x31x94xf32>
    %246 = vector.shape_cast %245 : vector<1x31x94xf32> to vector<31x94xf32>
    %c5_263 = arith.constant 5 : index
    %c0_264 = arith.constant 0 : index
    %c0_265 = arith.constant 0 : index
    %247 = vector.load %arg7[%c5_263, %c0_264, %c0_265] : memref<7x94x97xf32, #tpu.memory_space<vmem>>, vector<1x94x97xf32>
    %248 = vector.shape_cast %247 : vector<1x94x97xf32> to vector<94x97xf32>
    %cst_266 = arith.constant dense<0.000000e+00> : vector<31x97xf32>
    %249 = tpu.matmul %246, %248, %cst_266 {dimension_numbers = #tpu.dot_dimension_numbers<[1], [0], [0], [1], [0, 0, 1, 1], [], []>} : vector<31x94xf32>, vector<94x97xf32>, vector<31x97xf32> -> vector<31x97xf32>
    %250 = arith.addf %244, %249 : vector<31x97xf32>
    %c0_267 = arith.constant 0 : index
    %c6 = arith.constant 6 : index
    %c0_268 = arith.constant 0 : index
    %251 = vector.load %arg29[%c0_267, %c6, %c0_268] : memref<2x37x94xf32, #tpu.memory_space<vmem>>, vector<1x31x94xf32>
    %252 = vector.shape_cast %251 : vector<1x31x94xf32> to vector<31x94xf32>
    %c6_269 = arith.constant 6 : index
    %c0_270 = arith.constant 0 : index
    %c0_271 = arith.constant 0 : index
    %253 = vector.load %arg7[%c6_269, %c0_270, %c0_271] : memref<7x94x97xf32, #tpu.memory_space<vmem>>, vector<1x94x97xf32>
    %254 = vector.shape_cast %253 : vector<1x94x97xf32> to vector<94x97xf32>
    %cst_272 = arith.constant dense<0.000000e+00> : vector<31x97xf32>
    %255 = tpu.matmul %252, %254, %cst_272 {dimension_numbers = #tpu.dot_dimension_numbers<[1], [0], [0], [1], [0, 0, 1, 1], [], []>} : vector<31x94xf32>, vector<94x97xf32>, vector<31x97xf32> -> vector<31x97xf32>
    %256 = arith.addf %250, %255 : vector<31x97xf32>
    %cst_273 = arith.constant dense<0.000000e+00> : vector<16x97xf32>
    %257 = tpu.matmul %215, %256, %cst_273 {dimension_numbers = #tpu.dot_dimension_numbers<[1], [0], [0], [1], [0, 0, 1, 1], [], []>} : vector<16x31xf32>, vector<31x97xf32>, vector<16x97xf32> -> vector<16x97xf32>
    %c0_274 = arith.constant 0 : index
    %c0_275 = arith.constant 0 : index
    %258 = vector.load %arg8[%c0_274, %c0_275] : memref<1x97xf32, #tpu.memory_space<vmem>>, vector<1x97xf32>
    %259 = vector.broadcast %258 : vector<1x97xf32> to vector<16x97xf32>
    %260 = arith.addf %257, %259 : vector<16x97xf32>
    %cst_276 = arith.constant 0.000000e+00 : f32
    %261 = vector.broadcast %cst_276 : f32 to vector<16x97xf32>
    %262 = arith.maximumf %260, %261 : vector<16x97xf32>
    %c0_277 = arith.constant 0 : index
    %c0_278 = arith.constant 0 : index
    %263 = vector.load %arg9[%c0_277, %c0_278] : memref<1x97xf32, #tpu.memory_space<vmem>>, vector<1x97xf32>
    %264 = vector.broadcast %263 : vector<1x97xf32> to vector<16x97xf32>
    %265 = arith.addf %262, %264 : vector<16x97xf32>
    %c1_279 = arith.constant 1 : index
    %c0_280 = arith.constant 0 : index
    %c0_281 = arith.constant 0 : index
    %266 = vector.load %arg29[%c1_279, %c0_280, %c0_281] : memref<2x37x94xf32, #tpu.memory_space<vmem>>, vector<1x31x94xf32>
    %267 = vector.shape_cast %266 : vector<1x31x94xf32> to vector<31x94xf32>
    %c0_282 = arith.constant 0 : index
    %c0_283 = arith.constant 0 : index
    %c0_284 = arith.constant 0 : index
    %268 = vector.load %arg7[%c0_282, %c0_283, %c0_284] : memref<7x94x97xf32, #tpu.memory_space<vmem>>, vector<1x94x97xf32>
    %269 = vector.shape_cast %268 : vector<1x94x97xf32> to vector<94x97xf32>
    %cst_285 = arith.constant dense<0.000000e+00> : vector<31x97xf32>
    %270 = tpu.matmul %267, %269, %cst_285 {dimension_numbers = #tpu.dot_dimension_numbers<[1], [0], [0], [1], [0, 0, 1, 1], [], []>} : vector<31x94xf32>, vector<94x97xf32>, vector<31x97xf32> -> vector<31x97xf32>
    %c1_286 = arith.constant 1 : index
    %c1_287 = arith.constant 1 : index
    %c0_288 = arith.constant 0 : index
    %271 = vector.load %arg29[%c1_286, %c1_287, %c0_288] : memref<2x37x94xf32, #tpu.memory_space<vmem>>, vector<1x31x94xf32>
    %272 = vector.shape_cast %271 : vector<1x31x94xf32> to vector<31x94xf32>
    %c1_289 = arith.constant 1 : index
    %c0_290 = arith.constant 0 : index
    %c0_291 = arith.constant 0 : index
    %273 = vector.load %arg7[%c1_289, %c0_290, %c0_291] : memref<7x94x97xf32, #tpu.memory_space<vmem>>, vector<1x94x97xf32>
    %274 = vector.shape_cast %273 : vector<1x94x97xf32> to vector<94x97xf32>
    %cst_292 = arith.constant dense<0.000000e+00> : vector<31x97xf32>
    %275 = tpu.matmul %272, %274, %cst_292 {dimension_numbers = #tpu.dot_dimension_numbers<[1], [0], [0], [1], [0, 0, 1, 1], [], []>} : vector<31x94xf32>, vector<94x97xf32>, vector<31x97xf32> -> vector<31x97xf32>
    %276 = arith.addf %270, %275 : vector<31x97xf32>
    %c1_293 = arith.constant 1 : index
    %c2_294 = arith.constant 2 : index
    %c0_295 = arith.constant 0 : index
    %277 = vector.load %arg29[%c1_293, %c2_294, %c0_295] : memref<2x37x94xf32, #tpu.memory_space<vmem>>, vector<1x31x94xf32>
    %278 = vector.shape_cast %277 : vector<1x31x94xf32> to vector<31x94xf32>
    %c2_296 = arith.constant 2 : index
    %c0_297 = arith.constant 0 : index
    %c0_298 = arith.constant 0 : index
    %279 = vector.load %arg7[%c2_296, %c0_297, %c0_298] : memref<7x94x97xf32, #tpu.memory_space<vmem>>, vector<1x94x97xf32>
    %280 = vector.shape_cast %279 : vector<1x94x97xf32> to vector<94x97xf32>
    %cst_299 = arith.constant dense<0.000000e+00> : vector<31x97xf32>
    %281 = tpu.matmul %278, %280, %cst_299 {dimension_numbers = #tpu.dot_dimension_numbers<[1], [0], [0], [1], [0, 0, 1, 1], [], []>} : vector<31x94xf32>, vector<94x97xf32>, vector<31x97xf32> -> vector<31x97xf32>
    %282 = arith.addf %276, %281 : vector<31x97xf32>
    %c1_300 = arith.constant 1 : index
    %c3_301 = arith.constant 3 : index
    %c0_302 = arith.constant 0 : index
    %283 = vector.load %arg29[%c1_300, %c3_301, %c0_302] : memref<2x37x94xf32, #tpu.memory_space<vmem>>, vector<1x31x94xf32>
    %284 = vector.shape_cast %283 : vector<1x31x94xf32> to vector<31x94xf32>
    %c3_303 = arith.constant 3 : index
    %c0_304 = arith.constant 0 : index
    %c0_305 = arith.constant 0 : index
    %285 = vector.load %arg7[%c3_303, %c0_304, %c0_305] : memref<7x94x97xf32, #tpu.memory_space<vmem>>, vector<1x94x97xf32>
    %286 = vector.shape_cast %285 : vector<1x94x97xf32> to vector<94x97xf32>
    %cst_306 = arith.constant dense<0.000000e+00> : vector<31x97xf32>
    %287 = tpu.matmul %284, %286, %cst_306 {dimension_numbers = #tpu.dot_dimension_numbers<[1], [0], [0], [1], [0, 0, 1, 1], [], []>} : vector<31x94xf32>, vector<94x97xf32>, vector<31x97xf32> -> vector<31x97xf32>
    %288 = arith.addf %282, %287 : vector<31x97xf32>
    %c1_307 = arith.constant 1 : index
    %c4_308 = arith.constant 4 : index
    %c0_309 = arith.constant 0 : index
    %289 = vector.load %arg29[%c1_307, %c4_308, %c0_309] : memref<2x37x94xf32, #tpu.memory_space<vmem>>, vector<1x31x94xf32>
    %290 = vector.shape_cast %289 : vector<1x31x94xf32> to vector<31x94xf32>
    %c4_310 = arith.constant 4 : index
    %c0_311 = arith.constant 0 : index
    %c0_312 = arith.constant 0 : index
    %291 = vector.load %arg7[%c4_310, %c0_311, %c0_312] : memref<7x94x97xf32, #tpu.memory_space<vmem>>, vector<1x94x97xf32>
    %292 = vector.shape_cast %291 : vector<1x94x97xf32> to vector<94x97xf32>
    %cst_313 = arith.constant dense<0.000000e+00> : vector<31x97xf32>
    %293 = tpu.matmul %290, %292, %cst_313 {dimension_numbers = #tpu.dot_dimension_numbers<[1], [0], [0], [1], [0, 0, 1, 1], [], []>} : vector<31x94xf32>, vector<94x97xf32>, vector<31x97xf32> -> vector<31x97xf32>
    %294 = arith.addf %288, %293 : vector<31x97xf32>
    %c1_314 = arith.constant 1 : index
    %c5_315 = arith.constant 5 : index
    %c0_316 = arith.constant 0 : index
    %295 = vector.load %arg29[%c1_314, %c5_315, %c0_316] : memref<2x37x94xf32, #tpu.memory_space<vmem>>, vector<1x31x94xf32>
    %296 = vector.shape_cast %295 : vector<1x31x94xf32> to vector<31x94xf32>
    %c5_317 = arith.constant 5 : index
    %c0_318 = arith.constant 0 : index
    %c0_319 = arith.constant 0 : index
    %297 = vector.load %arg7[%c5_317, %c0_318, %c0_319] : memref<7x94x97xf32, #tpu.memory_space<vmem>>, vector<1x94x97xf32>
    %298 = vector.shape_cast %297 : vector<1x94x97xf32> to vector<94x97xf32>
    %cst_320 = arith.constant dense<0.000000e+00> : vector<31x97xf32>
    %299 = tpu.matmul %296, %298, %cst_320 {dimension_numbers = #tpu.dot_dimension_numbers<[1], [0], [0], [1], [0, 0, 1, 1], [], []>} : vector<31x94xf32>, vector<94x97xf32>, vector<31x97xf32> -> vector<31x97xf32>
    %300 = arith.addf %294, %299 : vector<31x97xf32>
    %c1_321 = arith.constant 1 : index
    %c6_322 = arith.constant 6 : index
    %c0_323 = arith.constant 0 : index
    %301 = vector.load %arg29[%c1_321, %c6_322, %c0_323] : memref<2x37x94xf32, #tpu.memory_space<vmem>>, vector<1x31x94xf32>
    %302 = vector.shape_cast %301 : vector<1x31x94xf32> to vector<31x94xf32>
    %c6_324 = arith.constant 6 : index
    %c0_325 = arith.constant 0 : index
    %c0_326 = arith.constant 0 : index
    %303 = vector.load %arg7[%c6_324, %c0_325, %c0_326] : memref<7x94x97xf32, #tpu.memory_space<vmem>>, vector<1x94x97xf32>
    %304 = vector.shape_cast %303 : vector<1x94x97xf32> to vector<94x97xf32>
    %cst_327 = arith.constant dense<0.000000e+00> : vector<31x97xf32>
    %305 = tpu.matmul %302, %304, %cst_327 {dimension_numbers = #tpu.dot_dimension_numbers<[1], [0], [0], [1], [0, 0, 1, 1], [], []>} : vector<31x94xf32>, vector<94x97xf32>, vector<31x97xf32> -> vector<31x97xf32>
    %306 = arith.addf %300, %305 : vector<31x97xf32>
    %cst_328 = arith.constant dense<0.000000e+00> : vector<16x97xf32>
    %307 = tpu.matmul %215, %306, %cst_328 {dimension_numbers = #tpu.dot_dimension_numbers<[1], [0], [0], [1], [0, 0, 1, 1], [], []>} : vector<16x31xf32>, vector<31x97xf32>, vector<16x97xf32> -> vector<16x97xf32>
    %c0_329 = arith.constant 0 : index
    %c0_330 = arith.constant 0 : index
    %308 = vector.load %arg8[%c0_329, %c0_330] : memref<1x97xf32, #tpu.memory_space<vmem>>, vector<1x97xf32>
    %309 = vector.broadcast %308 : vector<1x97xf32> to vector<16x97xf32>
    %310 = arith.addf %307, %309 : vector<16x97xf32>
    %cst_331 = arith.constant 0.000000e+00 : f32
    %311 = vector.broadcast %cst_331 : f32 to vector<16x97xf32>
    %312 = arith.maximumf %310, %311 : vector<16x97xf32>
    %c0_332 = arith.constant 0 : index
    %c0_333 = arith.constant 0 : index
    %313 = vector.load %arg9[%c0_332, %c0_333] : memref<1x97xf32, #tpu.memory_space<vmem>>, vector<1x97xf32>
    %314 = vector.broadcast %313 : vector<1x97xf32> to vector<16x97xf32>
    %315 = arith.addf %312, %314 : vector<16x97xf32>
    %c0_334 = arith.constant 0 : index
    %c2_335 = arith.constant 2 : index
    %c0_336 = arith.constant 0 : index
    %316 = vector.load %arg30[%c0_334, %c2_335, %c0_336] : memref<2x20x97xf32, #tpu.memory_space<vmem>>, vector<1x16x97xf32>
    %317 = vector.shape_cast %316 : vector<1x16x97xf32> to vector<16x97xf32>
    %318 = vector.shape_cast %265 : vector<16x97xf32> to vector<1x16x97xf32>
    tpu.vector_store %arg30[%c0_334, %c2_335, %c0_336], %318 {strides = array<i32>} : memref<2x20x97xf32, #tpu.memory_space<vmem>>, vector<1x16x97xf32>,
    %c1_337 = arith.constant 1 : index
    %c2_338 = arith.constant 2 : index
    %c0_339 = arith.constant 0 : index
    %319 = vector.load %arg30[%c1_337, %c2_338, %c0_339] : memref<2x20x97xf32, #tpu.memory_space<vmem>>, vector<1x16x97xf32>
    %320 = vector.shape_cast %319 : vector<1x16x97xf32> to vector<16x97xf32>
    %321 = vector.shape_cast %315 : vector<16x97xf32> to vector<1x16x97xf32>
    tpu.vector_store %arg30[%c1_337, %c2_338, %c0_339], %321 {strides = array<i32>} : memref<2x20x97xf32, #tpu.memory_space<vmem>>, vector<1x16x97xf32>,
    %c0_340 = arith.constant 0 : index
    %c0_341 = arith.constant 0 : index
    %c0_342 = arith.constant 0 : index
    %322 = vector.load %arg30[%c0_340, %c0_341, %c0_342] : memref<2x20x97xf32, #tpu.memory_space<vmem>>, vector<1x14x97xf32>
    %323 = vector.shape_cast %322 : vector<1x14x97xf32> to vector<14x97xf32>
    %c0_343 = arith.constant 0 : index
    %c0_344 = arith.constant 0 : index
    %c0_345 = arith.constant 0 : index
    %324 = vector.load %arg10[%c0_343, %c0_344, %c0_345] : memref<7x97x86xf32, #tpu.memory_space<vmem>>, vector<1x97x86xf32>
    %325 = vector.shape_cast %324 : vector<1x97x86xf32> to vector<97x86xf32>
    %cst_346 = arith.constant dense<0.000000e+00> : vector<14x86xf32>
    %326 = tpu.matmul %323, %325, %cst_346 {dimension_numbers = #tpu.dot_dimension_numbers<[1], [0], [0], [1], [0, 0, 1, 1], [], []>} : vector<14x97xf32>, vector<97x86xf32>, vector<14x86xf32> -> vector<14x86xf32>
    %c0_347 = arith.constant 0 : index
    %c1_348 = arith.constant 1 : index
    %c0_349 = arith.constant 0 : index
    %327 = vector.load %arg30[%c0_347, %c1_348, %c0_349] : memref<2x20x97xf32, #tpu.memory_space<vmem>>, vector<1x14x97xf32>
    %328 = vector.shape_cast %327 : vector<1x14x97xf32> to vector<14x97xf32>
    %c1_350 = arith.constant 1 : index
    %c0_351 = arith.constant 0 : index
    %c0_352 = arith.constant 0 : index
    %329 = vector.load %arg10[%c1_350, %c0_351, %c0_352] : memref<7x97x86xf32, #tpu.memory_space<vmem>>, vector<1x97x86xf32>
    %330 = vector.shape_cast %329 : vector<1x97x86xf32> to vector<97x86xf32>
    %cst_353 = arith.constant dense<0.000000e+00> : vector<14x86xf32>
    %331 = tpu.matmul %328, %330, %cst_353 {dimension_numbers = #tpu.dot_dimension_numbers<[1], [0], [0], [1], [0, 0, 1, 1], [], []>} : vector<14x97xf32>, vector<97x86xf32>, vector<14x86xf32> -> vector<14x86xf32>
    %332 = arith.addf %326, %331 : vector<14x86xf32>
    %c0_354 = arith.constant 0 : index
    %c2_355 = arith.constant 2 : index
    %c0_356 = arith.constant 0 : index
    %333 = vector.load %arg30[%c0_354, %c2_355, %c0_356] : memref<2x20x97xf32, #tpu.memory_space<vmem>>, vector<1x14x97xf32>
    %334 = vector.shape_cast %333 : vector<1x14x97xf32> to vector<14x97xf32>
    %c2_357 = arith.constant 2 : index
    %c0_358 = arith.constant 0 : index
    %c0_359 = arith.constant 0 : index
    %335 = vector.load %arg10[%c2_357, %c0_358, %c0_359] : memref<7x97x86xf32, #tpu.memory_space<vmem>>, vector<1x97x86xf32>
    %336 = vector.shape_cast %335 : vector<1x97x86xf32> to vector<97x86xf32>
    %cst_360 = arith.constant dense<0.000000e+00> : vector<14x86xf32>
    %337 = tpu.matmul %334, %336, %cst_360 {dimension_numbers = #tpu.dot_dimension_numbers<[1], [0], [0], [1], [0, 0, 1, 1], [], []>} : vector<14x97xf32>, vector<97x86xf32>, vector<14x86xf32> -> vector<14x86xf32>
    %338 = arith.addf %332, %337 : vector<14x86xf32>
    %c0_361 = arith.constant 0 : index
    %c3_362 = arith.constant 3 : index
    %c0_363 = arith.constant 0 : index
    %339 = vector.load %arg30[%c0_361, %c3_362, %c0_363] : memref<2x20x97xf32, #tpu.memory_space<vmem>>, vector<1x14x97xf32>
    %340 = vector.shape_cast %339 : vector<1x14x97xf32> to vector<14x97xf32>
    %c3_364 = arith.constant 3 : index
    %c0_365 = arith.constant 0 : index
    %c0_366 = arith.constant 0 : index
    %341 = vector.load %arg10[%c3_364, %c0_365, %c0_366] : memref<7x97x86xf32, #tpu.memory_space<vmem>>, vector<1x97x86xf32>
    %342 = vector.shape_cast %341 : vector<1x97x86xf32> to vector<97x86xf32>
    %cst_367 = arith.constant dense<0.000000e+00> : vector<14x86xf32>
    %343 = tpu.matmul %340, %342, %cst_367 {dimension_numbers = #tpu.dot_dimension_numbers<[1], [0], [0], [1], [0, 0, 1, 1], [], []>} : vector<14x97xf32>, vector<97x86xf32>, vector<14x86xf32> -> vector<14x86xf32>
    %344 = arith.addf %338, %343 : vector<14x86xf32>
    %c0_368 = arith.constant 0 : index
    %c4_369 = arith.constant 4 : index
    %c0_370 = arith.constant 0 : index
    %345 = vector.load %arg30[%c0_368, %c4_369, %c0_370] : memref<2x20x97xf32, #tpu.memory_space<vmem>>, vector<1x14x97xf32>
    %346 = vector.shape_cast %345 : vector<1x14x97xf32> to vector<14x97xf32>
    %c4_371 = arith.constant 4 : index
    %c0_372 = arith.constant 0 : index
    %c0_373 = arith.constant 0 : index
    %347 = vector.load %arg10[%c4_371, %c0_372, %c0_373] : memref<7x97x86xf32, #tpu.memory_space<vmem>>, vector<1x97x86xf32>
    %348 = vector.shape_cast %347 : vector<1x97x86xf32> to vector<97x86xf32>
    %cst_374 = arith.constant dense<0.000000e+00> : vector<14x86xf32>
    %349 = tpu.matmul %346, %348, %cst_374 {dimension_numbers = #tpu.dot_dimension_numbers<[1], [0], [0], [1], [0, 0, 1, 1], [], []>} : vector<14x97xf32>, vector<97x86xf32>, vector<14x86xf32> -> vector<14x86xf32>
    %350 = arith.addf %344, %349 : vector<14x86xf32>
    %c0_375 = arith.constant 0 : index
    %c5_376 = arith.constant 5 : index
    %c0_377 = arith.constant 0 : index
    %351 = vector.load %arg30[%c0_375, %c5_376, %c0_377] : memref<2x20x97xf32, #tpu.memory_space<vmem>>, vector<1x14x97xf32>
    %352 = vector.shape_cast %351 : vector<1x14x97xf32> to vector<14x97xf32>
    %c5_378 = arith.constant 5 : index
    %c0_379 = arith.constant 0 : index
    %c0_380 = arith.constant 0 : index
    %353 = vector.load %arg10[%c5_378, %c0_379, %c0_380] : memref<7x97x86xf32, #tpu.memory_space<vmem>>, vector<1x97x86xf32>
    %354 = vector.shape_cast %353 : vector<1x97x86xf32> to vector<97x86xf32>
    %cst_381 = arith.constant dense<0.000000e+00> : vector<14x86xf32>
    %355 = tpu.matmul %352, %354, %cst_381 {dimension_numbers = #tpu.dot_dimension_numbers<[1], [0], [0], [1], [0, 0, 1, 1], [], []>} : vector<14x97xf32>, vector<97x86xf32>, vector<14x86xf32> -> vector<14x86xf32>
    %356 = arith.addf %350, %355 : vector<14x86xf32>
    %c0_382 = arith.constant 0 : index
    %c6_383 = arith.constant 6 : index
    %c0_384 = arith.constant 0 : index
    %357 = vector.load %arg30[%c0_382, %c6_383, %c0_384] : memref<2x20x97xf32, #tpu.memory_space<vmem>>, vector<1x14x97xf32>
    %358 = vector.shape_cast %357 : vector<1x14x97xf32> to vector<14x97xf32>
    %c6_385 = arith.constant 6 : index
    %c0_386 = arith.constant 0 : index
    %c0_387 = arith.constant 0 : index
    %359 = vector.load %arg10[%c6_385, %c0_386, %c0_387] : memref<7x97x86xf32, #tpu.memory_space<vmem>>, vector<1x97x86xf32>
    %360 = vector.shape_cast %359 : vector<1x97x86xf32> to vector<97x86xf32>
    %cst_388 = arith.constant dense<0.000000e+00> : vector<14x86xf32>
    %361 = tpu.matmul %358, %360, %cst_388 {dimension_numbers = #tpu.dot_dimension_numbers<[1], [0], [0], [1], [0, 0, 1, 1], [], []>} : vector<14x97xf32>, vector<97x86xf32>, vector<14x86xf32> -> vector<14x86xf32>
    %362 = arith.addf %356, %361 : vector<14x86xf32>
    %c0_389 = arith.constant 0 : index
    %c0_390 = arith.constant 0 : index
    %363 = vector.load %arg11[%c0_389, %c0_390] : memref<1x86xf32, #tpu.memory_space<vmem>>, vector<1x86xf32>
    %364 = vector.broadcast %363 : vector<1x86xf32> to vector<14x86xf32>
    %365 = arith.addf %362, %364 : vector<14x86xf32>
    %cst_391 = arith.constant 0.000000e+00 : f32
    %366 = vector.broadcast %cst_391 : f32 to vector<14x86xf32>
    %367 = arith.maximumf %365, %366 : vector<14x86xf32>
    %c0_392 = arith.constant 0 : index
    %c0_393 = arith.constant 0 : index
    %368 = vector.load %arg12[%c0_392, %c0_393] : memref<1x86xf32, #tpu.memory_space<vmem>>, vector<1x86xf32>
    %369 = vector.broadcast %368 : vector<1x86xf32> to vector<14x86xf32>
    %370 = arith.addf %367, %369 : vector<14x86xf32>
    %c1_394 = arith.constant 1 : index
    %c0_395 = arith.constant 0 : index
    %c0_396 = arith.constant 0 : index
    %371 = vector.load %arg30[%c1_394, %c0_395, %c0_396] : memref<2x20x97xf32, #tpu.memory_space<vmem>>, vector<1x14x97xf32>
    %372 = vector.shape_cast %371 : vector<1x14x97xf32> to vector<14x97xf32>
    %c0_397 = arith.constant 0 : index
    %c0_398 = arith.constant 0 : index
    %c0_399 = arith.constant 0 : index
    %373 = vector.load %arg10[%c0_397, %c0_398, %c0_399] : memref<7x97x86xf32, #tpu.memory_space<vmem>>, vector<1x97x86xf32>
    %374 = vector.shape_cast %373 : vector<1x97x86xf32> to vector<97x86xf32>
    %cst_400 = arith.constant dense<0.000000e+00> : vector<14x86xf32>
    %375 = tpu.matmul %372, %374, %cst_400 {dimension_numbers = #tpu.dot_dimension_numbers<[1], [0], [0], [1], [0, 0, 1, 1], [], []>} : vector<14x97xf32>, vector<97x86xf32>, vector<14x86xf32> -> vector<14x86xf32>
    %c1_401 = arith.constant 1 : index
    %c1_402 = arith.constant 1 : index
    %c0_403 = arith.constant 0 : index
    %376 = vector.load %arg30[%c1_401, %c1_402, %c0_403] : memref<2x20x97xf32, #tpu.memory_space<vmem>>, vector<1x14x97xf32>
    %377 = vector.shape_cast %376 : vector<1x14x97xf32> to vector<14x97xf32>
    %c1_404 = arith.constant 1 : index
    %c0_405 = arith.constant 0 : index
    %c0_406 = arith.constant 0 : index
    %378 = vector.load %arg10[%c1_404, %c0_405, %c0_406] : memref<7x97x86xf32, #tpu.memory_space<vmem>>, vector<1x97x86xf32>
    %379 = vector.shape_cast %378 : vector<1x97x86xf32> to vector<97x86xf32>
    %cst_407 = arith.constant dense<0.000000e+00> : vector<14x86xf32>
    %380 = tpu.matmul %377, %379, %cst_407 {dimension_numbers = #tpu.dot_dimension_numbers<[1], [0], [0], [1], [0, 0, 1, 1], [], []>} : vector<14x97xf32>, vector<97x86xf32>, vector<14x86xf32> -> vector<14x86xf32>
    %381 = arith.addf %375, %380 : vector<14x86xf32>
    %c1_408 = arith.constant 1 : index
    %c2_409 = arith.constant 2 : index
    %c0_410 = arith.constant 0 : index
    %382 = vector.load %arg30[%c1_408, %c2_409, %c0_410] : memref<2x20x97xf32, #tpu.memory_space<vmem>>, vector<1x14x97xf32>
    %383 = vector.shape_cast %382 : vector<1x14x97xf32> to vector<14x97xf32>
    %c2_411 = arith.constant 2 : index
    %c0_412 = arith.constant 0 : index
    %c0_413 = arith.constant 0 : index
    %384 = vector.load %arg10[%c2_411, %c0_412, %c0_413] : memref<7x97x86xf32, #tpu.memory_space<vmem>>, vector<1x97x86xf32>
    %385 = vector.shape_cast %384 : vector<1x97x86xf32> to vector<97x86xf32>
    %cst_414 = arith.constant dense<0.000000e+00> : vector<14x86xf32>
    %386 = tpu.matmul %383, %385, %cst_414 {dimension_numbers = #tpu.dot_dimension_numbers<[1], [0], [0], [1], [0, 0, 1, 1], [], []>} : vector<14x97xf32>, vector<97x86xf32>, vector<14x86xf32> -> vector<14x86xf32>
    %387 = arith.addf %381, %386 : vector<14x86xf32>
    %c1_415 = arith.constant 1 : index
    %c3_416 = arith.constant 3 : index
    %c0_417 = arith.constant 0 : index
    %388 = vector.load %arg30[%c1_415, %c3_416, %c0_417] : memref<2x20x97xf32, #tpu.memory_space<vmem>>, vector<1x14x97xf32>
    %389 = vector.shape_cast %388 : vector<1x14x97xf32> to vector<14x97xf32>
    %c3_418 = arith.constant 3 : index
    %c0_419 = arith.constant 0 : index
    %c0_420 = arith.constant 0 : index
    %390 = vector.load %arg10[%c3_418, %c0_419, %c0_420] : memref<7x97x86xf32, #tpu.memory_space<vmem>>, vector<1x97x86xf32>
    %391 = vector.shape_cast %390 : vector<1x97x86xf32> to vector<97x86xf32>
    %cst_421 = arith.constant dense<0.000000e+00> : vector<14x86xf32>
    %392 = tpu.matmul %389, %391, %cst_421 {dimension_numbers = #tpu.dot_dimension_numbers<[1], [0], [0], [1], [0, 0, 1, 1], [], []>} : vector<14x97xf32>, vector<97x86xf32>, vector<14x86xf32> -> vector<14x86xf32>
    %393 = arith.addf %387, %392 : vector<14x86xf32>
    %c1_422 = arith.constant 1 : index
    %c4_423 = arith.constant 4 : index
    %c0_424 = arith.constant 0 : index
    %394 = vector.load %arg30[%c1_422, %c4_423, %c0_424] : memref<2x20x97xf32, #tpu.memory_space<vmem>>, vector<1x14x97xf32>
    %395 = vector.shape_cast %394 : vector<1x14x97xf32> to vector<14x97xf32>
    %c4_425 = arith.constant 4 : index
    %c0_426 = arith.constant 0 : index
    %c0_427 = arith.constant 0 : index
    %396 = vector.load %arg10[%c4_425, %c0_426, %c0_427] : memref<7x97x86xf32, #tpu.memory_space<vmem>>, vector<1x97x86xf32>
    %397 = vector.shape_cast %396 : vector<1x97x86xf32> to vector<97x86xf32>
    %cst_428 = arith.constant dense<0.000000e+00> : vector<14x86xf32>
    %398 = tpu.matmul %395, %397, %cst_428 {dimension_numbers = #tpu.dot_dimension_numbers<[1], [0], [0], [1], [0, 0, 1, 1], [], []>} : vector<14x97xf32>, vector<97x86xf32>, vector<14x86xf32> -> vector<14x86xf32>
    %399 = arith.addf %393, %398 : vector<14x86xf32>
    %c1_429 = arith.constant 1 : index
    %c5_430 = arith.constant 5 : index
    %c0_431 = arith.constant 0 : index
    %400 = vector.load %arg30[%c1_429, %c5_430, %c0_431] : memref<2x20x97xf32, #tpu.memory_space<vmem>>, vector<1x14x97xf32>
    %401 = vector.shape_cast %400 : vector<1x14x97xf32> to vector<14x97xf32>
    %c5_432 = arith.constant 5 : index
    %c0_433 = arith.constant 0 : index
    %c0_434 = arith.constant 0 : index
    %402 = vector.load %arg10[%c5_432, %c0_433, %c0_434] : memref<7x97x86xf32, #tpu.memory_space<vmem>>, vector<1x97x86xf32>
    %403 = vector.shape_cast %402 : vector<1x97x86xf32> to vector<97x86xf32>
    %cst_435 = arith.constant dense<0.000000e+00> : vector<14x86xf32>
    %404 = tpu.matmul %401, %403, %cst_435 {dimension_numbers = #tpu.dot_dimension_numbers<[1], [0], [0], [1], [0, 0, 1, 1], [], []>} : vector<14x97xf32>, vector<97x86xf32>, vector<14x86xf32> -> vector<14x86xf32>
    %405 = arith.addf %399, %404 : vector<14x86xf32>
    %c1_436 = arith.constant 1 : index
    %c6_437 = arith.constant 6 : index
    %c0_438 = arith.constant 0 : index
    %406 = vector.load %arg30[%c1_436, %c6_437, %c0_438] : memref<2x20x97xf32, #tpu.memory_space<vmem>>, vector<1x14x97xf32>
    %407 = vector.shape_cast %406 : vector<1x14x97xf32> to vector<14x97xf32>
    %c6_439 = arith.constant 6 : index
    %c0_440 = arith.constant 0 : index
    %c0_441 = arith.constant 0 : index
    %408 = vector.load %arg10[%c6_439, %c0_440, %c0_441] : memref<7x97x86xf32, #tpu.memory_space<vmem>>, vector<1x97x86xf32>
    %409 = vector.shape_cast %408 : vector<1x97x86xf32> to vector<97x86xf32>
    %cst_442 = arith.constant dense<0.000000e+00> : vector<14x86xf32>
    %410 = tpu.matmul %407, %409, %cst_442 {dimension_numbers = #tpu.dot_dimension_numbers<[1], [0], [0], [1], [0, 0, 1, 1], [], []>} : vector<14x97xf32>, vector<97x86xf32>, vector<14x86xf32> -> vector<14x86xf32>
    %411 = arith.addf %405, %410 : vector<14x86xf32>
    %c0_443 = arith.constant 0 : index
    %c0_444 = arith.constant 0 : index
    %412 = vector.load %arg11[%c0_443, %c0_444] : memref<1x86xf32, #tpu.memory_space<vmem>>, vector<1x86xf32>
    %413 = vector.broadcast %412 : vector<1x86xf32> to vector<14x86xf32>
    %414 = arith.addf %411, %413 : vector<14x86xf32>
    %cst_445 = arith.constant 0.000000e+00 : f32
    %415 = vector.broadcast %cst_445 : f32 to vector<14x86xf32>
    %416 = arith.maximumf %414, %415 : vector<14x86xf32>
    %c0_446 = arith.constant 0 : index
    %c0_447 = arith.constant 0 : index
    %417 = vector.load %arg12[%c0_446, %c0_447] : memref<1x86xf32, #tpu.memory_space<vmem>>, vector<1x86xf32>
    %418 = vector.broadcast %417 : vector<1x86xf32> to vector<14x86xf32>
    %419 = arith.addf %416, %418 : vector<14x86xf32>
    %c0_448 = arith.constant 0 : index
    %c1_449 = arith.constant 1 : index
    %c0_450 = arith.constant 0 : index
    %420 = vector.load %arg31[%c0_448, %c1_449, %c0_450] : memref<2x16x86xf32, #tpu.memory_space<vmem>>, vector<1x14x86xf32>
    %421 = vector.shape_cast %420 : vector<1x14x86xf32> to vector<14x86xf32>
    %422 = vector.shape_cast %370 : vector<14x86xf32> to vector<1x14x86xf32>
    tpu.vector_store %arg31[%c0_448, %c1_449, %c0_450], %422 {strides = array<i32>} : memref<2x16x86xf32, #tpu.memory_space<vmem>>, vector<1x14x86xf32>,
    %c1_451 = arith.constant 1 : index
    %c1_452 = arith.constant 1 : index
    %c0_453 = arith.constant 0 : index
    %423 = vector.load %arg31[%c1_451, %c1_452, %c0_453] : memref<2x16x86xf32, #tpu.memory_space<vmem>>, vector<1x14x86xf32>
    %424 = vector.shape_cast %423 : vector<1x14x86xf32> to vector<14x86xf32>
    %425 = vector.shape_cast %419 : vector<14x86xf32> to vector<1x14x86xf32>
    tpu.vector_store %arg31[%c1_451, %c1_452, %c0_453], %425 {strides = array<i32>} : memref<2x16x86xf32, #tpu.memory_space<vmem>>, vector<1x14x86xf32>,
    %c0_454 = arith.constant 0 : index
    %c0_455 = arith.constant 0 : index
    %c0_456 = arith.constant 0 : index
    %426 = vector.load %arg31[%c0_454, %c0_455, %c0_456] : memref<2x16x86xf32, #tpu.memory_space<vmem>>, vector<1x10x86xf32>
    %427 = vector.shape_cast %426 : vector<1x10x86xf32> to vector<10x86xf32>
    %c0_457 = arith.constant 0 : index
    %c0_458 = arith.constant 0 : index
    %c0_459 = arith.constant 0 : index
    %428 = vector.load %arg13[%c0_457, %c0_458, %c0_459] : memref<7x86x111xf32, #tpu.memory_space<vmem>>, vector<1x86x111xf32>
    %429 = vector.shape_cast %428 : vector<1x86x111xf32> to vector<86x111xf32>
    %cst_460 = arith.constant dense<0.000000e+00> : vector<10x111xf32>
    %430 = tpu.matmul %427, %429, %cst_460 {dimension_numbers = #tpu.dot_dimension_numbers<[1], [0], [0], [1], [0, 0, 1, 1], [], []>} : vector<10x86xf32>, vector<86x111xf32>, vector<10x111xf32> -> vector<10x111xf32>
    %c0_461 = arith.constant 0 : index
    %c1_462 = arith.constant 1 : index
    %c0_463 = arith.constant 0 : index
    %431 = vector.load %arg31[%c0_461, %c1_462, %c0_463] : memref<2x16x86xf32, #tpu.memory_space<vmem>>, vector<1x10x86xf32>
    %432 = vector.shape_cast %431 : vector<1x10x86xf32> to vector<10x86xf32>
    %c1_464 = arith.constant 1 : index
    %c0_465 = arith.constant 0 : index
    %c0_466 = arith.constant 0 : index
    %433 = vector.load %arg13[%c1_464, %c0_465, %c0_466] : memref<7x86x111xf32, #tpu.memory_space<vmem>>, vector<1x86x111xf32>
    %434 = vector.shape_cast %433 : vector<1x86x111xf32> to vector<86x111xf32>
    %cst_467 = arith.constant dense<0.000000e+00> : vector<10x111xf32>
    %435 = tpu.matmul %432, %434, %cst_467 {dimension_numbers = #tpu.dot_dimension_numbers<[1], [0], [0], [1], [0, 0, 1, 1], [], []>} : vector<10x86xf32>, vector<86x111xf32>, vector<10x111xf32> -> vector<10x111xf32>
    %436 = arith.addf %430, %435 : vector<10x111xf32>
    %c0_468 = arith.constant 0 : index
    %c2_469 = arith.constant 2 : index
    %c0_470 = arith.constant 0 : index
    %437 = vector.load %arg31[%c0_468, %c2_469, %c0_470] : memref<2x16x86xf32, #tpu.memory_space<vmem>>, vector<1x10x86xf32>
    %438 = vector.shape_cast %437 : vector<1x10x86xf32> to vector<10x86xf32>
    %c2_471 = arith.constant 2 : index
    %c0_472 = arith.constant 0 : index
    %c0_473 = arith.constant 0 : index
    %439 = vector.load %arg13[%c2_471, %c0_472, %c0_473] : memref<7x86x111xf32, #tpu.memory_space<vmem>>, vector<1x86x111xf32>
    %440 = vector.shape_cast %439 : vector<1x86x111xf32> to vector<86x111xf32>
    %cst_474 = arith.constant dense<0.000000e+00> : vector<10x111xf32>
    %441 = tpu.matmul %438, %440, %cst_474 {dimension_numbers = #tpu.dot_dimension_numbers<[1], [0], [0], [1], [0, 0, 1, 1], [], []>} : vector<10x86xf32>, vector<86x111xf32>, vector<10x111xf32> -> vector<10x111xf32>
    %442 = arith.addf %436, %441 : vector<10x111xf32>
    %c0_475 = arith.constant 0 : index
    %c3_476 = arith.constant 3 : index
    %c0_477 = arith.constant 0 : index
    %443 = vector.load %arg31[%c0_475, %c3_476, %c0_477] : memref<2x16x86xf32, #tpu.memory_space<vmem>>, vector<1x10x86xf32>
    %444 = vector.shape_cast %443 : vector<1x10x86xf32> to vector<10x86xf32>
    %c3_478 = arith.constant 3 : index
    %c0_479 = arith.constant 0 : index
    %c0_480 = arith.constant 0 : index
    %445 = vector.load %arg13[%c3_478, %c0_479, %c0_480] : memref<7x86x111xf32, #tpu.memory_space<vmem>>, vector<1x86x111xf32>
    %446 = vector.shape_cast %445 : vector<1x86x111xf32> to vector<86x111xf32>
    %cst_481 = arith.constant dense<0.000000e+00> : vector<10x111xf32>
    %447 = tpu.matmul %444, %446, %cst_481 {dimension_numbers = #tpu.dot_dimension_numbers<[1], [0], [0], [1], [0, 0, 1, 1], [], []>} : vector<10x86xf32>, vector<86x111xf32>, vector<10x111xf32> -> vector<10x111xf32>
    %448 = arith.addf %442, %447 : vector<10x111xf32>
    %c0_482 = arith.constant 0 : index
    %c4_483 = arith.constant 4 : index
    %c0_484 = arith.constant 0 : index
    %449 = vector.load %arg31[%c0_482, %c4_483, %c0_484] : memref<2x16x86xf32, #tpu.memory_space<vmem>>, vector<1x10x86xf32>
    %450 = vector.shape_cast %449 : vector<1x10x86xf32> to vector<10x86xf32>
    %c4_485 = arith.constant 4 : index
    %c0_486 = arith.constant 0 : index
    %c0_487 = arith.constant 0 : index
    %451 = vector.load %arg13[%c4_485, %c0_486, %c0_487] : memref<7x86x111xf32, #tpu.memory_space<vmem>>, vector<1x86x111xf32>
    %452 = vector.shape_cast %451 : vector<1x86x111xf32> to vector<86x111xf32>
    %cst_488 = arith.constant dense<0.000000e+00> : vector<10x111xf32>
    %453 = tpu.matmul %450, %452, %cst_488 {dimension_numbers = #tpu.dot_dimension_numbers<[1], [0], [0], [1], [0, 0, 1, 1], [], []>} : vector<10x86xf32>, vector<86x111xf32>, vector<10x111xf32> -> vector<10x111xf32>
    %454 = arith.addf %448, %453 : vector<10x111xf32>
    %c0_489 = arith.constant 0 : index
    %c5_490 = arith.constant 5 : index
    %c0_491 = arith.constant 0 : index
    %455 = vector.load %arg31[%c0_489, %c5_490, %c0_491] : memref<2x16x86xf32, #tpu.memory_space<vmem>>, vector<1x10x86xf32>
    %456 = vector.shape_cast %455 : vector<1x10x86xf32> to vector<10x86xf32>
    %c5_492 = arith.constant 5 : index
    %c0_493 = arith.constant 0 : index
    %c0_494 = arith.constant 0 : index
    %457 = vector.load %arg13[%c5_492, %c0_493, %c0_494] : memref<7x86x111xf32, #tpu.memory_space<vmem>>, vector<1x86x111xf32>
    %458 = vector.shape_cast %457 : vector<1x86x111xf32> to vector<86x111xf32>
    %cst_495 = arith.constant dense<0.000000e+00> : vector<10x111xf32>
    %459 = tpu.matmul %456, %458, %cst_495 {dimension_numbers = #tpu.dot_dimension_numbers<[1], [0], [0], [1], [0, 0, 1, 1], [], []>} : vector<10x86xf32>, vector<86x111xf32>, vector<10x111xf32> -> vector<10x111xf32>
    %460 = arith.addf %454, %459 : vector<10x111xf32>
    %c0_496 = arith.constant 0 : index
    %c6_497 = arith.constant 6 : index
    %c0_498 = arith.constant 0 : index
    %461 = vector.load %arg31[%c0_496, %c6_497, %c0_498] : memref<2x16x86xf32, #tpu.memory_space<vmem>>, vector<1x10x86xf32>
    %462 = vector.shape_cast %461 : vector<1x10x86xf32> to vector<10x86xf32>
    %c6_499 = arith.constant 6 : index
    %c0_500 = arith.constant 0 : index
    %c0_501 = arith.constant 0 : index
    %463 = vector.load %arg13[%c6_499, %c0_500, %c0_501] : memref<7x86x111xf32, #tpu.memory_space<vmem>>, vector<1x86x111xf32>
    %464 = vector.shape_cast %463 : vector<1x86x111xf32> to vector<86x111xf32>
    %cst_502 = arith.constant dense<0.000000e+00> : vector<10x111xf32>
    %465 = tpu.matmul %462, %464, %cst_502 {dimension_numbers = #tpu.dot_dimension_numbers<[1], [0], [0], [1], [0, 0, 1, 1], [], []>} : vector<10x86xf32>, vector<86x111xf32>, vector<10x111xf32> -> vector<10x111xf32>
    %466 = arith.addf %460, %465 : vector<10x111xf32>
    %c0_503 = arith.constant 0 : index
    %c0_504 = arith.constant 0 : index
    %467 = vector.load %arg14[%c0_503, %c0_504] : memref<1x111xf32, #tpu.memory_space<vmem>>, vector<1x111xf32>
    %468 = vector.broadcast %467 : vector<1x111xf32> to vector<10x111xf32>
    %469 = arith.addf %466, %468 : vector<10x111xf32>
    %cst_505 = arith.constant 0.000000e+00 : f32
    %470 = vector.broadcast %cst_505 : f32 to vector<10x111xf32>
    %471 = arith.maximumf %469, %470 : vector<10x111xf32>
    %c0_506 = arith.constant 0 : index
    %c0_507 = arith.constant 0 : index
    %472 = vector.load %arg15[%c0_506, %c0_507] : memref<1x111xf32, #tpu.memory_space<vmem>>, vector<1x111xf32>
    %473 = vector.broadcast %472 : vector<1x111xf32> to vector<10x111xf32>
    %474 = arith.addf %471, %473 : vector<10x111xf32>
    %c1_508 = arith.constant 1 : index
    %c0_509 = arith.constant 0 : index
    %c0_510 = arith.constant 0 : index
    %475 = vector.load %arg31[%c1_508, %c0_509, %c0_510] : memref<2x16x86xf32, #tpu.memory_space<vmem>>, vector<1x10x86xf32>
    %476 = vector.shape_cast %475 : vector<1x10x86xf32> to vector<10x86xf32>
    %c0_511 = arith.constant 0 : index
    %c0_512 = arith.constant 0 : index
    %c0_513 = arith.constant 0 : index
    %477 = vector.load %arg13[%c0_511, %c0_512, %c0_513] : memref<7x86x111xf32, #tpu.memory_space<vmem>>, vector<1x86x111xf32>
    %478 = vector.shape_cast %477 : vector<1x86x111xf32> to vector<86x111xf32>
    %cst_514 = arith.constant dense<0.000000e+00> : vector<10x111xf32>
    %479 = tpu.matmul %476, %478, %cst_514 {dimension_numbers = #tpu.dot_dimension_numbers<[1], [0], [0], [1], [0, 0, 1, 1], [], []>} : vector<10x86xf32>, vector<86x111xf32>, vector<10x111xf32> -> vector<10x111xf32>
    %c1_515 = arith.constant 1 : index
    %c1_516 = arith.constant 1 : index
    %c0_517 = arith.constant 0 : index
    %480 = vector.load %arg31[%c1_515, %c1_516, %c0_517] : memref<2x16x86xf32, #tpu.memory_space<vmem>>, vector<1x10x86xf32>
    %481 = vector.shape_cast %480 : vector<1x10x86xf32> to vector<10x86xf32>
    %c1_518 = arith.constant 1 : index
    %c0_519 = arith.constant 0 : index
    %c0_520 = arith.constant 0 : index
    %482 = vector.load %arg13[%c1_518, %c0_519, %c0_520] : memref<7x86x111xf32, #tpu.memory_space<vmem>>, vector<1x86x111xf32>
    %483 = vector.shape_cast %482 : vector<1x86x111xf32> to vector<86x111xf32>
    %cst_521 = arith.constant dense<0.000000e+00> : vector<10x111xf32>
    %484 = tpu.matmul %481, %483, %cst_521 {dimension_numbers = #tpu.dot_dimension_numbers<[1], [0], [0], [1], [0, 0, 1, 1], [], []>} : vector<10x86xf32>, vector<86x111xf32>, vector<10x111xf32> -> vector<10x111xf32>
    %485 = arith.addf %479, %484 : vector<10x111xf32>
    %c1_522 = arith.constant 1 : index
    %c2_523 = arith.constant 2 : index
    %c0_524 = arith.constant 0 : index
    %486 = vector.load %arg31[%c1_522, %c2_523, %c0_524] : memref<2x16x86xf32, #tpu.memory_space<vmem>>, vector<1x10x86xf32>
    %487 = vector.shape_cast %486 : vector<1x10x86xf32> to vector<10x86xf32>
    %c2_525 = arith.constant 2 : index
    %c0_526 = arith.constant 0 : index
    %c0_527 = arith.constant 0 : index
    %488 = vector.load %arg13[%c2_525, %c0_526, %c0_527] : memref<7x86x111xf32, #tpu.memory_space<vmem>>, vector<1x86x111xf32>
    %489 = vector.shape_cast %488 : vector<1x86x111xf32> to vector<86x111xf32>
    %cst_528 = arith.constant dense<0.000000e+00> : vector<10x111xf32>
    %490 = tpu.matmul %487, %489, %cst_528 {dimension_numbers = #tpu.dot_dimension_numbers<[1], [0], [0], [1], [0, 0, 1, 1], [], []>} : vector<10x86xf32>, vector<86x111xf32>, vector<10x111xf32> -> vector<10x111xf32>
    %491 = arith.addf %485, %490 : vector<10x111xf32>
    %c1_529 = arith.constant 1 : index
    %c3_530 = arith.constant 3 : index
    %c0_531 = arith.constant 0 : index
    %492 = vector.load %arg31[%c1_529, %c3_530, %c0_531] : memref<2x16x86xf32, #tpu.memory_space<vmem>>, vector<1x10x86xf32>
    %493 = vector.shape_cast %492 : vector<1x10x86xf32> to vector<10x86xf32>
    %c3_532 = arith.constant 3 : index
    %c0_533 = arith.constant 0 : index
    %c0_534 = arith.constant 0 : index
    %494 = vector.load %arg13[%c3_532, %c0_533, %c0_534] : memref<7x86x111xf32, #tpu.memory_space<vmem>>, vector<1x86x111xf32>
    %495 = vector.shape_cast %494 : vector<1x86x111xf32> to vector<86x111xf32>
    %cst_535 = arith.constant dense<0.000000e+00> : vector<10x111xf32>
    %496 = tpu.matmul %493, %495, %cst_535 {dimension_numbers = #tpu.dot_dimension_numbers<[1], [0], [0], [1], [0, 0, 1, 1], [], []>} : vector<10x86xf32>, vector<86x111xf32>, vector<10x111xf32> -> vector<10x111xf32>
    %497 = arith.addf %491, %496 : vector<10x111xf32>
    %c1_536 = arith.constant 1 : index
    %c4_537 = arith.constant 4 : index
    %c0_538 = arith.constant 0 : index
    %498 = vector.load %arg31[%c1_536, %c4_537, %c0_538] : memref<2x16x86xf32, #tpu.memory_space<vmem>>, vector<1x10x86xf32>
    %499 = vector.shape_cast %498 : vector<1x10x86xf32> to vector<10x86xf32>
    %c4_539 = arith.constant 4 : index
    %c0_540 = arith.constant 0 : index
    %c0_541 = arith.constant 0 : index
    %500 = vector.load %arg13[%c4_539, %c0_540, %c0_541] : memref<7x86x111xf32, #tpu.memory_space<vmem>>, vector<1x86x111xf32>
    %501 = vector.shape_cast %500 : vector<1x86x111xf32> to vector<86x111xf32>
    %cst_542 = arith.constant dense<0.000000e+00> : vector<10x111xf32>
    %502 = tpu.matmul %499, %501, %cst_542 {dimension_numbers = #tpu.dot_dimension_numbers<[1], [0], [0], [1], [0, 0, 1, 1], [], []>} : vector<10x86xf32>, vector<86x111xf32>, vector<10x111xf32> -> vector<10x111xf32>
    %503 = arith.addf %497, %502 : vector<10x111xf32>
    %c1_543 = arith.constant 1 : index
    %c5_544 = arith.constant 5 : index
    %c0_545 = arith.constant 0 : index
    %504 = vector.load %arg31[%c1_543, %c5_544, %c0_545] : memref<2x16x86xf32, #tpu.memory_space<vmem>>, vector<1x10x86xf32>
    %505 = vector.shape_cast %504 : vector<1x10x86xf32> to vector<10x86xf32>
    %c5_546 = arith.constant 5 : index
    %c0_547 = arith.constant 0 : index
    %c0_548 = arith.constant 0 : index
    %506 = vector.load %arg13[%c5_546, %c0_547, %c0_548] : memref<7x86x111xf32, #tpu.memory_space<vmem>>, vector<1x86x111xf32>
    %507 = vector.shape_cast %506 : vector<1x86x111xf32> to vector<86x111xf32>
    %cst_549 = arith.constant dense<0.000000e+00> : vector<10x111xf32>
    %508 = tpu.matmul %505, %507, %cst_549 {dimension_numbers = #tpu.dot_dimension_numbers<[1], [0], [0], [1], [0, 0, 1, 1], [], []>} : vector<10x86xf32>, vector<86x111xf32>, vector<10x111xf32> -> vector<10x111xf32>
    %509 = arith.addf %503, %508 : vector<10x111xf32>
    %c1_550 = arith.constant 1 : index
    %c6_551 = arith.constant 6 : index
    %c0_552 = arith.constant 0 : index
    %510 = vector.load %arg31[%c1_550, %c6_551, %c0_552] : memref<2x16x86xf32, #tpu.memory_space<vmem>>, vector<1x10x86xf32>
    %511 = vector.shape_cast %510 : vector<1x10x86xf32> to vector<10x86xf32>
    %c6_553 = arith.constant 6 : index
    %c0_554 = arith.constant 0 : index
    %c0_555 = arith.constant 0 : index
    %512 = vector.load %arg13[%c6_553, %c0_554, %c0_555] : memref<7x86x111xf32, #tpu.memory_space<vmem>>, vector<1x86x111xf32>
    %513 = vector.shape_cast %512 : vector<1x86x111xf32> to vector<86x111xf32>
    %cst_556 = arith.constant dense<0.000000e+00> : vector<10x111xf32>
    %514 = tpu.matmul %511, %513, %cst_556 {dimension_numbers = #tpu.dot_dimension_numbers<[1], [0], [0], [1], [0, 0, 1, 1], [], []>} : vector<10x86xf32>, vector<86x111xf32>, vector<10x111xf32> -> vector<10x111xf32>
    %515 = arith.addf %509, %514 : vector<10x111xf32>
    %c0_557 = arith.constant 0 : index
    %c0_558 = arith.constant 0 : index
    %516 = vector.load %arg14[%c0_557, %c0_558] : memref<1x111xf32, #tpu.memory_space<vmem>>, vector<1x111xf32>
    %517 = vector.broadcast %516 : vector<1x111xf32> to vector<10x111xf32>
    %518 = arith.addf %515, %517 : vector<10x111xf32>
    %cst_559 = arith.constant 0.000000e+00 : f32
    %519 = vector.broadcast %cst_559 : f32 to vector<10x111xf32>
    %520 = arith.maximumf %518, %519 : vector<10x111xf32>
    %c0_560 = arith.constant 0 : index
    %c0_561 = arith.constant 0 : index
    %521 = vector.load %arg15[%c0_560, %c0_561] : memref<1x111xf32, #tpu.memory_space<vmem>>, vector<1x111xf32>
    %522 = vector.broadcast %521 : vector<1x111xf32> to vector<10x111xf32>
    %523 = arith.addf %520, %522 : vector<10x111xf32>
    %c0_562 = arith.constant 0 : index
    %c3_563 = arith.constant 3 : index
    %c0_564 = arith.constant 0 : index
    %524 = vector.load %arg32[%c0_562, %c3_563, %c0_564] : memref<2x16x111xf32, #tpu.memory_space<vmem>>, vector<1x10x111xf32>
    %525 = vector.shape_cast %524 : vector<1x10x111xf32> to vector<10x111xf32>
    %526 = vector.shape_cast %474 : vector<10x111xf32> to vector<1x10x111xf32>
    tpu.vector_store %arg32[%c0_562, %c3_563, %c0_564], %526 {strides = array<i32>} : memref<2x16x111xf32, #tpu.memory_space<vmem>>, vector<1x10x111xf32>,
    %c1_565 = arith.constant 1 : index
    %c3_566 = arith.constant 3 : index
    %c0_567 = arith.constant 0 : index
    %527 = vector.load %arg32[%c1_565, %c3_566, %c0_567] : memref<2x16x111xf32, #tpu.memory_space<vmem>>, vector<1x10x111xf32>
    %528 = vector.shape_cast %527 : vector<1x10x111xf32> to vector<10x111xf32>
    %529 = vector.shape_cast %523 : vector<10x111xf32> to vector<1x10x111xf32>
    tpu.vector_store %arg32[%c1_565, %c3_566, %c0_567], %529 {strides = array<i32>} : memref<2x16x111xf32, #tpu.memory_space<vmem>>, vector<1x10x111xf32>,
    %530 = tpu.iota {dimensions = array<i32: 0>} : vector<7x13xi32>
    %531 = tpu.iota {dimensions = array<i32: 1>} : vector<7x13xi32>
    %c2_i32_568 = arith.constant 2 : i32
    %532 = vector.broadcast %c2_i32_568 : i32 to vector<7x13xi32>
    %533 = arith.muli %530, %532 : vector<7x13xi32>
    %534 = arith.cmpi eq, %531, %533 : vector<7x13xi32>
    %cst_569 = arith.constant 1.000000e+00 : f32
    %cst_570 = arith.constant 0.000000e+00 : f32
    %535 = vector.broadcast %cst_569 : f32 to vector<7x13xf32>
    %536 = vector.broadcast %cst_570 : f32 to vector<7x13xf32>
    %537 = arith.select %534, %535, %536 : vector<7x13xi1>, vector<7x13xf32>
    %c0_571 = arith.constant 0 : index
    %c0_572 = arith.constant 0 : index
    %c0_573 = arith.constant 0 : index
    %538 = vector.load %arg32[%c0_571, %c0_572, %c0_573] : memref<2x16x111xf32, #tpu.memory_space<vmem>>, vector<1x13x111xf32>
    %539 = vector.shape_cast %538 : vector<1x13x111xf32> to vector<13x111xf32>
    %c0_574 = arith.constant 0 : index
    %c0_575 = arith.constant 0 : index
    %c0_576 = arith.constant 0 : index
    %540 = vector.load %arg16[%c0_574, %c0_575, %c0_576] : memref<4x111x112xf32, #tpu.memory_space<vmem>>, vector<1x111x112xf32>
    %541 = vector.shape_cast %540 : vector<1x111x112xf32> to vector<111x112xf32>
    %cst_577 = arith.constant dense<0.000000e+00> : vector<13x112xf32>
    %542 = tpu.matmul %539, %541, %cst_577 {dimension_numbers = #tpu.dot_dimension_numbers<[1], [0], [0], [1], [0, 0, 1, 1], [], []>} : vector<13x111xf32>, vector<111x112xf32>, vector<13x112xf32> -> vector<13x112xf32>
    %c0_578 = arith.constant 0 : index
    %c1_579 = arith.constant 1 : index
    %c0_580 = arith.constant 0 : index
    %543 = vector.load %arg32[%c0_578, %c1_579, %c0_580] : memref<2x16x111xf32, #tpu.memory_space<vmem>>, vector<1x13x111xf32>
    %544 = vector.shape_cast %543 : vector<1x13x111xf32> to vector<13x111xf32>
    %c1_581 = arith.constant 1 : index
    %c0_582 = arith.constant 0 : index
    %c0_583 = arith.constant 0 : index
    %545 = vector.load %arg16[%c1_581, %c0_582, %c0_583] : memref<4x111x112xf32, #tpu.memory_space<vmem>>, vector<1x111x112xf32>
    %546 = vector.shape_cast %545 : vector<1x111x112xf32> to vector<111x112xf32>
    %cst_584 = arith.constant dense<0.000000e+00> : vector<13x112xf32>
    %547 = tpu.matmul %544, %546, %cst_584 {dimension_numbers = #tpu.dot_dimension_numbers<[1], [0], [0], [1], [0, 0, 1, 1], [], []>} : vector<13x111xf32>, vector<111x112xf32>, vector<13x112xf32> -> vector<13x112xf32>
    %548 = arith.addf %542, %547 : vector<13x112xf32>
    %c0_585 = arith.constant 0 : index
    %c2_586 = arith.constant 2 : index
    %c0_587 = arith.constant 0 : index
    %549 = vector.load %arg32[%c0_585, %c2_586, %c0_587] : memref<2x16x111xf32, #tpu.memory_space<vmem>>, vector<1x13x111xf32>
    %550 = vector.shape_cast %549 : vector<1x13x111xf32> to vector<13x111xf32>
    %c2_588 = arith.constant 2 : index
    %c0_589 = arith.constant 0 : index
    %c0_590 = arith.constant 0 : index
    %551 = vector.load %arg16[%c2_588, %c0_589, %c0_590] : memref<4x111x112xf32, #tpu.memory_space<vmem>>, vector<1x111x112xf32>
    %552 = vector.shape_cast %551 : vector<1x111x112xf32> to vector<111x112xf32>
    %cst_591 = arith.constant dense<0.000000e+00> : vector<13x112xf32>
    %553 = tpu.matmul %550, %552, %cst_591 {dimension_numbers = #tpu.dot_dimension_numbers<[1], [0], [0], [1], [0, 0, 1, 1], [], []>} : vector<13x111xf32>, vector<111x112xf32>, vector<13x112xf32> -> vector<13x112xf32>
    %554 = arith.addf %548, %553 : vector<13x112xf32>
    %c0_592 = arith.constant 0 : index
    %c3_593 = arith.constant 3 : index
    %c0_594 = arith.constant 0 : index
    %555 = vector.load %arg32[%c0_592, %c3_593, %c0_594] : memref<2x16x111xf32, #tpu.memory_space<vmem>>, vector<1x13x111xf32>
    %556 = vector.shape_cast %555 : vector<1x13x111xf32> to vector<13x111xf32>
    %c3_595 = arith.constant 3 : index
    %c0_596 = arith.constant 0 : index
    %c0_597 = arith.constant 0 : index
    %557 = vector.load %arg16[%c3_595, %c0_596, %c0_597] : memref<4x111x112xf32, #tpu.memory_space<vmem>>, vector<1x111x112xf32>
    %558 = vector.shape_cast %557 : vector<1x111x112xf32> to vector<111x112xf32>
    %cst_598 = arith.constant dense<0.000000e+00> : vector<13x112xf32>
    %559 = tpu.matmul %556, %558, %cst_598 {dimension_numbers = #tpu.dot_dimension_numbers<[1], [0], [0], [1], [0, 0, 1, 1], [], []>} : vector<13x111xf32>, vector<111x112xf32>, vector<13x112xf32> -> vector<13x112xf32>
    %560 = arith.addf %554, %559 : vector<13x112xf32>
    %cst_599 = arith.constant dense<0.000000e+00> : vector<7x112xf32>
    %561 = tpu.matmul %537, %560, %cst_599 {dimension_numbers = #tpu.dot_dimension_numbers<[1], [0], [0], [1], [0, 0, 1, 1], [], []>} : vector<7x13xf32>, vector<13x112xf32>, vector<7x112xf32> -> vector<7x112xf32>
    %c0_600 = arith.constant 0 : index
    %c0_601 = arith.constant 0 : index
    %562 = vector.load %arg17[%c0_600, %c0_601] : memref<1x112xf32, #tpu.memory_space<vmem>>, vector<1x112xf32>
    %563 = vector.broadcast %562 : vector<1x112xf32> to vector<7x112xf32>
    %564 = arith.addf %561, %563 : vector<7x112xf32>
    %cst_602 = arith.constant 0.000000e+00 : f32
    %565 = vector.broadcast %cst_602 : f32 to vector<7x112xf32>
    %566 = arith.maximumf %564, %565 : vector<7x112xf32>
    %c0_603 = arith.constant 0 : index
    %c0_604 = arith.constant 0 : index
    %567 = vector.load %arg18[%c0_603, %c0_604] : memref<1x112xf32, #tpu.memory_space<vmem>>, vector<1x112xf32>
    %568 = vector.broadcast %567 : vector<1x112xf32> to vector<7x112xf32>
    %569 = arith.addf %566, %568 : vector<7x112xf32>
    %c1_605 = arith.constant 1 : index
    %c0_606 = arith.constant 0 : index
    %c0_607 = arith.constant 0 : index
    %570 = vector.load %arg32[%c1_605, %c0_606, %c0_607] : memref<2x16x111xf32, #tpu.memory_space<vmem>>, vector<1x13x111xf32>
    %571 = vector.shape_cast %570 : vector<1x13x111xf32> to vector<13x111xf32>
    %c0_608 = arith.constant 0 : index
    %c0_609 = arith.constant 0 : index
    %c0_610 = arith.constant 0 : index
    %572 = vector.load %arg16[%c0_608, %c0_609, %c0_610] : memref<4x111x112xf32, #tpu.memory_space<vmem>>, vector<1x111x112xf32>
    %573 = vector.shape_cast %572 : vector<1x111x112xf32> to vector<111x112xf32>
    %cst_611 = arith.constant dense<0.000000e+00> : vector<13x112xf32>
    %574 = tpu.matmul %571, %573, %cst_611 {dimension_numbers = #tpu.dot_dimension_numbers<[1], [0], [0], [1], [0, 0, 1, 1], [], []>} : vector<13x111xf32>, vector<111x112xf32>, vector<13x112xf32> -> vector<13x112xf32>
    %c1_612 = arith.constant 1 : index
    %c1_613 = arith.constant 1 : index
    %c0_614 = arith.constant 0 : index
    %575 = vector.load %arg32[%c1_612, %c1_613, %c0_614] : memref<2x16x111xf32, #tpu.memory_space<vmem>>, vector<1x13x111xf32>
    %576 = vector.shape_cast %575 : vector<1x13x111xf32> to vector<13x111xf32>
    %c1_615 = arith.constant 1 : index
    %c0_616 = arith.constant 0 : index
    %c0_617 = arith.constant 0 : index
    %577 = vector.load %arg16[%c1_615, %c0_616, %c0_617] : memref<4x111x112xf32, #tpu.memory_space<vmem>>, vector<1x111x112xf32>
    %578 = vector.shape_cast %577 : vector<1x111x112xf32> to vector<111x112xf32>
    %cst_618 = arith.constant dense<0.000000e+00> : vector<13x112xf32>
    %579 = tpu.matmul %576, %578, %cst_618 {dimension_numbers = #tpu.dot_dimension_numbers<[1], [0], [0], [1], [0, 0, 1, 1], [], []>} : vector<13x111xf32>, vector<111x112xf32>, vector<13x112xf32> -> vector<13x112xf32>
    %580 = arith.addf %574, %579 : vector<13x112xf32>
    %c1_619 = arith.constant 1 : index
    %c2_620 = arith.constant 2 : index
    %c0_621 = arith.constant 0 : index
    %581 = vector.load %arg32[%c1_619, %c2_620, %c0_621] : memref<2x16x111xf32, #tpu.memory_space<vmem>>, vector<1x13x111xf32>
    %582 = vector.shape_cast %581 : vector<1x13x111xf32> to vector<13x111xf32>
    %c2_622 = arith.constant 2 : index
    %c0_623 = arith.constant 0 : index
    %c0_624 = arith.constant 0 : index
    %583 = vector.load %arg16[%c2_622, %c0_623, %c0_624] : memref<4x111x112xf32, #tpu.memory_space<vmem>>, vector<1x111x112xf32>
    %584 = vector.shape_cast %583 : vector<1x111x112xf32> to vector<111x112xf32>
    %cst_625 = arith.constant dense<0.000000e+00> : vector<13x112xf32>
    %585 = tpu.matmul %582, %584, %cst_625 {dimension_numbers = #tpu.dot_dimension_numbers<[1], [0], [0], [1], [0, 0, 1, 1], [], []>} : vector<13x111xf32>, vector<111x112xf32>, vector<13x112xf32> -> vector<13x112xf32>
    %586 = arith.addf %580, %585 : vector<13x112xf32>
    %c1_626 = arith.constant 1 : index
    %c3_627 = arith.constant 3 : index
    %c0_628 = arith.constant 0 : index
    %587 = vector.load %arg32[%c1_626, %c3_627, %c0_628] : memref<2x16x111xf32, #tpu.memory_space<vmem>>, vector<1x13x111xf32>
    %588 = vector.shape_cast %587 : vector<1x13x111xf32> to vector<13x111xf32>
    %c3_629 = arith.constant 3 : index
    %c0_630 = arith.constant 0 : index
    %c0_631 = arith.constant 0 : index
    %589 = vector.load %arg16[%c3_629, %c0_630, %c0_631] : memref<4x111x112xf32, #tpu.memory_space<vmem>>, vector<1x111x112xf32>
    %590 = vector.shape_cast %589 : vector<1x111x112xf32> to vector<111x112xf32>
    %cst_632 = arith.constant dense<0.000000e+00> : vector<13x112xf32>
    %591 = tpu.matmul %588, %590, %cst_632 {dimension_numbers = #tpu.dot_dimension_numbers<[1], [0], [0], [1], [0, 0, 1, 1], [], []>} : vector<13x111xf32>, vector<111x112xf32>, vector<13x112xf32> -> vector<13x112xf32>
    %592 = arith.addf %586, %591 : vector<13x112xf32>
    %cst_633 = arith.constant dense<0.000000e+00> : vector<7x112xf32>
    %593 = tpu.matmul %537, %592, %cst_633 {dimension_numbers = #tpu.dot_dimension_numbers<[1], [0], [0], [1], [0, 0, 1, 1], [], []>} : vector<7x13xf32>, vector<13x112xf32>, vector<7x112xf32> -> vector<7x112xf32>
    %c0_634 = arith.constant 0 : index
    %c0_635 = arith.constant 0 : index
    %594 = vector.load %arg17[%c0_634, %c0_635] : memref<1x112xf32, #tpu.memory_space<vmem>>, vector<1x112xf32>
    %595 = vector.broadcast %594 : vector<1x112xf32> to vector<7x112xf32>
    %596 = arith.addf %593, %595 : vector<7x112xf32>
    %cst_636 = arith.constant 0.000000e+00 : f32
    %597 = vector.broadcast %cst_636 : f32 to vector<7x112xf32>
    %598 = arith.maximumf %596, %597 : vector<7x112xf32>
    %c0_637 = arith.constant 0 : index
    %c0_638 = arith.constant 0 : index
    %599 = vector.load %arg18[%c0_637, %c0_638] : memref<1x112xf32, #tpu.memory_space<vmem>>, vector<1x112xf32>
    %600 = vector.broadcast %599 : vector<1x112xf32> to vector<7x112xf32>
    %601 = arith.addf %598, %600 : vector<7x112xf32>
    %c0_639 = arith.constant 0 : index
    %c1_640 = arith.constant 1 : index
    %c0_641 = arith.constant 0 : index
    %602 = vector.load %arg33[%c0_639, %c1_640, %c0_641] : memref<2x9x112xf32, #tpu.memory_space<vmem>>, vector<1x7x112xf32>
    %603 = vector.shape_cast %602 : vector<1x7x112xf32> to vector<7x112xf32>
    %604 = vector.shape_cast %569 : vector<7x112xf32> to vector<1x7x112xf32>
    tpu.vector_store %arg33[%c0_639, %c1_640, %c0_641], %604 {strides = array<i32>} : memref<2x9x112xf32, #tpu.memory_space<vmem>>, vector<1x7x112xf32>,
    %c1_642 = arith.constant 1 : index
    %c1_643 = arith.constant 1 : index
    %c0_644 = arith.constant 0 : index
    %605 = vector.load %arg33[%c1_642, %c1_643, %c0_644] : memref<2x9x112xf32, #tpu.memory_space<vmem>>, vector<1x7x112xf32>
    %606 = vector.shape_cast %605 : vector<1x7x112xf32> to vector<7x112xf32>
    %607 = vector.shape_cast %601 : vector<7x112xf32> to vector<1x7x112xf32>
    tpu.vector_store %arg33[%c1_642, %c1_643, %c0_644], %607 {strides = array<i32>} : memref<2x9x112xf32, #tpu.memory_space<vmem>>, vector<1x7x112xf32>,
    %c0_645 = arith.constant 0 : index
    %c0_646 = arith.constant 0 : index
    %c0_647 = arith.constant 0 : index
    %608 = vector.load %arg33[%c0_645, %c0_646, %c0_647] : memref<2x9x112xf32, #tpu.memory_space<vmem>>, vector<1x3x112xf32>
    %609 = vector.shape_cast %608 : vector<1x3x112xf32> to vector<3x112xf32>
    %c0_648 = arith.constant 0 : index
    %c0_649 = arith.constant 0 : index
    %c0_650 = arith.constant 0 : index
    %610 = vector.load %arg19[%c0_648, %c0_649, %c0_650] : memref<7x112x18xf32, #tpu.memory_space<vmem>>, vector<1x112x18xf32>
    %611 = vector.shape_cast %610 : vector<1x112x18xf32> to vector<112x18xf32>
    %cst_651 = arith.constant dense<0.000000e+00> : vector<3x18xf32>
    %612 = tpu.matmul %609, %611, %cst_651 {dimension_numbers = #tpu.dot_dimension_numbers<[1], [0], [0], [1], [0, 0, 1, 1], [], []>} : vector<3x112xf32>, vector<112x18xf32>, vector<3x18xf32> -> vector<3x18xf32>
    %c0_652 = arith.constant 0 : index
    %c1_653 = arith.constant 1 : index
    %c0_654 = arith.constant 0 : index
    %613 = vector.load %arg33[%c0_652, %c1_653, %c0_654] : memref<2x9x112xf32, #tpu.memory_space<vmem>>, vector<1x3x112xf32>
    %614 = vector.shape_cast %613 : vector<1x3x112xf32> to vector<3x112xf32>
    %c1_655 = arith.constant 1 : index
    %c0_656 = arith.constant 0 : index
    %c0_657 = arith.constant 0 : index
    %615 = vector.load %arg19[%c1_655, %c0_656, %c0_657] : memref<7x112x18xf32, #tpu.memory_space<vmem>>, vector<1x112x18xf32>
    %616 = vector.shape_cast %615 : vector<1x112x18xf32> to vector<112x18xf32>
    %cst_658 = arith.constant dense<0.000000e+00> : vector<3x18xf32>
    %617 = tpu.matmul %614, %616, %cst_658 {dimension_numbers = #tpu.dot_dimension_numbers<[1], [0], [0], [1], [0, 0, 1, 1], [], []>} : vector<3x112xf32>, vector<112x18xf32>, vector<3x18xf32> -> vector<3x18xf32>
    %618 = arith.addf %612, %617 : vector<3x18xf32>
    %c0_659 = arith.constant 0 : index
    %c2_660 = arith.constant 2 : index
    %c0_661 = arith.constant 0 : index
    %619 = vector.load %arg33[%c0_659, %c2_660, %c0_661] : memref<2x9x112xf32, #tpu.memory_space<vmem>>, vector<1x3x112xf32>
    %620 = vector.shape_cast %619 : vector<1x3x112xf32> to vector<3x112xf32>
    %c2_662 = arith.constant 2 : index
    %c0_663 = arith.constant 0 : index
    %c0_664 = arith.constant 0 : index
    %621 = vector.load %arg19[%c2_662, %c0_663, %c0_664] : memref<7x112x18xf32, #tpu.memory_space<vmem>>, vector<1x112x18xf32>
    %622 = vector.shape_cast %621 : vector<1x112x18xf32> to vector<112x18xf32>
    %cst_665 = arith.constant dense<0.000000e+00> : vector<3x18xf32>
    %623 = tpu.matmul %620, %622, %cst_665 {dimension_numbers = #tpu.dot_dimension_numbers<[1], [0], [0], [1], [0, 0, 1, 1], [], []>} : vector<3x112xf32>, vector<112x18xf32>, vector<3x18xf32> -> vector<3x18xf32>
    %624 = arith.addf %618, %623 : vector<3x18xf32>
    %c0_666 = arith.constant 0 : index
    %c3_667 = arith.constant 3 : index
    %c0_668 = arith.constant 0 : index
    %625 = vector.load %arg33[%c0_666, %c3_667, %c0_668] : memref<2x9x112xf32, #tpu.memory_space<vmem>>, vector<1x3x112xf32>
    %626 = vector.shape_cast %625 : vector<1x3x112xf32> to vector<3x112xf32>
    %c3_669 = arith.constant 3 : index
    %c0_670 = arith.constant 0 : index
    %c0_671 = arith.constant 0 : index
    %627 = vector.load %arg19[%c3_669, %c0_670, %c0_671] : memref<7x112x18xf32, #tpu.memory_space<vmem>>, vector<1x112x18xf32>
    %628 = vector.shape_cast %627 : vector<1x112x18xf32> to vector<112x18xf32>
    %cst_672 = arith.constant dense<0.000000e+00> : vector<3x18xf32>
    %629 = tpu.matmul %626, %628, %cst_672 {dimension_numbers = #tpu.dot_dimension_numbers<[1], [0], [0], [1], [0, 0, 1, 1], [], []>} : vector<3x112xf32>, vector<112x18xf32>, vector<3x18xf32> -> vector<3x18xf32>
    %630 = arith.addf %624, %629 : vector<3x18xf32>
    %c0_673 = arith.constant 0 : index
    %c4_674 = arith.constant 4 : index
    %c0_675 = arith.constant 0 : index
    %631 = vector.load %arg33[%c0_673, %c4_674, %c0_675] : memref<2x9x112xf32, #tpu.memory_space<vmem>>, vector<1x3x112xf32>
    %632 = vector.shape_cast %631 : vector<1x3x112xf32> to vector<3x112xf32>
    %c4_676 = arith.constant 4 : index
    %c0_677 = arith.constant 0 : index
    %c0_678 = arith.constant 0 : index
    %633 = vector.load %arg19[%c4_676, %c0_677, %c0_678] : memref<7x112x18xf32, #tpu.memory_space<vmem>>, vector<1x112x18xf32>
    %634 = vector.shape_cast %633 : vector<1x112x18xf32> to vector<112x18xf32>
    %cst_679 = arith.constant dense<0.000000e+00> : vector<3x18xf32>
    %635 = tpu.matmul %632, %634, %cst_679 {dimension_numbers = #tpu.dot_dimension_numbers<[1], [0], [0], [1], [0, 0, 1, 1], [], []>} : vector<3x112xf32>, vector<112x18xf32>, vector<3x18xf32> -> vector<3x18xf32>
    %636 = arith.addf %630, %635 : vector<3x18xf32>
    %c0_680 = arith.constant 0 : index
    %c5_681 = arith.constant 5 : index
    %c0_682 = arith.constant 0 : index
    %637 = vector.load %arg33[%c0_680, %c5_681, %c0_682] : memref<2x9x112xf32, #tpu.memory_space<vmem>>, vector<1x3x112xf32>
    %638 = vector.shape_cast %637 : vector<1x3x112xf32> to vector<3x112xf32>
    %c5_683 = arith.constant 5 : index
    %c0_684 = arith.constant 0 : index
    %c0_685 = arith.constant 0 : index
    %639 = vector.load %arg19[%c5_683, %c0_684, %c0_685] : memref<7x112x18xf32, #tpu.memory_space<vmem>>, vector<1x112x18xf32>
    %640 = vector.shape_cast %639 : vector<1x112x18xf32> to vector<112x18xf32>
    %cst_686 = arith.constant dense<0.000000e+00> : vector<3x18xf32>
    %641 = tpu.matmul %638, %640, %cst_686 {dimension_numbers = #tpu.dot_dimension_numbers<[1], [0], [0], [1], [0, 0, 1, 1], [], []>} : vector<3x112xf32>, vector<112x18xf32>, vector<3x18xf32> -> vector<3x18xf32>
    %642 = arith.addf %636, %641 : vector<3x18xf32>
    %c0_687 = arith.constant 0 : index
    %c6_688 = arith.constant 6 : index
    %c0_689 = arith.constant 0 : index
    %643 = vector.load %arg33[%c0_687, %c6_688, %c0_689] : memref<2x9x112xf32, #tpu.memory_space<vmem>>, vector<1x3x112xf32>
    %644 = vector.shape_cast %643 : vector<1x3x112xf32> to vector<3x112xf32>
    %c6_690 = arith.constant 6 : index
    %c0_691 = arith.constant 0 : index
    %c0_692 = arith.constant 0 : index
    %645 = vector.load %arg19[%c6_690, %c0_691, %c0_692] : memref<7x112x18xf32, #tpu.memory_space<vmem>>, vector<1x112x18xf32>
    %646 = vector.shape_cast %645 : vector<1x112x18xf32> to vector<112x18xf32>
    %cst_693 = arith.constant dense<0.000000e+00> : vector<3x18xf32>
    %647 = tpu.matmul %644, %646, %cst_693 {dimension_numbers = #tpu.dot_dimension_numbers<[1], [0], [0], [1], [0, 0, 1, 1], [], []>} : vector<3x112xf32>, vector<112x18xf32>, vector<3x18xf32> -> vector<3x18xf32>
    %648 = arith.addf %642, %647 : vector<3x18xf32>
    %c0_694 = arith.constant 0 : index
    %c0_695 = arith.constant 0 : index
    %649 = vector.load %arg20[%c0_694, %c0_695] : memref<1x18xf32, #tpu.memory_space<vmem>>, vector<1x18xf32>
    %650 = vector.broadcast %649 : vector<1x18xf32> to vector<3x18xf32>
    %651 = arith.addf %648, %650 : vector<3x18xf32>
    %cst_696 = arith.constant 0.000000e+00 : f32
    %652 = vector.broadcast %cst_696 : f32 to vector<3x18xf32>
    %653 = arith.maximumf %651, %652 : vector<3x18xf32>
    %c0_697 = arith.constant 0 : index
    %c0_698 = arith.constant 0 : index
    %654 = vector.load %arg21[%c0_697, %c0_698] : memref<1x18xf32, #tpu.memory_space<vmem>>, vector<1x18xf32>
    %655 = vector.broadcast %654 : vector<1x18xf32> to vector<3x18xf32>
    %656 = arith.addf %653, %655 : vector<3x18xf32>
    %c1_699 = arith.constant 1 : index
    %c0_700 = arith.constant 0 : index
    %c0_701 = arith.constant 0 : index
    %657 = vector.load %arg33[%c1_699, %c0_700, %c0_701] : memref<2x9x112xf32, #tpu.memory_space<vmem>>, vector<1x3x112xf32>
    %658 = vector.shape_cast %657 : vector<1x3x112xf32> to vector<3x112xf32>
    %c0_702 = arith.constant 0 : index
    %c0_703 = arith.constant 0 : index
    %c0_704 = arith.constant 0 : index
    %659 = vector.load %arg19[%c0_702, %c0_703, %c0_704] : memref<7x112x18xf32, #tpu.memory_space<vmem>>, vector<1x112x18xf32>
    %660 = vector.shape_cast %659 : vector<1x112x18xf32> to vector<112x18xf32>
    %cst_705 = arith.constant dense<0.000000e+00> : vector<3x18xf32>
    %661 = tpu.matmul %658, %660, %cst_705 {dimension_numbers = #tpu.dot_dimension_numbers<[1], [0], [0], [1], [0, 0, 1, 1], [], []>} : vector<3x112xf32>, vector<112x18xf32>, vector<3x18xf32> -> vector<3x18xf32>
    %c1_706 = arith.constant 1 : index
    %c1_707 = arith.constant 1 : index
    %c0_708 = arith.constant 0 : index
    %662 = vector.load %arg33[%c1_706, %c1_707, %c0_708] : memref<2x9x112xf32, #tpu.memory_space<vmem>>, vector<1x3x112xf32>
    %663 = vector.shape_cast %662 : vector<1x3x112xf32> to vector<3x112xf32>
    %c1_709 = arith.constant 1 : index
    %c0_710 = arith.constant 0 : index
    %c0_711 = arith.constant 0 : index
    %664 = vector.load %arg19[%c1_709, %c0_710, %c0_711] : memref<7x112x18xf32, #tpu.memory_space<vmem>>, vector<1x112x18xf32>
    %665 = vector.shape_cast %664 : vector<1x112x18xf32> to vector<112x18xf32>
    %cst_712 = arith.constant dense<0.000000e+00> : vector<3x18xf32>
    %666 = tpu.matmul %663, %665, %cst_712 {dimension_numbers = #tpu.dot_dimension_numbers<[1], [0], [0], [1], [0, 0, 1, 1], [], []>} : vector<3x112xf32>, vector<112x18xf32>, vector<3x18xf32> -> vector<3x18xf32>
    %667 = arith.addf %661, %666 : vector<3x18xf32>
    %c1_713 = arith.constant 1 : index
    %c2_714 = arith.constant 2 : index
    %c0_715 = arith.constant 0 : index
    %668 = vector.load %arg33[%c1_713, %c2_714, %c0_715] : memref<2x9x112xf32, #tpu.memory_space<vmem>>, vector<1x3x112xf32>
    %669 = vector.shape_cast %668 : vector<1x3x112xf32> to vector<3x112xf32>
    %c2_716 = arith.constant 2 : index
    %c0_717 = arith.constant 0 : index
    %c0_718 = arith.constant 0 : index
    %670 = vector.load %arg19[%c2_716, %c0_717, %c0_718] : memref<7x112x18xf32, #tpu.memory_space<vmem>>, vector<1x112x18xf32>
    %671 = vector.shape_cast %670 : vector<1x112x18xf32> to vector<112x18xf32>
    %cst_719 = arith.constant dense<0.000000e+00> : vector<3x18xf32>
    %672 = tpu.matmul %669, %671, %cst_719 {dimension_numbers = #tpu.dot_dimension_numbers<[1], [0], [0], [1], [0, 0, 1, 1], [], []>} : vector<3x112xf32>, vector<112x18xf32>, vector<3x18xf32> -> vector<3x18xf32>
    %673 = arith.addf %667, %672 : vector<3x18xf32>
    %c1_720 = arith.constant 1 : index
    %c3_721 = arith.constant 3 : index
    %c0_722 = arith.constant 0 : index
    %674 = vector.load %arg33[%c1_720, %c3_721, %c0_722] : memref<2x9x112xf32, #tpu.memory_space<vmem>>, vector<1x3x112xf32>
    %675 = vector.shape_cast %674 : vector<1x3x112xf32> to vector<3x112xf32>
    %c3_723 = arith.constant 3 : index
    %c0_724 = arith.constant 0 : index
    %c0_725 = arith.constant 0 : index
    %676 = vector.load %arg19[%c3_723, %c0_724, %c0_725] : memref<7x112x18xf32, #tpu.memory_space<vmem>>, vector<1x112x18xf32>
    %677 = vector.shape_cast %676 : vector<1x112x18xf32> to vector<112x18xf32>
    %cst_726 = arith.constant dense<0.000000e+00> : vector<3x18xf32>
    %678 = tpu.matmul %675, %677, %cst_726 {dimension_numbers = #tpu.dot_dimension_numbers<[1], [0], [0], [1], [0, 0, 1, 1], [], []>} : vector<3x112xf32>, vector<112x18xf32>, vector<3x18xf32> -> vector<3x18xf32>
    %679 = arith.addf %673, %678 : vector<3x18xf32>
    %c1_727 = arith.constant 1 : index
    %c4_728 = arith.constant 4 : index
    %c0_729 = arith.constant 0 : index
    %680 = vector.load %arg33[%c1_727, %c4_728, %c0_729] : memref<2x9x112xf32, #tpu.memory_space<vmem>>, vector<1x3x112xf32>
    %681 = vector.shape_cast %680 : vector<1x3x112xf32> to vector<3x112xf32>
    %c4_730 = arith.constant 4 : index
    %c0_731 = arith.constant 0 : index
    %c0_732 = arith.constant 0 : index
    %682 = vector.load %arg19[%c4_730, %c0_731, %c0_732] : memref<7x112x18xf32, #tpu.memory_space<vmem>>, vector<1x112x18xf32>
    %683 = vector.shape_cast %682 : vector<1x112x18xf32> to vector<112x18xf32>
    %cst_733 = arith.constant dense<0.000000e+00> : vector<3x18xf32>
    %684 = tpu.matmul %681, %683, %cst_733 {dimension_numbers = #tpu.dot_dimension_numbers<[1], [0], [0], [1], [0, 0, 1, 1], [], []>} : vector<3x112xf32>, vector<112x18xf32>, vector<3x18xf32> -> vector<3x18xf32>
    %685 = arith.addf %679, %684 : vector<3x18xf32>
    %c1_734 = arith.constant 1 : index
    %c5_735 = arith.constant 5 : index
    %c0_736 = arith.constant 0 : index
    %686 = vector.load %arg33[%c1_734, %c5_735, %c0_736] : memref<2x9x112xf32, #tpu.memory_space<vmem>>, vector<1x3x112xf32>
    %687 = vector.shape_cast %686 : vector<1x3x112xf32> to vector<3x112xf32>
    %c5_737 = arith.constant 5 : index
    %c0_738 = arith.constant 0 : index
    %c0_739 = arith.constant 0 : index
    %688 = vector.load %arg19[%c5_737, %c0_738, %c0_739] : memref<7x112x18xf32, #tpu.memory_space<vmem>>, vector<1x112x18xf32>
    %689 = vector.shape_cast %688 : vector<1x112x18xf32> to vector<112x18xf32>
    %cst_740 = arith.constant dense<0.000000e+00> : vector<3x18xf32>
    %690 = tpu.matmul %687, %689, %cst_740 {dimension_numbers = #tpu.dot_dimension_numbers<[1], [0], [0], [1], [0, 0, 1, 1], [], []>} : vector<3x112xf32>, vector<112x18xf32>, vector<3x18xf32> -> vector<3x18xf32>
    %691 = arith.addf %685, %690 : vector<3x18xf32>
    %c1_741 = arith.constant 1 : index
    %c6_742 = arith.constant 6 : index
    %c0_743 = arith.constant 0 : index
    %692 = vector.load %arg33[%c1_741, %c6_742, %c0_743] : memref<2x9x112xf32, #tpu.memory_space<vmem>>, vector<1x3x112xf32>
    %693 = vector.shape_cast %692 : vector<1x3x112xf32> to vector<3x112xf32>
    %c6_744 = arith.constant 6 : index
    %c0_745 = arith.constant 0 : index
    %c0_746 = arith.constant 0 : index
    %694 = vector.load %arg19[%c6_744, %c0_745, %c0_746] : memref<7x112x18xf32, #tpu.memory_space<vmem>>, vector<1x112x18xf32>
    %695 = vector.shape_cast %694 : vector<1x112x18xf32> to vector<112x18xf32>
    %cst_747 = arith.constant dense<0.000000e+00> : vector<3x18xf32>
    %696 = tpu.matmul %693, %695, %cst_747 {dimension_numbers = #tpu.dot_dimension_numbers<[1], [0], [0], [1], [0, 0, 1, 1], [], []>} : vector<3x112xf32>, vector<112x18xf32>, vector<3x18xf32> -> vector<3x18xf32>
    %697 = arith.addf %691, %696 : vector<3x18xf32>
    %c0_748 = arith.constant 0 : index
    %c0_749 = arith.constant 0 : index
    %698 = vector.load %arg20[%c0_748, %c0_749] : memref<1x18xf32, #tpu.memory_space<vmem>>, vector<1x18xf32>
    %699 = vector.broadcast %698 : vector<1x18xf32> to vector<3x18xf32>
    %700 = arith.addf %697, %699 : vector<3x18xf32>
    %cst_750 = arith.constant 0.000000e+00 : f32
    %701 = vector.broadcast %cst_750 : f32 to vector<3x18xf32>
    %702 = arith.maximumf %700, %701 : vector<3x18xf32>
    %c0_751 = arith.constant 0 : index
    %c0_752 = arith.constant 0 : index
    %703 = vector.load %arg21[%c0_751, %c0_752] : memref<1x18xf32, #tpu.memory_space<vmem>>, vector<1x18xf32>
    %704 = vector.broadcast %703 : vector<1x18xf32> to vector<3x18xf32>
    %705 = arith.addf %702, %704 : vector<3x18xf32>
    %c0_753 = arith.constant 0 : index
    %c0_754 = arith.constant 0 : index
    %706 = vector.load %arg23[%c0_753, %c0_754] : memref<1x216xf32, #tpu.memory_space<vmem>>, vector<1x216xf32>
    %707 = vector.extract_strided_slice %656 {offsets = [0, 0], sizes = [1, 18], strides = [1, 1]} : vector<3x18xf32> to vector<1x18xf32>
    %c0_755 = arith.constant 0 : index
    %c0_756 = arith.constant 0 : index
    %c0_757 = arith.constant 0 : index
    %708 = vector.load %arg22[%c0_755, %c0_756, %c0_757] : memref<3x18x216xf32, #tpu.memory_space<vmem>>, vector<1x18x216xf32>
    %709 = vector.shape_cast %708 : vector<1x18x216xf32> to vector<18x216xf32>
    %cst_758 = arith.constant dense<0.000000e+00> : vector<1x216xf32>
    %710 = tpu.matmul %707, %709, %cst_758 {dimension_numbers = #tpu.dot_dimension_numbers<[1], [0], [0], [1], [0, 0, 1, 1], [], []>} : vector<1x18xf32>, vector<18x216xf32>, vector<1x216xf32> -> vector<1x216xf32>
    %711 = arith.addf %706, %710 : vector<1x216xf32>
    %712 = vector.extract_strided_slice %656 {offsets = [1, 0], sizes = [1, 18], strides = [1, 1]} : vector<3x18xf32> to vector<1x18xf32>
    %c1_759 = arith.constant 1 : index
    %c0_760 = arith.constant 0 : index
    %c0_761 = arith.constant 0 : index
    %713 = vector.load %arg22[%c1_759, %c0_760, %c0_761] : memref<3x18x216xf32, #tpu.memory_space<vmem>>, vector<1x18x216xf32>
    %714 = vector.shape_cast %713 : vector<1x18x216xf32> to vector<18x216xf32>
    %cst_762 = arith.constant dense<0.000000e+00> : vector<1x216xf32>
    %715 = tpu.matmul %712, %714, %cst_762 {dimension_numbers = #tpu.dot_dimension_numbers<[1], [0], [0], [1], [0, 0, 1, 1], [], []>} : vector<1x18xf32>, vector<18x216xf32>, vector<1x216xf32> -> vector<1x216xf32>
    %716 = arith.addf %711, %715 : vector<1x216xf32>
    %717 = vector.extract_strided_slice %656 {offsets = [2, 0], sizes = [1, 18], strides = [1, 1]} : vector<3x18xf32> to vector<1x18xf32>
    %c2_763 = arith.constant 2 : index
    %c0_764 = arith.constant 0 : index
    %c0_765 = arith.constant 0 : index
    %718 = vector.load %arg22[%c2_763, %c0_764, %c0_765] : memref<3x18x216xf32, #tpu.memory_space<vmem>>, vector<1x18x216xf32>
    %719 = vector.shape_cast %718 : vector<1x18x216xf32> to vector<18x216xf32>
    %cst_766 = arith.constant dense<0.000000e+00> : vector<1x216xf32>
    %720 = tpu.matmul %717, %719, %cst_766 {dimension_numbers = #tpu.dot_dimension_numbers<[1], [0], [0], [1], [0, 0, 1, 1], [], []>} : vector<1x18xf32>, vector<18x216xf32>, vector<1x216xf32> -> vector<1x216xf32>
    %721 = arith.addf %716, %720 : vector<1x216xf32>
    %cst_767 = arith.constant 0.000000e+00 : f32
    %722 = vector.broadcast %cst_767 : f32 to vector<1x216xf32>
    %723 = arith.maximumf %721, %722 : vector<1x216xf32>
    %c0_768 = arith.constant 0 : index
    %c0_769 = arith.constant 0 : index
    %724 = vector.load %arg24[%c0_768, %c0_769] : memref<216x17xf32, #tpu.memory_space<vmem>>, vector<216x17xf32>
    %cst_770 = arith.constant dense<0.000000e+00> : vector<1x17xf32>
    %725 = tpu.matmul %723, %724, %cst_770 {dimension_numbers = #tpu.dot_dimension_numbers<[1], [0], [0], [1], [0, 0, 1, 1], [], []>} : vector<1x216xf32>, vector<216x17xf32>, vector<1x17xf32> -> vector<1x17xf32>
    %c0_771 = arith.constant 0 : index
    %c0_772 = arith.constant 0 : index
    %726 = vector.load %arg25[%c0_771, %c0_772] : memref<1x17xf32, #tpu.memory_space<vmem>>, vector<1x17xf32>
    %727 = arith.addf %725, %726 : vector<1x17xf32>
    %c0_773 = arith.constant 0 : index
    %c0_774 = arith.constant 0 : index
    %728 = vector.load %arg26[%c0_773, %c0_774] : memref<2x17xf32, #tpu.memory_space<vmem>>, vector<1x17xf32>
    tpu.vector_store %arg26[%c0_773, %c0_774], %727 {strides = array<i32>} : memref<2x17xf32, #tpu.memory_space<vmem>>, vector<1x17xf32>,
    %c0_775 = arith.constant 0 : index
    %c0_776 = arith.constant 0 : index
    %729 = vector.load %arg23[%c0_775, %c0_776] : memref<1x216xf32, #tpu.memory_space<vmem>>, vector<1x216xf32>
    %730 = vector.extract_strided_slice %705 {offsets = [0, 0], sizes = [1, 18], strides = [1, 1]} : vector<3x18xf32> to vector<1x18xf32>
    %c0_777 = arith.constant 0 : index
    %c0_778 = arith.constant 0 : index
    %c0_779 = arith.constant 0 : index
    %731 = vector.load %arg22[%c0_777, %c0_778, %c0_779] : memref<3x18x216xf32, #tpu.memory_space<vmem>>, vector<1x18x216xf32>
    %732 = vector.shape_cast %731 : vector<1x18x216xf32> to vector<18x216xf32>
    %cst_780 = arith.constant dense<0.000000e+00> : vector<1x216xf32>
    %733 = tpu.matmul %730, %732, %cst_780 {dimension_numbers = #tpu.dot_dimension_numbers<[1], [0], [0], [1], [0, 0, 1, 1], [], []>} : vector<1x18xf32>, vector<18x216xf32>, vector<1x216xf32> -> vector<1x216xf32>
    %734 = arith.addf %729, %733 : vector<1x216xf32>
    %735 = vector.extract_strided_slice %705 {offsets = [1, 0], sizes = [1, 18], strides = [1, 1]} : vector<3x18xf32> to vector<1x18xf32>
    %c1_781 = arith.constant 1 : index
    %c0_782 = arith.constant 0 : index
    %c0_783 = arith.constant 0 : index
    %736 = vector.load %arg22[%c1_781, %c0_782, %c0_783] : memref<3x18x216xf32, #tpu.memory_space<vmem>>, vector<1x18x216xf32>
    %737 = vector.shape_cast %736 : vector<1x18x216xf32> to vector<18x216xf32>
    %cst_784 = arith.constant dense<0.000000e+00> : vector<1x216xf32>
    %738 = tpu.matmul %735, %737, %cst_784 {dimension_numbers = #tpu.dot_dimension_numbers<[1], [0], [0], [1], [0, 0, 1, 1], [], []>} : vector<1x18xf32>, vector<18x216xf32>, vector<1x216xf32> -> vector<1x216xf32>
    %739 = arith.addf %734, %738 : vector<1x216xf32>
    %740 = vector.extract_strided_slice %705 {offsets = [2, 0], sizes = [1, 18], strides = [1, 1]} : vector<3x18xf32> to vector<1x18xf32>
    %c2_785 = arith.constant 2 : index
    %c0_786 = arith.constant 0 : index
    %c0_787 = arith.constant 0 : index
    %741 = vector.load %arg22[%c2_785, %c0_786, %c0_787] : memref<3x18x216xf32, #tpu.memory_space<vmem>>, vector<1x18x216xf32>
    %742 = vector.shape_cast %741 : vector<1x18x216xf32> to vector<18x216xf32>
    %cst_788 = arith.constant dense<0.000000e+00> : vector<1x216xf32>
    %743 = tpu.matmul %740, %742, %cst_788 {dimension_numbers = #tpu.dot_dimension_numbers<[1], [0], [0], [1], [0, 0, 1, 1], [], []>} : vector<1x18xf32>, vector<18x216xf32>, vector<1x216xf32> -> vector<1x216xf32>
    %744 = arith.addf %739, %743 : vector<1x216xf32>
    %cst_789 = arith.constant 0.000000e+00 : f32
    %745 = vector.broadcast %cst_789 : f32 to vector<1x216xf32>
    %746 = arith.maximumf %744, %745 : vector<1x216xf32>
    %c0_790 = arith.constant 0 : index
    %c0_791 = arith.constant 0 : index
    %747 = vector.load %arg24[%c0_790, %c0_791] : memref<216x17xf32, #tpu.memory_space<vmem>>, vector<216x17xf32>
    %cst_792 = arith.constant dense<0.000000e+00> : vector<1x17xf32>
    %748 = tpu.matmul %746, %747, %cst_792 {dimension_numbers = #tpu.dot_dimension_numbers<[1], [0], [0], [1], [0, 0, 1, 1], [], []>} : vector<1x216xf32>, vector<216x17xf32>, vector<1x17xf32> -> vector<1x17xf32>
    %c0_793 = arith.constant 0 : index
    %c0_794 = arith.constant 0 : index
    %749 = vector.load %arg25[%c0_793, %c0_794] : memref<1x17xf32, #tpu.memory_space<vmem>>, vector<1x17xf32>
    %750 = arith.addf %748, %749 : vector<1x17xf32>
    %c1_795 = arith.constant 1 : index
    %c0_796 = arith.constant 0 : index
    %751 = vector.load %arg26[%c1_795, %c0_796] : memref<2x17xf32, #tpu.memory_space<vmem>>, vector<1x17xf32>
    tpu.vector_store %arg26[%c1_795, %c0_796], %750 {strides = array<i32>} : memref<2x17xf32, #tpu.memory_space<vmem>>, vector<1x17xf32>,
    return
  }
}

</mosaic_0001>

<llo_original>
// kernel: forward.1
$region0: #{forward.1}
  #allocation0 [shape = 'u32[]', space=smem, size = 0x4, offset = 0x4, fixed_abs, tag = 'smem constant byte address 0x4 - core index']
  #allocation1 [shape = 'u32[72,128]{1,0:T(1,128)}', space=vmem, size = 0x9000, scoped, tag = 'internal scratch']
  #allocation2 [shape = 'f32[2,130,9]{2,1,0:T(8,128)}', space=vmem, size = 0x22000, scoped, tag = 'scratch operand']
  #allocation3 [shape = 'f32[2,69,135]{2,1,0:T(8,128)}', space=vmem, size = 0x24000, scoped, tag = 'scratch operand']
  #allocation4 [shape = 'f32[2,37,94]{2,1,0:T(8,128)}', space=vmem, size = 0xa000, scoped, tag = 'scratch operand']
  #allocation5 [shape = 'f32[2,20,97]{2,1,0:T(8,128)}', space=vmem, size = 0x6000, scoped, tag = 'scratch operand']
  #allocation6 [shape = 'f32[2,16,86]{2,1,0:T(8,128)}', space=vmem, size = 0x4000, scoped, tag = 'scratch operand']
  #allocation7 [shape = 'f32[2,16,111]{2,1,0:T(8,128)}', space=vmem, size = 0x4000, scoped, tag = 'scratch operand']
  #allocation8 [shape = 'f32[2,9,112]{2,1,0:T(8,128)}', space=vmem, size = 0x4000, scoped, tag = 'scratch operand']
  %s0 = inlined_call_operand.vmem [shape: f32[2,128,9], index: 0, kind: input, shape index: {}]
  %s1 = inlined_call_operand.vmem [shape: f32[6,9,135], index: 1, kind: input, shape index: {}]
  %s2 = inlined_call_operand.vmem [shape: f32[1,135], index: 2, kind: input, shape index: {}]
  %s3 = inlined_call_operand.vmem [shape: f32[1,135], index: 3, kind: input, shape index: {}]
  %s4 = inlined_call_operand.vmem [shape: f32[5,135,94], index: 4, kind: input, shape index: {}]
  %s5 = inlined_call_operand.vmem [shape: f32[1,94], index: 5, kind: input, shape index: {}]
  %s6 = inlined_call_operand.vmem [shape: f32[1,94], index: 6, kind: input, shape index: {}]
  %s7 = inlined_call_operand.vmem [shape: f32[7,94,97], index: 7, kind: input, shape index: {}]
  %s8 = inlined_call_operand.vmem [shape: f32[1,97], index: 8, kind: input, shape index: {}]
  %s9 = inlined_call_operand.vmem [shape: f32[1,97], index: 9, kind: input, shape index: {}]
  %s10 = inlined_call_operand.vmem [shape: f32[7,97,86], index: 10, kind: input, shape index: {}]
  %s11 = inlined_call_operand.vmem [shape: f32[1,86], index: 11, kind: input, shape index: {}]
  %s12 = inlined_call_operand.vmem [shape: f32[1,86], index: 12, kind: input, shape index: {}]
  %s13 = inlined_call_operand.vmem [shape: f32[7,86,111], index: 13, kind: input, shape index: {}]
  %s14 = inlined_call_operand.vmem [shape: f32[1,111], index: 14, kind: input, shape index: {}]
  %s15 = inlined_call_operand.vmem [shape: f32[1,111], index: 15, kind: input, shape index: {}]
  %s16 = inlined_call_operand.vmem [shape: f32[4,111,112], index: 16, kind: input, shape index: {}]
  %s17 = inlined_call_operand.vmem [shape: f32[1,112], index: 17, kind: input, shape index: {}]
  %s18 = inlined_call_operand.vmem [shape: f32[1,112], index: 18, kind: input, shape index: {}]
  %s19 = inlined_call_operand.vmem [shape: f32[7,112,18], index: 19, kind: input, shape index: {}]
  %s20 = inlined_call_operand.vmem [shape: f32[1,18], index: 20, kind: input, shape index: {}]
  %s21 = inlined_call_operand.vmem [shape: f32[1,18], index: 21, kind: input, shape index: {}]
  %s22 = inlined_call_operand.vmem [shape: f32[3,18,216], index: 22, kind: input, shape index: {}]
  %s23 = inlined_call_operand.vmem [shape: f32[1,216], index: 23, kind: input, shape index: {}]
  %s24 = inlined_call_operand.vmem [shape: f32[216,17], index: 24, kind: input, shape index: {}]
  %s25 = inlined_call_operand.vmem [shape: f32[1,17], index: 25, kind: input, shape index: {}]
  %s26 = inlined_call_operand.hbm [shape: f32[2,17], index: 26, kind: output, shape index: {}]
  %s27 = sld [smem:[#allocation0]]
  $region114: #{forward.1} parent=0
    _
  %s29 = ssub.s32 1, %s27
  %s30 = scalar_select 0, %s29, %s27
  $region1: #{forward.1} parent=0
    #allocation9 [shape = 'u8[1024]{0}', space=vmem, size = 0x400, scoped, tag = 'output window, operand 0, single buffered']
    #allocation10 [shape = 's32[1]{0}', space=sflag, size = 0x4, scoped, tag = 'scoped memory for forward.1']
    %31 = vsyncpa [#allocation10], 0
    // Predicated region
    $region2: #{forward.1} parent=1 // pred_check
      _
    $region3: #{forward.1} parent=1 // pred_check_branch
      %33 = sbr.rel (0) target = $region5
    $region4: #{forward.1} parent=1 // pred_region
      _
    $region5: #{forward.1} parent=1 // pred_fallthru
      _
    // Predicated region
    $region6: #{forward.1} parent=1 // pred_check
      _
    $region7: #{forward.1} parent=1 // pred_check_branch
      %35 = sbr.rel (0) target = $region9
    $region8: #{forward.1} parent=1 // pred_region
      _
    $region9: #{forward.1} parent=1 // pred_fallthru
      _
    // Predicated region
    $region10: #{forward.1} parent=1 // pred_check
      _
    $region11: #{forward.1} parent=1 // pred_check_branch
      %37 = sbr.rel (0) target = $region13
    $region12: #{forward.1} parent=1 // pred_region
      _
    $region13: #{forward.1} parent=1 // pred_fallthru
      _
    // Predicated region
    $region14: #{forward.1} parent=1 // pred_check
      _
    $region15: #{forward.1} parent=1 // pred_check_branch
      %39 = sbr.rel (0) target = $region17
    $region16: #{forward.1} parent=1 // pred_region
      _
    $region17: #{forward.1} parent=1 // pred_fallthru
      _
    // Predicated region
    $region18: #{forward.1} parent=1 // pred_check
      _
    $region19: #{forward.1} parent=1 // pred_check_branch
      %41 = sbr.rel (0) target = $region21
    $region20: #{forward.1} parent=1 // pred_region
      _
    $region21: #{forward.1} parent=1 // pred_fallthru
      _
    // Predicated region
    $region22: #{forward.1} parent=1 // pred_check
      _
    $region23: #{forward.1} parent=1 // pred_check_branch
      %43 = sbr.rel (0) target = $region25
    $region24: #{forward.1} parent=1 // pred_region
      _
    $region25: #{forward.1} parent=1 // pred_fallthru
      _
    // Predicated region
    $region26: #{forward.1} parent=1 // pred_check
      _
    $region27: #{forward.1} parent=1 // pred_check_branch
      %45 = sbr.rel (0) target = $region29
    $region28: #{forward.1} parent=1 // pred_region
      _
    $region29: #{forward.1} parent=1 // pred_fallthru
      _
    // Predicated region
    $region30: #{forward.1} parent=1 // pred_check
      _
    $region31: #{forward.1} parent=1 // pred_check_branch
      %47 = sbr.rel (0) target = $region33
    $region32: #{forward.1} parent=1 // pred_region
      _
    $region33: #{forward.1} parent=1 // pred_fallthru
      _
    // Predicated region
    $region34: #{forward.1} parent=1 // pred_check
      _
    $region35: #{forward.1} parent=1 // pred_check_branch
      %49 = sbr.rel (0) target = $region37
    $region36: #{forward.1} parent=1 // pred_region
      _
    $region37: #{forward.1} parent=1 // pred_fallthru
      _
    // Predicated region
    $region38: #{forward.1} parent=1 // pred_check
      _
    $region39: #{forward.1} parent=1 // pred_check_branch
      %51 = sbr.rel (0) target = $region41
    $region40: #{forward.1} parent=1 // pred_region
      _
    $region41: #{forward.1} parent=1 // pred_fallthru
      _
    // Predicated region
    $region42: #{forward.1} parent=1 // pred_check
      _
    $region43: #{forward.1} parent=1 // pred_check_branch
      %53 = sbr.rel (0) target = $region45
    $region44: #{forward.1} parent=1 // pred_region
      _
    $region45: #{forward.1} parent=1 // pred_fallthru
      _
    // Predicated region
    $region46: #{forward.1} parent=1 // pred_check
      _
    $region47: #{forward.1} parent=1 // pred_check_branch
      %55 = sbr.rel (0) target = $region49
    $region48: #{forward.1} parent=1 // pred_region
      _
    $region49: #{forward.1} parent=1 // pred_fallthru
      _
    // Predicated region
    $region50: #{forward.1} parent=1 // pred_check
      _
    $region51: #{forward.1} parent=1 // pred_check_branch
      %57 = sbr.rel (0) target = $region53
    $region52: #{forward.1} parent=1 // pred_region
      _
    $region53: #{forward.1} parent=1 // pred_fallthru
      _
    // Predicated region
    $region54: #{forward.1} parent=1 // pred_check
      _
    $region55: #{forward.1} parent=1 // pred_check_branch
      %59 = sbr.rel (0) target = $region57
    $region56: #{forward.1} parent=1 // pred_region
      _
    $region57: #{forward.1} parent=1 // pred_fallthru
      _
    // Predicated region
    $region58: #{forward.1} parent=1 // pred_check
      _
    $region59: #{forward.1} parent=1 // pred_check_branch
      %61 = sbr.rel (0) target = $region61
    $region60: #{forward.1} parent=1 // pred_region
      _
    $region61: #{forward.1} parent=1 // pred_fallthru
      _
    // Predicated region
    $region62: #{forward.1} parent=1 // pred_check
      _
    $region63: #{forward.1} parent=1 // pred_check_branch
      %63 = sbr.rel (0) target = $region65
    $region64: #{forward.1} parent=1 // pred_region
      _
    $region65: #{forward.1} parent=1 // pred_fallthru
      _
    // Predicated region
    $region66: #{forward.1} parent=1 // pred_check
      _
    $region67: #{forward.1} parent=1 // pred_check_branch
      %65 = sbr.rel (0) target = $region69
    $region68: #{forward.1} parent=1 // pred_region
      _
    $region69: #{forward.1} parent=1 // pred_fallthru
      _
    // Predicated region
    $region70: #{forward.1} parent=1 // pred_check
      _
    $region71: #{forward.1} parent=1 // pred_check_branch
      %67 = sbr.rel (0) target = $region73
    $region72: #{forward.1} parent=1 // pred_region
      _
    $region73: #{forward.1} parent=1 // pred_fallthru
      _
    // Predicated region
    $region74: #{forward.1} parent=1 // pred_check
      _
    $region75: #{forward.1} parent=1 // pred_check_branch
      %69 = sbr.rel (0) target = $region77
    $region76: #{forward.1} parent=1 // pred_region
      _
    $region77: #{forward.1} parent=1 // pred_fallthru
      _
    // Predicated region
    $region78: #{forward.1} parent=1 // pred_check
      _
    $region79: #{forward.1} parent=1 // pred_check_branch
      %71 = sbr.rel (0) target = $region81
    $region80: #{forward.1} parent=1 // pred_region
      _
    $region81: #{forward.1} parent=1 // pred_fallthru
      _
    // Predicated region
    $region82: #{forward.1} parent=1 // pred_check
      _
    $region83: #{forward.1} parent=1 // pred_check_branch
      %73 = sbr.rel (0) target = $region85
    $region84: #{forward.1} parent=1 // pred_region
      _
    $region85: #{forward.1} parent=1 // pred_fallthru
      _
    // Predicated region
    $region86: #{forward.1} parent=1 // pred_check
      _
    $region87: #{forward.1} parent=1 // pred_check_branch
      %75 = sbr.rel (0) target = $region89
    $region88: #{forward.1} parent=1 // pred_region
      _
    $region89: #{forward.1} parent=1 // pred_fallthru
      _
    // Predicated region
    $region90: #{forward.1} parent=1 // pred_check
      _
    $region91: #{forward.1} parent=1 // pred_check_branch
      %77 = sbr.rel (0) target = $region93
    $region92: #{forward.1} parent=1 // pred_region
      _
    $region93: #{forward.1} parent=1 // pred_fallthru
      _
    // Predicated region
    $region94: #{forward.1} parent=1 // pred_check
      _
    $region95: #{forward.1} parent=1 // pred_check_branch
      %79 = sbr.rel (0) target = $region97
    $region96: #{forward.1} parent=1 // pred_region
      _
    $region97: #{forward.1} parent=1 // pred_fallthru
      _
    // Predicated region
    $region98: #{forward.1} parent=1 // pred_check
      _
    $region99: #{forward.1} parent=1 // pred_check_branch
      %81 = sbr.rel (0) target = $region101
    $region100: #{forward.1} parent=1 // pred_region
      _
    $region101: #{forward.1} parent=1 // pred_fallthru
      _
    // Predicated region
    $region102: #{forward.1} parent=1 // pred_check
      _
    $region103: #{forward.1} parent=1 // pred_check_branch
      %83 = sbr.rel (0) target = $region105
    $region104: #{forward.1} parent=1 // pred_region
      _
    $region105: #{forward.1} parent=1 // pred_fallthru
      _
    %vm84 = vcmask 72704
    %85 = vst.msk [vmem:[#allocation2] sm:$0xff] %vm84, 0.0
    %86 = vst.msk [vmem:[#allocation2 + $0x8] sm:$0xff] %vm84, 0.0
    %87 = vst.msk [vmem:[#allocation2 + $0x10] sm:$0xff] %vm84, 0.0
    %88 = vst.msk [vmem:[#allocation2 + $0x18] sm:$0xff] %vm84, 0.0
    %89 = vst.msk [vmem:[#allocation2 + $0x20] sm:$0xff] %vm84, 0.0
    %90 = vst.msk [vmem:[#allocation2 + $0x28] sm:$0xff] %vm84, 0.0
    %91 = vst.msk [vmem:[#allocation2 + $0x30] sm:$0xff] %vm84, 0.0
    %92 = vst.msk [vmem:[#allocation2 + $0x38] sm:$0xff] %vm84, 0.0
    %93 = vst.msk [vmem:[#allocation2 + $0x40] sm:$0xff] %vm84, 0.0
    %94 = vst.msk [vmem:[#allocation2 + $0x48] sm:$0xff] %vm84, 0.0
    %95 = vst.msk [vmem:[#allocation2 + $0x50] sm:$0xff] %vm84, 0.0
    %96 = vst.msk [vmem:[#allocation2 + $0x58] sm:$0xff] %vm84, 0.0
    %97 = vst.msk [vmem:[#allocation2 + $0x60] sm:$0xff] %vm84, 0.0
    %98 = vst.msk [vmem:[#allocation2 + $0x68] sm:$0xff] %vm84, 0.0
    %99 = vst.msk [vmem:[#allocation2 + $0x70] sm:$0xff] %vm84, 0.0
    %100 = vst.msk [vmem:[#allocation2 + $0x78] sm:$0xff] %vm84, 0.0
    %vm101 = vcmask 66560
    %102 = vst.msk [vmem:[#allocation2 + $0x80] sm:$0x3] %vm101, 0.0
    %103 = vst.msk [vmem:[#allocation2 + $0x88] sm:$0xff] %vm84, 0.0
    %104 = vst.msk [vmem:[#allocation2 + $0x90] sm:$0xff] %vm84, 0.0
    %105 = vst.msk [vmem:[#allocation2 + $0x98] sm:$0xff] %vm84, 0.0
    %106 = vst.msk [vmem:[#allocation2 + $0xa0] sm:$0xff] %vm84, 0.0
    %107 = vst.msk [vmem:[#allocation2 + $0xa8] sm:$0xff] %vm84, 0.0
    %108 = vst.msk [vmem:[#allocation2 + $0xb0] sm:$0xff] %vm84, 0.0
    %109 = vst.msk [vmem:[#allocation2 + $0xb8] sm:$0xff] %vm84, 0.0
    %110 = vst.msk [vmem:[#allocation2 + $0xc0] sm:$0xff] %vm84, 0.0
    %111 = vst.msk [vmem:[#allocation2 + $0xc8] sm:$0xff] %vm84, 0.0
    %112 = vst.msk [vmem:[#allocation2 + $0xd0] sm:$0xff] %vm84, 0.0
    %113 = vst.msk [vmem:[#allocation2 + $0xd8] sm:$0xff] %vm84, 0.0
    %114 = vst.msk [vmem:[#allocation2 + $0xe0] sm:$0xff] %vm84, 0.0
    %115 = vst.msk [vmem:[#allocation2 + $0xe8] sm:$0xff] %vm84, 0.0
    %116 = vst.msk [vmem:[#allocation2 + $0xf0] sm:$0xff] %vm84, 0.0
    %117 = vst.msk [vmem:[#allocation2 + $0xf8] sm:$0xff] %vm84, 0.0
    %118 = vst.msk [vmem:[#allocation2 + $0x100] sm:$0xff] %vm84, 0.0
    %119 = vst.msk [vmem:[#allocation2 + $0x108] sm:$0x3] %vm101, 0.0
    %120 = vst [vmem:[#allocation3] sm:$0xff] 0.0
    %vm121 = vcmask 56320
    %122 = vst.msk [vmem:[#allocation3 + $0x8] sm:$0xff] %vm121, 0.0
    %123 = vst [vmem:[#allocation3 + $0x10] sm:$0xff] 0.0
    %124 = vst.msk [vmem:[#allocation3 + $0x18] sm:$0xff] %vm121, 0.0
    %125 = vst [vmem:[#allocation3 + $0x20] sm:$0xff] 0.0
    %126 = vst.msk [vmem:[#allocation3 + $0x28] sm:$0xff] %vm121, 0.0
    %127 = vst [vmem:[#allocation3 + $0x30] sm:$0xff] 0.0
    %128 = vst.msk [vmem:[#allocation3 + $0x38] sm:$0xff] %vm121, 0.0
    %129 = vst [vmem:[#allocation3 + $0x40] sm:$0xff] 0.0
    %130 = vst.msk [vmem:[#allocation3 + $0x48] sm:$0xff] %vm121, 0.0
    %131 = vst [vmem:[#allocation3 + $0x50] sm:$0xff] 0.0
    %132 = vst.msk [vmem:[#allocation3 + $0x58] sm:$0xff] %vm121, 0.0
    %133 = vst [vmem:[#allocation3 + $0x60] sm:$0xff] 0.0
    %134 = vst.msk [vmem:[#allocation3 + $0x68] sm:$0xff] %vm121, 0.0
    %135 = vst [vmem:[#allocation3 + $0x70] sm:$0xff] 0.0
    %136 = vst.msk [vmem:[#allocation3 + $0x78] sm:$0xff] %vm121, 0.0
    %137 = vst [vmem:[#allocation3 + $0x80] sm:$0x1f] 0.0
    %vm138 = vcmask 53248
    %139 = vst.msk [vmem:[#allocation3 + $0x88] sm:$0x1f] %vm138, 0.0
    %140 = vst [vmem:[#allocation3 + $0x90] sm:$0xff] 0.0
    %141 = vst.msk [vmem:[#allocation3 + $0x98] sm:$0xff] %vm121, 0.0
    %142 = vst [vmem:[#allocation3 + $0xa0] sm:$0xff] 0.0
    %143 = vst.msk [vmem:[#allocation3 + $0xa8] sm:$0xff] %vm121, 0.0
    %144 = vst [vmem:[#allocation3 + $0xb0] sm:$0xff] 0.0
    %145 = vst.msk [vmem:[#allocation3 + $0xb8] sm:$0xff] %vm121, 0.0
    %146 = vst [vmem:[#allocation3 + $0xc0] sm:$0xff] 0.0
    %147 = vst.msk [vmem:[#allocation3 + $0xc8] sm:$0xff] %vm121, 0.0
    %148 = vst [vmem:[#allocation3 + $0xd0] sm:$0xff] 0.0
    %149 = vst.msk [vmem:[#allocation3 + $0xd8] sm:$0xff] %vm121, 0.0
    %150 = vst [vmem:[#allocation3 + $0xe0] sm:$0xff] 0.0
    %151 = vst.msk [vmem:[#allocation3 + $0xe8] sm:$0xff] %vm121, 0.0
    %152 = vst [vmem:[#allocation3 + $0xf0] sm:$0xff] 0.0
    %153 = vst.msk [vmem:[#allocation3 + $0xf8] sm:$0xff] %vm121, 0.0
    %154 = vst [vmem:[#allocation3 + $0x100] sm:$0xff] 0.0
    %155 = vst.msk [vmem:[#allocation3 + $0x108] sm:$0xff] %vm121, 0.0
    %156 = vst [vmem:[#allocation3 + $0x110] sm:$0x1f] 0.0
    %157 = vst.msk [vmem:[#allocation3 + $0x118] sm:$0x1f] %vm138, 0.0
    %vm158 = vcmask 769024
    %159 = vst.msk [vmem:[#allocation4] sm:$0xff] %vm158, 0.0
    %160 = vst.msk [vmem:[#allocation4 + $0x8] sm:$0xff] %vm158, 0.0
    %161 = vst.msk [vmem:[#allocation4 + $0x10] sm:$0xff] %vm158, 0.0
    %162 = vst.msk [vmem:[#allocation4 + $0x18] sm:$0xff] %vm158, 0.0
    %vm163 = vcmask 765952
    %164 = vst.msk [vmem:[#allocation4 + $0x20] sm:$0x1f] %vm163, 0.0
    %165 = vst.msk [vmem:[#allocation4 + $0x28] sm:$0xff] %vm158, 0.0
    %166 = vst.msk [vmem:[#allocation4 + $0x30] sm:$0xff] %vm158, 0.0
    %167 = vst.msk [vmem:[#allocation4 + $0x38] sm:$0xff] %vm158, 0.0
    %168 = vst.msk [vmem:[#allocation4 + $0x40] sm:$0xff] %vm158, 0.0
    %169 = vst.msk [vmem:[#allocation4 + $0x48] sm:$0x1f] %vm163, 0.0
    %vm170 = vcmask 793600
    %171 = vst.msk [vmem:[#allocation5] sm:$0xff] %vm170, 0.0
    %172 = vst.msk [vmem:[#allocation5 + $0x8] sm:$0xff] %vm170, 0.0
    %vm173 = vcmask 789504
    %174 = vst.msk [vmem:[#allocation5 + $0x10] sm:$0xf] %vm173, 0.0
    %175 = vst.msk [vmem:[#allocation5 + $0x18] sm:$0xff] %vm170, 0.0
    %176 = vst.msk [vmem:[#allocation5 + $0x20] sm:$0xff] %vm170, 0.0
    %177 = vst.msk [vmem:[#allocation5 + $0x28] sm:$0xf] %vm173, 0.0
    %vm178 = vcmask 703488
    %179 = vst.msk [vmem:[#allocation6] sm:$0xff] %vm178, 0.0
    %180 = vst.msk [vmem:[#allocation6 + $0x8] sm:$0xff] %vm178, 0.0
    %181 = vst.msk [vmem:[#allocation6 + $0x10] sm:$0xff] %vm178, 0.0
    %182 = vst.msk [vmem:[#allocation6 + $0x18] sm:$0xff] %vm178, 0.0
    %vm183 = vcmask 908288
    %184 = vst.msk [vmem:[#allocation7] sm:$0xff] %vm183, 0.0
    %185 = vst.msk [vmem:[#allocation7 + $0x8] sm:$0xff] %vm183, 0.0
    %186 = vst.msk [vmem:[#allocation7 + $0x10] sm:$0xff] %vm183, 0.0
    %187 = vst.msk [vmem:[#allocation7 + $0x18] sm:$0xff] %vm183, 0.0
    %vm188 = vcmask 916480
    %189 = vst.msk [vmem:[#allocation8] sm:$0xff] %vm188, 0.0
    %vm190 = vcmask 909312
    %191 = vst.msk [vmem:[#allocation8 + $0x8] sm:$0x1] %vm190, 0.0
    %192 = vst.msk [vmem:[#allocation8 + $0x10] sm:$0xff] %vm188, 0.0
    %193 = vst.msk [vmem:[#allocation8 + $0x18] sm:$0x1] %vm190, 0.0
    %v194 = vld [vmem:[%s0] sm:$0xff]
    %v195 = vld [vmem:[%s0 + $0x8] sm:$0xff]
    %v196 = vld [vmem:[%s0 + $0x10] sm:$0xff]
    %v197 = vld [vmem:[%s0 + $0x18] sm:$0xff]
    %v198 = vld [vmem:[%s0 + $0x20] sm:$0xff]
    %v199 = vld [vmem:[%s0 + $0x28] sm:$0xff]
    %v200 = vld [vmem:[%s0 + $0x30] sm:$0xff]
    %v201 = vld [vmem:[%s0 + $0x38] sm:$0xff]
    %v202 = vld [vmem:[%s0 + $0x40] sm:$0xff]
    %v203 = vld [vmem:[%s0 + $0x48] sm:$0xff]
    %v204 = vld [vmem:[%s0 + $0x50] sm:$0xff]
    %v205 = vld [vmem:[%s0 + $0x58] sm:$0xff]
    %v206 = vld [vmem:[%s0 + $0x60] sm:$0xff]
    %v207 = vld [vmem:[%s0 + $0x68] sm:$0xff]
    %v208 = vld [vmem:[%s0 + $0x70] sm:$0xff]
    %v209 = vld [vmem:[%s0 + $0x78] sm:$0xff]
    %v210 = vld [vmem:[%s0 + $0x80] sm:$0xff]
    %v211 = vld [vmem:[%s0 + $0x88] sm:$0xff]
    %v212 = vld [vmem:[%s0 + $0x90] sm:$0xff]
    %v213 = vld [vmem:[%s0 + $0x98] sm:$0xff]
    %v214 = vld [vmem:[%s0 + $0xa0] sm:$0xff]
    %v215 = vld [vmem:[%s0 + $0xa8] sm:$0xff]
    %v216 = vld [vmem:[%s0 + $0xb0] sm:$0xff]
    %v217 = vld [vmem:[%s0 + $0xb8] sm:$0xff]
    %v218 = vld [vmem:[%s0 + $0xc0] sm:$0xff]
    %v219 = vld [vmem:[%s0 + $0xc8] sm:$0xff]
    %v220 = vld [vmem:[%s0 + $0xd0] sm:$0xff]
    %v221 = vld [vmem:[%s0 + $0xd8] sm:$0xff]
    %v222 = vld [vmem:[%s0 + $0xe0] sm:$0xff]
    %v223 = vld [vmem:[%s0 + $0xe8] sm:$0xff]
    %v224 = vld [vmem:[%s0 + $0xf0] sm:$0xff]
    %v225 = vld [vmem:[%s0 + $0xf8] sm:$0xff]
    %226 = vst.msk [vmem:[#allocation2 + $0x1] sm:$0xff] %vm84, %v194
    %227 = vst.msk [vmem:[#allocation2 + $0x9] sm:$0xff] %vm84, %v195
    %228 = vst.msk [vmem:[#allocation2 + $0x11] sm:$0xff] %vm84, %v196
    %229 = vst.msk [vmem:[#allocation2 + $0x19] sm:$0xff] %vm84, %v197
    %230 = vst.msk [vmem:[#allocation2 + $0x21] sm:$0xff] %vm84, %v198
    %231 = vst.msk [vmem:[#allocation2 + $0x29] sm:$0xff] %vm84, %v199
    %232 = vst.msk [vmem:[#allocation2 + $0x31] sm:$0xff] %vm84, %v200
    %233 = vst.msk [vmem:[#allocation2 + $0x39] sm:$0xff] %vm84, %v201
    %234 = vst.msk [vmem:[#allocation2 + $0x41] sm:$0xff] %vm84, %v202
    %235 = vst.msk [vmem:[#allocation2 + $0x49] sm:$0xff] %vm84, %v203
    %236 = vst.msk [vmem:[#allocation2 + $0x51] sm:$0xff] %vm84, %v204
    %237 = vst.msk [vmem:[#allocation2 + $0x59] sm:$0xff] %vm84, %v205
    %238 = vst.msk [vmem:[#allocation2 + $0x61] sm:$0xff] %vm84, %v206
    %239 = vst.msk [vmem:[#allocation2 + $0x69] sm:$0xff] %vm84, %v207
    %240 = vst.msk [vmem:[#allocation2 + $0x71] sm:$0xff] %vm84, %v208
    %241 = vst.msk [vmem:[#allocation2 + $0x79] sm:$0xff] %vm84, %v209
    %242 = vst.msk [vmem:[#allocation2 + $0x89] sm:$0xff] %vm84, %v210
    %243 = vst.msk [vmem:[#allocation2 + $0x91] sm:$0xff] %vm84, %v211
    %244 = vst.msk [vmem:[#allocation2 + $0x99] sm:$0xff] %vm84, %v212
    %245 = vst.msk [vmem:[#allocation2 + $0xa1] sm:$0xff] %vm84, %v213
    %246 = vst.msk [vmem:[#allocation2 + $0xa9] sm:$0xff] %vm84, %v214
    %247 = vst.msk [vmem:[#allocation2 + $0xb1] sm:$0xff] %vm84, %v215
    %248 = vst.msk [vmem:[#allocation2 + $0xb9] sm:$0xff] %vm84, %v216
    %249 = vst.msk [vmem:[#allocation2 + $0xc1] sm:$0xff] %vm84, %v217
    %250 = vst.msk [vmem:[#allocation2 + $0xc9] sm:$0xff] %vm84, %v218
    %251 = vst.msk [vmem:[#allocation2 + $0xd1] sm:$0xff] %vm84, %v219
    %252 = vst.msk [vmem:[#allocation2 + $0xd9] sm:$0xff] %vm84, %v220
    %253 = vst.msk [vmem:[#allocation2 + $0xe1] sm:$0xff] %vm84, %v221
    %254 = vst.msk [vmem:[#allocation2 + $0xe9] sm:$0xff] %vm84, %v222
    %255 = vst.msk [vmem:[#allocation2 + $0xf1] sm:$0xff] %vm84, %v223
    %256 = vst.msk [vmem:[#allocation2 + $0xf9] sm:$0xff] %vm84, %v224
    %257 = vst.msk [vmem:[#allocation2 + $0x101] sm:$0xff] %vm84, %v225
    %v258 = vlaneseq
    %v259 = vshrl.u32 %v258, 7
    %v260 = vadd.s32 %v259, 8
    %v261 = vadd.s32 %v259, 16
    %v262 = vadd.s32 %v259, 24
    %v263 = vadd.s32 %v259, 32
    %v264 = vadd.s32 %v259, 40
    %v265 = vadd.s32 %v259, 48
    %v266 = vadd.s32 %v259, 56
    %v267 = vlaneseq
    %v268 = vand.u32 %v267, 127
    %v269 = vmul.u32 %v259, 2
    %v270 = vmul.u32 %v260, 2
    %v271 = vmul.u32 %v261, 2
    %v272 = vmul.u32 %v262, 2
    %v273 = vmul.u32 %v263, 2
    %v274 = vmul.u32 %v264, 2
    %v275 = vmul.u32 %v265, 2
    %v276 = vmul.u32 %v266, 2
    %vm277 = vcmp.eq.s32.totalorder %v268, %v269
    %vm278 = vcmp.eq.s32.totalorder %v268, %v270
    %vm279 = vcmp.eq.s32.totalorder %v268, %v271
    %vm280 = vcmp.eq.s32.totalorder %v268, %v272
    %vm281 = vcmp.eq.s32.totalorder %v268, %v273
    %vm282 = vcmp.eq.s32.totalorder %v268, %v274
    %vm283 = vcmp.eq.s32.totalorder %v268, %v275
    %vm284 = vcmp.eq.s32.totalorder %v268, %v276
    %v285 = vsel %vm277, 1.0, 0.0
    %v286 = vsel %vm278, 1.0, 0.0
    %v287 = vsel %vm279, 1.0, 0.0
    %v288 = vsel %vm280, 1.0, 0.0
    %v289 = vsel %vm281, 1.0, 0.0
    %v290 = vsel %vm282, 1.0, 0.0
    %v291 = vsel %vm283, 1.0, 0.0
    %v292 = vsel %vm284, 1.0, 0.0
    %v293 = vld [vmem:[#allocation2] sm:$0xff]
    %v294 = vld [vmem:[#allocation2 + $0x8] sm:$0xff]
    %v295 = vld [vmem:[#allocation2 + $0x10] sm:$0xff]
    %v296 = vld [vmem:[#allocation2 + $0x18] sm:$0xff]
    %v297 = vld [vmem:[#allocation2 + $0x20] sm:$0xff]
    %v298 = vld [vmem:[#allocation2 + $0x28] sm:$0xff]
    %v299 = vld [vmem:[#allocation2 + $0x30] sm:$0xff]
    %v300 = vld [vmem:[#allocation2 + $0x38] sm:$0xff]
    %v301 = vld [vmem:[#allocation2 + $0x40] sm:$0xff]
    %v302 = vld [vmem:[#allocation2 + $0x48] sm:$0xff]
    %v303 = vld [vmem:[#allocation2 + $0x50] sm:$0xff]
    %v304 = vld [vmem:[#allocation2 + $0x58] sm:$0xff]
    %v305 = vld [vmem:[#allocation2 + $0x60] sm:$0xff]
    %v306 = vld [vmem:[#allocation2 + $0x68] sm:$0xff]
    %v307 = vld [vmem:[#allocation2 + $0x70] sm:$0xff]
    %v308 = vld [vmem:[#allocation2 + $0x78] sm:$0x1f]
    %v309 = vld [vmem:[%s1] sm:$0xff]
    %v310 = vld [vmem:[%s1 + $0x8] sm:$0xff]
    %v311 = vld [vmem:[%s1 + $0x10] sm:$0x1]
    %v312 = vld [vmem:[%s1 + $0x18] sm:$0x1]
    %v313 = vld [vmem:[#allocation2 + $0x1] sm:$0xff]
    %v314 = vld [vmem:[#allocation2 + $0x9] sm:$0xff]
    %v315 = vld [vmem:[#allocation2 + $0x11] sm:$0xff]
    %v316 = vld [vmem:[#allocation2 + $0x19] sm:$0xff]
    %v317 = vld [vmem:[#allocation2 + $0x21] sm:$0xff]
    %v318 = vld [vmem:[#allocation2 + $0x29] sm:$0xff]
    %v319 = vld [vmem:[#allocation2 + $0x31] sm:$0xff]
    %v320 = vld [vmem:[#allocation2 + $0x39] sm:$0xff]
    %v321 = vld [vmem:[#allocation2 + $0x41] sm:$0xff]
    %v322 = vld [vmem:[#allocation2 + $0x49] sm:$0xff]
    %v323 = vld [vmem:[#allocation2 + $0x51] sm:$0xff]
    %v324 = vld [vmem:[#allocation2 + $0x59] sm:$0xff]
    %v325 = vld [vmem:[#allocation2 + $0x61] sm:$0xff]
    %v326 = vld [vmem:[#allocation2 + $0x69] sm:$0xff]
    %v327 = vld [vmem:[#allocation2 + $0x71] sm:$0xff]
    %v328 = vld [vmem:[#allocation2 + $0x79] sm:$0x1f]
    %s329 = scalar_lea.vmem %s1, 32
    %v330 = vld [vmem:[%s329] sm:$0xff]
    %v331 = vld [vmem:[%s329 + $0x8] sm:$0xff]
    %v332 = vld [vmem:[%s329 + $0x10] sm:$0x1]
    %v333 = vld [vmem:[%s329 + $0x18] sm:$0x1]
    %v335 = vsel %vm84, %v313, 0
    %v338 = vsel %vm84, %v314, 0
    %v341 = vsel %vm84, %v315, 0
    %v344 = vsel %vm84, %v316, 0
    %v347 = vsel %vm84, %v317, 0
    %v350 = vsel %vm84, %v318, 0
    %v353 = vsel %vm84, %v319, 0
    %v356 = vsel %vm84, %v320, 0
    %v359 = vsel %vm84, %v321, 0
    %v362 = vsel %vm84, %v322, 0
    %v365 = vsel %vm84, %v323, 0
    %v368 = vsel %vm84, %v324, 0
    %v371 = vsel %vm84, %v325, 0
    %v374 = vsel %vm84, %v326, 0
    %v377 = vsel %vm84, %v327, 0
    %v380 = vsel %vm84, %v328, 0
    %vm382 = vcmask 1040384
    %v384 = vsel %vm382, %v332, 0
    %v387 = vsel %vm382, %v333, 0
    %389 = vmatpush.msra.mxu0 0.0
    %390 = vmatpush.msra.mxu0 0.0
    %391 = vmatpush.msra.mxu0 0.0
    %392 = vmatpush.msra.mxu0 0.0
    %393 = vmatpush.msra.mxu0 0.0
    %394 = vmatpush.msra.mxu0 0.0
    %395 = vmatpush.msra.mxu0 0.0
    %396 = vmatpush.msra.mxu0 0.0
    %397 = vmatpush.msra.mxu0 0.0
    %398 = vmatpush.msra.mxu0 0.0
    %399 = vmatpush.msra.mxu0 0.0
    %400 = vmatpush.msra.mxu0 0.0
    %401 = vmatpush.msra.mxu0 0.0
    %402 = vmatpush.msra.mxu0 0.0
    %403 = vmatpush.msra.mxu0 %v384
    %404 = vmatpush.msra.mxu0 %v330
    %405 = vmatmul.f32.gmra.mxu0 %v335
    %v406 = vpop.f32.mrf.mxu0
    %v407 = vadd.f32 0.0, %v406
    %408 = vmatmul.f32.gmra.mxu0 %v338
    %v409 = vpop.f32.mrf.mxu0
    %v410 = vadd.f32 0.0, %v409
    %411 = vmatmul.f32.gmra.mxu0 %v341
    %v412 = vpop.f32.mrf.mxu0
    %v413 = vadd.f32 0.0, %v412
    %414 = vmatmul.f32.gmra.mxu0 %v344
    %v415 = vpop.f32.mrf.mxu0
    %v416 = vadd.f32 0.0, %v415
    %417 = vmatmul.f32.gmra.mxu0 %v347
    %v418 = vpop.f32.mrf.mxu0
    %v419 = vadd.f32 0.0, %v418
    %420 = vmatmul.f32.gmra.mxu0 %v350
    %v421 = vpop.f32.mrf.mxu0
    %v422 = vadd.f32 0.0, %v421
    %423 = vmatmul.f32.gmra.mxu0 %v353
    %v424 = vpop.f32.mrf.mxu0
    %v425 = vadd.f32 0.0, %v424
    %426 = vmatmul.f32.gmra.mxu0 %v356
    %v427 = vpop.f32.mrf.mxu0
    %v428 = vadd.f32 0.0, %v427
    %429 = vmatmul.f32.gmra.mxu0 %v359
    %v430 = vpop.f32.mrf.mxu0
    %v431 = vadd.f32 0.0, %v430
    %432 = vmatmul.f32.gmra.mxu0 %v362
    %v433 = vpop.f32.mrf.mxu0
    %v434 = vadd.f32 0.0, %v433
    %435 = vmatmul.f32.gmra.mxu0 %v365
    %v436 = vpop.f32.mrf.mxu0
    %v437 = vadd.f32 0.0, %v436
    %438 = vmatmul.f32.gmra.mxu0 %v368
    %v439 = vpop.f32.mrf.mxu0
    %v440 = vadd.f32 0.0, %v439
    %441 = vmatmul.f32.gmra.mxu0 %v371
    %v442 = vpop.f32.mrf.mxu0
    %v443 = vadd.f32 0.0, %v442
    %444 = vmatmul.f32.gmra.mxu0 %v374
    %v445 = vpop.f32.mrf.mxu0
    %v446 = vadd.f32 0.0, %v445
    %447 = vmatmul.f32.gmra.mxu0 %v377
    %v448 = vpop.f32.mrf.mxu0
    %v449 = vadd.f32 0.0, %v448
    %450 = vmatmul.f32.gmra.mxu0 %v380
    %v451 = vpop.f32.mrf.mxu0
    %v452 = vadd.f32 0.0, %v451
    %453 = vdwg.mxu0
    %454 = vmatpush.msra.mxu0 0.0
    %455 = vmatpush.msra.mxu0 0.0
    %456 = vmatpush.msra.mxu0 0.0
    %457 = vmatpush.msra.mxu0 0.0
    %458 = vmatpush.msra.mxu0 0.0
    %459 = vmatpush.msra.mxu0 0.0
    %460 = vmatpush.msra.mxu0 0.0
    %461 = vmatpush.msra.mxu0 0.0
    %462 = vmatpush.msra.mxu0 0.0
    %463 = vmatpush.msra.mxu0 0.0
    %464 = vmatpush.msra.mxu0 0.0
    %465 = vmatpush.msra.mxu0 0.0
    %466 = vmatpush.msra.mxu0 0.0
    %467 = vmatpush.msra.mxu0 0.0
    %468 = vmatpush.msra.mxu0 %v387
    %469 = vmatpush.msra.mxu0 %v331
    %470 = vmatmul.f32.gmra.mxu0 %v335
    %v471 = vpop.f32.mrf.mxu0
    %v472 = vadd.f32 0.0, %v471
    %473 = vmatmul.f32.gmra.mxu0 %v338
    %v474 = vpop.f32.mrf.mxu0
    %v475 = vadd.f32 0.0, %v474
    %476 = vmatmul.f32.gmra.mxu0 %v341
    %v477 = vpop.f32.mrf.mxu0
    %v478 = vadd.f32 0.0, %v477
    %479 = vmatmul.f32.gmra.mxu0 %v344
    %v480 = vpop.f32.mrf.mxu0
    %v481 = vadd.f32 0.0, %v480
    %482 = vmatmul.f32.gmra.mxu0 %v347
    %v483 = vpop.f32.mrf.mxu0
    %v484 = vadd.f32 0.0, %v483
    %485 = vmatmul.f32.gmra.mxu0 %v350
    %v486 = vpop.f32.mrf.mxu0
    %v487 = vadd.f32 0.0, %v486
    %488 = vmatmul.f32.gmra.mxu0 %v353
    %v489 = vpop.f32.mrf.mxu0
    %v490 = vadd.f32 0.0, %v489
    %491 = vmatmul.f32.gmra.mxu0 %v356
    %v492 = vpop.f32.mrf.mxu0
    %v493 = vadd.f32 0.0, %v492
    %494 = vmatmul.f32.gmra.mxu0 %v359
    %v495 = vpop.f32.mrf.mxu0
    %v496 = vadd.f32 0.0, %v495
    %497 = vmatmul.f32.gmra.mxu0 %v362
    %v498 = vpop.f32.mrf.mxu0
    %v499 = vadd.f32 0.0, %v498
    %500 = vmatmul.f32.gmra.mxu0 %v365
    %v501 = vpop.f32.mrf.mxu0
    %v502 = vadd.f32 0.0, %v501
    %503 = vmatmul.f32.gmra.mxu0 %v368
    %v504 = vpop.f32.mrf.mxu0
    %v505 = vadd.f32 0.0, %v504
    %506 = vmatmul.f32.gmra.mxu0 %v371
    %v507 = vpop.f32.mrf.mxu0
    %v508 = vadd.f32 0.0, %v507
    %509 = vmatmul.f32.gmra.mxu0 %v374
    %v510 = vpop.f32.mrf.mxu0
    %v511 = vadd.f32 0.0, %v510
    %512 = vmatmul.f32.gmra.mxu0 %v377
    %v513 = vpop.f32.mrf.mxu0
    %v514 = vadd.f32 0.0, %v513
    %515 = vmatmul.f32.gmra.mxu0 %v380
    %v516 = vpop.f32.mrf.mxu0
    %v517 = vadd.f32 0.0, %v516
    %518 = vdwg.mxu0
    %v520 = vsel %vm84, %v293, 0
    %v523 = vsel %vm84, %v294, 0
    %v526 = vsel %vm84, %v295, 0
    %v529 = vsel %vm84, %v296, 0
    %v532 = vsel %vm84, %v297, 0
    %v535 = vsel %vm84, %v298, 0
    %v538 = vsel %vm84, %v299, 0
    %v541 = vsel %vm84, %v300, 0
    %v544 = vsel %vm84, %v301, 0
    %v547 = vsel %vm84, %v302, 0
    %v550 = vsel %vm84, %v303, 0
    %v553 = vsel %vm84, %v304, 0
    %v556 = vsel %vm84, %v305, 0
    %v559 = vsel %vm84, %v306, 0
    %v562 = vsel %vm84, %v307, 0
    %v565 = vsel %vm84, %v308, 0
    %v568 = vsel %vm382, %v311, 0
    %v571 = vsel %vm382, %v312, 0
    %573 = vmatpush.msra.mxu0 0.0
    %574 = vmatpush.msra.mxu0 0.0
    %575 = vmatpush.msra.mxu0 0.0
    %576 = vmatpush.msra.mxu0 0.0
    %577 = vmatpush.msra.mxu0 0.0
    %578 = vmatpush.msra.mxu0 0.0
    %579 = vmatpush.msra.mxu0 0.0
    %580 = vmatpush.msra.mxu0 0.0
    %581 = vmatpush.msra.mxu0 0.0
    %582 = vmatpush.msra.mxu0 0.0
    %583 = vmatpush.msra.mxu0 0.0
    %584 = vmatpush.msra.mxu0 0.0
    %585 = vmatpush.msra.mxu0 0.0
    %586 = vmatpush.msra.mxu0 0.0
    %587 = vmatpush.msra.mxu0 %v568
    %588 = vmatpush.msra.mxu0 %v309
    %589 = vmatmul.f32.gmra.mxu0 %v520
    %v590 = vpop.f32.mrf.mxu0
    %v591 = vadd.f32 %v407, %v590
    %592 = vmatmul.f32.gmra.mxu0 %v523
    %v593 = vpop.f32.mrf.mxu0
    %v594 = vadd.f32 %v410, %v593
    %595 = vmatmul.f32.gmra.mxu0 %v526
    %v596 = vpop.f32.mrf.mxu0
    %v597 = vadd.f32 %v413, %v596
    %598 = vmatmul.f32.gmra.mxu0 %v529
    %v599 = vpop.f32.mrf.mxu0
    %v600 = vadd.f32 %v416, %v599
    %601 = vmatmul.f32.gmra.mxu0 %v532
    %v602 = vpop.f32.mrf.mxu0
    %v603 = vadd.f32 %v419, %v602
    %604 = vmatmul.f32.gmra.mxu0 %v535
    %v605 = vpop.f32.mrf.mxu0
    %v606 = vadd.f32 %v422, %v605
    %607 = vmatmul.f32.gmra.mxu0 %v538
    %v608 = vpop.f32.mrf.mxu0
    %v609 = vadd.f32 %v425, %v608
    %610 = vmatmul.f32.gmra.mxu0 %v541
    %v611 = vpop.f32.mrf.mxu0
    %v612 = vadd.f32 %v428, %v611
    %613 = vmatmul.f32.gmra.mxu0 %v544
    %v614 = vpop.f32.mrf.mxu0
    %v615 = vadd.f32 %v431, %v614
    %616 = vmatmul.f32.gmra.mxu0 %v547
    %v617 = vpop.f32.mrf.mxu0
    %v618 = vadd.f32 %v434, %v617
    %619 = vmatmul.f32.gmra.mxu0 %v550
    %v620 = vpop.f32.mrf.mxu0
    %v621 = vadd.f32 %v437, %v620
    %622 = vmatmul.f32.gmra.mxu0 %v553
    %v623 = vpop.f32.mrf.mxu0
    %v624 = vadd.f32 %v440, %v623
    %625 = vmatmul.f32.gmra.mxu0 %v556
    %v626 = vpop.f32.mrf.mxu0
    %v627 = vadd.f32 %v443, %v626
    %628 = vmatmul.f32.gmra.mxu0 %v559
    %v629 = vpop.f32.mrf.mxu0
    %v630 = vadd.f32 %v446, %v629
    %631 = vmatmul.f32.gmra.mxu0 %v562
    %v632 = vpop.f32.mrf.mxu0
    %v633 = vadd.f32 %v449, %v632
    %634 = vmatmul.f32.gmra.mxu0 %v565
    %v635 = vpop.f32.mrf.mxu0
    %v636 = vadd.f32 %v452, %v635
    %637 = vdwg.mxu0
    %638 = vmatpush.msra.mxu0 0.0
    %639 = vmatpush.msra.mxu0 0.0
    %640 = vmatpush.msra.mxu0 0.0
    %641 = vmatpush.msra.mxu0 0.0
    %642 = vmatpush.msra.mxu0 0.0
    %643 = vmatpush.msra.mxu0 0.0
    %644 = vmatpush.msra.mxu0 0.0
    %645 = vmatpush.msra.mxu0 0.0
    %646 = vmatpush.msra.mxu0 0.0
    %647 = vmatpush.msra.mxu0 0.0
    %648 = vmatpush.msra.mxu0 0.0
    %649 = vmatpush.msra.mxu0 0.0
    %650 = vmatpush.msra.mxu0 0.0
    %651 = vmatpush.msra.mxu0 0.0
    %652 = vmatpush.msra.mxu0 %v571
    %653 = vmatpush.msra.mxu0 %v310
    %654 = vmatmul.f32.gmra.mxu0 %v520
    %v655 = vpop.f32.mrf.mxu0
    %v656 = vadd.f32 %v472, %v655
    %657 = vmatmul.f32.gmra.mxu0 %v523
    %v658 = vpop.f32.mrf.mxu0
    %v659 = vadd.f32 %v475, %v658
    %660 = vmatmul.f32.gmra.mxu0 %v526
    %v661 = vpop.f32.mrf.mxu0
    %v662 = vadd.f32 %v478, %v661
    %663 = vmatmul.f32.gmra.mxu0 %v529
    %v664 = vpop.f32.mrf.mxu0
    %v665 = vadd.f32 %v481, %v664
    %666 = vmatmul.f32.gmra.mxu0 %v532
    %v667 = vpop.f32.mrf.mxu0
    %v668 = vadd.f32 %v484, %v667
    %669 = vmatmul.f32.gmra.mxu0 %v535
    %v670 = vpop.f32.mrf.mxu0
    %v671 = vadd.f32 %v487, %v670
    %672 = vmatmul.f32.gmra.mxu0 %v538
    %v673 = vpop.f32.mrf.mxu0
    %v674 = vadd.f32 %v490, %v673
    %675 = vmatmul.f32.gmra.mxu0 %v541
    %v676 = vpop.f32.mrf.mxu0
    %v677 = vadd.f32 %v493, %v676
    %678 = vmatmul.f32.gmra.mxu0 %v544
    %v679 = vpop.f32.mrf.mxu0
    %v680 = vadd.f32 %v496, %v679
    %681 = vmatmul.f32.gmra.mxu0 %v547
    %v682 = vpop.f32.mrf.mxu0
    %v683 = vadd.f32 %v499, %v682
    %684 = vmatmul.f32.gmra.mxu0 %v550
    %v685 = vpop.f32.mrf.mxu0
    %v686 = vadd.f32 %v502, %v685
    %687 = vmatmul.f32.gmra.mxu0 %v553
    %v688 = vpop.f32.mrf.mxu0
    %v689 = vadd.f32 %v505, %v688
    %690 = vmatmul.f32.gmra.mxu0 %v556
    %v691 = vpop.f32.mrf.mxu0
    %v692 = vadd.f32 %v508, %v691
    %693 = vmatmul.f32.gmra.mxu0 %v559
    %v694 = vpop.f32.mrf.mxu0
    %v695 = vadd.f32 %v511, %v694
    %696 = vmatmul.f32.gmra.mxu0 %v562
    %v697 = vpop.f32.mrf.mxu0
    %v698 = vadd.f32 %v514, %v697
    %699 = vmatmul.f32.gmra.mxu0 %v565
    %v700 = vpop.f32.mrf.mxu0
    %v701 = vadd.f32 %v517, %v700
    %702 = vdwg.mxu0
    %v703 = vld [vmem:[#allocation2 + $0x2] sm:$0xff]
    %v704 = vld [vmem:[#allocation2 + $0xa] sm:$0xff]
    %v705 = vld [vmem:[#allocation2 + $0x12] sm:$0xff]
    %v706 = vld [vmem:[#allocation2 + $0x1a] sm:$0xff]
    %v707 = vld [vmem:[#allocation2 + $0x22] sm:$0xff]
    %v708 = vld [vmem:[#allocation2 + $0x2a] sm:$0xff]
    %v709 = vld [vmem:[#allocation2 + $0x32] sm:$0xff]
    %v710 = vld [vmem:[#allocation2 + $0x3a] sm:$0xff]
    %v711 = vld [vmem:[#allocation2 + $0x42] sm:$0xff]
    %v712 = vld [vmem:[#allocation2 + $0x4a] sm:$0xff]
    %v713 = vld [vmem:[#allocation2 + $0x52] sm:$0xff]
    %v714 = vld [vmem:[#allocation2 + $0x5a] sm:$0xff]
    %v715 = vld [vmem:[#allocation2 + $0x62] sm:$0xff]
    %v716 = vld [vmem:[#allocation2 + $0x6a] sm:$0xff]
    %v717 = vld [vmem:[#allocation2 + $0x72] sm:$0xff]
    %v718 = vld [vmem:[#allocation2 + $0x7a] sm:$0x1f]
    %s719 = scalar_lea.vmem %s1, 64
    %v720 = vld [vmem:[%s719] sm:$0xff]
    %v721 = vld [vmem:[%s719 + $0x8] sm:$0xff]
    %v722 = vld [vmem:[%s719 + $0x10] sm:$0x1]
    %v723 = vld [vmem:[%s719 + $0x18] sm:$0x1]
    %v725 = vsel %vm84, %v703, 0
    %v728 = vsel %vm84, %v704, 0
    %v731 = vsel %vm84, %v705, 0
    %v734 = vsel %vm84, %v706, 0
    %v737 = vsel %vm84, %v707, 0
    %v740 = vsel %vm84, %v708, 0
    %v743 = vsel %vm84, %v709, 0
    %v746 = vsel %vm84, %v710, 0
    %v749 = vsel %vm84, %v711, 0
    %v752 = vsel %vm84, %v712, 0
    %v755 = vsel %vm84, %v713, 0
    %v758 = vsel %vm84, %v714, 0
    %v761 = vsel %vm84, %v715, 0
    %v764 = vsel %vm84, %v716, 0
    %v767 = vsel %vm84, %v717, 0
    %v770 = vsel %vm84, %v718, 0
    %v773 = vsel %vm382, %v722, 0
    %v776 = vsel %vm382, %v723, 0
    %778 = vmatpush.msra.mxu0 0.0
    %779 = vmatpush.msra.mxu0 0.0
    %780 = vmatpush.msra.mxu0 0.0
    %781 = vmatpush.msra.mxu0 0.0
    %782 = vmatpush.msra.mxu0 0.0
    %783 = vmatpush.msra.mxu0 0.0
    %784 = vmatpush.msra.mxu0 0.0
    %785 = vmatpush.msra.mxu0 0.0
    %786 = vmatpush.msra.mxu0 0.0
    %787 = vmatpush.msra.mxu0 0.0
    %788 = vmatpush.msra.mxu0 0.0
    %789 = vmatpush.msra.mxu0 0.0
    %790 = vmatpush.msra.mxu0 0.0
    %791 = vmatpush.msra.mxu0 0.0
    %792 = vmatpush.msra.mxu0 %v773
    %793 = vmatpush.msra.mxu0 %v720
    %794 = vmatmul.f32.gmra.mxu0 %v725
    %v795 = vpop.f32.mrf.mxu0
    %v796 = vadd.f32 0.0, %v795
    %797 = vmatmul.f32.gmra.mxu0 %v728
    %v798 = vpop.f32.mrf.mxu0
    %v799 = vadd.f32 0.0, %v798
    %800 = vmatmul.f32.gmra.mxu0 %v731
    %v801 = vpop.f32.mrf.mxu0
    %v802 = vadd.f32 0.0, %v801
    %803 = vmatmul.f32.gmra.mxu0 %v734
    %v804 = vpop.f32.mrf.mxu0
    %v805 = vadd.f32 0.0, %v804
    %806 = vmatmul.f32.gmra.mxu0 %v737
    %v807 = vpop.f32.mrf.mxu0
    %v808 = vadd.f32 0.0, %v807
    %809 = vmatmul.f32.gmra.mxu0 %v740
    %v810 = vpop.f32.mrf.mxu0
    %v811 = vadd.f32 0.0, %v810
    %812 = vmatmul.f32.gmra.mxu0 %v743
    %v813 = vpop.f32.mrf.mxu0
    %v814 = vadd.f32 0.0, %v813
    %815 = vmatmul.f32.gmra.mxu0 %v746
    %v816 = vpop.f32.mrf.mxu0
    %v817 = vadd.f32 0.0, %v816
    %818 = vmatmul.f32.gmra.mxu0 %v749
    %v819 = vpop.f32.mrf.mxu0
    %v820 = vadd.f32 0.0, %v819
    %821 = vmatmul.f32.gmra.mxu0 %v752
    %v822 = vpop.f32.mrf.mxu0
    %v823 = vadd.f32 0.0, %v822
    %824 = vmatmul.f32.gmra.mxu0 %v755
    %v825 = vpop.f32.mrf.mxu0
    %v826 = vadd.f32 0.0, %v825
    %827 = vmatmul.f32.gmra.mxu0 %v758
    %v828 = vpop.f32.mrf.mxu0
    %v829 = vadd.f32 0.0, %v828
    %830 = vmatmul.f32.gmra.mxu0 %v761
    %v831 = vpop.f32.mrf.mxu0
    %v832 = vadd.f32 0.0, %v831
    %833 = vmatmul.f32.gmra.mxu0 %v764
    %v834 = vpop.f32.mrf.mxu0
    %v835 = vadd.f32 0.0, %v834
    %836 = vmatmul.f32.gmra.mxu0 %v767
    %v837 = vpop.f32.mrf.mxu0
    %v838 = vadd.f32 0.0, %v837
    %839 = vmatmul.f32.gmra.mxu0 %v770
    %v840 = vpop.f32.mrf.mxu0
    %v841 = vadd.f32 0.0, %v840
    %842 = vdwg.mxu0
    %843 = vmatpush.msra.mxu0 0.0
    %844 = vmatpush.msra.mxu0 0.0
    %845 = vmatpush.msra.mxu0 0.0
    %846 = vmatpush.msra.mxu0 0.0
    %847 = vmatpush.msra.mxu0 0.0
    %848 = vmatpush.msra.mxu0 0.0
    %849 = vmatpush.msra.mxu0 0.0
    %850 = vmatpush.msra.mxu0 0.0
    %851 = vmatpush.msra.mxu0 0.0
    %852 = vmatpush.msra.mxu0 0.0
    %853 = vmatpush.msra.mxu0 0.0
    %854 = vmatpush.msra.mxu0 0.0
    %855 = vmatpush.msra.mxu0 0.0
    %856 = vmatpush.msra.mxu0 0.0
    %857 = vmatpush.msra.mxu0 %v776
    %858 = vmatpush.msra.mxu0 %v721
    %859 = vmatmul.f32.gmra.mxu0 %v725
    %v860 = vpop.f32.mrf.mxu0
    %v861 = vadd.f32 0.0, %v860
    %862 = vmatmul.f32.gmra.mxu0 %v728
    %v863 = vpop.f32.mrf.mxu0
    %v864 = vadd.f32 0.0, %v863
    %865 = vmatmul.f32.gmra.mxu0 %v731
    %v866 = vpop.f32.mrf.mxu0
    %v867 = vadd.f32 0.0, %v866
    %868 = vmatmul.f32.gmra.mxu0 %v734
    %v869 = vpop.f32.mrf.mxu0
    %v870 = vadd.f32 0.0, %v869
    %871 = vmatmul.f32.gmra.mxu0 %v737
    %v872 = vpop.f32.mrf.mxu0
    %v873 = vadd.f32 0.0, %v872
    %874 = vmatmul.f32.gmra.mxu0 %v740
    %v875 = vpop.f32.mrf.mxu0
    %v876 = vadd.f32 0.0, %v875
    %877 = vmatmul.f32.gmra.mxu0 %v743
    %v878 = vpop.f32.mrf.mxu0
    %v879 = vadd.f32 0.0, %v878
    %880 = vmatmul.f32.gmra.mxu0 %v746
    %v881 = vpop.f32.mrf.mxu0
    %v882 = vadd.f32 0.0, %v881
    %883 = vmatmul.f32.gmra.mxu0 %v749
    %v884 = vpop.f32.mrf.mxu0
    %v885 = vadd.f32 0.0, %v884
    %886 = vmatmul.f32.gmra.mxu0 %v752
    %v887 = vpop.f32.mrf.mxu0
    %v888 = vadd.f32 0.0, %v887
    %889 = vmatmul.f32.gmra.mxu0 %v755
    %v890 = vpop.f32.mrf.mxu0
    %v891 = vadd.f32 0.0, %v890
    %892 = vmatmul.f32.gmra.mxu0 %v758
    %v893 = vpop.f32.mrf.mxu0
    %v894 = vadd.f32 0.0, %v893
    %895 = vmatmul.f32.gmra.mxu0 %v761
    %v896 = vpop.f32.mrf.mxu0
    %v897 = vadd.f32 0.0, %v896
    %898 = vmatmul.f32.gmra.mxu0 %v764
    %v899 = vpop.f32.mrf.mxu0
    %v900 = vadd.f32 0.0, %v899
    %901 = vmatmul.f32.gmra.mxu0 %v767
    %v902 = vpop.f32.mrf.mxu0
    %v903 = vadd.f32 0.0, %v902
    %904 = vmatmul.f32.gmra.mxu0 %v770
    %v905 = vpop.f32.mrf.mxu0
    %v906 = vadd.f32 0.0, %v905
    %907 = vdwg.mxu0
    %v908 = vadd.f32 %v591, %v796
    %v909 = vadd.f32 %v656, %v861
    %v910 = vadd.f32 %v594, %v799
    %v911 = vadd.f32 %v659, %v864
    %v912 = vadd.f32 %v597, %v802
    %v913 = vadd.f32 %v662, %v867
    %v914 = vadd.f32 %v600, %v805
    %v915 = vadd.f32 %v665, %v870
    %v916 = vadd.f32 %v603, %v808
    %v917 = vadd.f32 %v668, %v873
    %v918 = vadd.f32 %v606, %v811
    %v919 = vadd.f32 %v671, %v876
    %v920 = vadd.f32 %v609, %v814
    %v921 = vadd.f32 %v674, %v879
    %v922 = vadd.f32 %v612, %v817
    %v923 = vadd.f32 %v677, %v882
    %v924 = vadd.f32 %v615, %v820
    %v925 = vadd.f32 %v680, %v885
    %v926 = vadd.f32 %v618, %v823
    %v927 = vadd.f32 %v683, %v888
    %v928 = vadd.f32 %v621, %v826
    %v929 = vadd.f32 %v686, %v891
    %v930 = vadd.f32 %v624, %v829
    %v931 = vadd.f32 %v689, %v894
    %v932 = vadd.f32 %v627, %v832
    %v933 = vadd.f32 %v692, %v897
    %v934 = vadd.f32 %v630, %v835
    %v935 = vadd.f32 %v695, %v900
    %v936 = vadd.f32 %v633, %v838
    %v937 = vadd.f32 %v698, %v903
    %v938 = vadd.f32 %v636, %v841
    %v939 = vadd.f32 %v701, %v906
    %v940 = vld [vmem:[#allocation2 + $0x3] sm:$0xff]
    %v941 = vld [vmem:[#allocation2 + $0xb] sm:$0xff]
    %v942 = vld [vmem:[#allocation2 + $0x13] sm:$0xff]
    %v943 = vld [vmem:[#allocation2 + $0x1b] sm:$0xff]
    %v944 = vld [vmem:[#allocation2 + $0x23] sm:$0xff]
    %v945 = vld [vmem:[#allocation2 + $0x2b] sm:$0xff]
    %v946 = vld [vmem:[#allocation2 + $0x33] sm:$0xff]
    %v947 = vld [vmem:[#allocation2 + $0x3b] sm:$0xff]
    %v948 = vld [vmem:[#allocation2 + $0x43] sm:$0xff]
    %v949 = vld [vmem:[#allocation2 + $0x4b] sm:$0xff]
    %v950 = vld [vmem:[#allocation2 + $0x53] sm:$0xff]
    %v951 = vld [vmem:[#allocation2 + $0x5b] sm:$0xff]
    %v952 = vld [vmem:[#allocation2 + $0x63] sm:$0xff]
    %v953 = vld [vmem:[#allocation2 + $0x6b] sm:$0xff]
    %v954 = vld [vmem:[#allocation2 + $0x73] sm:$0xff]
    %v955 = vld [vmem:[#allocation2 + $0x7b] sm:$0x1f]
    %s956 = scalar_lea.vmem %s1, 96
    %v957 = vld [vmem:[%s956] sm:$0xff]
    %v958 = vld [vmem:[%s956 + $0x8] sm:$0xff]
    %v959 = vld [vmem:[%s956 + $0x10] sm:$0x1]
    %v960 = vld [vmem:[%s956 + $0x18] sm:$0x1]
    %v962 = vsel %vm84, %v940, 0
    %v965 = vsel %vm84, %v941, 0
    %v968 = vsel %vm84, %v942, 0
    %v971 = vsel %vm84, %v943, 0
    %v974 = vsel %vm84, %v944, 0
    %v977 = vsel %vm84, %v945, 0
    %v980 = vsel %vm84, %v946, 0
    %v983 = vsel %vm84, %v947, 0
    %v986 = vsel %vm84, %v948, 0
    %v989 = vsel %vm84, %v949, 0
    %v992 = vsel %vm84, %v950, 0
    %v995 = vsel %vm84, %v951, 0
    %v998 = vsel %vm84, %v952, 0
    %v1001 = vsel %vm84, %v953, 0
    %v1004 = vsel %vm84, %v954, 0
    %v1007 = vsel %vm84, %v955, 0
    %v1010 = vsel %vm382, %v959, 0
    %v1013 = vsel %vm382, %v960, 0
    %1015 = vmatpush.msra.mxu0 0.0
    %1016 = vmatpush.msra.mxu0 0.0
    %1017 = vmatpush.msra.mxu0 0.0
    %1018 = vmatpush.msra.mxu0 0.0
    %1019 = vmatpush.msra.mxu0 0.0
    %1020 = vmatpush.msra.mxu0 0.0
    %1021 = vmatpush.msra.mxu0 0.0
    %1022 = vmatpush.msra.mxu0 0.0
    %1023 = vmatpush.msra.mxu0 0.0
    %1024 = vmatpush.msra.mxu0 0.0
    %1025 = vmatpush.msra.mxu0 0.0
    %1026 = vmatpush.msra.mxu0 0.0
    %1027 = vmatpush.msra.mxu0 0.0
    %1028 = vmatpush.msra.mxu0 0.0
    %1029 = vmatpush.msra.mxu0 %v1010
    %1030 = vmatpush.msra.mxu0 %v957
    %1031 = vmatmul.f32.gmra.mxu0 %v962
    %v1032 = vpop.f32.mrf.mxu0
    %v1033 = vadd.f32 0.0, %v1032
    %1034 = vmatmul.f32.gmra.mxu0 %v965
    %v1035 = vpop.f32.mrf.mxu0
    %v1036 = vadd.f32 0.0, %v1035
    %1037 = vmatmul.f32.gmra.mxu0 %v968
    %v1038 = vpop.f32.mrf.mxu0
    %v1039 = vadd.f32 0.0, %v1038
    %1040 = vmatmul.f32.gmra.mxu0 %v971
    %v1041 = vpop.f32.mrf.mxu0
    %v1042 = vadd.f32 0.0, %v1041
    %1043 = vmatmul.f32.gmra.mxu0 %v974
    %v1044 = vpop.f32.mrf.mxu0
    %v1045 = vadd.f32 0.0, %v1044
    %1046 = vmatmul.f32.gmra.mxu0 %v977
    %v1047 = vpop.f32.mrf.mxu0
    %v1048 = vadd.f32 0.0, %v1047
    %1049 = vmatmul.f32.gmra.mxu0 %v980
    %v1050 = vpop.f32.mrf.mxu0
    %v1051 = vadd.f32 0.0, %v1050
    %1052 = vmatmul.f32.gmra.mxu0 %v983
    %v1053 = vpop.f32.mrf.mxu0
    %v1054 = vadd.f32 0.0, %v1053
    %1055 = vmatmul.f32.gmra.mxu0 %v986
    %v1056 = vpop.f32.mrf.mxu0
    %v1057 = vadd.f32 0.0, %v1056
    %1058 = vmatmul.f32.gmra.mxu0 %v989
    %v1059 = vpop.f32.mrf.mxu0
    %v1060 = vadd.f32 0.0, %v1059
    %1061 = vmatmul.f32.gmra.mxu0 %v992
    %v1062 = vpop.f32.mrf.mxu0
    %v1063 = vadd.f32 0.0, %v1062
    %1064 = vmatmul.f32.gmra.mxu0 %v995
    %v1065 = vpop.f32.mrf.mxu0
    %v1066 = vadd.f32 0.0, %v1065
    %1067 = vmatmul.f32.gmra.mxu0 %v998
    %v1068 = vpop.f32.mrf.mxu0
    %v1069 = vadd.f32 0.0, %v1068
    %1070 = vmatmul.f32.gmra.mxu0 %v1001
    %v1071 = vpop.f32.mrf.mxu0
    %v1072 = vadd.f32 0.0, %v1071
    %1073 = vmatmul.f32.gmra.mxu0 %v1004
    %v1074 = vpop.f32.mrf.mxu0
    %v1075 = vadd.f32 0.0, %v1074
    %1076 = vmatmul.f32.gmra.mxu0 %v1007
    %v1077 = vpop.f32.mrf.mxu0
    %v1078 = vadd.f32 0.0, %v1077
    %1079 = vdwg.mxu0
    %1080 = vmatpush.msra.mxu0 0.0
    %1081 = vmatpush.msra.mxu0 0.0
    %1082 = vmatpush.msra.mxu0 0.0
    %1083 = vmatpush.msra.mxu0 0.0
    %1084 = vmatpush.msra.mxu0 0.0
    %1085 = vmatpush.msra.mxu0 0.0
    %1086 = vmatpush.msra.mxu0 0.0
    %1087 = vmatpush.msra.mxu0 0.0
    %1088 = vmatpush.msra.mxu0 0.0
    %1089 = vmatpush.msra.mxu0 0.0
    %1090 = vmatpush.msra.mxu0 0.0
    %1091 = vmatpush.msra.mxu0 0.0
    %1092 = vmatpush.msra.mxu0 0.0
    %1093 = vmatpush.msra.mxu0 0.0
    %1094 = vmatpush.msra.mxu0 %v1013
    %1095 = vmatpush.msra.mxu0 %v958
    %1096 = vmatmul.f32.gmra.mxu0 %v962
    %v1097 = vpop.f32.mrf.mxu0
    %v1098 = vadd.f32 0.0, %v1097
    %1099 = vmatmul.f32.gmra.mxu0 %v965
    %v1100 = vpop.f32.mrf.mxu0
    %v1101 = vadd.f32 0.0, %v1100
    %1102 = vmatmul.f32.gmra.mxu0 %v968
    %v1103 = vpop.f32.mrf.mxu0
    %v1104 = vadd.f32 0.0, %v1103
    %1105 = vmatmul.f32.gmra.mxu0 %v971
    %v1106 = vpop.f32.mrf.mxu0
    %v1107 = vadd.f32 0.0, %v1106
    %1108 = vmatmul.f32.gmra.mxu0 %v974
    %v1109 = vpop.f32.mrf.mxu0
    %v1110 = vadd.f32 0.0, %v1109
    %1111 = vmatmul.f32.gmra.mxu0 %v977
    %v1112 = vpop.f32.mrf.mxu0
    %v1113 = vadd.f32 0.0, %v1112
    %1114 = vmatmul.f32.gmra.mxu0 %v980
    %v1115 = vpop.f32.mrf.mxu0
    %v1116 = vadd.f32 0.0, %v1115
    %1117 = vmatmul.f32.gmra.mxu0 %v983
    %v1118 = vpop.f32.mrf.mxu0
    %v1119 = vadd.f32 0.0, %v1118
    %1120 = vmatmul.f32.gmra.mxu0 %v986
    %v1121 = vpop.f32.mrf.mxu0
    %v1122 = vadd.f32 0.0, %v1121
    %1123 = vmatmul.f32.gmra.mxu0 %v989
    %v1124 = vpop.f32.mrf.mxu0
    %v1125 = vadd.f32 0.0, %v1124
    %1126 = vmatmul.f32.gmra.mxu0 %v992
    %v1127 = vpop.f32.mrf.mxu0
    %v1128 = vadd.f32 0.0, %v1127
    %1129 = vmatmul.f32.gmra.mxu0 %v995
    %v1130 = vpop.f32.mrf.mxu0
    %v1131 = vadd.f32 0.0, %v1130
    %1132 = vmatmul.f32.gmra.mxu0 %v998
    %v1133 = vpop.f32.mrf.mxu0
    %v1134 = vadd.f32 0.0, %v1133
    %1135 = vmatmul.f32.gmra.mxu0 %v1001
    %v1136 = vpop.f32.mrf.mxu0
    %v1137 = vadd.f32 0.0, %v1136
    %1138 = vmatmul.f32.gmra.mxu0 %v1004
    %v1139 = vpop.f32.mrf.mxu0
    %v1140 = vadd.f32 0.0, %v1139
    %1141 = vmatmul.f32.gmra.mxu0 %v1007
    %v1142 = vpop.f32.mrf.mxu0
    %v1143 = vadd.f32 0.0, %v1142
    %1144 = vdwg.mxu0
    %v1145 = vadd.f32 %v908, %v1033
    %v1146 = vadd.f32 %v909, %v1098
    %v1147 = vadd.f32 %v910, %v1036
    %v1148 = vadd.f32 %v911, %v1101
    %v1149 = vadd.f32 %v912, %v1039
    %v1150 = vadd.f32 %v913, %v1104
    %v1151 = vadd.f32 %v914, %v1042
    %v1152 = vadd.f32 %v915, %v1107
    %v1153 = vadd.f32 %v916, %v1045
    %v1154 = vadd.f32 %v917, %v1110
    %v1155 = vadd.f32 %v918, %v1048
    %v1156 = vadd.f32 %v919, %v1113
    %v1157 = vadd.f32 %v920, %v1051
    %v1158 = vadd.f32 %v921, %v1116
    %v1159 = vadd.f32 %v922, %v1054
    %v1160 = vadd.f32 %v923, %v1119
    %v1161 = vadd.f32 %v924, %v1057
    %v1162 = vadd.f32 %v925, %v1122
    %v1163 = vadd.f32 %v926, %v1060
    %v1164 = vadd.f32 %v927, %v1125
    %v1165 = vadd.f32 %v928, %v1063
    %v1166 = vadd.f32 %v929, %v1128
    %v1167 = vadd.f32 %v930, %v1066
    %v1168 = vadd.f32 %v931, %v1131
    %v1169 = vadd.f32 %v932, %v1069
    %v1170 = vadd.f32 %v933, %v1134
    %v1171 = vadd.f32 %v934, %v1072
    %v1172 = vadd.f32 %v935, %v1137
    %v1173 = vadd.f32 %v936, %v1075
    %v1174 = vadd.f32 %v937, %v1140
    %v1175 = vadd.f32 %v938, %v1078
    %v1176 = vadd.f32 %v939, %v1143
    %v1177 = vld [vmem:[#allocation2 + $0x4] sm:$0xff]
    %v1178 = vld [vmem:[#allocation2 + $0xc] sm:$0xff]
    %v1179 = vld [vmem:[#allocation2 + $0x14] sm:$0xff]
    %v1180 = vld [vmem:[#allocation2 + $0x1c] sm:$0xff]
    %v1181 = vld [vmem:[#allocation2 + $0x24] sm:$0xff]
    %v1182 = vld [vmem:[#allocation2 + $0x2c] sm:$0xff]
    %v1183 = vld [vmem:[#allocation2 + $0x34] sm:$0xff]
    %v1184 = vld [vmem:[#allocation2 + $0x3c] sm:$0xff]
    %v1185 = vld [vmem:[#allocation2 + $0x44] sm:$0xff]
    %v1186 = vld [vmem:[#allocation2 + $0x4c] sm:$0xff]
    %v1187 = vld [vmem:[#allocation2 + $0x54] sm:$0xff]
    %v1188 = vld [vmem:[#allocation2 + $0x5c] sm:$0xff]
    %v1189 = vld [vmem:[#allocation2 + $0x64] sm:$0xff]
    %v1190 = vld [vmem:[#allocation2 + $0x6c] sm:$0xff]
    %v1191 = vld [vmem:[#allocation2 + $0x74] sm:$0xff]
    %v1192 = vld [vmem:[#allocation2 + $0x7c] sm:$0x1f]
    %s1193 = scalar_lea.vmem %s1, 128
    %v1194 = vld [vmem:[%s1193] sm:$0xff]
    %v1195 = vld [vmem:[%s1193 + $0x8] sm:$0xff]
    %v1196 = vld [vmem:[%s1193 + $0x10] sm:$0x1]
    %v1197 = vld [vmem:[%s1193 + $0x18] sm:$0x1]
    %v1199 = vsel %vm84, %v1177, 0
    %v1202 = vsel %vm84, %v1178, 0
    %v1205 = vsel %vm84, %v1179, 0
    %v1208 = vsel %vm84, %v1180, 0
    %v1211 = vsel %vm84, %v1181, 0
    %v1214 = vsel %vm84, %v1182, 0
    %v1217 = vsel %vm84, %v1183, 0
    %v1220 = vsel %vm84, %v1184, 0
    %v1223 = vsel %vm84, %v1185, 0
    %v1226 = vsel %vm84, %v1186, 0
    %v1229 = vsel %vm84, %v1187, 0
    %v1232 = vsel %vm84, %v1188, 0
    %v1235 = vsel %vm84, %v1189, 0
    %v1238 = vsel %vm84, %v1190, 0
    %v1241 = vsel %vm84, %v1191, 0
    %v1244 = vsel %vm84, %v1192, 0
    %v1247 = vsel %vm382, %v1196, 0
    %v1250 = vsel %vm382, %v1197, 0
    %1252 = vmatpush.msra.mxu0 0.0
    %1253 = vmatpush.msra.mxu0 0.0
    %1254 = vmatpush.msra.mxu0 0.0
    %1255 = vmatpush.msra.mxu0 0.0
    %1256 = vmatpush.msra.mxu0 0.0
    %1257 = vmatpush.msra.mxu0 0.0
    %1258 = vmatpush.msra.mxu0 0.0
    %1259 = vmatpush.msra.mxu0 0.0
    %1260 = vmatpush.msra.mxu0 0.0
    %1261 = vmatpush.msra.mxu0 0.0
    %1262 = vmatpush.msra.mxu0 0.0
    %1263 = vmatpush.msra.mxu0 0.0
    %1264 = vmatpush.msra.mxu0 0.0
    %1265 = vmatpush.msra.mxu0 0.0
    %1266 = vmatpush.msra.mxu0 %v1247
    %1267 = vmatpush.msra.mxu0 %v1194
    %1268 = vmatmul.f32.gmra.mxu0 %v1199
    %v1269 = vpop.f32.mrf.mxu0
    %v1270 = vadd.f32 0.0, %v1269
    %1271 = vmatmul.f32.gmra.mxu0 %v1202
    %v1272 = vpop.f32.mrf.mxu0
    %v1273 = vadd.f32 0.0, %v1272
    %1274 = vmatmul.f32.gmra.mxu0 %v1205
    %v1275 = vpop.f32.mrf.mxu0
    %v1276 = vadd.f32 0.0, %v1275
    %1277 = vmatmul.f32.gmra.mxu0 %v1208
    %v1278 = vpop.f32.mrf.mxu0
    %v1279 = vadd.f32 0.0, %v1278
    %1280 = vmatmul.f32.gmra.mxu0 %v1211
    %v1281 = vpop.f32.mrf.mxu0
    %v1282 = vadd.f32 0.0, %v1281
    %1283 = vmatmul.f32.gmra.mxu0 %v1214
    %v1284 = vpop.f32.mrf.mxu0
    %v1285 = vadd.f32 0.0, %v1284
    %1286 = vmatmul.f32.gmra.mxu0 %v1217
    %v1287 = vpop.f32.mrf.mxu0
    %v1288 = vadd.f32 0.0, %v1287
    %1289 = vmatmul.f32.gmra.mxu0 %v1220
    %v1290 = vpop.f32.mrf.mxu0
    %v1291 = vadd.f32 0.0, %v1290
    %1292 = vmatmul.f32.gmra.mxu0 %v1223
    %v1293 = vpop.f32.mrf.mxu0
    %v1294 = vadd.f32 0.0, %v1293
    %1295 = vmatmul.f32.gmra.mxu0 %v1226
    %v1296 = vpop.f32.mrf.mxu0
    %v1297 = vadd.f32 0.0, %v1296
    %1298 = vmatmul.f32.gmra.mxu0 %v1229
    %v1299 = vpop.f32.mrf.mxu0
    %v1300 = vadd.f32 0.0, %v1299
    %1301 = vmatmul.f32.gmra.mxu0 %v1232
    %v1302 = vpop.f32.mrf.mxu0
    %v1303 = vadd.f32 0.0, %v1302
    %1304 = vmatmul.f32.gmra.mxu0 %v1235
    %v1305 = vpop.f32.mrf.mxu0
    %v1306 = vadd.f32 0.0, %v1305
    %1307 = vmatmul.f32.gmra.mxu0 %v1238
    %v1308 = vpop.f32.mrf.mxu0
    %v1309 = vadd.f32 0.0, %v1308
    %1310 = vmatmul.f32.gmra.mxu0 %v1241
    %v1311 = vpop.f32.mrf.mxu0
    %v1312 = vadd.f32 0.0, %v1311
    %1313 = vmatmul.f32.gmra.mxu0 %v1244
    %v1314 = vpop.f32.mrf.mxu0
    %v1315 = vadd.f32 0.0, %v1314
    %1316 = vdwg.mxu0
    %1317 = vmatpush.msra.mxu0 0.0
    %1318 = vmatpush.msra.mxu0 0.0
    %1319 = vmatpush.msra.mxu0 0.0
    %1320 = vmatpush.msra.mxu0 0.0
    %1321 = vmatpush.msra.mxu0 0.0
    %1322 = vmatpush.msra.mxu0 0.0
    %1323 = vmatpush.msra.mxu0 0.0
    %1324 = vmatpush.msra.mxu0 0.0
    %1325 = vmatpush.msra.mxu0 0.0
    %1326 = vmatpush.msra.mxu0 0.0
    %1327 = vmatpush.msra.mxu0 0.0
    %1328 = vmatpush.msra.mxu0 0.0
    %1329 = vmatpush.msra.mxu0 0.0
    %1330 = vmatpush.msra.mxu0 0.0
    %1331 = vmatpush.msra.mxu0 %v1250
    %1332 = vmatpush.msra.mxu0 %v1195
    %1333 = vmatmul.f32.gmra.mxu0 %v1199
    %v1334 = vpop.f32.mrf.mxu0
    %v1335 = vadd.f32 0.0, %v1334
    %1336 = vmatmul.f32.gmra.mxu0 %v1202
    %v1337 = vpop.f32.mrf.mxu0
    %v1338 = vadd.f32 0.0, %v1337
    %1339 = vmatmul.f32.gmra.mxu0 %v1205
    %v1340 = vpop.f32.mrf.mxu0
    %v1341 = vadd.f32 0.0, %v1340
    %1342 = vmatmul.f32.gmra.mxu0 %v1208
    %v1343 = vpop.f32.mrf.mxu0
    %v1344 = vadd.f32 0.0, %v1343
    %1345 = vmatmul.f32.gmra.mxu0 %v1211
    %v1346 = vpop.f32.mrf.mxu0
    %v1347 = vadd.f32 0.0, %v1346
    %1348 = vmatmul.f32.gmra.mxu0 %v1214
    %v1349 = vpop.f32.mrf.mxu0
    %v1350 = vadd.f32 0.0, %v1349
    %1351 = vmatmul.f32.gmra.mxu0 %v1217
    %v1352 = vpop.f32.mrf.mxu0
    %v1353 = vadd.f32 0.0, %v1352
    %1354 = vmatmul.f32.gmra.mxu0 %v1220
    %v1355 = vpop.f32.mrf.mxu0
    %v1356 = vadd.f32 0.0, %v1355
    %1357 = vmatmul.f32.gmra.mxu0 %v1223
    %v1358 = vpop.f32.mrf.mxu0
    %v1359 = vadd.f32 0.0, %v1358
    %1360 = vmatmul.f32.gmra.mxu0 %v1226
    %v1361 = vpop.f32.mrf.mxu0
    %v1362 = vadd.f32 0.0, %v1361
    %1363 = vmatmul.f32.gmra.mxu0 %v1229
    %v1364 = vpop.f32.mrf.mxu0
    %v1365 = vadd.f32 0.0, %v1364
    %1366 = vmatmul.f32.gmra.mxu0 %v1232
    %v1367 = vpop.f32.mrf.mxu0
    %v1368 = vadd.f32 0.0, %v1367
    %1369 = vmatmul.f32.gmra.mxu0 %v1235
    %v1370 = vpop.f32.mrf.mxu0
    %v1371 = vadd.f32 0.0, %v1370
    %1372 = vmatmul.f32.gmra.mxu0 %v1238
    %v1373 = vpop.f32.mrf.mxu0
    %v1374 = vadd.f32 0.0, %v1373
    %1375 = vmatmul.f32.gmra.mxu0 %v1241
    %v1376 = vpop.f32.mrf.mxu0
    %v1377 = vadd.f32 0.0, %v1376
    %1378 = vmatmul.f32.gmra.mxu0 %v1244
    %v1379 = vpop.f32.mrf.mxu0
    %v1380 = vadd.f32 0.0, %v1379
    %1381 = vdwg.mxu0
    %v1382 = vadd.f32 %v1145, %v1270
    %v1383 = vadd.f32 %v1146, %v1335
    %v1384 = vadd.f32 %v1147, %v1273
    %v1385 = vadd.f32 %v1148, %v1338
    %v1386 = vadd.f32 %v1149, %v1276
    %v1387 = vadd.f32 %v1150, %v1341
    %v1388 = vadd.f32 %v1151, %v1279
    %v1389 = vadd.f32 %v1152, %v1344
    %v1390 = vadd.f32 %v1153, %v1282
    %v1391 = vadd.f32 %v1154, %v1347
    %v1392 = vadd.f32 %v1155, %v1285
    %v1393 = vadd.f32 %v1156, %v1350
    %v1394 = vadd.f32 %v1157, %v1288
    %v1395 = vadd.f32 %v1158, %v1353
    %v1396 = vadd.f32 %v1159, %v1291
    %v1397 = vadd.f32 %v1160, %v1356
    %v1398 = vadd.f32 %v1161, %v1294
    %v1399 = vadd.f32 %v1162, %v1359
    %v1400 = vadd.f32 %v1163, %v1297
    %v1401 = vadd.f32 %v1164, %v1362
    %v1402 = vadd.f32 %v1165, %v1300
    %v1403 = vadd.f32 %v1166, %v1365
    %v1404 = vadd.f32 %v1167, %v1303
    %v1405 = vadd.f32 %v1168, %v1368
    %v1406 = vadd.f32 %v1169, %v1306
    %v1407 = vadd.f32 %v1170, %v1371
    %v1408 = vadd.f32 %v1171, %v1309
    %v1409 = vadd.f32 %v1172, %v1374
    %v1410 = vadd.f32 %v1173, %v1312
    %v1411 = vadd.f32 %v1174, %v1377
    %v1412 = vadd.f32 %v1175, %v1315
    %v1413 = vadd.f32 %v1176, %v1380
    %v1414 = vld [vmem:[#allocation2 + $0x5] sm:$0xff]
    %v1415 = vld [vmem:[#allocation2 + $0xd] sm:$0xff]
    %v1416 = vld [vmem:[#allocation2 + $0x15] sm:$0xff]
    %v1417 = vld [vmem:[#allocation2 + $0x1d] sm:$0xff]
    %v1418 = vld [vmem:[#allocation2 + $0x25] sm:$0xff]
    %v1419 = vld [vmem:[#allocation2 + $0x2d] sm:$0xff]
    %v1420 = vld [vmem:[#allocation2 + $0x35] sm:$0xff]
    %v1421 = vld [vmem:[#allocation2 + $0x3d] sm:$0xff]
    %v1422 = vld [vmem:[#allocation2 + $0x45] sm:$0xff]
    %v1423 = vld [vmem:[#allocation2 + $0x4d] sm:$0xff]
    %v1424 = vld [vmem:[#allocation2 + $0x55] sm:$0xff]
    %v1425 = vld [vmem:[#allocation2 + $0x5d] sm:$0xff]
    %v1426 = vld [vmem:[#allocation2 + $0x65] sm:$0xff]
    %v1427 = vld [vmem:[#allocation2 + $0x6d] sm:$0xff]
    %v1428 = vld [vmem:[#allocation2 + $0x75] sm:$0xff]
    %v1429 = vld [vmem:[#allocation2 + $0x7d] sm:$0x1f]
    %s1430 = scalar_lea.vmem %s1, 160
    %v1431 = vld [vmem:[%s1430] sm:$0xff]
    %v1432 = vld [vmem:[%s1430 + $0x8] sm:$0xff]
    %v1433 = vld [vmem:[%s1430 + $0x10] sm:$0x1]
    %v1434 = vld [vmem:[%s1430 + $0x18] sm:$0x1]
    %v1436 = vsel %vm84, %v1414, 0
    %v1439 = vsel %vm84, %v1415, 0
    %v1442 = vsel %vm84, %v1416, 0
    %v1445 = vsel %vm84, %v1417, 0
    %v1448 = vsel %vm84, %v1418, 0
    %v1451 = vsel %vm84, %v1419, 0
    %v1454 = vsel %vm84, %v1420, 0
    %v1457 = vsel %vm84, %v1421, 0
    %v1460 = vsel %vm84, %v1422, 0
    %v1463 = vsel %vm84, %v1423, 0
    %v1466 = vsel %vm84, %v1424, 0
    %v1469 = vsel %vm84, %v1425, 0
    %v1472 = vsel %vm84, %v1426, 0
    %v1475 = vsel %vm84, %v1427, 0
    %v1478 = vsel %vm84, %v1428, 0
    %v1481 = vsel %vm84, %v1429, 0
    %v1484 = vsel %vm382, %v1433, 0
    %v1487 = vsel %vm382, %v1434, 0
    %1489 = vmatpush.msra.mxu0 0.0
    %1490 = vmatpush.msra.mxu0 0.0
    %1491 = vmatpush.msra.mxu0 0.0
    %1492 = vmatpush.msra.mxu0 0.0
    %1493 = vmatpush.msra.mxu0 0.0
    %1494 = vmatpush.msra.mxu0 0.0
    %1495 = vmatpush.msra.mxu0 0.0
    %1496 = vmatpush.msra.mxu0 0.0
    %1497 = vmatpush.msra.mxu0 0.0
    %1498 = vmatpush.msra.mxu0 0.0
    %1499 = vmatpush.msra.mxu0 0.0
    %1500 = vmatpush.msra.mxu0 0.0
    %1501 = vmatpush.msra.mxu0 0.0
    %1502 = vmatpush.msra.mxu0 0.0
    %1503 = vmatpush.msra.mxu0 %v1484
    %1504 = vmatpush.msra.mxu0 %v1431
    %1505 = vmatmul.f32.gmra.mxu0 %v1436
    %v1506 = vpop.f32.mrf.mxu0
    %v1507 = vadd.f32 0.0, %v1506
    %1508 = vmatmul.f32.gmra.mxu0 %v1439
    %v1509 = vpop.f32.mrf.mxu0
    %v1510 = vadd.f32 0.0, %v1509
    %1511 = vmatmul.f32.gmra.mxu0 %v1442
    %v1512 = vpop.f32.mrf.mxu0
    %v1513 = vadd.f32 0.0, %v1512
    %1514 = vmatmul.f32.gmra.mxu0 %v1445
    %v1515 = vpop.f32.mrf.mxu0
    %v1516 = vadd.f32 0.0, %v1515
    %1517 = vmatmul.f32.gmra.mxu0 %v1448
    %v1518 = vpop.f32.mrf.mxu0
    %v1519 = vadd.f32 0.0, %v1518
    %1520 = vmatmul.f32.gmra.mxu0 %v1451
    %v1521 = vpop.f32.mrf.mxu0
    %v1522 = vadd.f32 0.0, %v1521
    %1523 = vmatmul.f32.gmra.mxu0 %v1454
    %v1524 = vpop.f32.mrf.mxu0
    %v1525 = vadd.f32 0.0, %v1524
    %1526 = vmatmul.f32.gmra.mxu0 %v1457
    %v1527 = vpop.f32.mrf.mxu0
    %v1528 = vadd.f32 0.0, %v1527
    %1529 = vmatmul.f32.gmra.mxu0 %v1460
    %v1530 = vpop.f32.mrf.mxu0
    %v1531 = vadd.f32 0.0, %v1530
    %1532 = vmatmul.f32.gmra.mxu0 %v1463
    %v1533 = vpop.f32.mrf.mxu0
    %v1534 = vadd.f32 0.0, %v1533
    %1535 = vmatmul.f32.gmra.mxu0 %v1466
    %v1536 = vpop.f32.mrf.mxu0
    %v1537 = vadd.f32 0.0, %v1536
    %1538 = vmatmul.f32.gmra.mxu0 %v1469
    %v1539 = vpop.f32.mrf.mxu0
    %v1540 = vadd.f32 0.0, %v1539
    %1541 = vmatmul.f32.gmra.mxu0 %v1472
    %v1542 = vpop.f32.mrf.mxu0
    %v1543 = vadd.f32 0.0, %v1542
    %1544 = vmatmul.f32.gmra.mxu0 %v1475
    %v1545 = vpop.f32.mrf.mxu0
    %v1546 = vadd.f32 0.0, %v1545
    %1547 = vmatmul.f32.gmra.mxu0 %v1478
    %v1548 = vpop.f32.mrf.mxu0
    %v1549 = vadd.f32 0.0, %v1548
    %1550 = vmatmul.f32.gmra.mxu0 %v1481
    %v1551 = vpop.f32.mrf.mxu0
    %v1552 = vadd.f32 0.0, %v1551
    %1553 = vdwg.mxu0
    %1554 = vmatpush.msra.mxu0 0.0
    %1555 = vmatpush.msra.mxu0 0.0
    %1556 = vmatpush.msra.mxu0 0.0
    %1557 = vmatpush.msra.mxu0 0.0
    %1558 = vmatpush.msra.mxu0 0.0
    %1559 = vmatpush.msra.mxu0 0.0
    %1560 = vmatpush.msra.mxu0 0.0
    %1561 = vmatpush.msra.mxu0 0.0
    %1562 = vmatpush.msra.mxu0 0.0
    %1563 = vmatpush.msra.mxu0 0.0
    %1564 = vmatpush.msra.mxu0 0.0
    %1565 = vmatpush.msra.mxu0 0.0
    %1566 = vmatpush.msra.mxu0 0.0
    %1567 = vmatpush.msra.mxu0 0.0
    %1568 = vmatpush.msra.mxu0 %v1487
    %1569 = vmatpush.msra.mxu0 %v1432
    %1570 = vmatmul.f32.gmra.mxu0 %v1436
    %v1571 = vpop.f32.mrf.mxu0
    %v1572 = vadd.f32 0.0, %v1571
    %1573 = vmatmul.f32.gmra.mxu0 %v1439
    %v1574 = vpop.f32.mrf.mxu0
    %v1575 = vadd.f32 0.0, %v1574
    %1576 = vmatmul.f32.gmra.mxu0 %v1442
    %v1577 = vpop.f32.mrf.mxu0
    %v1578 = vadd.f32 0.0, %v1577
    %1579 = vmatmul.f32.gmra.mxu0 %v1445
    %v1580 = vpop.f32.mrf.mxu0
    %v1581 = vadd.f32 0.0, %v1580
    %1582 = vmatmul.f32.gmra.mxu0 %v1448
    %v1583 = vpop.f32.mrf.mxu0
    %v1584 = vadd.f32 0.0, %v1583
    %1585 = vmatmul.f32.gmra.mxu0 %v1451
    %v1586 = vpop.f32.mrf.mxu0
    %v1587 = vadd.f32 0.0, %v1586
    %1588 = vmatmul.f32.gmra.mxu0 %v1454
    %v1589 = vpop.f32.mrf.mxu0
    %v1590 = vadd.f32 0.0, %v1589
    %1591 = vmatmul.f32.gmra.mxu0 %v1457
    %v1592 = vpop.f32.mrf.mxu0
    %v1593 = vadd.f32 0.0, %v1592
    %1594 = vmatmul.f32.gmra.mxu0 %v1460
    %v1595 = vpop.f32.mrf.mxu0
    %v1596 = vadd.f32 0.0, %v1595
    %1597 = vmatmul.f32.gmra.mxu0 %v1463
    %v1598 = vpop.f32.mrf.mxu0
    %v1599 = vadd.f32 0.0, %v1598
    %1600 = vmatmul.f32.gmra.mxu0 %v1466
    %v1601 = vpop.f32.mrf.mxu0
    %v1602 = vadd.f32 0.0, %v1601
    %1603 = vmatmul.f32.gmra.mxu0 %v1469
    %v1604 = vpop.f32.mrf.mxu0
    %v1605 = vadd.f32 0.0, %v1604
    %1606 = vmatmul.f32.gmra.mxu0 %v1472
    %v1607 = vpop.f32.mrf.mxu0
    %v1608 = vadd.f32 0.0, %v1607
    %1609 = vmatmul.f32.gmra.mxu0 %v1475
    %v1610 = vpop.f32.mrf.mxu0
    %v1611 = vadd.f32 0.0, %v1610
    %1612 = vmatmul.f32.gmra.mxu0 %v1478
    %v1613 = vpop.f32.mrf.mxu0
    %v1614 = vadd.f32 0.0, %v1613
    %1615 = vmatmul.f32.gmra.mxu0 %v1481
    %v1616 = vpop.f32.mrf.mxu0
    %v1617 = vadd.f32 0.0, %v1616
    %1618 = vdwg.mxu0
    %v1619 = vadd.f32 %v1382, %v1507
    %v1620 = vadd.f32 %v1383, %v1572
    %v1621 = vadd.f32 %v1384, %v1510
    %v1622 = vadd.f32 %v1385, %v1575
    %v1623 = vadd.f32 %v1386, %v1513
    %v1624 = vadd.f32 %v1387, %v1578
    %v1625 = vadd.f32 %v1388, %v1516
    %v1626 = vadd.f32 %v1389, %v1581
    %v1627 = vadd.f32 %v1390, %v1519
    %v1628 = vadd.f32 %v1391, %v1584
    %v1629 = vadd.f32 %v1392, %v1522
    %v1630 = vadd.f32 %v1393, %v1587
    %v1631 = vadd.f32 %v1394, %v1525
    %v1632 = vadd.f32 %v1395, %v1590
    %v1633 = vadd.f32 %v1396, %v1528
    %v1634 = vadd.f32 %v1397, %v1593
    %v1635 = vadd.f32 %v1398, %v1531
    %v1636 = vadd.f32 %v1399, %v1596
    %v1637 = vadd.f32 %v1400, %v1534
    %v1638 = vadd.f32 %v1401, %v1599
    %v1639 = vadd.f32 %v1402, %v1537
    %v1640 = vadd.f32 %v1403, %v1602
    %v1641 = vadd.f32 %v1404, %v1540
    %v1642 = vadd.f32 %v1405, %v1605
    %v1643 = vadd.f32 %v1406, %v1543
    %v1644 = vadd.f32 %v1407, %v1608
    %v1645 = vadd.f32 %v1408, %v1546
    %v1646 = vadd.f32 %v1409, %v1611
    %v1647 = vadd.f32 %v1410, %v1549
    %v1648 = vadd.f32 %v1411, %v1614
    %v1649 = vadd.f32 %v1412, %v1552
    %v1650 = vadd.f32 %v1413, %v1617
    %v1651 = vld [vmem:[%s2] sm:$0x3]
    %v1653 = vperm.slane %v1651, 0
    %v1654 = vperm.slane %v1651, 1
    %vm1657 = vcmask 1022976
    %v1659 = vsel %vm1657, %v285, 0
    %v1662 = vsel %vm1657, %v286, 0
    %v1665 = vsel %vm1657, %v287, 0
    %v1668 = vsel %vm1657, %v288, 0
    %v1671 = vsel %vm1657, %v289, 0
    %v1674 = vsel %vm1657, %v290, 0
    %v1677 = vsel %vm1657, %v291, 0
    %v1680 = vsel %vm1657, %v292, 0
    %vm1682 = vcmask 1044480
    %v1684 = vsel %vm1682, %v1649, 0
    %v1687 = vsel %vm1682, %v1650, 0
    %1689 = vmatpush.msra.mxu0 %v1684
    %1690 = vmatpush.msra.mxu0 %v1647
    %1691 = vmatpush.msra.mxu0 %v1645
    %1692 = vmatpush.msra.mxu0 %v1643
    %1693 = vmatpush.msra.mxu0 %v1641
    %1694 = vmatpush.msra.mxu0 %v1639
    %1695 = vmatpush.msra.mxu0 %v1637
    %1696 = vmatpush.msra.mxu0 %v1635
    %1697 = vmatpush.msra.mxu0 %v1633
    %1698 = vmatpush.msra.mxu0 %v1631
    %1699 = vmatpush.msra.mxu0 %v1629
    %1700 = vmatpush.msra.mxu0 %v1627
    %1701 = vmatpush.msra.mxu0 %v1625
    %1702 = vmatpush.msra.mxu0 %v1623
    %1703 = vmatpush.msra.mxu0 %v1621
    %1704 = vmatpush.msra.mxu0 %v1619
    %1705 = vmatmul.f32.gmra.mxu0 %v1659
    %v1706 = vpop.f32.mrf.mxu0
    %v1707 = vadd.f32 %v1653, %v1706
    %1708 = vmatmul.f32.gmra.mxu0 %v1662
    %v1709 = vpop.f32.mrf.mxu0
    %v1710 = vadd.f32 %v1653, %v1709
    %1711 = vmatmul.f32.gmra.mxu0 %v1665
    %v1712 = vpop.f32.mrf.mxu0
    %v1713 = vadd.f32 %v1653, %v1712
    %1714 = vmatmul.f32.gmra.mxu0 %v1668
    %v1715 = vpop.f32.mrf.mxu0
    %v1716 = vadd.f32 %v1653, %v1715
    %1717 = vmatmul.f32.gmra.mxu0 %v1671
    %v1718 = vpop.f32.mrf.mxu0
    %v1719 = vadd.f32 %v1653, %v1718
    %1720 = vmatmul.f32.gmra.mxu0 %v1674
    %v1721 = vpop.f32.mrf.mxu0
    %v1722 = vadd.f32 %v1653, %v1721
    %1723 = vmatmul.f32.gmra.mxu0 %v1677
    %v1724 = vpop.f32.mrf.mxu0
    %v1725 = vadd.f32 %v1653, %v1724
    %1726 = vmatmul.f32.gmra.mxu0 %v1680
    %v1727 = vpop.f32.mrf.mxu0
    %v1728 = vadd.f32 %v1653, %v1727
    %1729 = vdwg.mxu0
    %1730 = vmatpush.msra.mxu0 %v1687
    %1731 = vmatpush.msra.mxu0 %v1648
    %1732 = vmatpush.msra.mxu0 %v1646
    %1733 = vmatpush.msra.mxu0 %v1644
    %1734 = vmatpush.msra.mxu0 %v1642
    %1735 = vmatpush.msra.mxu0 %v1640
    %1736 = vmatpush.msra.mxu0 %v1638
    %1737 = vmatpush.msra.mxu0 %v1636
    %1738 = vmatpush.msra.mxu0 %v1634
    %1739 = vmatpush.msra.mxu0 %v1632
    %1740 = vmatpush.msra.mxu0 %v1630
    %1741 = vmatpush.msra.mxu0 %v1628
    %1742 = vmatpush.msra.mxu0 %v1626
    %1743 = vmatpush.msra.mxu0 %v1624
    %1744 = vmatpush.msra.mxu0 %v1622
    %1745 = vmatpush.msra.mxu0 %v1620
    %1746 = vmatmul.f32.gmra.mxu0 %v1659
    %v1747 = vpop.f32.mrf.mxu0
    %v1748 = vadd.f32 %v1654, %v1747
    %1749 = vmatmul.f32.gmra.mxu0 %v1662
    %v1750 = vpop.f32.mrf.mxu0
    %v1751 = vadd.f32 %v1654, %v1750
    %1752 = vmatmul.f32.gmra.mxu0 %v1665
    %v1753 = vpop.f32.mrf.mxu0
    %v1754 = vadd.f32 %v1654, %v1753
    %1755 = vmatmul.f32.gmra.mxu0 %v1668
    %v1756 = vpop.f32.mrf.mxu0
    %v1757 = vadd.f32 %v1654, %v1756
    %1758 = vmatmul.f32.gmra.mxu0 %v1671
    %v1759 = vpop.f32.mrf.mxu0
    %v1760 = vadd.f32 %v1654, %v1759
    %1761 = vmatmul.f32.gmra.mxu0 %v1674
    %v1762 = vpop.f32.mrf.mxu0
    %v1763 = vadd.f32 %v1654, %v1762
    %1764 = vmatmul.f32.gmra.mxu0 %v1677
    %v1765 = vpop.f32.mrf.mxu0
    %v1766 = vadd.f32 %v1654, %v1765
    %1767 = vmatmul.f32.gmra.mxu0 %v1680
    %v1768 = vpop.f32.mrf.mxu0
    %v1769 = vadd.f32 %v1654, %v1768
    %1770 = vdwg.mxu0
    %v1771 = vmax.f32 %v1707, 0.0
    %v1772 = vmax.f32 %v1748, 0.0
    %v1773 = vmax.f32 %v1710, 0.0
    %v1774 = vmax.f32 %v1751, 0.0
    %v1775 = vmax.f32 %v1713, 0.0
    %v1776 = vmax.f32 %v1754, 0.0
    %v1777 = vmax.f32 %v1716, 0.0
    %v1778 = vmax.f32 %v1757, 0.0
    %v1779 = vmax.f32 %v1719, 0.0
    %v1780 = vmax.f32 %v1760, 0.0
    %v1781 = vmax.f32 %v1722, 0.0
    %v1782 = vmax.f32 %v1763, 0.0
    %v1783 = vmax.f32 %v1725, 0.0
    %v1784 = vmax.f32 %v1766, 0.0
    %v1785 = vmax.f32 %v1728, 0.0
    %v1786 = vmax.f32 %v1769, 0.0
    %v1787 = vld [vmem:[%s3] sm:$0x3]
    %v1789 = vperm.slane %v1787, 0
    %v1790 = vperm.slane %v1787, 1
    %v1793 = vadd.f32 %v1771, %v1789
    %v1794 = vadd.f32 %v1772, %v1790
    %v1795 = vadd.f32 %v1773, %v1789
    %v1796 = vadd.f32 %v1774, %v1790
    %v1797 = vadd.f32 %v1775, %v1789
    %v1798 = vadd.f32 %v1776, %v1790
    %v1799 = vadd.f32 %v1777, %v1789
    %v1800 = vadd.f32 %v1778, %v1790
    %v1801 = vadd.f32 %v1779, %v1789
    %v1802 = vadd.f32 %v1780, %v1790
    %v1803 = vadd.f32 %v1781, %v1789
    %v1804 = vadd.f32 %v1782, %v1790
    %v1805 = vadd.f32 %v1783, %v1789
    %v1806 = vadd.f32 %v1784, %v1790
    %v1807 = vadd.f32 %v1785, %v1789
    %v1808 = vadd.f32 %v1786, %v1790
    %s1809 = scalar_lea.vmem [#allocation2], 136
    %v1810 = vld [vmem:[%s1809] sm:$0xff]
    %v1811 = vld [vmem:[%s1809 + $0x8] sm:$0xff]
    %v1812 = vld [vmem:[%s1809 + $0x10] sm:$0xff]
    %v1813 = vld [vmem:[%s1809 + $0x18] sm:$0xff]
    %v1814 = vld [vmem:[%s1809 + $0x20] sm:$0xff]
    %v1815 = vld [vmem:[%s1809 + $0x28] sm:$0xff]
    %v1816 = vld [vmem:[%s1809 + $0x30] sm:$0xff]
    %v1817 = vld [vmem:[%s1809 + $0x38] sm:$0xff]
    %v1818 = vld [vmem:[%s1809 + $0x40] sm:$0xff]
    %v1819 = vld [vmem:[%s1809 + $0x48] sm:$0xff]
    %v1820 = vld [vmem:[%s1809 + $0x50] sm:$0xff]
    %v1821 = vld [vmem:[%s1809 + $0x58] sm:$0xff]
    %v1822 = vld [vmem:[%s1809 + $0x60] sm:$0xff]
    %v1823 = vld [vmem:[%s1809 + $0x68] sm:$0xff]
    %v1824 = vld [vmem:[%s1809 + $0x70] sm:$0xff]
    %v1825 = vld [vmem:[%s1809 + $0x78] sm:$0x1f]
    %v1826 = vld [vmem:[%s1809 + $0x1] sm:$0xff]
    %v1827 = vld [vmem:[%s1809 + $0x9] sm:$0xff]
    %v1828 = vld [vmem:[%s1809 + $0x11] sm:$0xff]
    %v1829 = vld [vmem:[%s1809 + $0x19] sm:$0xff]
    %v1830 = vld [vmem:[%s1809 + $0x21] sm:$0xff]
    %v1831 = vld [vmem:[%s1809 + $0x29] sm:$0xff]
    %v1832 = vld [vmem:[%s1809 + $0x31] sm:$0xff]
    %v1833 = vld [vmem:[%s1809 + $0x39] sm:$0xff]
    %v1834 = vld [vmem:[%s1809 + $0x41] sm:$0xff]
    %v1835 = vld [vmem:[%s1809 + $0x49] sm:$0xff]
    %v1836 = vld [vmem:[%s1809 + $0x51] sm:$0xff]
    %v1837 = vld [vmem:[%s1809 + $0x59] sm:$0xff]
    %v1838 = vld [vmem:[%s1809 + $0x61] sm:$0xff]
    %v1839 = vld [vmem:[%s1809 + $0x69] sm:$0xff]
    %v1840 = vld [vmem:[%s1809 + $0x71] sm:$0xff]
    %v1841 = vld [vmem:[%s1809 + $0x79] sm:$0x1f]
    %v1843 = vsel %vm84, %v1826, 0
    %v1846 = vsel %vm84, %v1827, 0
    %v1849 = vsel %vm84, %v1828, 0
    %v1852 = vsel %vm84, %v1829, 0
    %v1855 = vsel %vm84, %v1830, 0
    %v1858 = vsel %vm84, %v1831, 0
    %v1861 = vsel %vm84, %v1832, 0
    %v1864 = vsel %vm84, %v1833, 0
    %v1867 = vsel %vm84, %v1834, 0
    %v1870 = vsel %vm84, %v1835, 0
    %v1873 = vsel %vm84, %v1836, 0
    %v1876 = vsel %vm84, %v1837, 0
    %v1879 = vsel %vm84, %v1838, 0
    %v1882 = vsel %vm84, %v1839, 0
    %v1885 = vsel %vm84, %v1840, 0
    %v1888 = vsel %vm84, %v1841, 0
    %1890 = vmatpush.msra.mxu0 0.0
    %1891 = vmatpush.msra.mxu0 0.0
    %1892 = vmatpush.msra.mxu0 0.0
    %1893 = vmatpush.msra.mxu0 0.0
    %1894 = vmatpush.msra.mxu0 0.0
    %1895 = vmatpush.msra.mxu0 0.0
    %1896 = vmatpush.msra.mxu0 0.0
    %1897 = vmatpush.msra.mxu0 0.0
    %1898 = vmatpush.msra.mxu0 0.0
    %1899 = vmatpush.msra.mxu0 0.0
    %1900 = vmatpush.msra.mxu0 0.0
    %1901 = vmatpush.msra.mxu0 0.0
    %1902 = vmatpush.msra.mxu0 0.0
    %1903 = vmatpush.msra.mxu0 0.0
    %1904 = vmatpush.msra.mxu0 %v384
    %1905 = vmatpush.msra.mxu0 %v330
    %1906 = vmatmul.f32.gmra.mxu0 %v1843
    %v1907 = vpop.f32.mrf.mxu0
    %v1908 = vadd.f32 0.0, %v1907
    %1909 = vmatmul.f32.gmra.mxu0 %v1846
    %v1910 = vpop.f32.mrf.mxu0
    %v1911 = vadd.f32 0.0, %v1910
    %1912 = vmatmul.f32.gmra.mxu0 %v1849
    %v1913 = vpop.f32.mrf.mxu0
    %v1914 = vadd.f32 0.0, %v1913
    %1915 = vmatmul.f32.gmra.mxu0 %v1852
    %v1916 = vpop.f32.mrf.mxu0
    %v1917 = vadd.f32 0.0, %v1916
    %1918 = vmatmul.f32.gmra.mxu0 %v1855
    %v1919 = vpop.f32.mrf.mxu0
    %v1920 = vadd.f32 0.0, %v1919
    %1921 = vmatmul.f32.gmra.mxu0 %v1858
    %v1922 = vpop.f32.mrf.mxu0
    %v1923 = vadd.f32 0.0, %v1922
    %1924 = vmatmul.f32.gmra.mxu0 %v1861
    %v1925 = vpop.f32.mrf.mxu0
    %v1926 = vadd.f32 0.0, %v1925
    %1927 = vmatmul.f32.gmra.mxu0 %v1864
    %v1928 = vpop.f32.mrf.mxu0
    %v1929 = vadd.f32 0.0, %v1928
    %1930 = vmatmul.f32.gmra.mxu0 %v1867
    %v1931 = vpop.f32.mrf.mxu0
    %v1932 = vadd.f32 0.0, %v1931
    %1933 = vmatmul.f32.gmra.mxu0 %v1870
    %v1934 = vpop.f32.mrf.mxu0
    %v1935 = vadd.f32 0.0, %v1934
    %1936 = vmatmul.f32.gmra.mxu0 %v1873
    %v1937 = vpop.f32.mrf.mxu0
    %v1938 = vadd.f32 0.0, %v1937
    %1939 = vmatmul.f32.gmra.mxu0 %v1876
    %v1940 = vpop.f32.mrf.mxu0
    %v1941 = vadd.f32 0.0, %v1940
    %1942 = vmatmul.f32.gmra.mxu0 %v1879
    %v1943 = vpop.f32.mrf.mxu0
    %v1944 = vadd.f32 0.0, %v1943
    %1945 = vmatmul.f32.gmra.mxu0 %v1882
    %v1946 = vpop.f32.mrf.mxu0
    %v1947 = vadd.f32 0.0, %v1946
    %1948 = vmatmul.f32.gmra.mxu0 %v1885
    %v1949 = vpop.f32.mrf.mxu0
    %v1950 = vadd.f32 0.0, %v1949
    %1951 = vmatmul.f32.gmra.mxu0 %v1888
    %v1952 = vpop.f32.mrf.mxu0
    %v1953 = vadd.f32 0.0, %v1952
    %1954 = vdwg.mxu0
    %1955 = vmatpush.msra.mxu0 0.0
    %1956 = vmatpush.msra.mxu0 0.0
    %1957 = vmatpush.msra.mxu0 0.0
    %1958 = vmatpush.msra.mxu0 0.0
    %1959 = vmatpush.msra.mxu0 0.0
    %1960 = vmatpush.msra.mxu0 0.0
    %1961 = vmatpush.msra.mxu0 0.0
    %1962 = vmatpush.msra.mxu0 0.0
    %1963 = vmatpush.msra.mxu0 0.0
    %1964 = vmatpush.msra.mxu0 0.0
    %1965 = vmatpush.msra.mxu0 0.0
    %1966 = vmatpush.msra.mxu0 0.0
    %1967 = vmatpush.msra.mxu0 0.0
    %1968 = vmatpush.msra.mxu0 0.0
    %1969 = vmatpush.msra.mxu0 %v387
    %1970 = vmatpush.msra.mxu0 %v331
    %1971 = vmatmul.f32.gmra.mxu0 %v1843
    %v1972 = vpop.f32.mrf.mxu0
    %v1973 = vadd.f32 0.0, %v1972
    %1974 = vmatmul.f32.gmra.mxu0 %v1846
    %v1975 = vpop.f32.mrf.mxu0
    %v1976 = vadd.f32 0.0, %v1975
    %1977 = vmatmul.f32.gmra.mxu0 %v1849
    %v1978 = vpop.f32.mrf.mxu0
    %v1979 = vadd.f32 0.0, %v1978
    %1980 = vmatmul.f32.gmra.mxu0 %v1852
    %v1981 = vpop.f32.mrf.mxu0
    %v1982 = vadd.f32 0.0, %v1981
    %1983 = vmatmul.f32.gmra.mxu0 %v1855
    %v1984 = vpop.f32.mrf.mxu0
    %v1985 = vadd.f32 0.0, %v1984
    %1986 = vmatmul.f32.gmra.mxu0 %v1858
    %v1987 = vpop.f32.mrf.mxu0
    %v1988 = vadd.f32 0.0, %v1987
    %1989 = vmatmul.f32.gmra.mxu0 %v1861
    %v1990 = vpop.f32.mrf.mxu0
    %v1991 = vadd.f32 0.0, %v1990
    %1992 = vmatmul.f32.gmra.mxu0 %v1864
    %v1993 = vpop.f32.mrf.mxu0
    %v1994 = vadd.f32 0.0, %v1993
    %1995 = vmatmul.f32.gmra.mxu0 %v1867
    %v1996 = vpop.f32.mrf.mxu0
    %v1997 = vadd.f32 0.0, %v1996
    %1998 = vmatmul.f32.gmra.mxu0 %v1870
    %v1999 = vpop.f32.mrf.mxu0
    %v2000 = vadd.f32 0.0, %v1999
    %2001 = vmatmul.f32.gmra.mxu0 %v1873
    %v2002 = vpop.f32.mrf.mxu0
    %v2003 = vadd.f32 0.0, %v2002
    %2004 = vmatmul.f32.gmra.mxu0 %v1876
    %v2005 = vpop.f32.mrf.mxu0
    %v2006 = vadd.f32 0.0, %v2005
    %2007 = vmatmul.f32.gmra.mxu0 %v1879
    %v2008 = vpop.f32.mrf.mxu0
    %v2009 = vadd.f32 0.0, %v2008
    %2010 = vmatmul.f32.gmra.mxu0 %v1882
    %v2011 = vpop.f32.mrf.mxu0
    %v2012 = vadd.f32 0.0, %v2011
    %2013 = vmatmul.f32.gmra.mxu0 %v1885
    %v2014 = vpop.f32.mrf.mxu0
    %v2015 = vadd.f32 0.0, %v2014
    %2016 = vmatmul.f32.gmra.mxu0 %v1888
    %v2017 = vpop.f32.mrf.mxu0
    %v2018 = vadd.f32 0.0, %v2017
    %2019 = vdwg.mxu0
    %v2021 = vsel %vm84, %v1810, 0
    %v2024 = vsel %vm84, %v1811, 0
    %v2027 = vsel %vm84, %v1812, 0
    %v2030 = vsel %vm84, %v1813, 0
    %v2033 = vsel %vm84, %v1814, 0
    %v2036 = vsel %vm84, %v1815, 0
    %v2039 = vsel %vm84, %v1816, 0
    %v2042 = vsel %vm84, %v1817, 0
    %v2045 = vsel %vm84, %v1818, 0
    %v2048 = vsel %vm84, %v1819, 0
    %v2051 = vsel %vm84, %v1820, 0
    %v2054 = vsel %vm84, %v1821, 0
    %v2057 = vsel %vm84, %v1822, 0
    %v2060 = vsel %vm84, %v1823, 0
    %v2063 = vsel %vm84, %v1824, 0
    %v2066 = vsel %vm84, %v1825, 0
    %2068 = vmatpush.msra.mxu0 0.0
    %2069 = vmatpush.msra.mxu0 0.0
    %2070 = vmatpush.msra.mxu0 0.0
    %2071 = vmatpush.msra.mxu0 0.0
    %2072 = vmatpush.msra.mxu0 0.0
    %2073 = vmatpush.msra.mxu0 0.0
    %2074 = vmatpush.msra.mxu0 0.0
    %2075 = vmatpush.msra.mxu0 0.0
    %2076 = vmatpush.msra.mxu0 0.0
    %2077 = vmatpush.msra.mxu0 0.0
    %2078 = vmatpush.msra.mxu0 0.0
    %2079 = vmatpush.msra.mxu0 0.0
    %2080 = vmatpush.msra.mxu0 0.0
    %2081 = vmatpush.msra.mxu0 0.0
    %2082 = vmatpush.msra.mxu0 %v568
    %2083 = vmatpush.msra.mxu0 %v309
    %2084 = vmatmul.f32.gmra.mxu0 %v2021
    %v2085 = vpop.f32.mrf.mxu0
    %v2086 = vadd.f32 %v1908, %v2085
    %2087 = vmatmul.f32.gmra.mxu0 %v2024
    %v2088 = vpop.f32.mrf.mxu0
    %v2089 = vadd.f32 %v1911, %v2088
    %2090 = vmatmul.f32.gmra.mxu0 %v2027
    %v2091 = vpop.f32.mrf.mxu0
    %v2092 = vadd.f32 %v1914, %v2091
    %2093 = vmatmul.f32.gmra.mxu0 %v2030
    %v2094 = vpop.f32.mrf.mxu0
    %v2095 = vadd.f32 %v1917, %v2094
    %2096 = vmatmul.f32.gmra.mxu0 %v2033
    %v2097 = vpop.f32.mrf.mxu0
    %v2098 = vadd.f32 %v1920, %v2097
    %2099 = vmatmul.f32.gmra.mxu0 %v2036
    %v2100 = vpop.f32.mrf.mxu0
    %v2101 = vadd.f32 %v1923, %v2100
    %2102 = vmatmul.f32.gmra.mxu0 %v2039
    %v2103 = vpop.f32.mrf.mxu0
    %v2104 = vadd.f32 %v1926, %v2103
    %2105 = vmatmul.f32.gmra.mxu0 %v2042
    %v2106 = vpop.f32.mrf.mxu0
    %v2107 = vadd.f32 %v1929, %v2106
    %2108 = vmatmul.f32.gmra.mxu0 %v2045
    %v2109 = vpop.f32.mrf.mxu0
    %v2110 = vadd.f32 %v1932, %v2109
    %2111 = vmatmul.f32.gmra.mxu0 %v2048
    %v2112 = vpop.f32.mrf.mxu0
    %v2113 = vadd.f32 %v1935, %v2112
    %2114 = vmatmul.f32.gmra.mxu0 %v2051
    %v2115 = vpop.f32.mrf.mxu0
    %v2116 = vadd.f32 %v1938, %v2115
    %2117 = vmatmul.f32.gmra.mxu0 %v2054
    %v2118 = vpop.f32.mrf.mxu0
    %v2119 = vadd.f32 %v1941, %v2118
    %2120 = vmatmul.f32.gmra.mxu0 %v2057
    %v2121 = vpop.f32.mrf.mxu0
    %v2122 = vadd.f32 %v1944, %v2121
    %2123 = vmatmul.f32.gmra.mxu0 %v2060
    %v2124 = vpop.f32.mrf.mxu0
    %v2125 = vadd.f32 %v1947, %v2124
    %2126 = vmatmul.f32.gmra.mxu0 %v2063
    %v2127 = vpop.f32.mrf.mxu0
    %v2128 = vadd.f32 %v1950, %v2127
    %2129 = vmatmul.f32.gmra.mxu0 %v2066
    %v2130 = vpop.f32.mrf.mxu0
    %v2131 = vadd.f32 %v1953, %v2130
    %2132 = vdwg.mxu0
    %2133 = vmatpush.msra.mxu0 0.0
    %2134 = vmatpush.msra.mxu0 0.0
    %2135 = vmatpush.msra.mxu0 0.0
    %2136 = vmatpush.msra.mxu0 0.0
    %2137 = vmatpush.msra.mxu0 0.0
    %2138 = vmatpush.msra.mxu0 0.0
    %2139 = vmatpush.msra.mxu0 0.0
    %2140 = vmatpush.msra.mxu0 0.0
    %2141 = vmatpush.msra.mxu0 0.0
    %2142 = vmatpush.msra.mxu0 0.0
    %2143 = vmatpush.msra.mxu0 0.0
    %2144 = vmatpush.msra.mxu0 0.0
    %2145 = vmatpush.msra.mxu0 0.0
    %2146 = vmatpush.msra.mxu0 0.0
    %2147 = vmatpush.msra.mxu0 %v571
    %2148 = vmatpush.msra.mxu0 %v310
    %2149 = vmatmul.f32.gmra.mxu0 %v2021
    %v2150 = vpop.f32.mrf.mxu0
    %v2151 = vadd.f32 %v1973, %v2150
    %2152 = vmatmul.f32.gmra.mxu0 %v2024
    %v2153 = vpop.f32.mrf.mxu0
    %v2154 = vadd.f32 %v1976, %v2153
    %2155 = vmatmul.f32.gmra.mxu0 %v2027
    %v2156 = vpop.f32.mrf.mxu0
    %v2157 = vadd.f32 %v1979, %v2156
    %2158 = vmatmul.f32.gmra.mxu0 %v2030
    %v2159 = vpop.f32.mrf.mxu0
    %v2160 = vadd.f32 %v1982, %v2159
    %2161 = vmatmul.f32.gmra.mxu0 %v2033
    %v2162 = vpop.f32.mrf.mxu0
    %v2163 = vadd.f32 %v1985, %v2162
    %2164 = vmatmul.f32.gmra.mxu0 %v2036
    %v2165 = vpop.f32.mrf.mxu0
    %v2166 = vadd.f32 %v1988, %v2165
    %2167 = vmatmul.f32.gmra.mxu0 %v2039
    %v2168 = vpop.f32.mrf.mxu0
    %v2169 = vadd.f32 %v1991, %v2168
    %2170 = vmatmul.f32.gmra.mxu0 %v2042
    %v2171 = vpop.f32.mrf.mxu0
    %v2172 = vadd.f32 %v1994, %v2171
    %2173 = vmatmul.f32.gmra.mxu0 %v2045
    %v2174 = vpop.f32.mrf.mxu0
    %v2175 = vadd.f32 %v1997, %v2174
    %2176 = vmatmul.f32.gmra.mxu0 %v2048
    %v2177 = vpop.f32.mrf.mxu0
    %v2178 = vadd.f32 %v2000, %v2177
    %2179 = vmatmul.f32.gmra.mxu0 %v2051
    %v2180 = vpop.f32.mrf.mxu0
    %v2181 = vadd.f32 %v2003, %v2180
    %2182 = vmatmul.f32.gmra.mxu0 %v2054
    %v2183 = vpop.f32.mrf.mxu0
    %v2184 = vadd.f32 %v2006, %v2183
    %2185 = vmatmul.f32.gmra.mxu0 %v2057
    %v2186 = vpop.f32.mrf.mxu0
    %v2187 = vadd.f32 %v2009, %v2186
    %2188 = vmatmul.f32.gmra.mxu0 %v2060
    %v2189 = vpop.f32.mrf.mxu0
    %v2190 = vadd.f32 %v2012, %v2189
    %2191 = vmatmul.f32.gmra.mxu0 %v2063
    %v2192 = vpop.f32.mrf.mxu0
    %v2193 = vadd.f32 %v2015, %v2192
    %2194 = vmatmul.f32.gmra.mxu0 %v2066
    %v2195 = vpop.f32.mrf.mxu0
    %v2196 = vadd.f32 %v2018, %v2195
    %2197 = vdwg.mxu0
    %v2198 = vld [vmem:[%s1809 + $0x2] sm:$0xff]
    %v2199 = vld [vmem:[%s1809 + $0xa] sm:$0xff]
    %v2200 = vld [vmem:[%s1809 + $0x12] sm:$0xff]
    %v2201 = vld [vmem:[%s1809 + $0x1a] sm:$0xff]
    %v2202 = vld [vmem:[%s1809 + $0x22] sm:$0xff]
    %v2203 = vld [vmem:[%s1809 + $0x2a] sm:$0xff]
    %v2204 = vld [vmem:[%s1809 + $0x32] sm:$0xff]
    %v2205 = vld [vmem:[%s1809 + $0x3a] sm:$0xff]
    %v2206 = vld [vmem:[%s1809 + $0x42] sm:$0xff]
    %v2207 = vld [vmem:[%s1809 + $0x4a] sm:$0xff]
    %v2208 = vld [vmem:[%s1809 + $0x52] sm:$0xff]
    %v2209 = vld [vmem:[%s1809 + $0x5a] sm:$0xff]
    %v2210 = vld [vmem:[%s1809 + $0x62] sm:$0xff]
    %v2211 = vld [vmem:[%s1809 + $0x6a] sm:$0xff]
    %v2212 = vld [vmem:[%s1809 + $0x72] sm:$0xff]
    %v2213 = vld [vmem:[%s1809 + $0x7a] sm:$0x1f]
    %v2215 = vsel %vm84, %v2198, 0
    %v2218 = vsel %vm84, %v2199, 0
    %v2221 = vsel %vm84, %v2200, 0
    %v2224 = vsel %vm84, %v2201, 0
    %v2227 = vsel %vm84, %v2202, 0
    %v2230 = vsel %vm84, %v2203, 0
    %v2233 = vsel %vm84, %v2204, 0
    %v2236 = vsel %vm84, %v2205, 0
    %v2239 = vsel %vm84, %v2206, 0
    %v2242 = vsel %vm84, %v2207, 0
    %v2245 = vsel %vm84, %v2208, 0
    %v2248 = vsel %vm84, %v2209, 0
    %v2251 = vsel %vm84, %v2210, 0
    %v2254 = vsel %vm84, %v2211, 0
    %v2257 = vsel %vm84, %v2212, 0
    %v2260 = vsel %vm84, %v2213, 0
    %2262 = vmatpush.msra.mxu0 0.0
    %2263 = vmatpush.msra.mxu0 0.0
    %2264 = vmatpush.msra.mxu0 0.0
    %2265 = vmatpush.msra.mxu0 0.0
    %2266 = vmatpush.msra.mxu0 0.0
    %2267 = vmatpush.msra.mxu0 0.0
    %2268 = vmatpush.msra.mxu0 0.0
    %2269 = vmatpush.msra.mxu0 0.0
    %2270 = vmatpush.msra.mxu0 0.0
    %2271 = vmatpush.msra.mxu0 0.0
    %2272 = vmatpush.msra.mxu0 0.0
    %2273 = vmatpush.msra.mxu0 0.0
    %2274 = vmatpush.msra.mxu0 0.0
    %2275 = vmatpush.msra.mxu0 0.0
    %2276 = vmatpush.msra.mxu0 %v773
    %2277 = vmatpush.msra.mxu0 %v720
    %2278 = vmatmul.f32.gmra.mxu0 %v2215
    %v2279 = vpop.f32.mrf.mxu0
    %v2280 = vadd.f32 0.0, %v2279
    %2281 = vmatmul.f32.gmra.mxu0 %v2218
    %v2282 = vpop.f32.mrf.mxu0
    %v2283 = vadd.f32 0.0, %v2282
    %2284 = vmatmul.f32.gmra.mxu0 %v2221
    %v2285 = vpop.f32.mrf.mxu0
    %v2286 = vadd.f32 0.0, %v2285
    %2287 = vmatmul.f32.gmra.mxu0 %v2224
    %v2288 = vpop.f32.mrf.mxu0
    %v2289 = vadd.f32 0.0, %v2288
    %2290 = vmatmul.f32.gmra.mxu0 %v2227
    %v2291 = vpop.f32.mrf.mxu0
    %v2292 = vadd.f32 0.0, %v2291
    %2293 = vmatmul.f32.gmra.mxu0 %v2230
    %v2294 = vpop.f32.mrf.mxu0
    %v2295 = vadd.f32 0.0, %v2294
    %2296 = vmatmul.f32.gmra.mxu0 %v2233
    %v2297 = vpop.f32.mrf.mxu0
    %v2298 = vadd.f32 0.0, %v2297
    %2299 = vmatmul.f32.gmra.mxu0 %v2236
    %v2300 = vpop.f32.mrf.mxu0
    %v2301 = vadd.f32 0.0, %v2300
    %2302 = vmatmul.f32.gmra.mxu0 %v2239
    %v2303 = vpop.f32.mrf.mxu0
    %v2304 = vadd.f32 0.0, %v2303
    %2305 = vmatmul.f32.gmra.mxu0 %v2242
    %v2306 = vpop.f32.mrf.mxu0
    %v2307 = vadd.f32 0.0, %v2306
    %2308 = vmatmul.f32.gmra.mxu0 %v2245
    %v2309 = vpop.f32.mrf.mxu0
    %v2310 = vadd.f32 0.0, %v2309
    %2311 = vmatmul.f32.gmra.mxu0 %v2248
    %v2312 = vpop.f32.mrf.mxu0
    %v2313 = vadd.f32 0.0, %v2312
    %2314 = vmatmul.f32.gmra.mxu0 %v2251
    %v2315 = vpop.f32.mrf.mxu0
    %v2316 = vadd.f32 0.0, %v2315
    %2317 = vmatmul.f32.gmra.mxu0 %v2254
    %v2318 = vpop.f32.mrf.mxu0
    %v2319 = vadd.f32 0.0, %v2318
    %2320 = vmatmul.f32.gmra.mxu0 %v2257
    %v2321 = vpop.f32.mrf.mxu0
    %v2322 = vadd.f32 0.0, %v2321
    %2323 = vmatmul.f32.gmra.mxu0 %v2260
    %v2324 = vpop.f32.mrf.mxu0
    %v2325 = vadd.f32 0.0, %v2324
    %2326 = vdwg.mxu0
    %2327 = vmatpush.msra.mxu0 0.0
    %2328 = vmatpush.msra.mxu0 0.0
    %2329 = vmatpush.msra.mxu0 0.0
    %2330 = vmatpush.msra.mxu0 0.0
    %2331 = vmatpush.msra.mxu0 0.0
    %2332 = vmatpush.msra.mxu0 0.0
    %2333 = vmatpush.msra.mxu0 0.0
    %2334 = vmatpush.msra.mxu0 0.0
    %2335 = vmatpush.msra.mxu0 0.0
    %2336 = vmatpush.msra.mxu0 0.0
    %2337 = vmatpush.msra.mxu0 0.0
    %2338 = vmatpush.msra.mxu0 0.0
    %2339 = vmatpush.msra.mxu0 0.0
    %2340 = vmatpush.msra.mxu0 0.0
    %2341 = vmatpush.msra.mxu0 %v776
    %2342 = vmatpush.msra.mxu0 %v721
    %2343 = vmatmul.f32.gmra.mxu0 %v2215
    %v2344 = vpop.f32.mrf.mxu0
    %v2345 = vadd.f32 0.0, %v2344
    %2346 = vmatmul.f32.gmra.mxu0 %v2218
    %v2347 = vpop.f32.mrf.mxu0
    %v2348 = vadd.f32 0.0, %v2347
    %2349 = vmatmul.f32.gmra.mxu0 %v2221
    %v2350 = vpop.f32.mrf.mxu0
    %v2351 = vadd.f32 0.0, %v2350
    %2352 = vmatmul.f32.gmra.mxu0 %v2224
    %v2353 = vpop.f32.mrf.mxu0
    %v2354 = vadd.f32 0.0, %v2353
    %2355 = vmatmul.f32.gmra.mxu0 %v2227
    %v2356 = vpop.f32.mrf.mxu0
    %v2357 = vadd.f32 0.0, %v2356
    %2358 = vmatmul.f32.gmra.mxu0 %v2230
    %v2359 = vpop.f32.mrf.mxu0
    %v2360 = vadd.f32 0.0, %v2359
    %2361 = vmatmul.f32.gmra.mxu0 %v2233
    %v2362 = vpop.f32.mrf.mxu0
    %v2363 = vadd.f32 0.0, %v2362
    %2364 = vmatmul.f32.gmra.mxu0 %v2236
    %v2365 = vpop.f32.mrf.mxu0
    %v2366 = vadd.f32 0.0, %v2365
    %2367 = vmatmul.f32.gmra.mxu0 %v2239
    %v2368 = vpop.f32.mrf.mxu0
    %v2369 = vadd.f32 0.0, %v2368
    %2370 = vmatmul.f32.gmra.mxu0 %v2242
    %v2371 = vpop.f32.mrf.mxu0
    %v2372 = vadd.f32 0.0, %v2371
    %2373 = vmatmul.f32.gmra.mxu0 %v2245
    %v2374 = vpop.f32.mrf.mxu0
    %v2375 = vadd.f32 0.0, %v2374
    %2376 = vmatmul.f32.gmra.mxu0 %v2248
    %v2377 = vpop.f32.mrf.mxu0
    %v2378 = vadd.f32 0.0, %v2377
    %2379 = vmatmul.f32.gmra.mxu0 %v2251
    %v2380 = vpop.f32.mrf.mxu0
    %v2381 = vadd.f32 0.0, %v2380
    %2382 = vmatmul.f32.gmra.mxu0 %v2254
    %v2383 = vpop.f32.mrf.mxu0
    %v2384 = vadd.f32 0.0, %v2383
    %2385 = vmatmul.f32.gmra.mxu0 %v2257
    %v2386 = vpop.f32.mrf.mxu0
    %v2387 = vadd.f32 0.0, %v2386
    %2388 = vmatmul.f32.gmra.mxu0 %v2260
    %v2389 = vpop.f32.mrf.mxu0
    %v2390 = vadd.f32 0.0, %v2389
    %2391 = vdwg.mxu0
    %v2392 = vadd.f32 %v2086, %v2280
    %v2393 = vadd.f32 %v2151, %v2345
    %v2394 = vadd.f32 %v2089, %v2283
    %v2395 = vadd.f32 %v2154, %v2348
    %v2396 = vadd.f32 %v2092, %v2286
    %v2397 = vadd.f32 %v2157, %v2351
    %v2398 = vadd.f32 %v2095, %v2289
    %v2399 = vadd.f32 %v2160, %v2354
    %v2400 = vadd.f32 %v2098, %v2292
    %v2401 = vadd.f32 %v2163, %v2357
    %v2402 = vadd.f32 %v2101, %v2295
    %v2403 = vadd.f32 %v2166, %v2360
    %v2404 = vadd.f32 %v2104, %v2298
    %v2405 = vadd.f32 %v2169, %v2363
    %v2406 = vadd.f32 %v2107, %v2301
    %v2407 = vadd.f32 %v2172, %v2366
    %v2408 = vadd.f32 %v2110, %v2304
    %v2409 = vadd.f32 %v2175, %v2369
    %v2410 = vadd.f32 %v2113, %v2307
    %v2411 = vadd.f32 %v2178, %v2372
    %v2412 = vadd.f32 %v2116, %v2310
    %v2413 = vadd.f32 %v2181, %v2375
    %v2414 = vadd.f32 %v2119, %v2313
    %v2415 = vadd.f32 %v2184, %v2378
    %v2416 = vadd.f32 %v2122, %v2316
    %v2417 = vadd.f32 %v2187, %v2381
    %v2418 = vadd.f32 %v2125, %v2319
    %v2419 = vadd.f32 %v2190, %v2384
    %v2420 = vadd.f32 %v2128, %v2322
    %v2421 = vadd.f32 %v2193, %v2387
    %v2422 = vadd.f32 %v2131, %v2325
    %v2423 = vadd.f32 %v2196, %v2390
    %v2424 = vld [vmem:[%s1809 + $0x3] sm:$0xff]
    %v2425 = vld [vmem:[%s1809 + $0xb] sm:$0xff]
    %v2426 = vld [vmem:[%s1809 + $0x13] sm:$0xff]
    %v2427 = vld [vmem:[%s1809 + $0x1b] sm:$0xff]
    %v2428 = vld [vmem:[%s1809 + $0x23] sm:$0xff]
    %v2429 = vld [vmem:[%s1809 + $0x2b] sm:$0xff]
    %v2430 = vld [vmem:[%s1809 + $0x33] sm:$0xff]
    %v2431 = vld [vmem:[%s1809 + $0x3b] sm:$0xff]
    %v2432 = vld [vmem:[%s1809 + $0x43] sm:$0xff]
    %v2433 = vld [vmem:[%s1809 + $0x4b] sm:$0xff]
    %v2434 = vld [vmem:[%s1809 + $0x53] sm:$0xff]
    %v2435 = vld [vmem:[%s1809 + $0x5b] sm:$0xff]
    %v2436 = vld [vmem:[%s1809 + $0x63] sm:$0xff]
    %v2437 = vld [vmem:[%s1809 + $0x6b] sm:$0xff]
    %v2438 = vld [vmem:[%s1809 + $0x73] sm:$0xff]
    %v2439 = vld [vmem:[%s1809 + $0x7b] sm:$0x1f]
    %v2441 = vsel %vm84, %v2424, 0
    %v2444 = vsel %vm84, %v2425, 0
    %v2447 = vsel %vm84, %v2426, 0
    %v2450 = vsel %vm84, %v2427, 0
    %v2453 = vsel %vm84, %v2428, 0
    %v2456 = vsel %vm84, %v2429, 0
    %v2459 = vsel %vm84, %v2430, 0
    %v2462 = vsel %vm84, %v2431, 0
    %v2465 = vsel %vm84, %v2432, 0
    %v2468 = vsel %vm84, %v2433, 0
    %v2471 = vsel %vm84, %v2434, 0
    %v2474 = vsel %vm84, %v2435, 0
    %v2477 = vsel %vm84, %v2436, 0
    %v2480 = vsel %vm84, %v2437, 0
    %v2483 = vsel %vm84, %v2438, 0
    %v2486 = vsel %vm84, %v2439, 0
    %2488 = vmatpush.msra.mxu0 0.0
    %2489 = vmatpush.msra.mxu0 0.0
    %2490 = vmatpush.msra.mxu0 0.0
    %2491 = vmatpush.msra.mxu0 0.0
    %2492 = vmatpush.msra.mxu0 0.0
    %2493 = vmatpush.msra.mxu0 0.0
    %2494 = vmatpush.msra.mxu0 0.0
    %2495 = vmatpush.msra.mxu0 0.0
    %2496 = vmatpush.msra.mxu0 0.0
    %2497 = vmatpush.msra.mxu0 0.0
    %2498 = vmatpush.msra.mxu0 0.0
    %2499 = vmatpush.msra.mxu0 0.0
    %2500 = vmatpush.msra.mxu0 0.0
    %2501 = vmatpush.msra.mxu0 0.0
    %2502 = vmatpush.msra.mxu0 %v1010
    %2503 = vmatpush.msra.mxu0 %v957
    %2504 = vmatmul.f32.gmra.mxu0 %v2441
    %v2505 = vpop.f32.mrf.mxu0
    %v2506 = vadd.f32 0.0, %v2505
    %2507 = vmatmul.f32.gmra.mxu0 %v2444
    %v2508 = vpop.f32.mrf.mxu0
    %v2509 = vadd.f32 0.0, %v2508
    %2510 = vmatmul.f32.gmra.mxu0 %v2447
    %v2511 = vpop.f32.mrf.mxu0
    %v2512 = vadd.f32 0.0, %v2511
    %2513 = vmatmul.f32.gmra.mxu0 %v2450
    %v2514 = vpop.f32.mrf.mxu0
    %v2515 = vadd.f32 0.0, %v2514
    %2516 = vmatmul.f32.gmra.mxu0 %v2453
    %v2517 = vpop.f32.mrf.mxu0
    %v2518 = vadd.f32 0.0, %v2517
    %2519 = vmatmul.f32.gmra.mxu0 %v2456
    %v2520 = vpop.f32.mrf.mxu0
    %v2521 = vadd.f32 0.0, %v2520
    %2522 = vmatmul.f32.gmra.mxu0 %v2459
    %v2523 = vpop.f32.mrf.mxu0
    %v2524 = vadd.f32 0.0, %v2523
    %2525 = vmatmul.f32.gmra.mxu0 %v2462
    %v2526 = vpop.f32.mrf.mxu0
    %v2527 = vadd.f32 0.0, %v2526
    %2528 = vmatmul.f32.gmra.mxu0 %v2465
    %v2529 = vpop.f32.mrf.mxu0
    %v2530 = vadd.f32 0.0, %v2529
    %2531 = vmatmul.f32.gmra.mxu0 %v2468
    %v2532 = vpop.f32.mrf.mxu0
    %v2533 = vadd.f32 0.0, %v2532
    %2534 = vmatmul.f32.gmra.mxu0 %v2471
    %v2535 = vpop.f32.mrf.mxu0
    %v2536 = vadd.f32 0.0, %v2535
    %2537 = vmatmul.f32.gmra.mxu0 %v2474
    %v2538 = vpop.f32.mrf.mxu0
    %v2539 = vadd.f32 0.0, %v2538
    %2540 = vmatmul.f32.gmra.mxu0 %v2477
    %v2541 = vpop.f32.mrf.mxu0
    %v2542 = vadd.f32 0.0, %v2541
    %2543 = vmatmul.f32.gmra.mxu0 %v2480
    %v2544 = vpop.f32.mrf.mxu0
    %v2545 = vadd.f32 0.0, %v2544
    %2546 = vmatmul.f32.gmra.mxu0 %v2483
    %v2547 = vpop.f32.mrf.mxu0
    %v2548 = vadd.f32 0.0, %v2547
    %2549 = vmatmul.f32.gmra.mxu0 %v2486
    %v2550 = vpop.f32.mrf.mxu0
    %v2551 = vadd.f32 0.0, %v2550
    %2552 = vdwg.mxu0
    %2553 = vmatpush.msra.mxu0 0.0
    %2554 = vmatpush.msra.mxu0 0.0
    %2555 = vmatpush.msra.mxu0 0.0
    %2556 = vmatpush.msra.mxu0 0.0
    %2557 = vmatpush.msra.mxu0 0.0
    %2558 = vmatpush.msra.mxu0 0.0
    %2559 = vmatpush.msra.mxu0 0.0
    %2560 = vmatpush.msra.mxu0 0.0
    %2561 = vmatpush.msra.mxu0 0.0
    %2562 = vmatpush.msra.mxu0 0.0
    %2563 = vmatpush.msra.mxu0 0.0
    %2564 = vmatpush.msra.mxu0 0.0
    %2565 = vmatpush.msra.mxu0 0.0
    %2566 = vmatpush.msra.mxu0 0.0
    %2567 = vmatpush.msra.mxu0 %v1013
    %2568 = vmatpush.msra.mxu0 %v958
    %2569 = vmatmul.f32.gmra.mxu0 %v2441
    %v2570 = vpop.f32.mrf.mxu0
    %v2571 = vadd.f32 0.0, %v2570
    %2572 = vmatmul.f32.gmra.mxu0 %v2444
    %v2573 = vpop.f32.mrf.mxu0
    %v2574 = vadd.f32 0.0, %v2573
    %2575 = vmatmul.f32.gmra.mxu0 %v2447
    %v2576 = vpop.f32.mrf.mxu0
    %v2577 = vadd.f32 0.0, %v2576
    %2578 = vmatmul.f32.gmra.mxu0 %v2450
    %v2579 = vpop.f32.mrf.mxu0
    %v2580 = vadd.f32 0.0, %v2579
    %2581 = vmatmul.f32.gmra.mxu0 %v2453
    %v2582 = vpop.f32.mrf.mxu0
    %v2583 = vadd.f32 0.0, %v2582
    %2584 = vmatmul.f32.gmra.mxu0 %v2456
    %v2585 = vpop.f32.mrf.mxu0
    %v2586 = vadd.f32 0.0, %v2585
    %2587 = vmatmul.f32.gmra.mxu0 %v2459
    %v2588 = vpop.f32.mrf.mxu0
    %v2589 = vadd.f32 0.0, %v2588
    %2590 = vmatmul.f32.gmra.mxu0 %v2462
    %v2591 = vpop.f32.mrf.mxu0
    %v2592 = vadd.f32 0.0, %v2591
    %2593 = vmatmul.f32.gmra.mxu0 %v2465
    %v2594 = vpop.f32.mrf.mxu0
    %v2595 = vadd.f32 0.0, %v2594
    %2596 = vmatmul.f32.gmra.mxu0 %v2468
    %v2597 = vpop.f32.mrf.mxu0
    %v2598 = vadd.f32 0.0, %v2597
    %2599 = vmatmul.f32.gmra.mxu0 %v2471
    %v2600 = vpop.f32.mrf.mxu0
    %v2601 = vadd.f32 0.0, %v2600
    %2602 = vmatmul.f32.gmra.mxu0 %v2474
    %v2603 = vpop.f32.mrf.mxu0
    %v2604 = vadd.f32 0.0, %v2603
    %2605 = vmatmul.f32.gmra.mxu0 %v2477
    %v2606 = vpop.f32.mrf.mxu0
    %v2607 = vadd.f32 0.0, %v2606
    %2608 = vmatmul.f32.gmra.mxu0 %v2480
    %v2609 = vpop.f32.mrf.mxu0
    %v2610 = vadd.f32 0.0, %v2609
    %2611 = vmatmul.f32.gmra.mxu0 %v2483
    %v2612 = vpop.f32.mrf.mxu0
    %v2613 = vadd.f32 0.0, %v2612
    %2614 = vmatmul.f32.gmra.mxu0 %v2486
    %v2615 = vpop.f32.mrf.mxu0
    %v2616 = vadd.f32 0.0, %v2615
    %2617 = vdwg.mxu0
    %v2618 = vadd.f32 %v2392, %v2506
    %v2619 = vadd.f32 %v2393, %v2571
    %v2620 = vadd.f32 %v2394, %v2509
    %v2621 = vadd.f32 %v2395, %v2574
    %v2622 = vadd.f32 %v2396, %v2512
    %v2623 = vadd.f32 %v2397, %v2577
    %v2624 = vadd.f32 %v2398, %v2515
    %v2625 = vadd.f32 %v2399, %v2580
    %v2626 = vadd.f32 %v2400, %v2518
    %v2627 = vadd.f32 %v2401, %v2583
    %v2628 = vadd.f32 %v2402, %v2521
    %v2629 = vadd.f32 %v2403, %v2586
    %v2630 = vadd.f32 %v2404, %v2524
    %v2631 = vadd.f32 %v2405, %v2589
    %v2632 = vadd.f32 %v2406, %v2527
    %v2633 = vadd.f32 %v2407, %v2592
    %v2634 = vadd.f32 %v2408, %v2530
    %v2635 = vadd.f32 %v2409, %v2595
    %v2636 = vadd.f32 %v2410, %v2533
    %v2637 = vadd.f32 %v2411, %v2598
    %v2638 = vadd.f32 %v2412, %v2536
    %v2639 = vadd.f32 %v2413, %v2601
    %v2640 = vadd.f32 %v2414, %v2539
    %v2641 = vadd.f32 %v2415, %v2604
    %v2642 = vadd.f32 %v2416, %v2542
    %v2643 = vadd.f32 %v2417, %v2607
    %v2644 = vadd.f32 %v2418, %v2545
    %v2645 = vadd.f32 %v2419, %v2610
    %v2646 = vadd.f32 %v2420, %v2548
    %v2647 = vadd.f32 %v2421, %v2613
    %v2648 = vadd.f32 %v2422, %v2551
    %v2649 = vadd.f32 %v2423, %v2616
    %v2650 = vld [vmem:[%s1809 + $0x4] sm:$0xff]
    %v2651 = vld [vmem:[%s1809 + $0xc] sm:$0xff]
    %v2652 = vld [vmem:[%s1809 + $0x14] sm:$0xff]
    %v2653 = vld [vmem:[%s1809 + $0x1c] sm:$0xff]
    %v2654 = vld [vmem:[%s1809 + $0x24] sm:$0xff]
    %v2655 = vld [vmem:[%s1809 + $0x2c] sm:$0xff]
    %v2656 = vld [vmem:[%s1809 + $0x34] sm:$0xff]
    %v2657 = vld [vmem:[%s1809 + $0x3c] sm:$0xff]
    %v2658 = vld [vmem:[%s1809 + $0x44] sm:$0xff]
    %v2659 = vld [vmem:[%s1809 + $0x4c] sm:$0xff]
    %v2660 = vld [vmem:[%s1809 + $0x54] sm:$0xff]
    %v2661 = vld [vmem:[%s1809 + $0x5c] sm:$0xff]
    %v2662 = vld [vmem:[%s1809 + $0x64] sm:$0xff]
    %v2663 = vld [vmem:[%s1809 + $0x6c] sm:$0xff]
    %v2664 = vld [vmem:[%s1809 + $0x74] sm:$0xff]
    %v2665 = vld [vmem:[%s1809 + $0x7c] sm:$0x1f]
    %v2667 = vsel %vm84, %v2650, 0
    %v2670 = vsel %vm84, %v2651, 0
    %v2673 = vsel %vm84, %v2652, 0
    %v2676 = vsel %vm84, %v2653, 0
    %v2679 = vsel %vm84, %v2654, 0
    %v2682 = vsel %vm84, %v2655, 0
    %v2685 = vsel %vm84, %v2656, 0
    %v2688 = vsel %vm84, %v2657, 0
    %v2691 = vsel %vm84, %v2658, 0
    %v2694 = vsel %vm84, %v2659, 0
    %v2697 = vsel %vm84, %v2660, 0
    %v2700 = vsel %vm84, %v2661, 0
    %v2703 = vsel %vm84, %v2662, 0
    %v2706 = vsel %vm84, %v2663, 0
    %v2709 = vsel %vm84, %v2664, 0
    %v2712 = vsel %vm84, %v2665, 0
    %2714 = vmatpush.msra.mxu0 0.0
    %2715 = vmatpush.msra.mxu0 0.0
    %2716 = vmatpush.msra.mxu0 0.0
    %2717 = vmatpush.msra.mxu0 0.0
    %2718 = vmatpush.msra.mxu0 0.0
    %2719 = vmatpush.msra.mxu0 0.0
    %2720 = vmatpush.msra.mxu0 0.0
    %2721 = vmatpush.msra.mxu0 0.0
    %2722 = vmatpush.msra.mxu0 0.0
    %2723 = vmatpush.msra.mxu0 0.0
    %2724 = vmatpush.msra.mxu0 0.0
    %2725 = vmatpush.msra.mxu0 0.0
    %2726 = vmatpush.msra.mxu0 0.0
    %2727 = vmatpush.msra.mxu0 0.0
    %2728 = vmatpush.msra.mxu0 %v1247
    %2729 = vmatpush.msra.mxu0 %v1194
    %2730 = vmatmul.f32.gmra.mxu0 %v2667
    %v2731 = vpop.f32.mrf.mxu0
    %v2732 = vadd.f32 0.0, %v2731
    %2733 = vmatmul.f32.gmra.mxu0 %v2670
    %v2734 = vpop.f32.mrf.mxu0
    %v2735 = vadd.f32 0.0, %v2734
    %2736 = vmatmul.f32.gmra.mxu0 %v2673
    %v2737 = vpop.f32.mrf.mxu0
    %v2738 = vadd.f32 0.0, %v2737
    %2739 = vmatmul.f32.gmra.mxu0 %v2676
    %v2740 = vpop.f32.mrf.mxu0
    %v2741 = vadd.f32 0.0, %v2740
    %2742 = vmatmul.f32.gmra.mxu0 %v2679
    %v2743 = vpop.f32.mrf.mxu0
    %v2744 = vadd.f32 0.0, %v2743
    %2745 = vmatmul.f32.gmra.mxu0 %v2682
    %v2746 = vpop.f32.mrf.mxu0
    %v2747 = vadd.f32 0.0, %v2746
    %2748 = vmatmul.f32.gmra.mxu0 %v2685
    %v2749 = vpop.f32.mrf.mxu0
    %v2750 = vadd.f32 0.0, %v2749
    %2751 = vmatmul.f32.gmra.mxu0 %v2688
    %v2752 = vpop.f32.mrf.mxu0
    %v2753 = vadd.f32 0.0, %v2752
    %2754 = vmatmul.f32.gmra.mxu0 %v2691
    %v2755 = vpop.f32.mrf.mxu0
    %v2756 = vadd.f32 0.0, %v2755
    %2757 = vmatmul.f32.gmra.mxu0 %v2694
    %v2758 = vpop.f32.mrf.mxu0
    %v2759 = vadd.f32 0.0, %v2758
    %2760 = vmatmul.f32.gmra.mxu0 %v2697
    %v2761 = vpop.f32.mrf.mxu0
    %v2762 = vadd.f32 0.0, %v2761
    %2763 = vmatmul.f32.gmra.mxu0 %v2700
    %v2764 = vpop.f32.mrf.mxu0
    %v2765 = vadd.f32 0.0, %v2764
    %2766 = vmatmul.f32.gmra.mxu0 %v2703
    %v2767 = vpop.f32.mrf.mxu0
    %v2768 = vadd.f32 0.0, %v2767
    %2769 = vmatmul.f32.gmra.mxu0 %v2706
    %v2770 = vpop.f32.mrf.mxu0
    %v2771 = vadd.f32 0.0, %v2770
    %2772 = vmatmul.f32.gmra.mxu0 %v2709
    %v2773 = vpop.f32.mrf.mxu0
    %v2774 = vadd.f32 0.0, %v2773
    %2775 = vmatmul.f32.gmra.mxu0 %v2712
    %v2776 = vpop.f32.mrf.mxu0
    %v2777 = vadd.f32 0.0, %v2776
    %2778 = vdwg.mxu0
    %2779 = vmatpush.msra.mxu0 0.0
    %2780 = vmatpush.msra.mxu0 0.0
    %2781 = vmatpush.msra.mxu0 0.0
    %2782 = vmatpush.msra.mxu0 0.0
    %2783 = vmatpush.msra.mxu0 0.0
    %2784 = vmatpush.msra.mxu0 0.0
    %2785 = vmatpush.msra.mxu0 0.0
    %2786 = vmatpush.msra.mxu0 0.0
    %2787 = vmatpush.msra.mxu0 0.0
    %2788 = vmatpush.msra.mxu0 0.0
    %2789 = vmatpush.msra.mxu0 0.0
    %2790 = vmatpush.msra.mxu0 0.0
    %2791 = vmatpush.msra.mxu0 0.0
    %2792 = vmatpush.msra.mxu0 0.0
    %2793 = vmatpush.msra.mxu0 %v1250
    %2794 = vmatpush.msra.mxu0 %v1195
    %2795 = vmatmul.f32.gmra.mxu0 %v2667
    %v2796 = vpop.f32.mrf.mxu0
    %v2797 = vadd.f32 0.0, %v2796
    %2798 = vmatmul.f32.gmra.mxu0 %v2670
    %v2799 = vpop.f32.mrf.mxu0
    %v2800 = vadd.f32 0.0, %v2799
    %2801 = vmatmul.f32.gmra.mxu0 %v2673
    %v2802 = vpop.f32.mrf.mxu0
    %v2803 = vadd.f32 0.0, %v2802
    %2804 = vmatmul.f32.gmra.mxu0 %v2676
    %v2805 = vpop.f32.mrf.mxu0
    %v2806 = vadd.f32 0.0, %v2805
    %2807 = vmatmul.f32.gmra.mxu0 %v2679
    %v2808 = vpop.f32.mrf.mxu0
    %v2809 = vadd.f32 0.0, %v2808
    %2810 = vmatmul.f32.gmra.mxu0 %v2682
    %v2811 = vpop.f32.mrf.mxu0
    %v2812 = vadd.f32 0.0, %v2811
    %2813 = vmatmul.f32.gmra.mxu0 %v2685
    %v2814 = vpop.f32.mrf.mxu0
    %v2815 = vadd.f32 0.0, %v2814
    %2816 = vmatmul.f32.gmra.mxu0 %v2688
    %v2817 = vpop.f32.mrf.mxu0
    %v2818 = vadd.f32 0.0, %v2817
    %2819 = vmatmul.f32.gmra.mxu0 %v2691
    %v2820 = vpop.f32.mrf.mxu0
    %v2821 = vadd.f32 0.0, %v2820
    %2822 = vmatmul.f32.gmra.mxu0 %v2694
    %v2823 = vpop.f32.mrf.mxu0
    %v2824 = vadd.f32 0.0, %v2823
    %2825 = vmatmul.f32.gmra.mxu0 %v2697
    %v2826 = vpop.f32.mrf.mxu0
    %v2827 = vadd.f32 0.0, %v2826
    %2828 = vmatmul.f32.gmra.mxu0 %v2700
    %v2829 = vpop.f32.mrf.mxu0
    %v2830 = vadd.f32 0.0, %v2829
    %2831 = vmatmul.f32.gmra.mxu0 %v2703
    %v2832 = vpop.f32.mrf.mxu0
    %v2833 = vadd.f32 0.0, %v2832
    %2834 = vmatmul.f32.gmra.mxu0 %v2706
    %v2835 = vpop.f32.mrf.mxu0
    %v2836 = vadd.f32 0.0, %v2835
    %2837 = vmatmul.f32.gmra.mxu0 %v2709
    %v2838 = vpop.f32.mrf.mxu0
    %v2839 = vadd.f32 0.0, %v2838
    %2840 = vmatmul.f32.gmra.mxu0 %v2712
    %v2841 = vpop.f32.mrf.mxu0
    %v2842 = vadd.f32 0.0, %v2841
    %2843 = vdwg.mxu0
    %v2844 = vadd.f32 %v2618, %v2732
    %v2845 = vadd.f32 %v2619, %v2797
    %v2846 = vadd.f32 %v2620, %v2735
    %v2847 = vadd.f32 %v2621, %v2800
    %v2848 = vadd.f32 %v2622, %v2738
    %v2849 = vadd.f32 %v2623, %v2803
    %v2850 = vadd.f32 %v2624, %v2741
    %v2851 = vadd.f32 %v2625, %v2806
    %v2852 = vadd.f32 %v2626, %v2744
    %v2853 = vadd.f32 %v2627, %v2809
    %v2854 = vadd.f32 %v2628, %v2747
    %v2855 = vadd.f32 %v2629, %v2812
    %v2856 = vadd.f32 %v2630, %v2750
    %v2857 = vadd.f32 %v2631, %v2815
    %v2858 = vadd.f32 %v2632, %v2753
    %v2859 = vadd.f32 %v2633, %v2818
    %v2860 = vadd.f32 %v2634, %v2756
    %v2861 = vadd.f32 %v2635, %v2821
    %v2862 = vadd.f32 %v2636, %v2759
    %v2863 = vadd.f32 %v2637, %v2824
    %v2864 = vadd.f32 %v2638, %v2762
    %v2865 = vadd.f32 %v2639, %v2827
    %v2866 = vadd.f32 %v2640, %v2765
    %v2867 = vadd.f32 %v2641, %v2830
    %v2868 = vadd.f32 %v2642, %v2768
    %v2869 = vadd.f32 %v2643, %v2833
    %v2870 = vadd.f32 %v2644, %v2771
    %v2871 = vadd.f32 %v2645, %v2836
    %v2872 = vadd.f32 %v2646, %v2774
    %v2873 = vadd.f32 %v2647, %v2839
    %v2874 = vadd.f32 %v2648, %v2777
    %v2875 = vadd.f32 %v2649, %v2842
    %v2876 = vld [vmem:[%s1809 + $0x5] sm:$0xff]
    %v2877 = vld [vmem:[%s1809 + $0xd] sm:$0xff]
    %v2878 = vld [vmem:[%s1809 + $0x15] sm:$0xff]
    %v2879 = vld [vmem:[%s1809 + $0x1d] sm:$0xff]
    %v2880 = vld [vmem:[%s1809 + $0x25] sm:$0xff]
    %v2881 = vld [vmem:[%s1809 + $0x2d] sm:$0xff]
    %v2882 = vld [vmem:[%s1809 + $0x35] sm:$0xff]
    %v2883 = vld [vmem:[%s1809 + $0x3d] sm:$0xff]
    %v2884 = vld [vmem:[%s1809 + $0x45] sm:$0xff]
    %v2885 = vld [vmem:[%s1809 + $0x4d] sm:$0xff]
    %v2886 = vld [vmem:[%s1809 + $0x55] sm:$0xff]
    %v2887 = vld [vmem:[%s1809 + $0x5d] sm:$0xff]
    %v2888 = vld [vmem:[%s1809 + $0x65] sm:$0xff]
    %v2889 = vld [vmem:[%s1809 + $0x6d] sm:$0xff]
    %v2890 = vld [vmem:[%s1809 + $0x75] sm:$0xff]
    %v2891 = vld [vmem:[%s1809 + $0x7d] sm:$0x1f]
    %v2893 = vsel %vm84, %v2876, 0
    %v2896 = vsel %vm84, %v2877, 0
    %v2899 = vsel %vm84, %v2878, 0
    %v2902 = vsel %vm84, %v2879, 0
    %v2905 = vsel %vm84, %v2880, 0
    %v2908 = vsel %vm84, %v2881, 0
    %v2911 = vsel %vm84, %v2882, 0
    %v2914 = vsel %vm84, %v2883, 0
    %v2917 = vsel %vm84, %v2884, 0
    %v2920 = vsel %vm84, %v2885, 0
    %v2923 = vsel %vm84, %v2886, 0
    %v2926 = vsel %vm84, %v2887, 0
    %v2929 = vsel %vm84, %v2888, 0
    %v2932 = vsel %vm84, %v2889, 0
    %v2935 = vsel %vm84, %v2890, 0
    %v2938 = vsel %vm84, %v2891, 0
    %2940 = vmatpush.msra.mxu0 0.0
    %2941 = vmatpush.msra.mxu0 0.0
    %2942 = vmatpush.msra.mxu0 0.0
    %2943 = vmatpush.msra.mxu0 0.0
    %2944 = vmatpush.msra.mxu0 0.0
    %2945 = vmatpush.msra.mxu0 0.0
    %2946 = vmatpush.msra.mxu0 0.0
    %2947 = vmatpush.msra.mxu0 0.0
    %2948 = vmatpush.msra.mxu0 0.0
    %2949 = vmatpush.msra.mxu0 0.0
    %2950 = vmatpush.msra.mxu0 0.0
    %2951 = vmatpush.msra.mxu0 0.0
    %2952 = vmatpush.msra.mxu0 0.0
    %2953 = vmatpush.msra.mxu0 0.0
    %2954 = vmatpush.msra.mxu0 %v1484
    %2955 = vmatpush.msra.mxu0 %v1431
    %2956 = vmatmul.f32.gmra.mxu0 %v2893
    %v2957 = vpop.f32.mrf.mxu0
    %v2958 = vadd.f32 0.0, %v2957
    %2959 = vmatmul.f32.gmra.mxu0 %v2896
    %v2960 = vpop.f32.mrf.mxu0
    %v2961 = vadd.f32 0.0, %v2960
    %2962 = vmatmul.f32.gmra.mxu0 %v2899
    %v2963 = vpop.f32.mrf.mxu0
    %v2964 = vadd.f32 0.0, %v2963
    %2965 = vmatmul.f32.gmra.mxu0 %v2902
    %v2966 = vpop.f32.mrf.mxu0
    %v2967 = vadd.f32 0.0, %v2966
    %2968 = vmatmul.f32.gmra.mxu0 %v2905
    %v2969 = vpop.f32.mrf.mxu0
    %v2970 = vadd.f32 0.0, %v2969
    %2971 = vmatmul.f32.gmra.mxu0 %v2908
    %v2972 = vpop.f32.mrf.mxu0
    %v2973 = vadd.f32 0.0, %v2972
    %2974 = vmatmul.f32.gmra.mxu0 %v2911
    %v2975 = vpop.f32.mrf.mxu0
    %v2976 = vadd.f32 0.0, %v2975
    %2977 = vmatmul.f32.gmra.mxu0 %v2914
    %v2978 = vpop.f32.mrf.mxu0
    %v2979 = vadd.f32 0.0, %v2978
    %2980 = vmatmul.f32.gmra.mxu0 %v2917
    %v2981 = vpop.f32.mrf.mxu0
    %v2982 = vadd.f32 0.0, %v2981
    %2983 = vmatmul.f32.gmra.mxu0 %v2920
    %v2984 = vpop.f32.mrf.mxu0
    %v2985 = vadd.f32 0.0, %v2984
    %2986 = vmatmul.f32.gmra.mxu0 %v2923
    %v2987 = vpop.f32.mrf.mxu0
    %v2988 = vadd.f32 0.0, %v2987
    %2989 = vmatmul.f32.gmra.mxu0 %v2926
    %v2990 = vpop.f32.mrf.mxu0
    %v2991 = vadd.f32 0.0, %v2990
    %2992 = vmatmul.f32.gmra.mxu0 %v2929
    %v2993 = vpop.f32.mrf.mxu0
    %v2994 = vadd.f32 0.0, %v2993
    %2995 = vmatmul.f32.gmra.mxu0 %v2932
    %v2996 = vpop.f32.mrf.mxu0
    %v2997 = vadd.f32 0.0, %v2996
    %2998 = vmatmul.f32.gmra.mxu0 %v2935
    %v2999 = vpop.f32.mrf.mxu0
    %v3000 = vadd.f32 0.0, %v2999
    %3001 = vmatmul.f32.gmra.mxu0 %v2938
    %v3002 = vpop.f32.mrf.mxu0
    %v3003 = vadd.f32 0.0, %v3002
    %3004 = vdwg.mxu0
    %3005 = vmatpush.msra.mxu0 0.0
    %3006 = vmatpush.msra.mxu0 0.0
    %3007 = vmatpush.msra.mxu0 0.0
    %3008 = vmatpush.msra.mxu0 0.0
    %3009 = vmatpush.msra.mxu0 0.0
    %3010 = vmatpush.msra.mxu0 0.0
    %3011 = vmatpush.msra.mxu0 0.0
    %3012 = vmatpush.msra.mxu0 0.0
    %3013 = vmatpush.msra.mxu0 0.0
    %3014 = vmatpush.msra.mxu0 0.0
    %3015 = vmatpush.msra.mxu0 0.0
    %3016 = vmatpush.msra.mxu0 0.0
    %3017 = vmatpush.msra.mxu0 0.0
    %3018 = vmatpush.msra.mxu0 0.0
    %3019 = vmatpush.msra.mxu0 %v1487
    %3020 = vmatpush.msra.mxu0 %v1432
    %3021 = vmatmul.f32.gmra.mxu0 %v2893
    %v3022 = vpop.f32.mrf.mxu0
    %v3023 = vadd.f32 0.0, %v3022
    %3024 = vmatmul.f32.gmra.mxu0 %v2896
    %v3025 = vpop.f32.mrf.mxu0
    %v3026 = vadd.f32 0.0, %v3025
    %3027 = vmatmul.f32.gmra.mxu0 %v2899
    %v3028 = vpop.f32.mrf.mxu0
    %v3029 = vadd.f32 0.0, %v3028
    %3030 = vmatmul.f32.gmra.mxu0 %v2902
    %v3031 = vpop.f32.mrf.mxu0
    %v3032 = vadd.f32 0.0, %v3031
    %3033 = vmatmul.f32.gmra.mxu0 %v2905
    %v3034 = vpop.f32.mrf.mxu0
    %v3035 = vadd.f32 0.0, %v3034
    %3036 = vmatmul.f32.gmra.mxu0 %v2908
    %v3037 = vpop.f32.mrf.mxu0
    %v3038 = vadd.f32 0.0, %v3037
    %3039 = vmatmul.f32.gmra.mxu0 %v2911
    %v3040 = vpop.f32.mrf.mxu0
    %v3041 = vadd.f32 0.0, %v3040
    %3042 = vmatmul.f32.gmra.mxu0 %v2914
    %v3043 = vpop.f32.mrf.mxu0
    %v3044 = vadd.f32 0.0, %v3043
    %3045 = vmatmul.f32.gmra.mxu0 %v2917
    %v3046 = vpop.f32.mrf.mxu0
    %v3047 = vadd.f32 0.0, %v3046
    %3048 = vmatmul.f32.gmra.mxu0 %v2920
    %v3049 = vpop.f32.mrf.mxu0
    %v3050 = vadd.f32 0.0, %v3049
    %3051 = vmatmul.f32.gmra.mxu0 %v2923
    %v3052 = vpop.f32.mrf.mxu0
    %v3053 = vadd.f32 0.0, %v3052
    %3054 = vmatmul.f32.gmra.mxu0 %v2926
    %v3055 = vpop.f32.mrf.mxu0
    %v3056 = vadd.f32 0.0, %v3055
    %3057 = vmatmul.f32.gmra.mxu0 %v2929
    %v3058 = vpop.f32.mrf.mxu0
    %v3059 = vadd.f32 0.0, %v3058
    %3060 = vmatmul.f32.gmra.mxu0 %v2932
    %v3061 = vpop.f32.mrf.mxu0
    %v3062 = vadd.f32 0.0, %v3061
    %3063 = vmatmul.f32.gmra.mxu0 %v2935
    %v3064 = vpop.f32.mrf.mxu0
    %v3065 = vadd.f32 0.0, %v3064
    %3066 = vmatmul.f32.gmra.mxu0 %v2938
    %v3067 = vpop.f32.mrf.mxu0
    %v3068 = vadd.f32 0.0, %v3067
    %3069 = vdwg.mxu0
    %v3070 = vadd.f32 %v2844, %v2958
    %v3071 = vadd.f32 %v2845, %v3023
    %v3072 = vadd.f32 %v2846, %v2961
    %v3073 = vadd.f32 %v2847, %v3026
    %v3074 = vadd.f32 %v2848, %v2964
    %v3075 = vadd.f32 %v2849, %v3029
    %v3076 = vadd.f32 %v2850, %v2967
    %v3077 = vadd.f32 %v2851, %v3032
    %v3078 = vadd.f32 %v2852, %v2970
    %v3079 = vadd.f32 %v2853, %v3035
    %v3080 = vadd.f32 %v2854, %v2973
    %v3081 = vadd.f32 %v2855, %v3038
    %v3082 = vadd.f32 %v2856, %v2976
    %v3083 = vadd.f32 %v2857, %v3041
    %v3084 = vadd.f32 %v2858, %v2979
    %v3085 = vadd.f32 %v2859, %v3044
    %v3086 = vadd.f32 %v2860, %v2982
    %v3087 = vadd.f32 %v2861, %v3047
    %v3088 = vadd.f32 %v2862, %v2985
    %v3089 = vadd.f32 %v2863, %v3050
    %v3090 = vadd.f32 %v2864, %v2988
    %v3091 = vadd.f32 %v2865, %v3053
    %v3092 = vadd.f32 %v2866, %v2991
    %v3093 = vadd.f32 %v2867, %v3056
    %v3094 = vadd.f32 %v2868, %v2994
    %v3095 = vadd.f32 %v2869, %v3059
    %v3096 = vadd.f32 %v2870, %v2997
    %v3097 = vadd.f32 %v2871, %v3062
    %v3098 = vadd.f32 %v2872, %v3000
    %v3099 = vadd.f32 %v2873, %v3065
    %v3100 = vadd.f32 %v2874, %v3003
    %v3101 = vadd.f32 %v2875, %v3068
    %v3103 = vsel %vm1682, %v3100, 0
    %v3106 = vsel %vm1682, %v3101, 0
    %3108 = vmatpush.msra.mxu0 %v3103
    %3109 = vmatpush.msra.mxu0 %v3098
    %3110 = vmatpush.msra.mxu0 %v3096
    %3111 = vmatpush.msra.mxu0 %v3094
    %3112 = vmatpush.msra.mxu0 %v3092
    %3113 = vmatpush.msra.mxu0 %v3090
    %3114 = vmatpush.msra.mxu0 %v3088
    %3115 = vmatpush.msra.mxu0 %v3086
    %3116 = vmatpush.msra.mxu0 %v3084
    %3117 = vmatpush.msra.mxu0 %v3082
    %3118 = vmatpush.msra.mxu0 %v3080
    %3119 = vmatpush.msra.mxu0 %v3078
    %3120 = vmatpush.msra.mxu0 %v3076
    %3121 = vmatpush.msra.mxu0 %v3074
    %3122 = vmatpush.msra.mxu0 %v3072
    %3123 = vmatpush.msra.mxu0 %v3070
    %3124 = vmatmul.f32.gmra.mxu0 %v1659
    %v3125 = vpop.f32.mrf.mxu0
    %v3126 = vadd.f32 %v1653, %v3125
    %3127 = vmatmul.f32.gmra.mxu0 %v1662
    %v3128 = vpop.f32.mrf.mxu0
    %v3129 = vadd.f32 %v1653, %v3128
    %3130 = vmatmul.f32.gmra.mxu0 %v1665
    %v3131 = vpop.f32.mrf.mxu0
    %v3132 = vadd.f32 %v1653, %v3131
    %3133 = vmatmul.f32.gmra.mxu0 %v1668
    %v3134 = vpop.f32.mrf.mxu0
    %v3135 = vadd.f32 %v1653, %v3134
    %3136 = vmatmul.f32.gmra.mxu0 %v1671
    %v3137 = vpop.f32.mrf.mxu0
    %v3138 = vadd.f32 %v1653, %v3137
    %3139 = vmatmul.f32.gmra.mxu0 %v1674
    %v3140 = vpop.f32.mrf.mxu0
    %v3141 = vadd.f32 %v1653, %v3140
    %3142 = vmatmul.f32.gmra.mxu0 %v1677
    %v3143 = vpop.f32.mrf.mxu0
    %v3144 = vadd.f32 %v1653, %v3143
    %3145 = vmatmul.f32.gmra.mxu0 %v1680
    %v3146 = vpop.f32.mrf.mxu0
    %v3147 = vadd.f32 %v1653, %v3146
    %3148 = vdwg.mxu0
    %3149 = vmatpush.msra.mxu0 %v3106
    %3150 = vmatpush.msra.mxu0 %v3099
    %3151 = vmatpush.msra.mxu0 %v3097
    %3152 = vmatpush.msra.mxu0 %v3095
    %3153 = vmatpush.msra.mxu0 %v3093
    %3154 = vmatpush.msra.mxu0 %v3091
    %3155 = vmatpush.msra.mxu0 %v3089
    %3156 = vmatpush.msra.mxu0 %v3087
    %3157 = vmatpush.msra.mxu0 %v3085
    %3158 = vmatpush.msra.mxu0 %v3083
    %3159 = vmatpush.msra.mxu0 %v3081
    %3160 = vmatpush.msra.mxu0 %v3079
    %3161 = vmatpush.msra.mxu0 %v3077
    %3162 = vmatpush.msra.mxu0 %v3075
    %3163 = vmatpush.msra.mxu0 %v3073
    %3164 = vmatpush.msra.mxu0 %v3071
    %3165 = vmatmul.f32.gmra.mxu0 %v1659
    %v3166 = vpop.f32.mrf.mxu0
    %v3167 = vadd.f32 %v1654, %v3166
    %3168 = vmatmul.f32.gmra.mxu0 %v1662
    %v3169 = vpop.f32.mrf.mxu0
    %v3170 = vadd.f32 %v1654, %v3169
    %3171 = vmatmul.f32.gmra.mxu0 %v1665
    %v3172 = vpop.f32.mrf.mxu0
    %v3173 = vadd.f32 %v1654, %v3172
    %3174 = vmatmul.f32.gmra.mxu0 %v1668
    %v3175 = vpop.f32.mrf.mxu0
    %v3176 = vadd.f32 %v1654, %v3175
    %3177 = vmatmul.f32.gmra.mxu0 %v1671
    %v3178 = vpop.f32.mrf.mxu0
    %v3179 = vadd.f32 %v1654, %v3178
    %3180 = vmatmul.f32.gmra.mxu0 %v1674
    %v3181 = vpop.f32.mrf.mxu0
    %v3182 = vadd.f32 %v1654, %v3181
    %3183 = vmatmul.f32.gmra.mxu0 %v1677
    %v3184 = vpop.f32.mrf.mxu0
    %v3185 = vadd.f32 %v1654, %v3184
    %3186 = vmatmul.f32.gmra.mxu0 %v1680
    %v3187 = vpop.f32.mrf.mxu0
    %v3188 = vadd.f32 %v1654, %v3187
    %3189 = vdwg.mxu0
    %v3190 = vmax.f32 %v3126, 0.0
    %v3191 = vmax.f32 %v3167, 0.0
    %v3192 = vmax.f32 %v3129, 0.0
    %v3193 = vmax.f32 %v3170, 0.0
    %v3194 = vmax.f32 %v3132, 0.0
    %v3195 = vmax.f32 %v3173, 0.0
    %v3196 = vmax.f32 %v3135, 0.0
    %v3197 = vmax.f32 %v3176, 0.0
    %v3198 = vmax.f32 %v3138, 0.0
    %v3199 = vmax.f32 %v3179, 0.0
    %v3200 = vmax.f32 %v3141, 0.0
    %v3201 = vmax.f32 %v3182, 0.0
    %v3202 = vmax.f32 %v3144, 0.0
    %v3203 = vmax.f32 %v3185, 0.0
    %v3204 = vmax.f32 %v3147, 0.0
    %v3205 = vmax.f32 %v3188, 0.0
    %v3206 = vadd.f32 %v3190, %v1789
    %v3207 = vadd.f32 %v3191, %v1790
    %v3208 = vadd.f32 %v3192, %v1789
    %v3209 = vadd.f32 %v3193, %v1790
    %v3210 = vadd.f32 %v3194, %v1789
    %v3211 = vadd.f32 %v3195, %v1790
    %v3212 = vadd.f32 %v3196, %v1789
    %v3213 = vadd.f32 %v3197, %v1790
    %v3214 = vadd.f32 %v3198, %v1789
    %v3215 = vadd.f32 %v3199, %v1790
    %v3216 = vadd.f32 %v3200, %v1789
    %v3217 = vadd.f32 %v3201, %v1790
    %v3218 = vadd.f32 %v3202, %v1789
    %v3219 = vadd.f32 %v3203, %v1790
    %v3220 = vadd.f32 %v3204, %v1789
    %v3221 = vadd.f32 %v3205, %v1790
    %vm3238 = vcmask 1042432
    %v3239 = vrot.slane %v1793, 5
    %v3240 = vrot.slane %v1794, 5
    %v3241 = vrot.slane %v1795, 5
    %v3242 = vsel %vm3238, %v3239, %v3241
    %v3243 = vrot.slane %v1796, 5
    %v3244 = vsel %vm3238, %v3240, %v3243
    %v3245 = vrot.slane %v1797, 5
    %v3246 = vsel %vm3238, %v3241, %v3245
    %v3247 = vrot.slane %v1798, 5
    %v3248 = vsel %vm3238, %v3243, %v3247
    %v3249 = vrot.slane %v1799, 5
    %v3250 = vsel %vm3238, %v3245, %v3249
    %v3251 = vrot.slane %v1800, 5
    %v3252 = vsel %vm3238, %v3247, %v3251
    %v3253 = vrot.slane %v1801, 5
    %v3254 = vsel %vm3238, %v3249, %v3253
    %v3255 = vrot.slane %v1802, 5
    %v3256 = vsel %vm3238, %v3251, %v3255
    %v3257 = vrot.slane %v1803, 5
    %v3258 = vsel %vm3238, %v3253, %v3257
    %v3259 = vrot.slane %v1804, 5
    %v3260 = vsel %vm3238, %v3255, %v3259
    %v3261 = vrot.slane %v1805, 5
    %v3262 = vsel %vm3238, %v3257, %v3261
    %v3263 = vrot.slane %v1806, 5
    %v3264 = vsel %vm3238, %v3259, %v3263
    %v3265 = vrot.slane %v1807, 5
    %v3266 = vsel %vm3238, %v3261, %v3265
    %v3267 = vrot.slane %v1808, 5
    %v3268 = vsel %vm3238, %v3263, %v3267
    %3287 = vst [vmem:[#allocation3] sm:$0xf8] %v3239
    %vm3288 = vcmask 56323
    %3289 = vst.msk [vmem:[#allocation3 + $0x8] sm:$0xf8] %vm3288, %v3240
    %3290 = vst [vmem:[#allocation3 + $0x10] sm:$0xff] %v3242
    %3291 = vst.msk [vmem:[#allocation3 + $0x18] sm:$0xff] %vm121, %v3244
    %3292 = vst [vmem:[#allocation3 + $0x20] sm:$0xff] %v3246
    %3293 = vst.msk [vmem:[#allocation3 + $0x28] sm:$0xff] %vm121, %v3248
    %3294 = vst [vmem:[#allocation3 + $0x30] sm:$0xff] %v3250
    %3295 = vst.msk [vmem:[#allocation3 + $0x38] sm:$0xff] %vm121, %v3252
    %3296 = vst [vmem:[#allocation3 + $0x40] sm:$0xff] %v3254
    %3297 = vst.msk [vmem:[#allocation3 + $0x48] sm:$0xff] %vm121, %v3256
    %3298 = vst [vmem:[#allocation3 + $0x50] sm:$0xff] %v3258
    %3299 = vst.msk [vmem:[#allocation3 + $0x58] sm:$0xff] %vm121, %v3260
    %3300 = vst [vmem:[#allocation3 + $0x60] sm:$0xff] %v3262
    %3301 = vst.msk [vmem:[#allocation3 + $0x68] sm:$0xff] %vm121, %v3264
    %3302 = vst [vmem:[#allocation3 + $0x70] sm:$0xff] %v3266
    %3303 = vst.msk [vmem:[#allocation3 + $0x78] sm:$0xff] %vm121, %v3268
    %3304 = vst [vmem:[#allocation3 + $0x80] sm:$0x3] %v3265
    %vm3305 = vcmask 50176
    %3306 = vst.msk [vmem:[#allocation3 + $0x88] sm:$0x3] %vm3305, %v3267
    %v3323 = vrot.slane %v3206, 5
    %v3324 = vrot.slane %v3207, 5
    %v3325 = vrot.slane %v3208, 5
    %v3326 = vsel %vm3238, %v3323, %v3325
    %v3327 = vrot.slane %v3209, 5
    %v3328 = vsel %vm3238, %v3324, %v3327
    %v3329 = vrot.slane %v3210, 5
    %v3330 = vsel %vm3238, %v3325, %v3329
    %v3331 = vrot.slane %v3211, 5
    %v3332 = vsel %vm3238, %v3327, %v3331
    %v3333 = vrot.slane %v3212, 5
    %v3334 = vsel %vm3238, %v3329, %v3333
    %v3335 = vrot.slane %v3213, 5
    %v3336 = vsel %vm3238, %v3331, %v3335
    %v3337 = vrot.slane %v3214, 5
    %v3338 = vsel %vm3238, %v3333, %v3337
    %v3339 = vrot.slane %v3215, 5
    %v3340 = vsel %vm3238, %v3335, %v3339
    %v3341 = vrot.slane %v3216, 5
    %v3342 = vsel %vm3238, %v3337, %v3341
    %v3343 = vrot.slane %v3217, 5
    %v3344 = vsel %vm3238, %v3339, %v3343
    %v3345 = vrot.slane %v3218, 5
    %v3346 = vsel %vm3238, %v3341, %v3345
    %v3347 = vrot.slane %v3219, 5
    %v3348 = vsel %vm3238, %v3343, %v3347
    %v3349 = vrot.slane %v3220, 5
    %v3350 = vsel %vm3238, %v3345, %v3349
    %v3351 = vrot.slane %v3221, 5
    %v3352 = vsel %vm3238, %v3347, %v3351
    %s3371 = scalar_lea.vmem [#allocation3], 144
    %3372 = vst [vmem:[%s3371] sm:$0xf8] %v3323
    %3373 = vst.msk [vmem:[%s3371 + $0x8] sm:$0xf8] %vm3288, %v3324
    %3374 = vst [vmem:[%s3371 + $0x10] sm:$0xff] %v3326
    %3375 = vst.msk [vmem:[%s3371 + $0x18] sm:$0xff] %vm121, %v3328
    %3376 = vst [vmem:[%s3371 + $0x20] sm:$0xff] %v3330
    %3377 = vst.msk [vmem:[%s3371 + $0x28] sm:$0xff] %vm121, %v3332
    %3378 = vst [vmem:[%s3371 + $0x30] sm:$0xff] %v3334
    %3379 = vst.msk [vmem:[%s3371 + $0x38] sm:$0xff] %vm121, %v3336
    %3380 = vst [vmem:[%s3371 + $0x40] sm:$0xff] %v3338
    %3381 = vst.msk [vmem:[%s3371 + $0x48] sm:$0xff] %vm121, %v3340
    %3382 = vst [vmem:[%s3371 + $0x50] sm:$0xff] %v3342
    %3383 = vst.msk [vmem:[%s3371 + $0x58] sm:$0xff] %vm121, %v3344
    %3384 = vst [vmem:[%s3371 + $0x60] sm:$0xff] %v3346
    %3385 = vst.msk [vmem:[%s3371 + $0x68] sm:$0xff] %vm121, %v3348
    %3386 = vst [vmem:[%s3371 + $0x70] sm:$0xff] %v3350
    %3387 = vst.msk [vmem:[%s3371 + $0x78] sm:$0xff] %vm121, %v3352
    %3388 = vst [vmem:[%s3371 + $0x80] sm:$0x3] %v3349
    %3389 = vst.msk [vmem:[%s3371 + $0x88] sm:$0x3] %vm3305, %v3351
    %v3390 = vld [vmem:[#allocation3] sm:$0xff]
    %v3391 = vld [vmem:[#allocation3 + $0x8] sm:$0xff]
    %v3392 = vld [vmem:[#allocation3 + $0x10] sm:$0xff]
    %v3393 = vld [vmem:[#allocation3 + $0x18] sm:$0xff]
    %v3394 = vld [vmem:[#allocation3 + $0x20] sm:$0xff]
    %v3395 = vld [vmem:[#allocation3 + $0x28] sm:$0xff]
    %v3396 = vld [vmem:[#allocation3 + $0x30] sm:$0xff]
    %v3397 = vld [vmem:[#allocation3 + $0x38] sm:$0xff]
    %v3398 = vld [vmem:[#allocation3 + $0x40] sm:$0xff]
    %v3399 = vld [vmem:[#allocation3 + $0x48] sm:$0xff]
    %v3400 = vld [vmem:[#allocation3 + $0x50] sm:$0xff]
    %v3401 = vld [vmem:[#allocation3 + $0x58] sm:$0xff]
    %v3402 = vld [vmem:[#allocation3 + $0x60] sm:$0xff]
    %v3403 = vld [vmem:[#allocation3 + $0x68] sm:$0xff]
    %v3404 = vld [vmem:[#allocation3 + $0x70] sm:$0xff]
    %v3405 = vld [vmem:[#allocation3 + $0x78] sm:$0xff]
    %v3406 = vld [vmem:[#allocation3 + $0x80] sm:$0x1]
    %v3407 = vld [vmem:[#allocation3 + $0x88] sm:$0x1]
    %v3408 = vld [vmem:[%s4] sm:$0xff]
    %v3409 = vld [vmem:[%s4 + $0x8] sm:$0xff]
    %v3410 = vld [vmem:[%s4 + $0x10] sm:$0xff]
    %v3411 = vld [vmem:[%s4 + $0x18] sm:$0xff]
    %v3412 = vld [vmem:[%s4 + $0x20] sm:$0xff]
    %v3413 = vld [vmem:[%s4 + $0x28] sm:$0xff]
    %v3414 = vld [vmem:[%s4 + $0x30] sm:$0xff]
    %v3415 = vld [vmem:[%s4 + $0x38] sm:$0xff]
    %v3416 = vld [vmem:[%s4 + $0x40] sm:$0xff]
    %v3417 = vld [vmem:[%s4 + $0x48] sm:$0xff]
    %v3418 = vld [vmem:[%s4 + $0x50] sm:$0xff]
    %v3419 = vld [vmem:[%s4 + $0x58] sm:$0xff]
    %v3420 = vld [vmem:[%s4 + $0x60] sm:$0xff]
    %v3421 = vld [vmem:[%s4 + $0x68] sm:$0xff]
    %v3422 = vld [vmem:[%s4 + $0x70] sm:$0xff]
    %v3423 = vld [vmem:[%s4 + $0x78] sm:$0xff]
    %v3424 = vld [vmem:[%s4 + $0x80] sm:$0x7f]
    %v3425 = vld [vmem:[#allocation3] sm:$0xfe]
    %v3426 = vld [vmem:[#allocation3 + $0x8] sm:$0xfe]
    %v3427 = vld [vmem:[#allocation3 + $0x80] sm:$0x3]
    %v3428 = vld [vmem:[#allocation3 + $0x88] sm:$0x3]
    %s3429 = scalar_lea.vmem %s4, 136
    %v3430 = vld [vmem:[%s3429] sm:$0xff]
    %v3431 = vld [vmem:[%s3429 + $0x8] sm:$0xff]
    %v3432 = vld [vmem:[%s3429 + $0x10] sm:$0xff]
    %v3433 = vld [vmem:[%s3429 + $0x18] sm:$0xff]
    %v3434 = vld [vmem:[%s3429 + $0x20] sm:$0xff]
    %v3435 = vld [vmem:[%s3429 + $0x28] sm:$0xff]
    %v3436 = vld [vmem:[%s3429 + $0x30] sm:$0xff]
    %v3437 = vld [vmem:[%s3429 + $0x38] sm:$0xff]
    %v3438 = vld [vmem:[%s3429 + $0x40] sm:$0xff]
    %v3439 = vld [vmem:[%s3429 + $0x48] sm:$0xff]
    %v3440 = vld [vmem:[%s3429 + $0x50] sm:$0xff]
    %v3441 = vld [vmem:[%s3429 + $0x58] sm:$0xff]
    %v3442 = vld [vmem:[%s3429 + $0x60] sm:$0xff]
    %v3443 = vld [vmem:[%s3429 + $0x68] sm:$0xff]
    %v3444 = vld [vmem:[%s3429 + $0x70] sm:$0xff]
    %v3445 = vld [vmem:[%s3429 + $0x78] sm:$0xff]
    %v3446 = vld [vmem:[%s3429 + $0x80] sm:$0x7f]
    %vm3465 = vcmask 1046528
    %v3466 = vrot.slane %v3425, 1
    %v3467 = vrot.slane %v3392, 1
    %v3468 = vsel %vm3465, %v3466, %v3467
    %v3469 = vrot.slane %v3426, 1
    %v3470 = vrot.slane %v3393, 1
    %v3471 = vsel %vm3465, %v3469, %v3470
    %v3472 = vrot.slane %v3394, 1
    %v3473 = vsel %vm3465, %v3467, %v3472
    %v3474 = vrot.slane %v3395, 1
    %v3475 = vsel %vm3465, %v3470, %v3474
    %v3476 = vrot.slane %v3396, 1
    %v3477 = vsel %vm3465, %v3472, %v3476
    %v3478 = vrot.slane %v3397, 1
    %v3479 = vsel %vm3465, %v3474, %v3478
    %v3480 = vrot.slane %v3398, 1
    %v3481 = vsel %vm3465, %v3476, %v3480
    %v3482 = vrot.slane %v3399, 1
    %v3483 = vsel %vm3465, %v3478, %v3482
    %v3484 = vrot.slane %v3400, 1
    %v3485 = vsel %vm3465, %v3480, %v3484
    %v3486 = vrot.slane %v3401, 1
    %v3487 = vsel %vm3465, %v3482, %v3486
    %v3488 = vrot.slane %v3402, 1
    %v3489 = vsel %vm3465, %v3484, %v3488
    %v3490 = vrot.slane %v3403, 1
    %v3491 = vsel %vm3465, %v3486, %v3490
    %v3492 = vrot.slane %v3404, 1
    %v3493 = vsel %vm3465, %v3488, %v3492
    %v3494 = vrot.slane %v3405, 1
    %v3495 = vsel %vm3465, %v3490, %v3494
    %v3496 = vrot.slane %v3427, 1
    %v3497 = vsel %vm3465, %v3492, %v3496
    %v3498 = vrot.slane %v3428, 1
    %v3499 = vsel %vm3465, %v3494, %v3498
    %v3509 = vsel %vm121, %v3471, 0
    %v3511 = vsel %vm121, %v3475, 0
    %v3513 = vsel %vm121, %v3479, 0
    %v3515 = vsel %vm121, %v3483, 0
    %v3517 = vsel %vm121, %v3487, 0
    %v3519 = vsel %vm121, %v3491, 0
    %v3521 = vsel %vm121, %v3495, 0
    %v3523 = vsel %vm121, %v3499, 0
    %v3525 = vsel %vm121, %v3498, 0
    %v3528 = vsel %vm3465, %v3446, 0
    %3530 = vmatpush.msra.mxu0 %v3445
    %3531 = vmatpush.msra.mxu0 %v3444
    %3532 = vmatpush.msra.mxu0 %v3443
    %3533 = vmatpush.msra.mxu0 %v3442
    %3534 = vmatpush.msra.mxu0 %v3441
    %3535 = vmatpush.msra.mxu0 %v3440
    %3536 = vmatpush.msra.mxu0 %v3439
    %3537 = vmatpush.msra.mxu0 %v3438
    %3538 = vmatpush.msra.mxu0 %v3437
    %3539 = vmatpush.msra.mxu0 %v3436
    %3540 = vmatpush.msra.mxu0 %v3435
    %3541 = vmatpush.msra.mxu0 %v3434
    %3542 = vmatpush.msra.mxu0 %v3433
    %3543 = vmatpush.msra.mxu0 %v3432
    %3544 = vmatpush.msra.mxu0 %v3431
    %3545 = vmatpush.msra.mxu0 %v3430
    %3546 = vmatmul.f32.gmra.mxu0 %v3468
    %v3547 = vpop.f32.mrf.mxu0
    %v3548 = vadd.f32 0.0, %v3547
    %3549 = vmatmul.f32.gmra.mxu0 %v3473
    %v3550 = vpop.f32.mrf.mxu0
    %v3551 = vadd.f32 0.0, %v3550
    %3552 = vmatmul.f32.gmra.mxu0 %v3477
    %v3553 = vpop.f32.mrf.mxu0
    %v3554 = vadd.f32 0.0, %v3553
    %3555 = vmatmul.f32.gmra.mxu0 %v3481
    %v3556 = vpop.f32.mrf.mxu0
    %v3557 = vadd.f32 0.0, %v3556
    %3558 = vmatmul.f32.gmra.mxu0 %v3485
    %v3559 = vpop.f32.mrf.mxu0
    %v3560 = vadd.f32 0.0, %v3559
    %3561 = vmatmul.f32.gmra.mxu0 %v3489
    %v3562 = vpop.f32.mrf.mxu0
    %v3563 = vadd.f32 0.0, %v3562
    %3564 = vmatmul.f32.gmra.mxu0 %v3493
    %v3565 = vpop.f32.mrf.mxu0
    %v3566 = vadd.f32 0.0, %v3565
    %3567 = vmatmul.f32.gmra.mxu0 %v3497
    %v3568 = vpop.f32.mrf.mxu0
    %v3569 = vadd.f32 0.0, %v3568
    %3570 = vmatmul.f32.gmra.mxu0 %v3496
    %v3571 = vpop.f32.mrf.mxu0
    %v3572 = vadd.f32 0.0, %v3571
    %3573 = vdwg.mxu0
    %3574 = vmatpush.msra.mxu0 0.0
    %3575 = vmatpush.msra.mxu0 0.0
    %3576 = vmatpush.msra.mxu0 0.0
    %3577 = vmatpush.msra.mxu0 0.0
    %3578 = vmatpush.msra.mxu0 0.0
    %3579 = vmatpush.msra.mxu0 0.0
    %3580 = vmatpush.msra.mxu0 0.0
    %3581 = vmatpush.msra.mxu0 0.0
    %3582 = vmatpush.msra.mxu0 0.0
    %3583 = vmatpush.msra.mxu0 0.0
    %3584 = vmatpush.msra.mxu0 0.0
    %3585 = vmatpush.msra.mxu0 0.0
    %3586 = vmatpush.msra.mxu0 0.0
    %3587 = vmatpush.msra.mxu0 0.0
    %3588 = vmatpush.msra.mxu0 0.0
    %3589 = vmatpush.msra.mxu0 %v3528
    %3590 = vmatmul.f32.gmra.mxu0 %v3509
    %v3591 = vpop.f32.mrf.mxu0
    %v3592 = vadd.f32 %v3548, %v3591
    %3593 = vmatmul.f32.gmra.mxu0 %v3511
    %v3594 = vpop.f32.mrf.mxu0
    %v3595 = vadd.f32 %v3551, %v3594
    %3596 = vmatmul.f32.gmra.mxu0 %v3513
    %v3597 = vpop.f32.mrf.mxu0
    %v3598 = vadd.f32 %v3554, %v3597
    %3599 = vmatmul.f32.gmra.mxu0 %v3515
    %v3600 = vpop.f32.mrf.mxu0
    %v3601 = vadd.f32 %v3557, %v3600
    %3602 = vmatmul.f32.gmra.mxu0 %v3517
    %v3603 = vpop.f32.mrf.mxu0
    %v3604 = vadd.f32 %v3560, %v3603
    %3605 = vmatmul.f32.gmra.mxu0 %v3519
    %v3606 = vpop.f32.mrf.mxu0
    %v3607 = vadd.f32 %v3563, %v3606
    %3608 = vmatmul.f32.gmra.mxu0 %v3521
    %v3609 = vpop.f32.mrf.mxu0
    %v3610 = vadd.f32 %v3566, %v3609
    %3611 = vmatmul.f32.gmra.mxu0 %v3523
    %v3612 = vpop.f32.mrf.mxu0
    %v3613 = vadd.f32 %v3569, %v3612
    %3614 = vmatmul.f32.gmra.mxu0 %v3525
    %v3615 = vpop.f32.mrf.mxu0
    %v3616 = vadd.f32 %v3572, %v3615
    %3617 = vdwg.mxu0
    %v3619 = vsel %vm121, %v3391, 0
    %v3621 = vsel %vm121, %v3393, 0
    %v3623 = vsel %vm121, %v3395, 0
    %v3625 = vsel %vm121, %v3397, 0
    %v3627 = vsel %vm121, %v3399, 0
    %v3629 = vsel %vm121, %v3401, 0
    %v3631 = vsel %vm121, %v3403, 0
    %v3633 = vsel %vm121, %v3405, 0
    %v3636 = vsel %vm121, %v3407, 0
    %v3639 = vsel %vm3465, %v3424, 0
    %3641 = vmatpush.msra.mxu0 %v3423
    %3642 = vmatpush.msra.mxu0 %v3422
    %3643 = vmatpush.msra.mxu0 %v3421
    %3644 = vmatpush.msra.mxu0 %v3420
    %3645 = vmatpush.msra.mxu0 %v3419
    %3646 = vmatpush.msra.mxu0 %v3418
    %3647 = vmatpush.msra.mxu0 %v3417
    %3648 = vmatpush.msra.mxu0 %v3416
    %3649 = vmatpush.msra.mxu0 %v3415
    %3650 = vmatpush.msra.mxu0 %v3414
    %3651 = vmatpush.msra.mxu0 %v3413
    %3652 = vmatpush.msra.mxu0 %v3412
    %3653 = vmatpush.msra.mxu0 %v3411
    %3654 = vmatpush.msra.mxu0 %v3410
    %3655 = vmatpush.msra.mxu0 %v3409
    %3656 = vmatpush.msra.mxu0 %v3408
    %3657 = vmatmul.f32.gmra.mxu0 %v3390
    %v3658 = vpop.f32.mrf.mxu0
    %v3659 = vadd.f32 %v3592, %v3658
    %3660 = vmatmul.f32.gmra.mxu0 %v3392
    %v3661 = vpop.f32.mrf.mxu0
    %v3662 = vadd.f32 %v3595, %v3661
    %3663 = vmatmul.f32.gmra.mxu0 %v3394
    %v3664 = vpop.f32.mrf.mxu0
    %v3665 = vadd.f32 %v3598, %v3664
    %3666 = vmatmul.f32.gmra.mxu0 %v3396
    %v3667 = vpop.f32.mrf.mxu0
    %v3668 = vadd.f32 %v3601, %v3667
    %3669 = vmatmul.f32.gmra.mxu0 %v3398
    %v3670 = vpop.f32.mrf.mxu0
    %v3671 = vadd.f32 %v3604, %v3670
    %3672 = vmatmul.f32.gmra.mxu0 %v3400
    %v3673 = vpop.f32.mrf.mxu0
    %v3674 = vadd.f32 %v3607, %v3673
    %3675 = vmatmul.f32.gmra.mxu0 %v3402
    %v3676 = vpop.f32.mrf.mxu0
    %v3677 = vadd.f32 %v3610, %v3676
    %3678 = vmatmul.f32.gmra.mxu0 %v3404
    %v3679 = vpop.f32.mrf.mxu0
    %v3680 = vadd.f32 %v3613, %v3679
    %3681 = vmatmul.f32.gmra.mxu0 %v3406
    %v3682 = vpop.f32.mrf.mxu0
    %v3683 = vadd.f32 %v3616, %v3682
    %3684 = vdwg.mxu0
    %3685 = vmatpush.msra.mxu0 0.0
    %3686 = vmatpush.msra.mxu0 0.0
    %3687 = vmatpush.msra.mxu0 0.0
    %3688 = vmatpush.msra.mxu0 0.0
    %3689 = vmatpush.msra.mxu0 0.0
    %3690 = vmatpush.msra.mxu0 0.0
    %3691 = vmatpush.msra.mxu0 0.0
    %3692 = vmatpush.msra.mxu0 0.0
    %3693 = vmatpush.msra.mxu0 0.0
    %3694 = vmatpush.msra.mxu0 0.0
    %3695 = vmatpush.msra.mxu0 0.0
    %3696 = vmatpush.msra.mxu0 0.0
    %3697 = vmatpush.msra.mxu0 0.0
    %3698 = vmatpush.msra.mxu0 0.0
    %3699 = vmatpush.msra.mxu0 0.0
    %3700 = vmatpush.msra.mxu0 %v3639
    %3701 = vmatmul.f32.gmra.mxu0 %v3619
    %v3702 = vpop.f32.mrf.mxu0
    %v3703 = vadd.f32 %v3659, %v3702
    %3704 = vmatmul.f32.gmra.mxu0 %v3621
    %v3705 = vpop.f32.mrf.mxu0
    %v3706 = vadd.f32 %v3662, %v3705
    %3707 = vmatmul.f32.gmra.mxu0 %v3623
    %v3708 = vpop.f32.mrf.mxu0
    %v3709 = vadd.f32 %v3665, %v3708
    %3710 = vmatmul.f32.gmra.mxu0 %v3625
    %v3711 = vpop.f32.mrf.mxu0
    %v3712 = vadd.f32 %v3668, %v3711
    %3713 = vmatmul.f32.gmra.mxu0 %v3627
    %v3714 = vpop.f32.mrf.mxu0
    %v3715 = vadd.f32 %v3671, %v3714
    %3716 = vmatmul.f32.gmra.mxu0 %v3629
    %v3717 = vpop.f32.mrf.mxu0
    %v3718 = vadd.f32 %v3674, %v3717
    %3719 = vmatmul.f32.gmra.mxu0 %v3631
    %v3720 = vpop.f32.mrf.mxu0
    %v3721 = vadd.f32 %v3677, %v3720
    %3722 = vmatmul.f32.gmra.mxu0 %v3633
    %v3723 = vpop.f32.mrf.mxu0
    %v3724 = vadd.f32 %v3680, %v3723
    %3725 = vmatmul.f32.gmra.mxu0 %v3636
    %v3726 = vpop.f32.mrf.mxu0
    %v3727 = vadd.f32 %v3683, %v3726
    %3728 = vdwg.mxu0
    %v3729 = vld [vmem:[#allocation3] sm:$0xfc]
    %v3730 = vld [vmem:[#allocation3 + $0x8] sm:$0xfc]
    %v3731 = vld [vmem:[#allocation3 + $0x80] sm:$0x7]
    %v3732 = vld [vmem:[#allocation3 + $0x88] sm:$0x7]
    %s3733 = scalar_lea.vmem %s4, 272
    %v3734 = vld [vmem:[%s3733] sm:$0xff]
    %v3735 = vld [vmem:[%s3733 + $0x8] sm:$0xff]
    %v3736 = vld [vmem:[%s3733 + $0x10] sm:$0xff]
    %v3737 = vld [vmem:[%s3733 + $0x18] sm:$0xff]
    %v3738 = vld [vmem:[%s3733 + $0x20] sm:$0xff]
    %v3739 = vld [vmem:[%s3733 + $0x28] sm:$0xff]
    %v3740 = vld [vmem:[%s3733 + $0x30] sm:$0xff]
    %v3741 = vld [vmem:[%s3733 + $0x38] sm:$0xff]
    %v3742 = vld [vmem:[%s3733 + $0x40] sm:$0xff]
    %v3743 = vld [vmem:[%s3733 + $0x48] sm:$0xff]
    %v3744 = vld [vmem:[%s3733 + $0x50] sm:$0xff]
    %v3745 = vld [vmem:[%s3733 + $0x58] sm:$0xff]
    %v3746 = vld [vmem:[%s3733 + $0x60] sm:$0xff]
    %v3747 = vld [vmem:[%s3733 + $0x68] sm:$0xff]
    %v3748 = vld [vmem:[%s3733 + $0x70] sm:$0xff]
    %v3749 = vld [vmem:[%s3733 + $0x78] sm:$0xff]
    %v3750 = vld [vmem:[%s3733 + $0x80] sm:$0x7f]
    %vm3755 = vcmask 1045504
    %v3756 = vrot.slane %v3729, 2
    %v3757 = vrot.slane %v3392, 2
    %v3758 = vsel %vm3755, %v3756, %v3757
    %v3759 = vrot.slane %v3730, 2
    %v3760 = vrot.slane %v3393, 2
    %v3761 = vsel %vm3755, %v3759, %v3760
    %v3762 = vrot.slane %v3394, 2
    %v3763 = vsel %vm3755, %v3757, %v3762
    %v3764 = vrot.slane %v3395, 2
    %v3765 = vsel %vm3755, %v3760, %v3764
    %v3766 = vrot.slane %v3396, 2
    %v3767 = vsel %vm3755, %v3762, %v3766
    %v3768 = vrot.slane %v3397, 2
    %v3769 = vsel %vm3755, %v3764, %v3768
    %v3770 = vrot.slane %v3398, 2
    %v3771 = vsel %vm3755, %v3766, %v3770
    %v3772 = vrot.slane %v3399, 2
    %v3773 = vsel %vm3755, %v3768, %v3772
    %v3774 = vrot.slane %v3400, 2
    %v3775 = vsel %vm3755, %v3770, %v3774
    %v3776 = vrot.slane %v3401, 2
    %v3777 = vsel %vm3755, %v3772, %v3776
    %v3778 = vrot.slane %v3402, 2
    %v3779 = vsel %vm3755, %v3774, %v3778
    %v3780 = vrot.slane %v3403, 2
    %v3781 = vsel %vm3755, %v3776, %v3780
    %v3782 = vrot.slane %v3404, 2
    %v3783 = vsel %vm3755, %v3778, %v3782
    %v3784 = vrot.slane %v3405, 2
    %v3785 = vsel %vm3755, %v3780, %v3784
    %v3786 = vrot.slane %v3731, 2
    %v3787 = vsel %vm3755, %v3782, %v3786
    %v3788 = vrot.slane %v3732, 2
    %v3789 = vsel %vm3755, %v3784, %v3788
    %v3799 = vsel %vm121, %v3761, 0
    %v3801 = vsel %vm121, %v3765, 0
    %v3803 = vsel %vm121, %v3769, 0
    %v3805 = vsel %vm121, %v3773, 0
    %v3807 = vsel %vm121, %v3777, 0
    %v3809 = vsel %vm121, %v3781, 0
    %v3811 = vsel %vm121, %v3785, 0
    %v3813 = vsel %vm121, %v3789, 0
    %v3815 = vsel %vm121, %v3788, 0
    %v3818 = vsel %vm3465, %v3750, 0
    %3820 = vmatpush.msra.mxu0 %v3749
    %3821 = vmatpush.msra.mxu0 %v3748
    %3822 = vmatpush.msra.mxu0 %v3747
    %3823 = vmatpush.msra.mxu0 %v3746
    %3824 = vmatpush.msra.mxu0 %v3745
    %3825 = vmatpush.msra.mxu0 %v3744
    %3826 = vmatpush.msra.mxu0 %v3743
    %3827 = vmatpush.msra.mxu0 %v3742
    %3828 = vmatpush.msra.mxu0 %v3741
    %3829 = vmatpush.msra.mxu0 %v3740
    %3830 = vmatpush.msra.mxu0 %v3739
    %3831 = vmatpush.msra.mxu0 %v3738
    %3832 = vmatpush.msra.mxu0 %v3737
    %3833 = vmatpush.msra.mxu0 %v3736
    %3834 = vmatpush.msra.mxu0 %v3735
    %3835 = vmatpush.msra.mxu0 %v3734
    %3836 = vmatmul.f32.gmra.mxu0 %v3758
    %v3837 = vpop.f32.mrf.mxu0
    %v3838 = vadd.f32 0.0, %v3837
    %3839 = vmatmul.f32.gmra.mxu0 %v3763
    %v3840 = vpop.f32.mrf.mxu0
    %v3841 = vadd.f32 0.0, %v3840
    %3842 = vmatmul.f32.gmra.mxu0 %v3767
    %v3843 = vpop.f32.mrf.mxu0
    %v3844 = vadd.f32 0.0, %v3843
    %3845 = vmatmul.f32.gmra.mxu0 %v3771
    %v3846 = vpop.f32.mrf.mxu0
    %v3847 = vadd.f32 0.0, %v3846
    %3848 = vmatmul.f32.gmra.mxu0 %v3775
    %v3849 = vpop.f32.mrf.mxu0
    %v3850 = vadd.f32 0.0, %v3849
    %3851 = vmatmul.f32.gmra.mxu0 %v3779
    %v3852 = vpop.f32.mrf.mxu0
    %v3853 = vadd.f32 0.0, %v3852
    %3854 = vmatmul.f32.gmra.mxu0 %v3783
    %v3855 = vpop.f32.mrf.mxu0
    %v3856 = vadd.f32 0.0, %v3855
    %3857 = vmatmul.f32.gmra.mxu0 %v3787
    %v3858 = vpop.f32.mrf.mxu0
    %v3859 = vadd.f32 0.0, %v3858
    %3860 = vmatmul.f32.gmra.mxu0 %v3786
    %v3861 = vpop.f32.mrf.mxu0
    %v3862 = vadd.f32 0.0, %v3861
    %3863 = vdwg.mxu0
    %3864 = vmatpush.msra.mxu0 0.0
    %3865 = vmatpush.msra.mxu0 0.0
    %3866 = vmatpush.msra.mxu0 0.0
    %3867 = vmatpush.msra.mxu0 0.0
    %3868 = vmatpush.msra.mxu0 0.0
    %3869 = vmatpush.msra.mxu0 0.0
    %3870 = vmatpush.msra.mxu0 0.0
    %3871 = vmatpush.msra.mxu0 0.0
    %3872 = vmatpush.msra.mxu0 0.0
    %3873 = vmatpush.msra.mxu0 0.0
    %3874 = vmatpush.msra.mxu0 0.0
    %3875 = vmatpush.msra.mxu0 0.0
    %3876 = vmatpush.msra.mxu0 0.0
    %3877 = vmatpush.msra.mxu0 0.0
    %3878 = vmatpush.msra.mxu0 0.0
    %3879 = vmatpush.msra.mxu0 %v3818
    %3880 = vmatmul.f32.gmra.mxu0 %v3799
    %v3881 = vpop.f32.mrf.mxu0
    %v3882 = vadd.f32 %v3838, %v3881
    %3883 = vmatmul.f32.gmra.mxu0 %v3801
    %v3884 = vpop.f32.mrf.mxu0
    %v3885 = vadd.f32 %v3841, %v3884
    %3886 = vmatmul.f32.gmra.mxu0 %v3803
    %v3887 = vpop.f32.mrf.mxu0
    %v3888 = vadd.f32 %v3844, %v3887
    %3889 = vmatmul.f32.gmra.mxu0 %v3805
    %v3890 = vpop.f32.mrf.mxu0
    %v3891 = vadd.f32 %v3847, %v3890
    %3892 = vmatmul.f32.gmra.mxu0 %v3807
    %v3893 = vpop.f32.mrf.mxu0
    %v3894 = vadd.f32 %v3850, %v3893
    %3895 = vmatmul.f32.gmra.mxu0 %v3809
    %v3896 = vpop.f32.mrf.mxu0
    %v3897 = vadd.f32 %v3853, %v3896
    %3898 = vmatmul.f32.gmra.mxu0 %v3811
    %v3899 = vpop.f32.mrf.mxu0
    %v3900 = vadd.f32 %v3856, %v3899
    %3901 = vmatmul.f32.gmra.mxu0 %v3813
    %v3902 = vpop.f32.mrf.mxu0
    %v3903 = vadd.f32 %v3859, %v3902
    %3904 = vmatmul.f32.gmra.mxu0 %v3815
    %v3905 = vpop.f32.mrf.mxu0
    %v3906 = vadd.f32 %v3862, %v3905
    %3907 = vdwg.mxu0
    %v3908 = vadd.f32 %v3703, %v3882
    %v3909 = vadd.f32 %v3706, %v3885
    %v3910 = vadd.f32 %v3709, %v3888
    %v3911 = vadd.f32 %v3712, %v3891
    %v3912 = vadd.f32 %v3715, %v3894
    %v3913 = vadd.f32 %v3718, %v3897
    %v3914 = vadd.f32 %v3721, %v3900
    %v3915 = vadd.f32 %v3724, %v3903
    %v3916 = vadd.f32 %v3727, %v3906
    %v3917 = vld [vmem:[#allocation3] sm:$0xf8]
    %v3918 = vld [vmem:[#allocation3 + $0x8] sm:$0xf8]
    %v3919 = vld [vmem:[#allocation3 + $0x80] sm:$0xf]
    %v3920 = vld [vmem:[#allocation3 + $0x88] sm:$0xf]
    %s3921 = scalar_lea.vmem %s4, 408
    %v3922 = vld [vmem:[%s3921] sm:$0xff]
    %v3923 = vld [vmem:[%s3921 + $0x8] sm:$0xff]
    %v3924 = vld [vmem:[%s3921 + $0x10] sm:$0xff]
    %v3925 = vld [vmem:[%s3921 + $0x18] sm:$0xff]
    %v3926 = vld [vmem:[%s3921 + $0x20] sm:$0xff]
    %v3927 = vld [vmem:[%s3921 + $0x28] sm:$0xff]
    %v3928 = vld [vmem:[%s3921 + $0x30] sm:$0xff]
    %v3929 = vld [vmem:[%s3921 + $0x38] sm:$0xff]
    %v3930 = vld [vmem:[%s3921 + $0x40] sm:$0xff]
    %v3931 = vld [vmem:[%s3921 + $0x48] sm:$0xff]
    %v3932 = vld [vmem:[%s3921 + $0x50] sm:$0xff]
    %v3933 = vld [vmem:[%s3921 + $0x58] sm:$0xff]
    %v3934 = vld [vmem:[%s3921 + $0x60] sm:$0xff]
    %v3935 = vld [vmem:[%s3921 + $0x68] sm:$0xff]
    %v3936 = vld [vmem:[%s3921 + $0x70] sm:$0xff]
    %v3937 = vld [vmem:[%s3921 + $0x78] sm:$0xff]
    %v3938 = vld [vmem:[%s3921 + $0x80] sm:$0x7f]
    %v3943 = vrot.slane %v3917, 3
    %v3944 = vrot.slane %v3392, 3
    %v3945 = vsel %vm1682, %v3943, %v3944
    %v3946 = vrot.slane %v3918, 3
    %v3947 = vrot.slane %v3393, 3
    %v3948 = vsel %vm1682, %v3946, %v3947
    %v3949 = vrot.slane %v3394, 3
    %v3950 = vsel %vm1682, %v3944, %v3949
    %v3951 = vrot.slane %v3395, 3
    %v3952 = vsel %vm1682, %v3947, %v3951
    %v3953 = vrot.slane %v3396, 3
    %v3954 = vsel %vm1682, %v3949, %v3953
    %v3955 = vrot.slane %v3397, 3
    %v3956 = vsel %vm1682, %v3951, %v3955
    %v3957 = vrot.slane %v3398, 3
    %v3958 = vsel %vm1682, %v3953, %v3957
    %v3959 = vrot.slane %v3399, 3
    %v3960 = vsel %vm1682, %v3955, %v3959
    %v3961 = vrot.slane %v3400, 3
    %v3962 = vsel %vm1682, %v3957, %v3961
    %v3963 = vrot.slane %v3401, 3
    %v3964 = vsel %vm1682, %v3959, %v3963
    %v3965 = vrot.slane %v3402, 3
    %v3966 = vsel %vm1682, %v3961, %v3965
    %v3967 = vrot.slane %v3403, 3
    %v3968 = vsel %vm1682, %v3963, %v3967
    %v3969 = vrot.slane %v3404, 3
    %v3970 = vsel %vm1682, %v3965, %v3969
    %v3971 = vrot.slane %v3405, 3
    %v3972 = vsel %vm1682, %v3967, %v3971
    %v3973 = vrot.slane %v3919, 3
    %v3974 = vsel %vm1682, %v3969, %v3973
    %v3975 = vrot.slane %v3920, 3
    %v3976 = vsel %vm1682, %v3971, %v3975
    %v3986 = vsel %vm121, %v3948, 0
    %v3988 = vsel %vm121, %v3952, 0
    %v3990 = vsel %vm121, %v3956, 0
    %v3992 = vsel %vm121, %v3960, 0
    %v3994 = vsel %vm121, %v3964, 0
    %v3996 = vsel %vm121, %v3968, 0
    %v3998 = vsel %vm121, %v3972, 0
    %v4000 = vsel %vm121, %v3976, 0
    %v4002 = vsel %vm121, %v3975, 0
    %v4005 = vsel %vm3465, %v3938, 0
    %4007 = vmatpush.msra.mxu0 %v3937
    %4008 = vmatpush.msra.mxu0 %v3936
    %4009 = vmatpush.msra.mxu0 %v3935
    %4010 = vmatpush.msra.mxu0 %v3934
    %4011 = vmatpush.msra.mxu0 %v3933
    %4012 = vmatpush.msra.mxu0 %v3932
    %4013 = vmatpush.msra.mxu0 %v3931
    %4014 = vmatpush.msra.mxu0 %v3930
    %4015 = vmatpush.msra.mxu0 %v3929
    %4016 = vmatpush.msra.mxu0 %v3928
    %4017 = vmatpush.msra.mxu0 %v3927
    %4018 = vmatpush.msra.mxu0 %v3926
    %4019 = vmatpush.msra.mxu0 %v3925
    %4020 = vmatpush.msra.mxu0 %v3924
    %4021 = vmatpush.msra.mxu0 %v3923
    %4022 = vmatpush.msra.mxu0 %v3922
    %4023 = vmatmul.f32.gmra.mxu0 %v3945
    %v4024 = vpop.f32.mrf.mxu0
    %v4025 = vadd.f32 0.0, %v4024
    %4026 = vmatmul.f32.gmra.mxu0 %v3950
    %v4027 = vpop.f32.mrf.mxu0
    %v4028 = vadd.f32 0.0, %v4027
    %4029 = vmatmul.f32.gmra.mxu0 %v3954
    %v4030 = vpop.f32.mrf.mxu0
    %v4031 = vadd.f32 0.0, %v4030
    %4032 = vmatmul.f32.gmra.mxu0 %v3958
    %v4033 = vpop.f32.mrf.mxu0
    %v4034 = vadd.f32 0.0, %v4033
    %4035 = vmatmul.f32.gmra.mxu0 %v3962
    %v4036 = vpop.f32.mrf.mxu0
    %v4037 = vadd.f32 0.0, %v4036
    %4038 = vmatmul.f32.gmra.mxu0 %v3966
    %v4039 = vpop.f32.mrf.mxu0
    %v4040 = vadd.f32 0.0, %v4039
    %4041 = vmatmul.f32.gmra.mxu0 %v3970
    %v4042 = vpop.f32.mrf.mxu0
    %v4043 = vadd.f32 0.0, %v4042
    %4044 = vmatmul.f32.gmra.mxu0 %v3974
    %v4045 = vpop.f32.mrf.mxu0
    %v4046 = vadd.f32 0.0, %v4045
    %4047 = vmatmul.f32.gmra.mxu0 %v3973
    %v4048 = vpop.f32.mrf.mxu0
    %v4049 = vadd.f32 0.0, %v4048
    %4050 = vdwg.mxu0
    %4051 = vmatpush.msra.mxu0 0.0
    %4052 = vmatpush.msra.mxu0 0.0
    %4053 = vmatpush.msra.mxu0 0.0
    %4054 = vmatpush.msra.mxu0 0.0
    %4055 = vmatpush.msra.mxu0 0.0
    %4056 = vmatpush.msra.mxu0 0.0
    %4057 = vmatpush.msra.mxu0 0.0
    %4058 = vmatpush.msra.mxu0 0.0
    %4059 = vmatpush.msra.mxu0 0.0
    %4060 = vmatpush.msra.mxu0 0.0
    %4061 = vmatpush.msra.mxu0 0.0
    %4062 = vmatpush.msra.mxu0 0.0
    %4063 = vmatpush.msra.mxu0 0.0
    %4064 = vmatpush.msra.mxu0 0.0
    %4065 = vmatpush.msra.mxu0 0.0
    %4066 = vmatpush.msra.mxu0 %v4005
    %4067 = vmatmul.f32.gmra.mxu0 %v3986
    %v4068 = vpop.f32.mrf.mxu0
    %v4069 = vadd.f32 %v4025, %v4068
    %4070 = vmatmul.f32.gmra.mxu0 %v3988
    %v4071 = vpop.f32.mrf.mxu0
    %v4072 = vadd.f32 %v4028, %v4071
    %4073 = vmatmul.f32.gmra.mxu0 %v3990
    %v4074 = vpop.f32.mrf.mxu0
    %v4075 = vadd.f32 %v4031, %v4074
    %4076 = vmatmul.f32.gmra.mxu0 %v3992
    %v4077 = vpop.f32.mrf.mxu0
    %v4078 = vadd.f32 %v4034, %v4077
    %4079 = vmatmul.f32.gmra.mxu0 %v3994
    %v4080 = vpop.f32.mrf.mxu0
    %v4081 = vadd.f32 %v4037, %v4080
    %4082 = vmatmul.f32.gmra.mxu0 %v3996
    %v4083 = vpop.f32.mrf.mxu0
    %v4084 = vadd.f32 %v4040, %v4083
    %4085 = vmatmul.f32.gmra.mxu0 %v3998
    %v4086 = vpop.f32.mrf.mxu0
    %v4087 = vadd.f32 %v4043, %v4086
    %4088 = vmatmul.f32.gmra.mxu0 %v4000
    %v4089 = vpop.f32.mrf.mxu0
    %v4090 = vadd.f32 %v4046, %v4089
    %4091 = vmatmul.f32.gmra.mxu0 %v4002
    %v4092 = vpop.f32.mrf.mxu0
    %v4093 = vadd.f32 %v4049, %v4092
    %4094 = vdwg.mxu0
    %v4095 = vadd.f32 %v3908, %v4069
    %v4096 = vadd.f32 %v3909, %v4072
    %v4097 = vadd.f32 %v3910, %v4075
    %v4098 = vadd.f32 %v3911, %v4078
    %v4099 = vadd.f32 %v3912, %v4081
    %v4100 = vadd.f32 %v3913, %v4084
    %v4101 = vadd.f32 %v3914, %v4087
    %v4102 = vadd.f32 %v3915, %v4090
    %v4103 = vadd.f32 %v3916, %v4093
    %v4104 = vld [vmem:[#allocation3] sm:$0xf0]
    %v4105 = vld [vmem:[#allocation3 + $0x8] sm:$0xf0]
    %v4106 = vld [vmem:[#allocation3 + $0x80] sm:$0x1f]
    %v4107 = vld [vmem:[#allocation3 + $0x88] sm:$0x1f]
    %s4108 = scalar_lea.vmem %s4, 544
    %v4109 = vld [vmem:[%s4108] sm:$0xff]
    %v4110 = vld [vmem:[%s4108 + $0x8] sm:$0xff]
    %v4111 = vld [vmem:[%s4108 + $0x10] sm:$0xff]
    %v4112 = vld [vmem:[%s4108 + $0x18] sm:$0xff]
    %v4113 = vld [vmem:[%s4108 + $0x20] sm:$0xff]
    %v4114 = vld [vmem:[%s4108 + $0x28] sm:$0xff]
    %v4115 = vld [vmem:[%s4108 + $0x30] sm:$0xff]
    %v4116 = vld [vmem:[%s4108 + $0x38] sm:$0xff]
    %v4117 = vld [vmem:[%s4108 + $0x40] sm:$0xff]
    %v4118 = vld [vmem:[%s4108 + $0x48] sm:$0xff]
    %v4119 = vld [vmem:[%s4108 + $0x50] sm:$0xff]
    %v4120 = vld [vmem:[%s4108 + $0x58] sm:$0xff]
    %v4121 = vld [vmem:[%s4108 + $0x60] sm:$0xff]
    %v4122 = vld [vmem:[%s4108 + $0x68] sm:$0xff]
    %v4123 = vld [vmem:[%s4108 + $0x70] sm:$0xff]
    %v4124 = vld [vmem:[%s4108 + $0x78] sm:$0xff]
    %v4125 = vld [vmem:[%s4108 + $0x80] sm:$0x7f]
    %vm4130 = vcmask 1043456
    %v4131 = vrot.slane %v4104, 4
    %v4132 = vrot.slane %v3392, 4
    %v4133 = vsel %vm4130, %v4131, %v4132
    %v4134 = vrot.slane %v4105, 4
    %v4135 = vrot.slane %v3393, 4
    %v4136 = vsel %vm4130, %v4134, %v4135
    %v4137 = vrot.slane %v3394, 4
    %v4138 = vsel %vm4130, %v4132, %v4137
    %v4139 = vrot.slane %v3395, 4
    %v4140 = vsel %vm4130, %v4135, %v4139
    %v4141 = vrot.slane %v3396, 4
    %v4142 = vsel %vm4130, %v4137, %v4141
    %v4143 = vrot.slane %v3397, 4
    %v4144 = vsel %vm4130, %v4139, %v4143
    %v4145 = vrot.slane %v3398, 4
    %v4146 = vsel %vm4130, %v4141, %v4145
    %v4147 = vrot.slane %v3399, 4
    %v4148 = vsel %vm4130, %v4143, %v4147
    %v4149 = vrot.slane %v3400, 4
    %v4150 = vsel %vm4130, %v4145, %v4149
    %v4151 = vrot.slane %v3401, 4
    %v4152 = vsel %vm4130, %v4147, %v4151
    %v4153 = vrot.slane %v3402, 4
    %v4154 = vsel %vm4130, %v4149, %v4153
    %v4155 = vrot.slane %v3403, 4
    %v4156 = vsel %vm4130, %v4151, %v4155
    %v4157 = vrot.slane %v3404, 4
    %v4158 = vsel %vm4130, %v4153, %v4157
    %v4159 = vrot.slane %v3405, 4
    %v4160 = vsel %vm4130, %v4155, %v4159
    %v4161 = vrot.slane %v4106, 4
    %v4162 = vsel %vm4130, %v4157, %v4161
    %v4163 = vrot.slane %v4107, 4
    %v4164 = vsel %vm4130, %v4159, %v4163
    %v4174 = vsel %vm121, %v4136, 0
    %v4176 = vsel %vm121, %v4140, 0
    %v4178 = vsel %vm121, %v4144, 0
    %v4180 = vsel %vm121, %v4148, 0
    %v4182 = vsel %vm121, %v4152, 0
    %v4184 = vsel %vm121, %v4156, 0
    %v4186 = vsel %vm121, %v4160, 0
    %v4188 = vsel %vm121, %v4164, 0
    %v4190 = vsel %vm121, %v4163, 0
    %v4193 = vsel %vm3465, %v4125, 0
    %4195 = vmatpush.msra.mxu0 %v4124
    %4196 = vmatpush.msra.mxu0 %v4123
    %4197 = vmatpush.msra.mxu0 %v4122
    %4198 = vmatpush.msra.mxu0 %v4121
    %4199 = vmatpush.msra.mxu0 %v4120
    %4200 = vmatpush.msra.mxu0 %v4119
    %4201 = vmatpush.msra.mxu0 %v4118
    %4202 = vmatpush.msra.mxu0 %v4117
    %4203 = vmatpush.msra.mxu0 %v4116
    %4204 = vmatpush.msra.mxu0 %v4115
    %4205 = vmatpush.msra.mxu0 %v4114
    %4206 = vmatpush.msra.mxu0 %v4113
    %4207 = vmatpush.msra.mxu0 %v4112
    %4208 = vmatpush.msra.mxu0 %v4111
    %4209 = vmatpush.msra.mxu0 %v4110
    %4210 = vmatpush.msra.mxu0 %v4109
    %4211 = vmatmul.f32.gmra.mxu0 %v4133
    %v4212 = vpop.f32.mrf.mxu0
    %v4213 = vadd.f32 0.0, %v4212
    %4214 = vmatmul.f32.gmra.mxu0 %v4138
    %v4215 = vpop.f32.mrf.mxu0
    %v4216 = vadd.f32 0.0, %v4215
    %4217 = vmatmul.f32.gmra.mxu0 %v4142
    %v4218 = vpop.f32.mrf.mxu0
    %v4219 = vadd.f32 0.0, %v4218
    %4220 = vmatmul.f32.gmra.mxu0 %v4146
    %v4221 = vpop.f32.mrf.mxu0
    %v4222 = vadd.f32 0.0, %v4221
    %4223 = vmatmul.f32.gmra.mxu0 %v4150
    %v4224 = vpop.f32.mrf.mxu0
    %v4225 = vadd.f32 0.0, %v4224
    %4226 = vmatmul.f32.gmra.mxu0 %v4154
    %v4227 = vpop.f32.mrf.mxu0
    %v4228 = vadd.f32 0.0, %v4227
    %4229 = vmatmul.f32.gmra.mxu0 %v4158
    %v4230 = vpop.f32.mrf.mxu0
    %v4231 = vadd.f32 0.0, %v4230
    %4232 = vmatmul.f32.gmra.mxu0 %v4162
    %v4233 = vpop.f32.mrf.mxu0
    %v4234 = vadd.f32 0.0, %v4233
    %4235 = vmatmul.f32.gmra.mxu0 %v4161
    %v4236 = vpop.f32.mrf.mxu0
    %v4237 = vadd.f32 0.0, %v4236
    %4238 = vdwg.mxu0
    %4239 = vmatpush.msra.mxu0 0.0
    %4240 = vmatpush.msra.mxu0 0.0
    %4241 = vmatpush.msra.mxu0 0.0
    %4242 = vmatpush.msra.mxu0 0.0
    %4243 = vmatpush.msra.mxu0 0.0
    %4244 = vmatpush.msra.mxu0 0.0
    %4245 = vmatpush.msra.mxu0 0.0
    %4246 = vmatpush.msra.mxu0 0.0
    %4247 = vmatpush.msra.mxu0 0.0
    %4248 = vmatpush.msra.mxu0 0.0
    %4249 = vmatpush.msra.mxu0 0.0
    %4250 = vmatpush.msra.mxu0 0.0
    %4251 = vmatpush.msra.mxu0 0.0
    %4252 = vmatpush.msra.mxu0 0.0
    %4253 = vmatpush.msra.mxu0 0.0
    %4254 = vmatpush.msra.mxu0 %v4193
    %4255 = vmatmul.f32.gmra.mxu0 %v4174
    %v4256 = vpop.f32.mrf.mxu0
    %v4257 = vadd.f32 %v4213, %v4256
    %4258 = vmatmul.f32.gmra.mxu0 %v4176
    %v4259 = vpop.f32.mrf.mxu0
    %v4260 = vadd.f32 %v4216, %v4259
    %4261 = vmatmul.f32.gmra.mxu0 %v4178
    %v4262 = vpop.f32.mrf.mxu0
    %v4263 = vadd.f32 %v4219, %v4262
    %4264 = vmatmul.f32.gmra.mxu0 %v4180
    %v4265 = vpop.f32.mrf.mxu0
    %v4266 = vadd.f32 %v4222, %v4265
    %4267 = vmatmul.f32.gmra.mxu0 %v4182
    %v4268 = vpop.f32.mrf.mxu0
    %v4269 = vadd.f32 %v4225, %v4268
    %4270 = vmatmul.f32.gmra.mxu0 %v4184
    %v4271 = vpop.f32.mrf.mxu0
    %v4272 = vadd.f32 %v4228, %v4271
    %4273 = vmatmul.f32.gmra.mxu0 %v4186
    %v4274 = vpop.f32.mrf.mxu0
    %v4275 = vadd.f32 %v4231, %v4274
    %4276 = vmatmul.f32.gmra.mxu0 %v4188
    %v4277 = vpop.f32.mrf.mxu0
    %v4278 = vadd.f32 %v4234, %v4277
    %4279 = vmatmul.f32.gmra.mxu0 %v4190
    %v4280 = vpop.f32.mrf.mxu0
    %v4281 = vadd.f32 %v4237, %v4280
    %4282 = vdwg.mxu0
    %v4283 = vadd.f32 %v4095, %v4257
    %v4284 = vadd.f32 %v4096, %v4260
    %v4285 = vadd.f32 %v4097, %v4263
    %v4286 = vadd.f32 %v4098, %v4266
    %v4287 = vadd.f32 %v4099, %v4269
    %v4288 = vadd.f32 %v4100, %v4272
    %v4289 = vadd.f32 %v4101, %v4275
    %v4290 = vadd.f32 %v4102, %v4278
    %v4291 = vadd.f32 %v4103, %v4281
    %v4292 = vld [vmem:[%s5] sm:$0x1]
    %v4294 = vperm.slane %v4292, 0
    %vm4296 = vcmask 531456
    %v4297 = vsel %vm4296, %v285, 0
    %v4299 = vsel %vm4296, %v286, 0
    %v4301 = vsel %vm4296, %v287, 0
    %v4303 = vsel %vm4296, %v288, 0
    %v4305 = vsel %vm4296, %v289, 0
    %v4308 = vsel %vm382, %v4291, 0
    %4310 = vmatpush.msra.mxu0 0.0
    %4311 = vmatpush.msra.mxu0 0.0
    %4312 = vmatpush.msra.mxu0 0.0
    %4313 = vmatpush.msra.mxu0 0.0
    %4314 = vmatpush.msra.mxu0 0.0
    %4315 = vmatpush.msra.mxu0 0.0
    %4316 = vmatpush.msra.mxu0 0.0
    %4317 = vmatpush.msra.mxu0 %v4308
    %4318 = vmatpush.msra.mxu0 %v4290
    %4319 = vmatpush.msra.mxu0 %v4289
    %4320 = vmatpush.msra.mxu0 %v4288
    %4321 = vmatpush.msra.mxu0 %v4287
    %4322 = vmatpush.msra.mxu0 %v4286
    %4323 = vmatpush.msra.mxu0 %v4285
    %4324 = vmatpush.msra.mxu0 %v4284
    %4325 = vmatpush.msra.mxu0 %v4283
    %4326 = vmatmul.f32.gmra.mxu0 %v4297
    %v4327 = vpop.f32.mrf.mxu0
    %v4328 = vadd.f32 %v4294, %v4327
    %4329 = vmatmul.f32.gmra.mxu0 %v4299
    %v4330 = vpop.f32.mrf.mxu0
    %v4331 = vadd.f32 %v4294, %v4330
    %4332 = vmatmul.f32.gmra.mxu0 %v4301
    %v4333 = vpop.f32.mrf.mxu0
    %v4334 = vadd.f32 %v4294, %v4333
    %4335 = vmatmul.f32.gmra.mxu0 %v4303
    %v4336 = vpop.f32.mrf.mxu0
    %v4337 = vadd.f32 %v4294, %v4336
    %4338 = vmatmul.f32.gmra.mxu0 %v4305
    %v4339 = vpop.f32.mrf.mxu0
    %v4340 = vadd.f32 %v4294, %v4339
    %4341 = vdwg.mxu0
    %v4342 = vmax.f32 %v4328, 0.0
    %v4343 = vmax.f32 %v4331, 0.0
    %v4344 = vmax.f32 %v4334, 0.0
    %v4345 = vmax.f32 %v4337, 0.0
    %v4346 = vmax.f32 %v4340, 0.0
    %v4347 = vld [vmem:[%s6] sm:$0x1]
    %v4349 = vperm.slane %v4347, 0
    %v4351 = vadd.f32 %v4342, %v4349
    %v4352 = vadd.f32 %v4343, %v4349
    %v4353 = vadd.f32 %v4344, %v4349
    %v4354 = vadd.f32 %v4345, %v4349
    %v4355 = vadd.f32 %v4346, %v4349
    %v4356 = vld [vmem:[%s3371] sm:$0xff]
    %v4357 = vld [vmem:[%s3371 + $0x8] sm:$0xff]
    %v4358 = vld [vmem:[%s3371 + $0x10] sm:$0xff]
    %v4359 = vld [vmem:[%s3371 + $0x18] sm:$0xff]
    %v4360 = vld [vmem:[%s3371 + $0x20] sm:$0xff]
    %v4361 = vld [vmem:[%s3371 + $0x28] sm:$0xff]
    %v4362 = vld [vmem:[%s3371 + $0x30] sm:$0xff]
    %v4363 = vld [vmem:[%s3371 + $0x38] sm:$0xff]
    %v4364 = vld [vmem:[%s3371 + $0x40] sm:$0xff]
    %v4365 = vld [vmem:[%s3371 + $0x48] sm:$0xff]
    %v4366 = vld [vmem:[%s3371 + $0x50] sm:$0xff]
    %v4367 = vld [vmem:[%s3371 + $0x58] sm:$0xff]
    %v4368 = vld [vmem:[%s3371 + $0x60] sm:$0xff]
    %v4369 = vld [vmem:[%s3371 + $0x68] sm:$0xff]
    %v4370 = vld [vmem:[%s3371 + $0x70] sm:$0xff]
    %v4371 = vld [vmem:[%s3371 + $0x78] sm:$0xff]
    %v4372 = vld [vmem:[%s3371 + $0x80] sm:$0x1]
    %v4373 = vld [vmem:[%s3371 + $0x88] sm:$0x1]
    %v4374 = vld [vmem:[%s3371] sm:$0xfe]
    %v4375 = vld [vmem:[%s3371 + $0x8] sm:$0xfe]
    %v4376 = vld [vmem:[%s3371 + $0x80] sm:$0x3]
    %v4377 = vld [vmem:[%s3371 + $0x88] sm:$0x3]
    %v4396 = vrot.slane %v4374, 1
    %v4397 = vrot.slane %v4358, 1
    %v4398 = vsel %vm3465, %v4396, %v4397
    %v4399 = vrot.slane %v4375, 1
    %v4400 = vrot.slane %v4359, 1
    %v4401 = vsel %vm3465, %v4399, %v4400
    %v4402 = vrot.slane %v4360, 1
    %v4403 = vsel %vm3465, %v4397, %v4402
    %v4404 = vrot.slane %v4361, 1
    %v4405 = vsel %vm3465, %v4400, %v4404
    %v4406 = vrot.slane %v4362, 1
    %v4407 = vsel %vm3465, %v4402, %v4406
    %v4408 = vrot.slane %v4363, 1
    %v4409 = vsel %vm3465, %v4404, %v4408
    %v4410 = vrot.slane %v4364, 1
    %v4411 = vsel %vm3465, %v4406, %v4410
    %v4412 = vrot.slane %v4365, 1
    %v4413 = vsel %vm3465, %v4408, %v4412
    %v4414 = vrot.slane %v4366, 1
    %v4415 = vsel %vm3465, %v4410, %v4414
    %v4416 = vrot.slane %v4367, 1
    %v4417 = vsel %vm3465, %v4412, %v4416
    %v4418 = vrot.slane %v4368, 1
    %v4419 = vsel %vm3465, %v4414, %v4418
    %v4420 = vrot.slane %v4369, 1
    %v4421 = vsel %vm3465, %v4416, %v4420
    %v4422 = vrot.slane %v4370, 1
    %v4423 = vsel %vm3465, %v4418, %v4422
    %v4424 = vrot.slane %v4371, 1
    %v4425 = vsel %vm3465, %v4420, %v4424
    %v4426 = vrot.slane %v4376, 1
    %v4427 = vsel %vm3465, %v4422, %v4426
    %v4428 = vrot.slane %v4377, 1
    %v4429 = vsel %vm3465, %v4424, %v4428
    %v4439 = vsel %vm121, %v4401, 0
    %v4441 = vsel %vm121, %v4405, 0
    %v4443 = vsel %vm121, %v4409, 0
    %v4445 = vsel %vm121, %v4413, 0
    %v4447 = vsel %vm121, %v4417, 0
    %v4449 = vsel %vm121, %v4421, 0
    %v4451 = vsel %vm121, %v4425, 0
    %v4453 = vsel %vm121, %v4429, 0
    %v4455 = vsel %vm121, %v4428, 0
    %4457 = vmatpush.msra.mxu0 %v3445
    %4458 = vmatpush.msra.mxu0 %v3444
    %4459 = vmatpush.msra.mxu0 %v3443
    %4460 = vmatpush.msra.mxu0 %v3442
    %4461 = vmatpush.msra.mxu0 %v3441
    %4462 = vmatpush.msra.mxu0 %v3440
    %4463 = vmatpush.msra.mxu0 %v3439
    %4464 = vmatpush.msra.mxu0 %v3438
    %4465 = vmatpush.msra.mxu0 %v3437
    %4466 = vmatpush.msra.mxu0 %v3436
    %4467 = vmatpush.msra.mxu0 %v3435
    %4468 = vmatpush.msra.mxu0 %v3434
    %4469 = vmatpush.msra.mxu0 %v3433
    %4470 = vmatpush.msra.mxu0 %v3432
    %4471 = vmatpush.msra.mxu0 %v3431
    %4472 = vmatpush.msra.mxu0 %v3430
    %4473 = vmatmul.f32.gmra.mxu0 %v4398
    %v4474 = vpop.f32.mrf.mxu0
    %v4475 = vadd.f32 0.0, %v4474
    %4476 = vmatmul.f32.gmra.mxu0 %v4403
    %v4477 = vpop.f32.mrf.mxu0
    %v4478 = vadd.f32 0.0, %v4477
    %4479 = vmatmul.f32.gmra.mxu0 %v4407
    %v4480 = vpop.f32.mrf.mxu0
    %v4481 = vadd.f32 0.0, %v4480
    %4482 = vmatmul.f32.gmra.mxu0 %v4411
    %v4483 = vpop.f32.mrf.mxu0
    %v4484 = vadd.f32 0.0, %v4483
    %4485 = vmatmul.f32.gmra.mxu0 %v4415
    %v4486 = vpop.f32.mrf.mxu0
    %v4487 = vadd.f32 0.0, %v4486
    %4488 = vmatmul.f32.gmra.mxu0 %v4419
    %v4489 = vpop.f32.mrf.mxu0
    %v4490 = vadd.f32 0.0, %v4489
    %4491 = vmatmul.f32.gmra.mxu0 %v4423
    %v4492 = vpop.f32.mrf.mxu0
    %v4493 = vadd.f32 0.0, %v4492
    %4494 = vmatmul.f32.gmra.mxu0 %v4427
    %v4495 = vpop.f32.mrf.mxu0
    %v4496 = vadd.f32 0.0, %v4495
    %4497 = vmatmul.f32.gmra.mxu0 %v4426
    %v4498 = vpop.f32.mrf.mxu0
    %v4499 = vadd.f32 0.0, %v4498
    %4500 = vdwg.mxu0
    %4501 = vmatpush.msra.mxu0 0.0
    %4502 = vmatpush.msra.mxu0 0.0
    %4503 = vmatpush.msra.mxu0 0.0
    %4504 = vmatpush.msra.mxu0 0.0
    %4505 = vmatpush.msra.mxu0 0.0
    %4506 = vmatpush.msra.mxu0 0.0
    %4507 = vmatpush.msra.mxu0 0.0
    %4508 = vmatpush.msra.mxu0 0.0
    %4509 = vmatpush.msra.mxu0 0.0
    %4510 = vmatpush.msra.mxu0 0.0
    %4511 = vmatpush.msra.mxu0 0.0
    %4512 = vmatpush.msra.mxu0 0.0
    %4513 = vmatpush.msra.mxu0 0.0
    %4514 = vmatpush.msra.mxu0 0.0
    %4515 = vmatpush.msra.mxu0 0.0
    %4516 = vmatpush.msra.mxu0 %v3528
    %4517 = vmatmul.f32.gmra.mxu0 %v4439
    %v4518 = vpop.f32.mrf.mxu0
    %v4519 = vadd.f32 %v4475, %v4518
    %4520 = vmatmul.f32.gmra.mxu0 %v4441
    %v4521 = vpop.f32.mrf.mxu0
    %v4522 = vadd.f32 %v4478, %v4521
    %4523 = vmatmul.f32.gmra.mxu0 %v4443
    %v4524 = vpop.f32.mrf.mxu0
    %v4525 = vadd.f32 %v4481, %v4524
    %4526 = vmatmul.f32.gmra.mxu0 %v4445
    %v4527 = vpop.f32.mrf.mxu0
    %v4528 = vadd.f32 %v4484, %v4527
    %4529 = vmatmul.f32.gmra.mxu0 %v4447
    %v4530 = vpop.f32.mrf.mxu0
    %v4531 = vadd.f32 %v4487, %v4530
    %4532 = vmatmul.f32.gmra.mxu0 %v4449
    %v4533 = vpop.f32.mrf.mxu0
    %v4534 = vadd.f32 %v4490, %v4533
    %4535 = vmatmul.f32.gmra.mxu0 %v4451
    %v4536 = vpop.f32.mrf.mxu0
    %v4537 = vadd.f32 %v4493, %v4536
    %4538 = vmatmul.f32.gmra.mxu0 %v4453
    %v4539 = vpop.f32.mrf.mxu0
    %v4540 = vadd.f32 %v4496, %v4539
    %4541 = vmatmul.f32.gmra.mxu0 %v4455
    %v4542 = vpop.f32.mrf.mxu0
    %v4543 = vadd.f32 %v4499, %v4542
    %4544 = vdwg.mxu0
    %v4546 = vsel %vm121, %v4357, 0
    %v4548 = vsel %vm121, %v4359, 0
    %v4550 = vsel %vm121, %v4361, 0
    %v4552 = vsel %vm121, %v4363, 0
    %v4554 = vsel %vm121, %v4365, 0
    %v4556 = vsel %vm121, %v4367, 0
    %v4558 = vsel %vm121, %v4369, 0
    %v4560 = vsel %vm121, %v4371, 0
    %v4563 = vsel %vm121, %v4373, 0
    %4565 = vmatpush.msra.mxu0 %v3423
    %4566 = vmatpush.msra.mxu0 %v3422
    %4567 = vmatpush.msra.mxu0 %v3421
    %4568 = vmatpush.msra.mxu0 %v3420
    %4569 = vmatpush.msra.mxu0 %v3419
    %4570 = vmatpush.msra.mxu0 %v3418
    %4571 = vmatpush.msra.mxu0 %v3417
    %4572 = vmatpush.msra.mxu0 %v3416
    %4573 = vmatpush.msra.mxu0 %v3415
    %4574 = vmatpush.msra.mxu0 %v3414
    %4575 = vmatpush.msra.mxu0 %v3413
    %4576 = vmatpush.msra.mxu0 %v3412
    %4577 = vmatpush.msra.mxu0 %v3411
    %4578 = vmatpush.msra.mxu0 %v3410
    %4579 = vmatpush.msra.mxu0 %v3409
    %4580 = vmatpush.msra.mxu0 %v3408
    %4581 = vmatmul.f32.gmra.mxu0 %v4356
    %v4582 = vpop.f32.mrf.mxu0
    %v4583 = vadd.f32 %v4519, %v4582
    %4584 = vmatmul.f32.gmra.mxu0 %v4358
    %v4585 = vpop.f32.mrf.mxu0
    %v4586 = vadd.f32 %v4522, %v4585
    %4587 = vmatmul.f32.gmra.mxu0 %v4360
    %v4588 = vpop.f32.mrf.mxu0
    %v4589 = vadd.f32 %v4525, %v4588
    %4590 = vmatmul.f32.gmra.mxu0 %v4362
    %v4591 = vpop.f32.mrf.mxu0
    %v4592 = vadd.f32 %v4528, %v4591
    %4593 = vmatmul.f32.gmra.mxu0 %v4364
    %v4594 = vpop.f32.mrf.mxu0
    %v4595 = vadd.f32 %v4531, %v4594
    %4596 = vmatmul.f32.gmra.mxu0 %v4366
    %v4597 = vpop.f32.mrf.mxu0
    %v4598 = vadd.f32 %v4534, %v4597
    %4599 = vmatmul.f32.gmra.mxu0 %v4368
    %v4600 = vpop.f32.mrf.mxu0
    %v4601 = vadd.f32 %v4537, %v4600
    %4602 = vmatmul.f32.gmra.mxu0 %v4370
    %v4603 = vpop.f32.mrf.mxu0
    %v4604 = vadd.f32 %v4540, %v4603
    %4605 = vmatmul.f32.gmra.mxu0 %v4372
    %v4606 = vpop.f32.mrf.mxu0
    %v4607 = vadd.f32 %v4543, %v4606
    %4608 = vdwg.mxu0
    %4609 = vmatpush.msra.mxu0 0.0
    %4610 = vmatpush.msra.mxu0 0.0
    %4611 = vmatpush.msra.mxu0 0.0
    %4612 = vmatpush.msra.mxu0 0.0
    %4613 = vmatpush.msra.mxu0 0.0
    %4614 = vmatpush.msra.mxu0 0.0
    %4615 = vmatpush.msra.mxu0 0.0
    %4616 = vmatpush.msra.mxu0 0.0
    %4617 = vmatpush.msra.mxu0 0.0
    %4618 = vmatpush.msra.mxu0 0.0
    %4619 = vmatpush.msra.mxu0 0.0
    %4620 = vmatpush.msra.mxu0 0.0
    %4621 = vmatpush.msra.mxu0 0.0
    %4622 = vmatpush.msra.mxu0 0.0
    %4623 = vmatpush.msra.mxu0 0.0
    %4624 = vmatpush.msra.mxu0 %v3639
    %4625 = vmatmul.f32.gmra.mxu0 %v4546
    %v4626 = vpop.f32.mrf.mxu0
    %v4627 = vadd.f32 %v4583, %v4626
    %4628 = vmatmul.f32.gmra.mxu0 %v4548
    %v4629 = vpop.f32.mrf.mxu0
    %v4630 = vadd.f32 %v4586, %v4629
    %4631 = vmatmul.f32.gmra.mxu0 %v4550
    %v4632 = vpop.f32.mrf.mxu0
    %v4633 = vadd.f32 %v4589, %v4632
    %4634 = vmatmul.f32.gmra.mxu0 %v4552
    %v4635 = vpop.f32.mrf.mxu0
    %v4636 = vadd.f32 %v4592, %v4635
    %4637 = vmatmul.f32.gmra.mxu0 %v4554
    %v4638 = vpop.f32.mrf.mxu0
    %v4639 = vadd.f32 %v4595, %v4638
    %4640 = vmatmul.f32.gmra.mxu0 %v4556
    %v4641 = vpop.f32.mrf.mxu0
    %v4642 = vadd.f32 %v4598, %v4641
    %4643 = vmatmul.f32.gmra.mxu0 %v4558
    %v4644 = vpop.f32.mrf.mxu0
    %v4645 = vadd.f32 %v4601, %v4644
    %4646 = vmatmul.f32.gmra.mxu0 %v4560
    %v4647 = vpop.f32.mrf.mxu0
    %v4648 = vadd.f32 %v4604, %v4647
    %4649 = vmatmul.f32.gmra.mxu0 %v4563
    %v4650 = vpop.f32.mrf.mxu0
    %v4651 = vadd.f32 %v4607, %v4650
    %4652 = vdwg.mxu0
    %v4653 = vld [vmem:[%s3371] sm:$0xfc]
    %v4654 = vld [vmem:[%s3371 + $0x8] sm:$0xfc]
    %v4655 = vld [vmem:[%s3371 + $0x80] sm:$0x7]
    %v4656 = vld [vmem:[%s3371 + $0x88] sm:$0x7]
    %v4661 = vrot.slane %v4653, 2
    %v4662 = vrot.slane %v4358, 2
    %v4663 = vsel %vm3755, %v4661, %v4662
    %v4664 = vrot.slane %v4654, 2
    %v4665 = vrot.slane %v4359, 2
    %v4666 = vsel %vm3755, %v4664, %v4665
    %v4667 = vrot.slane %v4360, 2
    %v4668 = vsel %vm3755, %v4662, %v4667
    %v4669 = vrot.slane %v4361, 2
    %v4670 = vsel %vm3755, %v4665, %v4669
    %v4671 = vrot.slane %v4362, 2
    %v4672 = vsel %vm3755, %v4667, %v4671
    %v4673 = vrot.slane %v4363, 2
    %v4674 = vsel %vm3755, %v4669, %v4673
    %v4675 = vrot.slane %v4364, 2
    %v4676 = vsel %vm3755, %v4671, %v4675
    %v4677 = vrot.slane %v4365, 2
    %v4678 = vsel %vm3755, %v4673, %v4677
    %v4679 = vrot.slane %v4366, 2
    %v4680 = vsel %vm3755, %v4675, %v4679
    %v4681 = vrot.slane %v4367, 2
    %v4682 = vsel %vm3755, %v4677, %v4681
    %v4683 = vrot.slane %v4368, 2
    %v4684 = vsel %vm3755, %v4679, %v4683
    %v4685 = vrot.slane %v4369, 2
    %v4686 = vsel %vm3755, %v4681, %v4685
    %v4687 = vrot.slane %v4370, 2
    %v4688 = vsel %vm3755, %v4683, %v4687
    %v4689 = vrot.slane %v4371, 2
    %v4690 = vsel %vm3755, %v4685, %v4689
    %v4691 = vrot.slane %v4655, 2
    %v4692 = vsel %vm3755, %v4687, %v4691
    %v4693 = vrot.slane %v4656, 2
    %v4694 = vsel %vm3755, %v4689, %v4693
    %v4704 = vsel %vm121, %v4666, 0
    %v4706 = vsel %vm121, %v4670, 0
    %v4708 = vsel %vm121, %v4674, 0
    %v4710 = vsel %vm121, %v4678, 0
    %v4712 = vsel %vm121, %v4682, 0
    %v4714 = vsel %vm121, %v4686, 0
    %v4716 = vsel %vm121, %v4690, 0
    %v4718 = vsel %vm121, %v4694, 0
    %v4720 = vsel %vm121, %v4693, 0
    %4722 = vmatpush.msra.mxu0 %v3749
    %4723 = vmatpush.msra.mxu0 %v3748
    %4724 = vmatpush.msra.mxu0 %v3747
    %4725 = vmatpush.msra.mxu0 %v3746
    %4726 = vmatpush.msra.mxu0 %v3745
    %4727 = vmatpush.msra.mxu0 %v3744
    %4728 = vmatpush.msra.mxu0 %v3743
    %4729 = vmatpush.msra.mxu0 %v3742
    %4730 = vmatpush.msra.mxu0 %v3741
    %4731 = vmatpush.msra.mxu0 %v3740
    %4732 = vmatpush.msra.mxu0 %v3739
    %4733 = vmatpush.msra.mxu0 %v3738
    %4734 = vmatpush.msra.mxu0 %v3737
    %4735 = vmatpush.msra.mxu0 %v3736
    %4736 = vmatpush.msra.mxu0 %v3735
    %4737 = vmatpush.msra.mxu0 %v3734
    %4738 = vmatmul.f32.gmra.mxu0 %v4663
    %v4739 = vpop.f32.mrf.mxu0
    %v4740 = vadd.f32 0.0, %v4739
    %4741 = vmatmul.f32.gmra.mxu0 %v4668
    %v4742 = vpop.f32.mrf.mxu0
    %v4743 = vadd.f32 0.0, %v4742
    %4744 = vmatmul.f32.gmra.mxu0 %v4672
    %v4745 = vpop.f32.mrf.mxu0
    %v4746 = vadd.f32 0.0, %v4745
    %4747 = vmatmul.f32.gmra.mxu0 %v4676
    %v4748 = vpop.f32.mrf.mxu0
    %v4749 = vadd.f32 0.0, %v4748
    %4750 = vmatmul.f32.gmra.mxu0 %v4680
    %v4751 = vpop.f32.mrf.mxu0
    %v4752 = vadd.f32 0.0, %v4751
    %4753 = vmatmul.f32.gmra.mxu0 %v4684
    %v4754 = vpop.f32.mrf.mxu0
    %v4755 = vadd.f32 0.0, %v4754
    %4756 = vmatmul.f32.gmra.mxu0 %v4688
    %v4757 = vpop.f32.mrf.mxu0
    %v4758 = vadd.f32 0.0, %v4757
    %4759 = vmatmul.f32.gmra.mxu0 %v4692
    %v4760 = vpop.f32.mrf.mxu0
    %v4761 = vadd.f32 0.0, %v4760
    %4762 = vmatmul.f32.gmra.mxu0 %v4691
    %v4763 = vpop.f32.mrf.mxu0
    %v4764 = vadd.f32 0.0, %v4763
    %4765 = vdwg.mxu0
    %4766 = vmatpush.msra.mxu0 0.0
    %4767 = vmatpush.msra.mxu0 0.0
    %4768 = vmatpush.msra.mxu0 0.0
    %4769 = vmatpush.msra.mxu0 0.0
    %4770 = vmatpush.msra.mxu0 0.0
    %4771 = vmatpush.msra.mxu0 0.0
    %4772 = vmatpush.msra.mxu0 0.0
    %4773 = vmatpush.msra.mxu0 0.0
    %4774 = vmatpush.msra.mxu0 0.0
    %4775 = vmatpush.msra.mxu0 0.0
    %4776 = vmatpush.msra.mxu0 0.0
    %4777 = vmatpush.msra.mxu0 0.0
    %4778 = vmatpush.msra.mxu0 0.0
    %4779 = vmatpush.msra.mxu0 0.0
    %4780 = vmatpush.msra.mxu0 0.0
    %4781 = vmatpush.msra.mxu0 %v3818
    %4782 = vmatmul.f32.gmra.mxu0 %v4704
    %v4783 = vpop.f32.mrf.mxu0
    %v4784 = vadd.f32 %v4740, %v4783
    %4785 = vmatmul.f32.gmra.mxu0 %v4706
    %v4786 = vpop.f32.mrf.mxu0
    %v4787 = vadd.f32 %v4743, %v4786
    %4788 = vmatmul.f32.gmra.mxu0 %v4708
    %v4789 = vpop.f32.mrf.mxu0
    %v4790 = vadd.f32 %v4746, %v4789
    %4791 = vmatmul.f32.gmra.mxu0 %v4710
    %v4792 = vpop.f32.mrf.mxu0
    %v4793 = vadd.f32 %v4749, %v4792
    %4794 = vmatmul.f32.gmra.mxu0 %v4712
    %v4795 = vpop.f32.mrf.mxu0
    %v4796 = vadd.f32 %v4752, %v4795
    %4797 = vmatmul.f32.gmra.mxu0 %v4714
    %v4798 = vpop.f32.mrf.mxu0
    %v4799 = vadd.f32 %v4755, %v4798
    %4800 = vmatmul.f32.gmra.mxu0 %v4716
    %v4801 = vpop.f32.mrf.mxu0
    %v4802 = vadd.f32 %v4758, %v4801
    %4803 = vmatmul.f32.gmra.mxu0 %v4718
    %v4804 = vpop.f32.mrf.mxu0
    %v4805 = vadd.f32 %v4761, %v4804
    %4806 = vmatmul.f32.gmra.mxu0 %v4720
    %v4807 = vpop.f32.mrf.mxu0
    %v4808 = vadd.f32 %v4764, %v4807
    %4809 = vdwg.mxu0
    %v4810 = vadd.f32 %v4627, %v4784
    %v4811 = vadd.f32 %v4630, %v4787
    %v4812 = vadd.f32 %v4633, %v4790
    %v4813 = vadd.f32 %v4636, %v4793
    %v4814 = vadd.f32 %v4639, %v4796
    %v4815 = vadd.f32 %v4642, %v4799
    %v4816 = vadd.f32 %v4645, %v4802
    %v4817 = vadd.f32 %v4648, %v4805
    %v4818 = vadd.f32 %v4651, %v4808
    %v4819 = vld [vmem:[%s3371] sm:$0xf8]
    %v4820 = vld [vmem:[%s3371 + $0x8] sm:$0xf8]
    %v4821 = vld [vmem:[%s3371 + $0x80] sm:$0xf]
    %v4822 = vld [vmem:[%s3371 + $0x88] sm:$0xf]
    %v4827 = vrot.slane %v4819, 3
    %v4828 = vrot.slane %v4358, 3
    %v4829 = vsel %vm1682, %v4827, %v4828
    %v4830 = vrot.slane %v4820, 3
    %v4831 = vrot.slane %v4359, 3
    %v4832 = vsel %vm1682, %v4830, %v4831
    %v4833 = vrot.slane %v4360, 3
    %v4834 = vsel %vm1682, %v4828, %v4833
    %v4835 = vrot.slane %v4361, 3
    %v4836 = vsel %vm1682, %v4831, %v4835
    %v4837 = vrot.slane %v4362, 3
    %v4838 = vsel %vm1682, %v4833, %v4837
    %v4839 = vrot.slane %v4363, 3
    %v4840 = vsel %vm1682, %v4835, %v4839
    %v4841 = vrot.slane %v4364, 3
    %v4842 = vsel %vm1682, %v4837, %v4841
    %v4843 = vrot.slane %v4365, 3
    %v4844 = vsel %vm1682, %v4839, %v4843
    %v4845 = vrot.slane %v4366, 3
    %v4846 = vsel %vm1682, %v4841, %v4845
    %v4847 = vrot.slane %v4367, 3
    %v4848 = vsel %vm1682, %v4843, %v4847
    %v4849 = vrot.slane %v4368, 3
    %v4850 = vsel %vm1682, %v4845, %v4849
    %v4851 = vrot.slane %v4369, 3
    %v4852 = vsel %vm1682, %v4847, %v4851
    %v4853 = vrot.slane %v4370, 3
    %v4854 = vsel %vm1682, %v4849, %v4853
    %v4855 = vrot.slane %v4371, 3
    %v4856 = vsel %vm1682, %v4851, %v4855
    %v4857 = vrot.slane %v4821, 3
    %v4858 = vsel %vm1682, %v4853, %v4857
    %v4859 = vrot.slane %v4822, 3
    %v4860 = vsel %vm1682, %v4855, %v4859
    %v4870 = vsel %vm121, %v4832, 0
    %v4872 = vsel %vm121, %v4836, 0
    %v4874 = vsel %vm121, %v4840, 0
    %v4876 = vsel %vm121, %v4844, 0
    %v4878 = vsel %vm121, %v4848, 0
    %v4880 = vsel %vm121, %v4852, 0
    %v4882 = vsel %vm121, %v4856, 0
    %v4884 = vsel %vm121, %v4860, 0
    %v4886 = vsel %vm121, %v4859, 0
    %4888 = vmatpush.msra.mxu0 %v3937
    %4889 = vmatpush.msra.mxu0 %v3936
    %4890 = vmatpush.msra.mxu0 %v3935
    %4891 = vmatpush.msra.mxu0 %v3934
    %4892 = vmatpush.msra.mxu0 %v3933
    %4893 = vmatpush.msra.mxu0 %v3932
    %4894 = vmatpush.msra.mxu0 %v3931
    %4895 = vmatpush.msra.mxu0 %v3930
    %4896 = vmatpush.msra.mxu0 %v3929
    %4897 = vmatpush.msra.mxu0 %v3928
    %4898 = vmatpush.msra.mxu0 %v3927
    %4899 = vmatpush.msra.mxu0 %v3926
    %4900 = vmatpush.msra.mxu0 %v3925
    %4901 = vmatpush.msra.mxu0 %v3924
    %4902 = vmatpush.msra.mxu0 %v3923
    %4903 = vmatpush.msra.mxu0 %v3922
    %4904 = vmatmul.f32.gmra.mxu0 %v4829
    %v4905 = vpop.f32.mrf.mxu0
    %v4906 = vadd.f32 0.0, %v4905
    %4907 = vmatmul.f32.gmra.mxu0 %v4834
    %v4908 = vpop.f32.mrf.mxu0
    %v4909 = vadd.f32 0.0, %v4908
    %4910 = vmatmul.f32.gmra.mxu0 %v4838
    %v4911 = vpop.f32.mrf.mxu0
    %v4912 = vadd.f32 0.0, %v4911
    %4913 = vmatmul.f32.gmra.mxu0 %v4842
    %v4914 = vpop.f32.mrf.mxu0
    %v4915 = vadd.f32 0.0, %v4914
    %4916 = vmatmul.f32.gmra.mxu0 %v4846
    %v4917 = vpop.f32.mrf.mxu0
    %v4918 = vadd.f32 0.0, %v4917
    %4919 = vmatmul.f32.gmra.mxu0 %v4850
    %v4920 = vpop.f32.mrf.mxu0
    %v4921 = vadd.f32 0.0, %v4920
    %4922 = vmatmul.f32.gmra.mxu0 %v4854
    %v4923 = vpop.f32.mrf.mxu0
    %v4924 = vadd.f32 0.0, %v4923
    %4925 = vmatmul.f32.gmra.mxu0 %v4858
    %v4926 = vpop.f32.mrf.mxu0
    %v4927 = vadd.f32 0.0, %v4926
    %4928 = vmatmul.f32.gmra.mxu0 %v4857
    %v4929 = vpop.f32.mrf.mxu0
    %v4930 = vadd.f32 0.0, %v4929
    %4931 = vdwg.mxu0
    %4932 = vmatpush.msra.mxu0 0.0
    %4933 = vmatpush.msra.mxu0 0.0
    %4934 = vmatpush.msra.mxu0 0.0
    %4935 = vmatpush.msra.mxu0 0.0
    %4936 = vmatpush.msra.mxu0 0.0
    %4937 = vmatpush.msra.mxu0 0.0
    %4938 = vmatpush.msra.mxu0 0.0
    %4939 = vmatpush.msra.mxu0 0.0
    %4940 = vmatpush.msra.mxu0 0.0
    %4941 = vmatpush.msra.mxu0 0.0
    %4942 = vmatpush.msra.mxu0 0.0
    %4943 = vmatpush.msra.mxu0 0.0
    %4944 = vmatpush.msra.mxu0 0.0
    %4945 = vmatpush.msra.mxu0 0.0
    %4946 = vmatpush.msra.mxu0 0.0
    %4947 = vmatpush.msra.mxu0 %v4005
    %4948 = vmatmul.f32.gmra.mxu0 %v4870
    %v4949 = vpop.f32.mrf.mxu0
    %v4950 = vadd.f32 %v4906, %v4949
    %4951 = vmatmul.f32.gmra.mxu0 %v4872
    %v4952 = vpop.f32.mrf.mxu0
    %v4953 = vadd.f32 %v4909, %v4952
    %4954 = vmatmul.f32.gmra.mxu0 %v4874
    %v4955 = vpop.f32.mrf.mxu0
    %v4956 = vadd.f32 %v4912, %v4955
    %4957 = vmatmul.f32.gmra.mxu0 %v4876
    %v4958 = vpop.f32.mrf.mxu0
    %v4959 = vadd.f32 %v4915, %v4958
    %4960 = vmatmul.f32.gmra.mxu0 %v4878
    %v4961 = vpop.f32.mrf.mxu0
    %v4962 = vadd.f32 %v4918, %v4961
    %4963 = vmatmul.f32.gmra.mxu0 %v4880
    %v4964 = vpop.f32.mrf.mxu0
    %v4965 = vadd.f32 %v4921, %v4964
    %4966 = vmatmul.f32.gmra.mxu0 %v4882
    %v4967 = vpop.f32.mrf.mxu0
    %v4968 = vadd.f32 %v4924, %v4967
    %4969 = vmatmul.f32.gmra.mxu0 %v4884
    %v4970 = vpop.f32.mrf.mxu0
    %v4971 = vadd.f32 %v4927, %v4970
    %4972 = vmatmul.f32.gmra.mxu0 %v4886
    %v4973 = vpop.f32.mrf.mxu0
    %v4974 = vadd.f32 %v4930, %v4973
    %4975 = vdwg.mxu0
    %v4976 = vadd.f32 %v4810, %v4950
    %v4977 = vadd.f32 %v4811, %v4953
    %v4978 = vadd.f32 %v4812, %v4956
    %v4979 = vadd.f32 %v4813, %v4959
    %v4980 = vadd.f32 %v4814, %v4962
    %v4981 = vadd.f32 %v4815, %v4965
    %v4982 = vadd.f32 %v4816, %v4968
    %v4983 = vadd.f32 %v4817, %v4971
    %v4984 = vadd.f32 %v4818, %v4974
    %v4985 = vld [vmem:[%s3371] sm:$0xf0]
    %v4986 = vld [vmem:[%s3371 + $0x8] sm:$0xf0]
    %v4987 = vld [vmem:[%s3371 + $0x80] sm:$0x1f]
    %v4988 = vld [vmem:[%s3371 + $0x88] sm:$0x1f]
    %v4993 = vrot.slane %v4985, 4
    %v4994 = vrot.slane %v4358, 4
    %v4995 = vsel %vm4130, %v4993, %v4994
    %v4996 = vrot.slane %v4986, 4
    %v4997 = vrot.slane %v4359, 4
    %v4998 = vsel %vm4130, %v4996, %v4997
    %v4999 = vrot.slane %v4360, 4
    %v5000 = vsel %vm4130, %v4994, %v4999
    %v5001 = vrot.slane %v4361, 4
    %v5002 = vsel %vm4130, %v4997, %v5001
    %v5003 = vrot.slane %v4362, 4
    %v5004 = vsel %vm4130, %v4999, %v5003
    %v5005 = vrot.slane %v4363, 4
    %v5006 = vsel %vm4130, %v5001, %v5005
    %v5007 = vrot.slane %v4364, 4
    %v5008 = vsel %vm4130, %v5003, %v5007
    %v5009 = vrot.slane %v4365, 4
    %v5010 = vsel %vm4130, %v5005, %v5009
    %v5011 = vrot.slane %v4366, 4
    %v5012 = vsel %vm4130, %v5007, %v5011
    %v5013 = vrot.slane %v4367, 4
    %v5014 = vsel %vm4130, %v5009, %v5013
    %v5015 = vrot.slane %v4368, 4
    %v5016 = vsel %vm4130, %v5011, %v5015
    %v5017 = vrot.slane %v4369, 4
    %v5018 = vsel %vm4130, %v5013, %v5017
    %v5019 = vrot.slane %v4370, 4
    %v5020 = vsel %vm4130, %v5015, %v5019
    %v5021 = vrot.slane %v4371, 4
    %v5022 = vsel %vm4130, %v5017, %v5021
    %v5023 = vrot.slane %v4987, 4
    %v5024 = vsel %vm4130, %v5019, %v5023
    %v5025 = vrot.slane %v4988, 4
    %v5026 = vsel %vm4130, %v5021, %v5025
    %v5036 = vsel %vm121, %v4998, 0
    %v5038 = vsel %vm121, %v5002, 0
    %v5040 = vsel %vm121, %v5006, 0
    %v5042 = vsel %vm121, %v5010, 0
    %v5044 = vsel %vm121, %v5014, 0
    %v5046 = vsel %vm121, %v5018, 0
    %v5048 = vsel %vm121, %v5022, 0
    %v5050 = vsel %vm121, %v5026, 0
    %v5052 = vsel %vm121, %v5025, 0
    %5054 = vmatpush.msra.mxu0 %v4124
    %5055 = vmatpush.msra.mxu0 %v4123
    %5056 = vmatpush.msra.mxu0 %v4122
    %5057 = vmatpush.msra.mxu0 %v4121
    %5058 = vmatpush.msra.mxu0 %v4120
    %5059 = vmatpush.msra.mxu0 %v4119
    %5060 = vmatpush.msra.mxu0 %v4118
    %5061 = vmatpush.msra.mxu0 %v4117
    %5062 = vmatpush.msra.mxu0 %v4116
    %5063 = vmatpush.msra.mxu0 %v4115
    %5064 = vmatpush.msra.mxu0 %v4114
    %5065 = vmatpush.msra.mxu0 %v4113
    %5066 = vmatpush.msra.mxu0 %v4112
    %5067 = vmatpush.msra.mxu0 %v4111
    %5068 = vmatpush.msra.mxu0 %v4110
    %5069 = vmatpush.msra.mxu0 %v4109
    %5070 = vmatmul.f32.gmra.mxu0 %v4995
    %v5071 = vpop.f32.mrf.mxu0
    %v5072 = vadd.f32 0.0, %v5071
    %5073 = vmatmul.f32.gmra.mxu0 %v5000
    %v5074 = vpop.f32.mrf.mxu0
    %v5075 = vadd.f32 0.0, %v5074
    %5076 = vmatmul.f32.gmra.mxu0 %v5004
    %v5077 = vpop.f32.mrf.mxu0
    %v5078 = vadd.f32 0.0, %v5077
    %5079 = vmatmul.f32.gmra.mxu0 %v5008
    %v5080 = vpop.f32.mrf.mxu0
    %v5081 = vadd.f32 0.0, %v5080
    %5082 = vmatmul.f32.gmra.mxu0 %v5012
    %v5083 = vpop.f32.mrf.mxu0
    %v5084 = vadd.f32 0.0, %v5083
    %5085 = vmatmul.f32.gmra.mxu0 %v5016
    %v5086 = vpop.f32.mrf.mxu0
    %v5087 = vadd.f32 0.0, %v5086
    %5088 = vmatmul.f32.gmra.mxu0 %v5020
    %v5089 = vpop.f32.mrf.mxu0
    %v5090 = vadd.f32 0.0, %v5089
    %5091 = vmatmul.f32.gmra.mxu0 %v5024
    %v5092 = vpop.f32.mrf.mxu0
    %v5093 = vadd.f32 0.0, %v5092
    %5094 = vmatmul.f32.gmra.mxu0 %v5023
    %v5095 = vpop.f32.mrf.mxu0
    %v5096 = vadd.f32 0.0, %v5095
    %5097 = vdwg.mxu0
    %5098 = vmatpush.msra.mxu0 0.0
    %5099 = vmatpush.msra.mxu0 0.0
    %5100 = vmatpush.msra.mxu0 0.0
    %5101 = vmatpush.msra.mxu0 0.0
    %5102 = vmatpush.msra.mxu0 0.0
    %5103 = vmatpush.msra.mxu0 0.0
    %5104 = vmatpush.msra.mxu0 0.0
    %5105 = vmatpush.msra.mxu0 0.0
    %5106 = vmatpush.msra.mxu0 0.0
    %5107 = vmatpush.msra.mxu0 0.0
    %5108 = vmatpush.msra.mxu0 0.0
    %5109 = vmatpush.msra.mxu0 0.0
    %5110 = vmatpush.msra.mxu0 0.0
    %5111 = vmatpush.msra.mxu0 0.0
    %5112 = vmatpush.msra.mxu0 0.0
    %5113 = vmatpush.msra.mxu0 %v4193
    %5114 = vmatmul.f32.gmra.mxu0 %v5036
    %v5115 = vpop.f32.mrf.mxu0
    %v5116 = vadd.f32 %v5072, %v5115
    %5117 = vmatmul.f32.gmra.mxu0 %v5038
    %v5118 = vpop.f32.mrf.mxu0
    %v5119 = vadd.f32 %v5075, %v5118
    %5120 = vmatmul.f32.gmra.mxu0 %v5040
    %v5121 = vpop.f32.mrf.mxu0
    %v5122 = vadd.f32 %v5078, %v5121
    %5123 = vmatmul.f32.gmra.mxu0 %v5042
    %v5124 = vpop.f32.mrf.mxu0
    %v5125 = vadd.f32 %v5081, %v5124
    %5126 = vmatmul.f32.gmra.mxu0 %v5044
    %v5127 = vpop.f32.mrf.mxu0
    %v5128 = vadd.f32 %v5084, %v5127
    %5129 = vmatmul.f32.gmra.mxu0 %v5046
    %v5130 = vpop.f32.mrf.mxu0
    %v5131 = vadd.f32 %v5087, %v5130
    %5132 = vmatmul.f32.gmra.mxu0 %v5048
    %v5133 = vpop.f32.mrf.mxu0
    %v5134 = vadd.f32 %v5090, %v5133
    %5135 = vmatmul.f32.gmra.mxu0 %v5050
    %v5136 = vpop.f32.mrf.mxu0
    %v5137 = vadd.f32 %v5093, %v5136
    %5138 = vmatmul.f32.gmra.mxu0 %v5052
    %v5139 = vpop.f32.mrf.mxu0
    %v5140 = vadd.f32 %v5096, %v5139
    %5141 = vdwg.mxu0
    %v5142 = vadd.f32 %v4976, %v5116
    %v5143 = vadd.f32 %v4977, %v5119
    %v5144 = vadd.f32 %v4978, %v5122
    %v5145 = vadd.f32 %v4979, %v5125
    %v5146 = vadd.f32 %v4980, %v5128
    %v5147 = vadd.f32 %v4981, %v5131
    %v5148 = vadd.f32 %v4982, %v5134
    %v5149 = vadd.f32 %v4983, %v5137
    %v5150 = vadd.f32 %v4984, %v5140
    %v5152 = vsel %vm382, %v5150, 0
    %5154 = vmatpush.msra.mxu0 0.0
    %5155 = vmatpush.msra.mxu0 0.0
    %5156 = vmatpush.msra.mxu0 0.0
    %5157 = vmatpush.msra.mxu0 0.0
    %5158 = vmatpush.msra.mxu0 0.0
    %5159 = vmatpush.msra.mxu0 0.0
    %5160 = vmatpush.msra.mxu0 0.0
    %5161 = vmatpush.msra.mxu0 %v5152
    %5162 = vmatpush.msra.mxu0 %v5149
    %5163 = vmatpush.msra.mxu0 %v5148
    %5164 = vmatpush.msra.mxu0 %v5147
    %5165 = vmatpush.msra.mxu0 %v5146
    %5166 = vmatpush.msra.mxu0 %v5145
    %5167 = vmatpush.msra.mxu0 %v5144
    %5168 = vmatpush.msra.mxu0 %v5143
    %5169 = vmatpush.msra.mxu0 %v5142
    %5170 = vmatmul.f32.gmra.mxu0 %v4297
    %v5171 = vpop.f32.mrf.mxu0
    %v5172 = vadd.f32 %v4294, %v5171
    %5173 = vmatmul.f32.gmra.mxu0 %v4299
    %v5174 = vpop.f32.mrf.mxu0
    %v5175 = vadd.f32 %v4294, %v5174
    %5176 = vmatmul.f32.gmra.mxu0 %v4301
    %v5177 = vpop.f32.mrf.mxu0
    %v5178 = vadd.f32 %v4294, %v5177
    %5179 = vmatmul.f32.gmra.mxu0 %v4303
    %v5180 = vpop.f32.mrf.mxu0
    %v5181 = vadd.f32 %v4294, %v5180
    %5182 = vmatmul.f32.gmra.mxu0 %v4305
    %v5183 = vpop.f32.mrf.mxu0
    %v5184 = vadd.f32 %v4294, %v5183
    %5185 = vdwg.mxu0
    %v5186 = vmax.f32 %v5172, 0.0
    %v5187 = vmax.f32 %v5175, 0.0
    %v5188 = vmax.f32 %v5178, 0.0
    %v5189 = vmax.f32 %v5181, 0.0
    %v5190 = vmax.f32 %v5184, 0.0
    %v5191 = vadd.f32 %v5186, %v4349
    %v5192 = vadd.f32 %v5187, %v4349
    %v5193 = vadd.f32 %v5188, %v4349
    %v5194 = vadd.f32 %v5189, %v4349
    %v5195 = vadd.f32 %v5190, %v4349
    %5196 = vst.msk [vmem:[#allocation4 + $0x2] sm:$0xff] %vm158, %v4351
    %5197 = vst.msk [vmem:[#allocation4 + $0xa] sm:$0xff] %vm158, %v4352
    %5198 = vst.msk [vmem:[#allocation4 + $0x12] sm:$0xff] %vm158, %v4353
    %5199 = vst.msk [vmem:[#allocation4 + $0x1a] sm:$0xff] %vm158, %v4354
    %vm5200 = vcmask 761856
    %5201 = vst.msk [vmem:[#allocation4 + $0x22] sm:$0x1] %vm5200, %v4355
    %s5202 = scalar_lea.vmem [#allocation4], 40
    %5203 = vst.msk [vmem:[%s5202 + $0x2] sm:$0xff] %vm158, %v5191
    %5204 = vst.msk [vmem:[%s5202 + $0xa] sm:$0xff] %vm158, %v5192
    %5205 = vst.msk [vmem:[%s5202 + $0x12] sm:$0xff] %vm158, %v5193
    %5206 = vst.msk [vmem:[%s5202 + $0x1a] sm:$0xff] %vm158, %v5194
    %5207 = vst.msk [vmem:[%s5202 + $0x22] sm:$0x1] %vm5200, %v5195
    %v5208 = vld [vmem:[#allocation4] sm:$0xff]
    %v5209 = vld [vmem:[#allocation4 + $0x8] sm:$0xff]
    %v5210 = vld [vmem:[#allocation4 + $0x10] sm:$0xff]
    %v5211 = vld [vmem:[#allocation4 + $0x18] sm:$0x7f]
    %v5212 = vld [vmem:[%s7] sm:$0xff]
    %v5213 = vld [vmem:[%s7 + $0x8] sm:$0xff]
    %v5214 = vld [vmem:[%s7 + $0x10] sm:$0xff]
    %v5215 = vld [vmem:[%s7 + $0x18] sm:$0xff]
    %v5216 = vld [vmem:[%s7 + $0x20] sm:$0xff]
    %v5217 = vld [vmem:[%s7 + $0x28] sm:$0xff]
    %v5218 = vld [vmem:[%s7 + $0x30] sm:$0xff]
    %v5219 = vld [vmem:[%s7 + $0x38] sm:$0xff]
    %v5220 = vld [vmem:[%s7 + $0x40] sm:$0xff]
    %v5221 = vld [vmem:[%s7 + $0x48] sm:$0xff]
    %v5222 = vld [vmem:[%s7 + $0x50] sm:$0xff]
    %v5223 = vld [vmem:[%s7 + $0x58] sm:$0x3f]
    %v5224 = vld [vmem:[#allocation4 + $0x1] sm:$0xff]
    %v5225 = vld [vmem:[#allocation4 + $0x9] sm:$0xff]
    %v5226 = vld [vmem:[#allocation4 + $0x11] sm:$0xff]
    %v5227 = vld [vmem:[#allocation4 + $0x19] sm:$0x7f]
    %s5228 = scalar_lea.vmem %s7, 96
    %v5229 = vld [vmem:[%s5228] sm:$0xff]
    %v5230 = vld [vmem:[%s5228 + $0x8] sm:$0xff]
    %v5231 = vld [vmem:[%s5228 + $0x10] sm:$0xff]
    %v5232 = vld [vmem:[%s5228 + $0x18] sm:$0xff]
    %v5233 = vld [vmem:[%s5228 + $0x20] sm:$0xff]
    %v5234 = vld [vmem:[%s5228 + $0x28] sm:$0xff]
    %v5235 = vld [vmem:[%s5228 + $0x30] sm:$0xff]
    %v5236 = vld [vmem:[%s5228 + $0x38] sm:$0xff]
    %v5237 = vld [vmem:[%s5228 + $0x40] sm:$0xff]
    %v5238 = vld [vmem:[%s5228 + $0x48] sm:$0xff]
    %v5239 = vld [vmem:[%s5228 + $0x50] sm:$0xff]
    %v5240 = vld [vmem:[%s5228 + $0x58] sm:$0x3f]
    %v5242 = vsel %vm158, %v5224, 0
    %v5245 = vsel %vm158, %v5225, 0
    %v5248 = vsel %vm158, %v5226, 0
    %v5251 = vsel %vm158, %v5227, 0
    %v5254 = vsel %vm3755, %v5240, 0
    %5256 = vmatpush.msra.mxu0 0.0
    %5257 = vmatpush.msra.mxu0 0.0
    %5258 = vmatpush.msra.mxu0 0.0
    %5259 = vmatpush.msra.mxu0 0.0
    %5260 = vmatpush.msra.mxu0 %v5254
    %5261 = vmatpush.msra.mxu0 %v5239
    %5262 = vmatpush.msra.mxu0 %v5238
    %5263 = vmatpush.msra.mxu0 %v5237
    %5264 = vmatpush.msra.mxu0 %v5236
    %5265 = vmatpush.msra.mxu0 %v5235
    %5266 = vmatpush.msra.mxu0 %v5234
    %5267 = vmatpush.msra.mxu0 %v5233
    %5268 = vmatpush.msra.mxu0 %v5232
    %5269 = vmatpush.msra.mxu0 %v5231
    %5270 = vmatpush.msra.mxu0 %v5230
    %5271 = vmatpush.msra.mxu0 %v5229
    %5272 = vmatmul.f32.gmra.mxu0 %v5242
    %v5273 = vpop.f32.mrf.mxu0
    %v5274 = vadd.f32 0.0, %v5273
    %5275 = vmatmul.f32.gmra.mxu0 %v5245
    %v5276 = vpop.f32.mrf.mxu0
    %v5277 = vadd.f32 0.0, %v5276
    %5278 = vmatmul.f32.gmra.mxu0 %v5248
    %v5279 = vpop.f32.mrf.mxu0
    %v5280 = vadd.f32 0.0, %v5279
    %5281 = vmatmul.f32.gmra.mxu0 %v5251
    %v5282 = vpop.f32.mrf.mxu0
    %v5283 = vadd.f32 0.0, %v5282
    %5284 = vdwg.mxu0
    %v5286 = vsel %vm158, %v5208, 0
    %v5289 = vsel %vm158, %v5209, 0
    %v5292 = vsel %vm158, %v5210, 0
    %v5295 = vsel %vm158, %v5211, 0
    %v5298 = vsel %vm3755, %v5223, 0
    %5300 = vmatpush.msra.mxu0 0.0
    %5301 = vmatpush.msra.mxu0 0.0
    %5302 = vmatpush.msra.mxu0 0.0
    %5303 = vmatpush.msra.mxu0 0.0
    %5304 = vmatpush.msra.mxu0 %v5298
    %5305 = vmatpush.msra.mxu0 %v5222
    %5306 = vmatpush.msra.mxu0 %v5221
    %5307 = vmatpush.msra.mxu0 %v5220
    %5308 = vmatpush.msra.mxu0 %v5219
    %5309 = vmatpush.msra.mxu0 %v5218
    %5310 = vmatpush.msra.mxu0 %v5217
    %5311 = vmatpush.msra.mxu0 %v5216
    %5312 = vmatpush.msra.mxu0 %v5215
    %5313 = vmatpush.msra.mxu0 %v5214
    %5314 = vmatpush.msra.mxu0 %v5213
    %5315 = vmatpush.msra.mxu0 %v5212
    %5316 = vmatmul.f32.gmra.mxu0 %v5286
    %v5317 = vpop.f32.mrf.mxu0
    %v5318 = vadd.f32 %v5274, %v5317
    %5319 = vmatmul.f32.gmra.mxu0 %v5289
    %v5320 = vpop.f32.mrf.mxu0
    %v5321 = vadd.f32 %v5277, %v5320
    %5322 = vmatmul.f32.gmra.mxu0 %v5292
    %v5323 = vpop.f32.mrf.mxu0
    %v5324 = vadd.f32 %v5280, %v5323
    %5325 = vmatmul.f32.gmra.mxu0 %v5295
    %v5326 = vpop.f32.mrf.mxu0
    %v5327 = vadd.f32 %v5283, %v5326
    %5328 = vdwg.mxu0
    %v5329 = vld [vmem:[#allocation4 + $0x2] sm:$0xff]
    %v5330 = vld [vmem:[#allocation4 + $0xa] sm:$0xff]
    %v5331 = vld [vmem:[#allocation4 + $0x12] sm:$0xff]
    %v5332 = vld [vmem:[#allocation4 + $0x1a] sm:$0x7f]
    %s5333 = scalar_lea.vmem %s7, 192
    %v5334 = vld [vmem:[%s5333] sm:$0xff]
    %v5335 = vld [vmem:[%s5333 + $0x8] sm:$0xff]
    %v5336 = vld [vmem:[%s5333 + $0x10] sm:$0xff]
    %v5337 = vld [vmem:[%s5333 + $0x18] sm:$0xff]
    %v5338 = vld [vmem:[%s5333 + $0x20] sm:$0xff]
    %v5339 = vld [vmem:[%s5333 + $0x28] sm:$0xff]
    %v5340 = vld [vmem:[%s5333 + $0x30] sm:$0xff]
    %v5341 = vld [vmem:[%s5333 + $0x38] sm:$0xff]
    %v5342 = vld [vmem:[%s5333 + $0x40] sm:$0xff]
    %v5343 = vld [vmem:[%s5333 + $0x48] sm:$0xff]
    %v5344 = vld [vmem:[%s5333 + $0x50] sm:$0xff]
    %v5345 = vld [vmem:[%s5333 + $0x58] sm:$0x3f]
    %v5347 = vsel %vm158, %v5329, 0
    %v5350 = vsel %vm158, %v5330, 0
    %v5353 = vsel %vm158, %v5331, 0
    %v5356 = vsel %vm158, %v5332, 0
    %v5359 = vsel %vm3755, %v5345, 0
    %5361 = vmatpush.msra.mxu0 0.0
    %5362 = vmatpush.msra.mxu0 0.0
    %5363 = vmatpush.msra.mxu0 0.0
    %5364 = vmatpush.msra.mxu0 0.0
    %5365 = vmatpush.msra.mxu0 %v5359
    %5366 = vmatpush.msra.mxu0 %v5344
    %5367 = vmatpush.msra.mxu0 %v5343
    %5368 = vmatpush.msra.mxu0 %v5342
    %5369 = vmatpush.msra.mxu0 %v5341
    %5370 = vmatpush.msra.mxu0 %v5340
    %5371 = vmatpush.msra.mxu0 %v5339
    %5372 = vmatpush.msra.mxu0 %v5338
    %5373 = vmatpush.msra.mxu0 %v5337
    %5374 = vmatpush.msra.mxu0 %v5336
    %5375 = vmatpush.msra.mxu0 %v5335
    %5376 = vmatpush.msra.mxu0 %v5334
    %5377 = vmatmul.f32.gmra.mxu0 %v5347
    %v5378 = vpop.f32.mrf.mxu0
    %v5379 = vadd.f32 0.0, %v5378
    %5380 = vmatmul.f32.gmra.mxu0 %v5350
    %v5381 = vpop.f32.mrf.mxu0
    %v5382 = vadd.f32 0.0, %v5381
    %5383 = vmatmul.f32.gmra.mxu0 %v5353
    %v5384 = vpop.f32.mrf.mxu0
    %v5385 = vadd.f32 0.0, %v5384
    %5386 = vmatmul.f32.gmra.mxu0 %v5356
    %v5387 = vpop.f32.mrf.mxu0
    %v5388 = vadd.f32 0.0, %v5387
    %5389 = vdwg.mxu0
    %v5390 = vadd.f32 %v5318, %v5379
    %v5391 = vadd.f32 %v5321, %v5382
    %v5392 = vadd.f32 %v5324, %v5385
    %v5393 = vadd.f32 %v5327, %v5388
    %v5394 = vld [vmem:[#allocation4 + $0x3] sm:$0xff]
    %v5395 = vld [vmem:[#allocation4 + $0xb] sm:$0xff]
    %v5396 = vld [vmem:[#allocation4 + $0x13] sm:$0xff]
    %v5397 = vld [vmem:[#allocation4 + $0x1b] sm:$0x7f]
    %s5398 = scalar_lea.vmem %s7, 288
    %v5399 = vld [vmem:[%s5398] sm:$0xff]
    %v5400 = vld [vmem:[%s5398 + $0x8] sm:$0xff]
    %v5401 = vld [vmem:[%s5398 + $0x10] sm:$0xff]
    %v5402 = vld [vmem:[%s5398 + $0x18] sm:$0xff]
    %v5403 = vld [vmem:[%s5398 + $0x20] sm:$0xff]
    %v5404 = vld [vmem:[%s5398 + $0x28] sm:$0xff]
    %v5405 = vld [vmem:[%s5398 + $0x30] sm:$0xff]
    %v5406 = vld [vmem:[%s5398 + $0x38] sm:$0xff]
    %v5407 = vld [vmem:[%s5398 + $0x40] sm:$0xff]
    %v5408 = vld [vmem:[%s5398 + $0x48] sm:$0xff]
    %v5409 = vld [vmem:[%s5398 + $0x50] sm:$0xff]
    %v5410 = vld [vmem:[%s5398 + $0x58] sm:$0x3f]
    %v5412 = vsel %vm158, %v5394, 0
    %v5415 = vsel %vm158, %v5395, 0
    %v5418 = vsel %vm158, %v5396, 0
    %v5421 = vsel %vm158, %v5397, 0
    %v5424 = vsel %vm3755, %v5410, 0
    %5426 = vmatpush.msra.mxu0 0.0
    %5427 = vmatpush.msra.mxu0 0.0
    %5428 = vmatpush.msra.mxu0 0.0
    %5429 = vmatpush.msra.mxu0 0.0
    %5430 = vmatpush.msra.mxu0 %v5424
    %5431 = vmatpush.msra.mxu0 %v5409
    %5432 = vmatpush.msra.mxu0 %v5408
    %5433 = vmatpush.msra.mxu0 %v5407
    %5434 = vmatpush.msra.mxu0 %v5406
    %5435 = vmatpush.msra.mxu0 %v5405
    %5436 = vmatpush.msra.mxu0 %v5404
    %5437 = vmatpush.msra.mxu0 %v5403
    %5438 = vmatpush.msra.mxu0 %v5402
    %5439 = vmatpush.msra.mxu0 %v5401
    %5440 = vmatpush.msra.mxu0 %v5400
    %5441 = vmatpush.msra.mxu0 %v5399
    %5442 = vmatmul.f32.gmra.mxu0 %v5412
    %v5443 = vpop.f32.mrf.mxu0
    %v5444 = vadd.f32 0.0, %v5443
    %5445 = vmatmul.f32.gmra.mxu0 %v5415
    %v5446 = vpop.f32.mrf.mxu0
    %v5447 = vadd.f32 0.0, %v5446
    %5448 = vmatmul.f32.gmra.mxu0 %v5418
    %v5449 = vpop.f32.mrf.mxu0
    %v5450 = vadd.f32 0.0, %v5449
    %5451 = vmatmul.f32.gmra.mxu0 %v5421
    %v5452 = vpop.f32.mrf.mxu0
    %v5453 = vadd.f32 0.0, %v5452
    %5454 = vdwg.mxu0
    %v5455 = vadd.f32 %v5390, %v5444
    %v5456 = vadd.f32 %v5391, %v5447
    %v5457 = vadd.f32 %v5392, %v5450
    %v5458 = vadd.f32 %v5393, %v5453
    %v5459 = vld [vmem:[#allocation4 + $0x4] sm:$0xff]
    %v5460 = vld [vmem:[#allocation4 + $0xc] sm:$0xff]
    %v5461 = vld [vmem:[#allocation4 + $0x14] sm:$0xff]
    %v5462 = vld [vmem:[#allocation4 + $0x1c] sm:$0x7f]
    %s5463 = scalar_lea.vmem %s7, 384
    %v5464 = vld [vmem:[%s5463] sm:$0xff]
    %v5465 = vld [vmem:[%s5463 + $0x8] sm:$0xff]
    %v5466 = vld [vmem:[%s5463 + $0x10] sm:$0xff]
    %v5467 = vld [vmem:[%s5463 + $0x18] sm:$0xff]
    %v5468 = vld [vmem:[%s5463 + $0x20] sm:$0xff]
    %v5469 = vld [vmem:[%s5463 + $0x28] sm:$0xff]
    %v5470 = vld [vmem:[%s5463 + $0x30] sm:$0xff]
    %v5471 = vld [vmem:[%s5463 + $0x38] sm:$0xff]
    %v5472 = vld [vmem:[%s5463 + $0x40] sm:$0xff]
    %v5473 = vld [vmem:[%s5463 + $0x48] sm:$0xff]
    %v5474 = vld [vmem:[%s5463 + $0x50] sm:$0xff]
    %v5475 = vld [vmem:[%s5463 + $0x58] sm:$0x3f]
    %v5477 = vsel %vm158, %v5459, 0
    %v5480 = vsel %vm158, %v5460, 0
    %v5483 = vsel %vm158, %v5461, 0
    %v5486 = vsel %vm158, %v5462, 0
    %v5489 = vsel %vm3755, %v5475, 0
    %5491 = vmatpush.msra.mxu0 0.0
    %5492 = vmatpush.msra.mxu0 0.0
    %5493 = vmatpush.msra.mxu0 0.0
    %5494 = vmatpush.msra.mxu0 0.0
    %5495 = vmatpush.msra.mxu0 %v5489
    %5496 = vmatpush.msra.mxu0 %v5474
    %5497 = vmatpush.msra.mxu0 %v5473
    %5498 = vmatpush.msra.mxu0 %v5472
    %5499 = vmatpush.msra.mxu0 %v5471
    %5500 = vmatpush.msra.mxu0 %v5470
    %5501 = vmatpush.msra.mxu0 %v5469
    %5502 = vmatpush.msra.mxu0 %v5468
    %5503 = vmatpush.msra.mxu0 %v5467
    %5504 = vmatpush.msra.mxu0 %v5466
    %5505 = vmatpush.msra.mxu0 %v5465
    %5506 = vmatpush.msra.mxu0 %v5464
    %5507 = vmatmul.f32.gmra.mxu0 %v5477
    %v5508 = vpop.f32.mrf.mxu0
    %v5509 = vadd.f32 0.0, %v5508
    %5510 = vmatmul.f32.gmra.mxu0 %v5480
    %v5511 = vpop.f32.mrf.mxu0
    %v5512 = vadd.f32 0.0, %v5511
    %5513 = vmatmul.f32.gmra.mxu0 %v5483
    %v5514 = vpop.f32.mrf.mxu0
    %v5515 = vadd.f32 0.0, %v5514
    %5516 = vmatmul.f32.gmra.mxu0 %v5486
    %v5517 = vpop.f32.mrf.mxu0
    %v5518 = vadd.f32 0.0, %v5517
    %5519 = vdwg.mxu0
    %v5520 = vadd.f32 %v5455, %v5509
    %v5521 = vadd.f32 %v5456, %v5512
    %v5522 = vadd.f32 %v5457, %v5515
    %v5523 = vadd.f32 %v5458, %v5518
    %v5524 = vld [vmem:[#allocation4 + $0x5] sm:$0xff]
    %v5525 = vld [vmem:[#allocation4 + $0xd] sm:$0xff]
    %v5526 = vld [vmem:[#allocation4 + $0x15] sm:$0xff]
    %v5527 = vld [vmem:[#allocation4 + $0x1d] sm:$0x7f]
    %s5528 = scalar_lea.vmem %s7, 480
    %v5529 = vld [vmem:[%s5528] sm:$0xff]
    %v5530 = vld [vmem:[%s5528 + $0x8] sm:$0xff]
    %v5531 = vld [vmem:[%s5528 + $0x10] sm:$0xff]
    %v5532 = vld [vmem:[%s5528 + $0x18] sm:$0xff]
    %v5533 = vld [vmem:[%s5528 + $0x20] sm:$0xff]
    %v5534 = vld [vmem:[%s5528 + $0x28] sm:$0xff]
    %v5535 = vld [vmem:[%s5528 + $0x30] sm:$0xff]
    %v5536 = vld [vmem:[%s5528 + $0x38] sm:$0xff]
    %v5537 = vld [vmem:[%s5528 + $0x40] sm:$0xff]
    %v5538 = vld [vmem:[%s5528 + $0x48] sm:$0xff]
    %v5539 = vld [vmem:[%s5528 + $0x50] sm:$0xff]
    %v5540 = vld [vmem:[%s5528 + $0x58] sm:$0x3f]
    %v5542 = vsel %vm158, %v5524, 0
    %v5545 = vsel %vm158, %v5525, 0
    %v5548 = vsel %vm158, %v5526, 0
    %v5551 = vsel %vm158, %v5527, 0
    %v5554 = vsel %vm3755, %v5540, 0
    %5556 = vmatpush.msra.mxu0 0.0
    %5557 = vmatpush.msra.mxu0 0.0
    %5558 = vmatpush.msra.mxu0 0.0
    %5559 = vmatpush.msra.mxu0 0.0
    %5560 = vmatpush.msra.mxu0 %v5554
    %5561 = vmatpush.msra.mxu0 %v5539
    %5562 = vmatpush.msra.mxu0 %v5538
    %5563 = vmatpush.msra.mxu0 %v5537
    %5564 = vmatpush.msra.mxu0 %v5536
    %5565 = vmatpush.msra.mxu0 %v5535
    %5566 = vmatpush.msra.mxu0 %v5534
    %5567 = vmatpush.msra.mxu0 %v5533
    %5568 = vmatpush.msra.mxu0 %v5532
    %5569 = vmatpush.msra.mxu0 %v5531
    %5570 = vmatpush.msra.mxu0 %v5530
    %5571 = vmatpush.msra.mxu0 %v5529
    %5572 = vmatmul.f32.gmra.mxu0 %v5542
    %v5573 = vpop.f32.mrf.mxu0
    %v5574 = vadd.f32 0.0, %v5573
    %5575 = vmatmul.f32.gmra.mxu0 %v5545
    %v5576 = vpop.f32.mrf.mxu0
    %v5577 = vadd.f32 0.0, %v5576
    %5578 = vmatmul.f32.gmra.mxu0 %v5548
    %v5579 = vpop.f32.mrf.mxu0
    %v5580 = vadd.f32 0.0, %v5579
    %5581 = vmatmul.f32.gmra.mxu0 %v5551
    %v5582 = vpop.f32.mrf.mxu0
    %v5583 = vadd.f32 0.0, %v5582
    %5584 = vdwg.mxu0
    %v5585 = vadd.f32 %v5520, %v5574
    %v5586 = vadd.f32 %v5521, %v5577
    %v5587 = vadd.f32 %v5522, %v5580
    %v5588 = vadd.f32 %v5523, %v5583
    %v5589 = vld [vmem:[#allocation4 + $0x6] sm:$0xff]
    %v5590 = vld [vmem:[#allocation4 + $0xe] sm:$0xff]
    %v5591 = vld [vmem:[#allocation4 + $0x16] sm:$0xff]
    %v5592 = vld [vmem:[#allocation4 + $0x1e] sm:$0x7f]
    %s5593 = scalar_lea.vmem %s7, 576
    %v5594 = vld [vmem:[%s5593] sm:$0xff]
    %v5595 = vld [vmem:[%s5593 + $0x8] sm:$0xff]
    %v5596 = vld [vmem:[%s5593 + $0x10] sm:$0xff]
    %v5597 = vld [vmem:[%s5593 + $0x18] sm:$0xff]
    %v5598 = vld [vmem:[%s5593 + $0x20] sm:$0xff]
    %v5599 = vld [vmem:[%s5593 + $0x28] sm:$0xff]
    %v5600 = vld [vmem:[%s5593 + $0x30] sm:$0xff]
    %v5601 = vld [vmem:[%s5593 + $0x38] sm:$0xff]
    %v5602 = vld [vmem:[%s5593 + $0x40] sm:$0xff]
    %v5603 = vld [vmem:[%s5593 + $0x48] sm:$0xff]
    %v5604 = vld [vmem:[%s5593 + $0x50] sm:$0xff]
    %v5605 = vld [vmem:[%s5593 + $0x58] sm:$0x3f]
    %v5607 = vsel %vm158, %v5589, 0
    %v5610 = vsel %vm158, %v5590, 0
    %v5613 = vsel %vm158, %v5591, 0
    %v5616 = vsel %vm158, %v5592, 0
    %v5619 = vsel %vm3755, %v5605, 0
    %5621 = vmatpush.msra.mxu0 0.0
    %5622 = vmatpush.msra.mxu0 0.0
    %5623 = vmatpush.msra.mxu0 0.0
    %5624 = vmatpush.msra.mxu0 0.0
    %5625 = vmatpush.msra.mxu0 %v5619
    %5626 = vmatpush.msra.mxu0 %v5604
    %5627 = vmatpush.msra.mxu0 %v5603
    %5628 = vmatpush.msra.mxu0 %v5602
    %5629 = vmatpush.msra.mxu0 %v5601
    %5630 = vmatpush.msra.mxu0 %v5600
    %5631 = vmatpush.msra.mxu0 %v5599
    %5632 = vmatpush.msra.mxu0 %v5598
    %5633 = vmatpush.msra.mxu0 %v5597
    %5634 = vmatpush.msra.mxu0 %v5596
    %5635 = vmatpush.msra.mxu0 %v5595
    %5636 = vmatpush.msra.mxu0 %v5594
    %5637 = vmatmul.f32.gmra.mxu0 %v5607
    %v5638 = vpop.f32.mrf.mxu0
    %v5639 = vadd.f32 0.0, %v5638
    %5640 = vmatmul.f32.gmra.mxu0 %v5610
    %v5641 = vpop.f32.mrf.mxu0
    %v5642 = vadd.f32 0.0, %v5641
    %5643 = vmatmul.f32.gmra.mxu0 %v5613
    %v5644 = vpop.f32.mrf.mxu0
    %v5645 = vadd.f32 0.0, %v5644
    %5646 = vmatmul.f32.gmra.mxu0 %v5616
    %v5647 = vpop.f32.mrf.mxu0
    %v5648 = vadd.f32 0.0, %v5647
    %5649 = vdwg.mxu0
    %v5650 = vadd.f32 %v5585, %v5639
    %v5651 = vadd.f32 %v5586, %v5642
    %v5652 = vadd.f32 %v5587, %v5645
    %v5653 = vadd.f32 %v5588, %v5648
    %v5654 = vld [vmem:[%s8] sm:$0x1]
    %v5656 = vperm.slane %v5654, 0
    %vm5658 = vcmask 252928
    %v5659 = vsel %vm5658, %v285, 0
    %v5661 = vsel %vm5658, %v286, 0
    %v5664 = vsel %vm3465, %v5653, 0
    %5666 = vmatpush.msra.mxu0 0.0
    %5667 = vmatpush.msra.mxu0 0.0
    %5668 = vmatpush.msra.mxu0 0.0
    %5669 = vmatpush.msra.mxu0 0.0
    %5670 = vmatpush.msra.mxu0 0.0
    %5671 = vmatpush.msra.mxu0 0.0
    %5672 = vmatpush.msra.mxu0 0.0
    %5673 = vmatpush.msra.mxu0 0.0
    %5674 = vmatpush.msra.mxu0 0.0
    %5675 = vmatpush.msra.mxu0 0.0
    %5676 = vmatpush.msra.mxu0 0.0
    %5677 = vmatpush.msra.mxu0 0.0
    %5678 = vmatpush.msra.mxu0 %v5664
    %5679 = vmatpush.msra.mxu0 %v5652
    %5680 = vmatpush.msra.mxu0 %v5651
    %5681 = vmatpush.msra.mxu0 %v5650
    %5682 = vmatmul.f32.gmra.mxu0 %v5659
    %v5683 = vpop.f32.mrf.mxu0
    %v5684 = vadd.f32 %v5656, %v5683
    %5685 = vmatmul.f32.gmra.mxu0 %v5661
    %v5686 = vpop.f32.mrf.mxu0
    %v5687 = vadd.f32 %v5656, %v5686
    %5688 = vdwg.mxu0
    %v5689 = vmax.f32 %v5684, 0.0
    %v5690 = vmax.f32 %v5687, 0.0
    %v5691 = vld [vmem:[%s9] sm:$0x1]
    %v5693 = vperm.slane %v5691, 0
    %v5695 = vadd.f32 %v5689, %v5693
    %v5696 = vadd.f32 %v5690, %v5693
    %v5697 = vld [vmem:[%s5202] sm:$0xff]
    %v5698 = vld [vmem:[%s5202 + $0x8] sm:$0xff]
    %v5699 = vld [vmem:[%s5202 + $0x10] sm:$0xff]
    %v5700 = vld [vmem:[%s5202 + $0x18] sm:$0x7f]
    %v5701 = vld [vmem:[%s5202 + $0x1] sm:$0xff]
    %v5702 = vld [vmem:[%s5202 + $0x9] sm:$0xff]
    %v5703 = vld [vmem:[%s5202 + $0x11] sm:$0xff]
    %v5704 = vld [vmem:[%s5202 + $0x19] sm:$0x7f]
    %v5706 = vsel %vm158, %v5701, 0
    %v5709 = vsel %vm158, %v5702, 0
    %v5712 = vsel %vm158, %v5703, 0
    %v5715 = vsel %vm158, %v5704, 0
    %5717 = vmatpush.msra.mxu0 0.0
    %5718 = vmatpush.msra.mxu0 0.0
    %5719 = vmatpush.msra.mxu0 0.0
    %5720 = vmatpush.msra.mxu0 0.0
    %5721 = vmatpush.msra.mxu0 %v5254
    %5722 = vmatpush.msra.mxu0 %v5239
    %5723 = vmatpush.msra.mxu0 %v5238
    %5724 = vmatpush.msra.mxu0 %v5237
    %5725 = vmatpush.msra.mxu0 %v5236
    %5726 = vmatpush.msra.mxu0 %v5235
    %5727 = vmatpush.msra.mxu0 %v5234
    %5728 = vmatpush.msra.mxu0 %v5233
    %5729 = vmatpush.msra.mxu0 %v5232
    %5730 = vmatpush.msra.mxu0 %v5231
    %5731 = vmatpush.msra.mxu0 %v5230
    %5732 = vmatpush.msra.mxu0 %v5229
    %5733 = vmatmul.f32.gmra.mxu0 %v5706
    %v5734 = vpop.f32.mrf.mxu0
    %v5735 = vadd.f32 0.0, %v5734
    %5736 = vmatmul.f32.gmra.mxu0 %v5709
    %v5737 = vpop.f32.mrf.mxu0
    %v5738 = vadd.f32 0.0, %v5737
    %5739 = vmatmul.f32.gmra.mxu0 %v5712
    %v5740 = vpop.f32.mrf.mxu0
    %v5741 = vadd.f32 0.0, %v5740
    %5742 = vmatmul.f32.gmra.mxu0 %v5715
    %v5743 = vpop.f32.mrf.mxu0
    %v5744 = vadd.f32 0.0, %v5743
    %5745 = vdwg.mxu0
    %v5747 = vsel %vm158, %v5697, 0
    %v5750 = vsel %vm158, %v5698, 0
    %v5753 = vsel %vm158, %v5699, 0
    %v5756 = vsel %vm158, %v5700, 0
    %5758 = vmatpush.msra.mxu0 0.0
    %5759 = vmatpush.msra.mxu0 0.0
    %5760 = vmatpush.msra.mxu0 0.0
    %5761 = vmatpush.msra.mxu0 0.0
    %5762 = vmatpush.msra.mxu0 %v5298
    %5763 = vmatpush.msra.mxu0 %v5222
    %5764 = vmatpush.msra.mxu0 %v5221
    %5765 = vmatpush.msra.mxu0 %v5220
    %5766 = vmatpush.msra.mxu0 %v5219
    %5767 = vmatpush.msra.mxu0 %v5218
    %5768 = vmatpush.msra.mxu0 %v5217
    %5769 = vmatpush.msra.mxu0 %v5216
    %5770 = vmatpush.msra.mxu0 %v5215
    %5771 = vmatpush.msra.mxu0 %v5214
    %5772 = vmatpush.msra.mxu0 %v5213
    %5773 = vmatpush.msra.mxu0 %v5212
    %5774 = vmatmul.f32.gmra.mxu0 %v5747
    %v5775 = vpop.f32.mrf.mxu0
    %v5776 = vadd.f32 %v5735, %v5775
    %5777 = vmatmul.f32.gmra.mxu0 %v5750
    %v5778 = vpop.f32.mrf.mxu0
    %v5779 = vadd.f32 %v5738, %v5778
    %5780 = vmatmul.f32.gmra.mxu0 %v5753
    %v5781 = vpop.f32.mrf.mxu0
    %v5782 = vadd.f32 %v5741, %v5781
    %5783 = vmatmul.f32.gmra.mxu0 %v5756
    %v5784 = vpop.f32.mrf.mxu0
    %v5785 = vadd.f32 %v5744, %v5784
    %5786 = vdwg.mxu0
    %v5787 = vld [vmem:[%s5202 + $0x2] sm:$0xff]
    %v5788 = vld [vmem:[%s5202 + $0xa] sm:$0xff]
    %v5789 = vld [vmem:[%s5202 + $0x12] sm:$0xff]
    %v5790 = vld [vmem:[%s5202 + $0x1a] sm:$0x7f]
    %v5792 = vsel %vm158, %v5787, 0
    %v5795 = vsel %vm158, %v5788, 0
    %v5798 = vsel %vm158, %v5789, 0
    %v5801 = vsel %vm158, %v5790, 0
    %5803 = vmatpush.msra.mxu0 0.0
    %5804 = vmatpush.msra.mxu0 0.0
    %5805 = vmatpush.msra.mxu0 0.0
    %5806 = vmatpush.msra.mxu0 0.0
    %5807 = vmatpush.msra.mxu0 %v5359
    %5808 = vmatpush.msra.mxu0 %v5344
    %5809 = vmatpush.msra.mxu0 %v5343
    %5810 = vmatpush.msra.mxu0 %v5342
    %5811 = vmatpush.msra.mxu0 %v5341
    %5812 = vmatpush.msra.mxu0 %v5340
    %5813 = vmatpush.msra.mxu0 %v5339
    %5814 = vmatpush.msra.mxu0 %v5338
    %5815 = vmatpush.msra.mxu0 %v5337
    %5816 = vmatpush.msra.mxu0 %v5336
    %5817 = vmatpush.msra.mxu0 %v5335
    %5818 = vmatpush.msra.mxu0 %v5334
    %5819 = vmatmul.f32.gmra.mxu0 %v5792
    %v5820 = vpop.f32.mrf.mxu0
    %v5821 = vadd.f32 0.0, %v5820
    %5822 = vmatmul.f32.gmra.mxu0 %v5795
    %v5823 = vpop.f32.mrf.mxu0
    %v5824 = vadd.f32 0.0, %v5823
    %5825 = vmatmul.f32.gmra.mxu0 %v5798
    %v5826 = vpop.f32.mrf.mxu0
    %v5827 = vadd.f32 0.0, %v5826
    %5828 = vmatmul.f32.gmra.mxu0 %v5801
    %v5829 = vpop.f32.mrf.mxu0
    %v5830 = vadd.f32 0.0, %v5829
    %5831 = vdwg.mxu0
    %v5832 = vadd.f32 %v5776, %v5821
    %v5833 = vadd.f32 %v5779, %v5824
    %v5834 = vadd.f32 %v5782, %v5827
    %v5835 = vadd.f32 %v5785, %v5830
    %v5836 = vld [vmem:[%s5202 + $0x3] sm:$0xff]
    %v5837 = vld [vmem:[%s5202 + $0xb] sm:$0xff]
    %v5838 = vld [vmem:[%s5202 + $0x13] sm:$0xff]
    %v5839 = vld [vmem:[%s5202 + $0x1b] sm:$0x7f]
    %v5841 = vsel %vm158, %v5836, 0
    %v5844 = vsel %vm158, %v5837, 0
    %v5847 = vsel %vm158, %v5838, 0
    %v5850 = vsel %vm158, %v5839, 0
    %5852 = vmatpush.msra.mxu0 0.0
    %5853 = vmatpush.msra.mxu0 0.0
    %5854 = vmatpush.msra.mxu0 0.0
    %5855 = vmatpush.msra.mxu0 0.0
    %5856 = vmatpush.msra.mxu0 %v5424
    %5857 = vmatpush.msra.mxu0 %v5409
    %5858 = vmatpush.msra.mxu0 %v5408
    %5859 = vmatpush.msra.mxu0 %v5407
    %5860 = vmatpush.msra.mxu0 %v5406
    %5861 = vmatpush.msra.mxu0 %v5405
    %5862 = vmatpush.msra.mxu0 %v5404
    %5863 = vmatpush.msra.mxu0 %v5403
    %5864 = vmatpush.msra.mxu0 %v5402
    %5865 = vmatpush.msra.mxu0 %v5401
    %5866 = vmatpush.msra.mxu0 %v5400
    %5867 = vmatpush.msra.mxu0 %v5399
    %5868 = vmatmul.f32.gmra.mxu0 %v5841
    %v5869 = vpop.f32.mrf.mxu0
    %v5870 = vadd.f32 0.0, %v5869
    %5871 = vmatmul.f32.gmra.mxu0 %v5844
    %v5872 = vpop.f32.mrf.mxu0
    %v5873 = vadd.f32 0.0, %v5872
    %5874 = vmatmul.f32.gmra.mxu0 %v5847
    %v5875 = vpop.f32.mrf.mxu0
    %v5876 = vadd.f32 0.0, %v5875
    %5877 = vmatmul.f32.gmra.mxu0 %v5850
    %v5878 = vpop.f32.mrf.mxu0
    %v5879 = vadd.f32 0.0, %v5878
    %5880 = vdwg.mxu0
    %v5881 = vadd.f32 %v5832, %v5870
    %v5882 = vadd.f32 %v5833, %v5873
    %v5883 = vadd.f32 %v5834, %v5876
    %v5884 = vadd.f32 %v5835, %v5879
    %v5885 = vld [vmem:[%s5202 + $0x4] sm:$0xff]
    %v5886 = vld [vmem:[%s5202 + $0xc] sm:$0xff]
    %v5887 = vld [vmem:[%s5202 + $0x14] sm:$0xff]
    %v5888 = vld [vmem:[%s5202 + $0x1c] sm:$0x7f]
    %v5890 = vsel %vm158, %v5885, 0
    %v5893 = vsel %vm158, %v5886, 0
    %v5896 = vsel %vm158, %v5887, 0
    %v5899 = vsel %vm158, %v5888, 0
    %5901 = vmatpush.msra.mxu0 0.0
    %5902 = vmatpush.msra.mxu0 0.0
    %5903 = vmatpush.msra.mxu0 0.0
    %5904 = vmatpush.msra.mxu0 0.0
    %5905 = vmatpush.msra.mxu0 %v5489
    %5906 = vmatpush.msra.mxu0 %v5474
    %5907 = vmatpush.msra.mxu0 %v5473
    %5908 = vmatpush.msra.mxu0 %v5472
    %5909 = vmatpush.msra.mxu0 %v5471
    %5910 = vmatpush.msra.mxu0 %v5470
    %5911 = vmatpush.msra.mxu0 %v5469
    %5912 = vmatpush.msra.mxu0 %v5468
    %5913 = vmatpush.msra.mxu0 %v5467
    %5914 = vmatpush.msra.mxu0 %v5466
    %5915 = vmatpush.msra.mxu0 %v5465
    %5916 = vmatpush.msra.mxu0 %v5464
    %5917 = vmatmul.f32.gmra.mxu0 %v5890
    %v5918 = vpop.f32.mrf.mxu0
    %v5919 = vadd.f32 0.0, %v5918
    %5920 = vmatmul.f32.gmra.mxu0 %v5893
    %v5921 = vpop.f32.mrf.mxu0
    %v5922 = vadd.f32 0.0, %v5921
    %5923 = vmatmul.f32.gmra.mxu0 %v5896
    %v5924 = vpop.f32.mrf.mxu0
    %v5925 = vadd.f32 0.0, %v5924
    %5926 = vmatmul.f32.gmra.mxu0 %v5899
    %v5927 = vpop.f32.mrf.mxu0
    %v5928 = vadd.f32 0.0, %v5927
    %5929 = vdwg.mxu0
    %v5930 = vadd.f32 %v5881, %v5919
    %v5931 = vadd.f32 %v5882, %v5922
    %v5932 = vadd.f32 %v5883, %v5925
    %v5933 = vadd.f32 %v5884, %v5928
    %v5934 = vld [vmem:[%s5202 + $0x5] sm:$0xff]
    %v5935 = vld [vmem:[%s5202 + $0xd] sm:$0xff]
    %v5936 = vld [vmem:[%s5202 + $0x15] sm:$0xff]
    %v5937 = vld [vmem:[%s5202 + $0x1d] sm:$0x7f]
    %v5939 = vsel %vm158, %v5934, 0
    %v5942 = vsel %vm158, %v5935, 0
    %v5945 = vsel %vm158, %v5936, 0
    %v5948 = vsel %vm158, %v5937, 0
    %5950 = vmatpush.msra.mxu0 0.0
    %5951 = vmatpush.msra.mxu0 0.0
    %5952 = vmatpush.msra.mxu0 0.0
    %5953 = vmatpush.msra.mxu0 0.0
    %5954 = vmatpush.msra.mxu0 %v5554
    %5955 = vmatpush.msra.mxu0 %v5539
    %5956 = vmatpush.msra.mxu0 %v5538
    %5957 = vmatpush.msra.mxu0 %v5537
    %5958 = vmatpush.msra.mxu0 %v5536
    %5959 = vmatpush.msra.mxu0 %v5535
    %5960 = vmatpush.msra.mxu0 %v5534
    %5961 = vmatpush.msra.mxu0 %v5533
    %5962 = vmatpush.msra.mxu0 %v5532
    %5963 = vmatpush.msra.mxu0 %v5531
    %5964 = vmatpush.msra.mxu0 %v5530
    %5965 = vmatpush.msra.mxu0 %v5529
    %5966 = vmatmul.f32.gmra.mxu0 %v5939
    %v5967 = vpop.f32.mrf.mxu0
    %v5968 = vadd.f32 0.0, %v5967
    %5969 = vmatmul.f32.gmra.mxu0 %v5942
    %v5970 = vpop.f32.mrf.mxu0
    %v5971 = vadd.f32 0.0, %v5970
    %5972 = vmatmul.f32.gmra.mxu0 %v5945
    %v5973 = vpop.f32.mrf.mxu0
    %v5974 = vadd.f32 0.0, %v5973
    %5975 = vmatmul.f32.gmra.mxu0 %v5948
    %v5976 = vpop.f32.mrf.mxu0
    %v5977 = vadd.f32 0.0, %v5976
    %5978 = vdwg.mxu0
    %v5979 = vadd.f32 %v5930, %v5968
    %v5980 = vadd.f32 %v5931, %v5971
    %v5981 = vadd.f32 %v5932, %v5974
    %v5982 = vadd.f32 %v5933, %v5977
    %v5983 = vld [vmem:[%s5202 + $0x6] sm:$0xff]
    %v5984 = vld [vmem:[%s5202 + $0xe] sm:$0xff]
    %v5985 = vld [vmem:[%s5202 + $0x16] sm:$0xff]
    %v5986 = vld [vmem:[%s5202 + $0x1e] sm:$0x7f]
    %v5988 = vsel %vm158, %v5983, 0
    %v5991 = vsel %vm158, %v5984, 0
    %v5994 = vsel %vm158, %v5985, 0
    %v5997 = vsel %vm158, %v5986, 0
    %5999 = vmatpush.msra.mxu0 0.0
    %6000 = vmatpush.msra.mxu0 0.0
    %6001 = vmatpush.msra.mxu0 0.0
    %6002 = vmatpush.msra.mxu0 0.0
    %6003 = vmatpush.msra.mxu0 %v5619
    %6004 = vmatpush.msra.mxu0 %v5604
    %6005 = vmatpush.msra.mxu0 %v5603
    %6006 = vmatpush.msra.mxu0 %v5602
    %6007 = vmatpush.msra.mxu0 %v5601
    %6008 = vmatpush.msra.mxu0 %v5600
    %6009 = vmatpush.msra.mxu0 %v5599
    %6010 = vmatpush.msra.mxu0 %v5598
    %6011 = vmatpush.msra.mxu0 %v5597
    %6012 = vmatpush.msra.mxu0 %v5596
    %6013 = vmatpush.msra.mxu0 %v5595
    %6014 = vmatpush.msra.mxu0 %v5594
    %6015 = vmatmul.f32.gmra.mxu0 %v5988
    %v6016 = vpop.f32.mrf.mxu0
    %v6017 = vadd.f32 0.0, %v6016
    %6018 = vmatmul.f32.gmra.mxu0 %v5991
    %v6019 = vpop.f32.mrf.mxu0
    %v6020 = vadd.f32 0.0, %v6019
    %6021 = vmatmul.f32.gmra.mxu0 %v5994
    %v6022 = vpop.f32.mrf.mxu0
    %v6023 = vadd.f32 0.0, %v6022
    %6024 = vmatmul.f32.gmra.mxu0 %v5997
    %v6025 = vpop.f32.mrf.mxu0
    %v6026 = vadd.f32 0.0, %v6025
    %6027 = vdwg.mxu0
    %v6028 = vadd.f32 %v5979, %v6017
    %v6029 = vadd.f32 %v5980, %v6020
    %v6030 = vadd.f32 %v5981, %v6023
    %v6031 = vadd.f32 %v5982, %v6026
    %v6033 = vsel %vm3465, %v6031, 0
    %6035 = vmatpush.msra.mxu0 0.0
    %6036 = vmatpush.msra.mxu0 0.0
    %6037 = vmatpush.msra.mxu0 0.0
    %6038 = vmatpush.msra.mxu0 0.0
    %6039 = vmatpush.msra.mxu0 0.0
    %6040 = vmatpush.msra.mxu0 0.0
    %6041 = vmatpush.msra.mxu0 0.0
    %6042 = vmatpush.msra.mxu0 0.0
    %6043 = vmatpush.msra.mxu0 0.0
    %6044 = vmatpush.msra.mxu0 0.0
    %6045 = vmatpush.msra.mxu0 0.0
    %6046 = vmatpush.msra.mxu0 0.0
    %6047 = vmatpush.msra.mxu0 %v6033
    %6048 = vmatpush.msra.mxu0 %v6030
    %6049 = vmatpush.msra.mxu0 %v6029
    %6050 = vmatpush.msra.mxu0 %v6028
    %6051 = vmatmul.f32.gmra.mxu0 %v5659
    %v6052 = vpop.f32.mrf.mxu0
    %v6053 = vadd.f32 %v5656, %v6052
    %6054 = vmatmul.f32.gmra.mxu0 %v5661
    %v6055 = vpop.f32.mrf.mxu0
    %v6056 = vadd.f32 %v5656, %v6055
    %6057 = vdwg.mxu0
    %v6058 = vmax.f32 %v6053, 0.0
    %v6059 = vmax.f32 %v6056, 0.0
    %v6060 = vadd.f32 %v6058, %v5693
    %v6061 = vadd.f32 %v6059, %v5693
    %6062 = vst.msk [vmem:[#allocation5 + $0x2] sm:$0xff] %vm170, %v5695
    %6063 = vst.msk [vmem:[#allocation5 + $0xa] sm:$0xff] %vm170, %v5696
    %s6064 = scalar_lea.vmem [#allocation5], 24
    %6065 = vst.msk [vmem:[%s6064 + $0x2] sm:$0xff] %vm170, %v6060
    %6066 = vst.msk [vmem:[%s6064 + $0xa] sm:$0xff] %vm170, %v6061
    %v6067 = vld [vmem:[#allocation5] sm:$0xff]
    %v6068 = vld [vmem:[#allocation5 + $0x8] sm:$0x3f]
    %v6069 = vld [vmem:[%s10] sm:$0xff]
    %v6070 = vld [vmem:[%s10 + $0x8] sm:$0xff]
    %v6071 = vld [vmem:[%s10 + $0x10] sm:$0xff]
    %v6072 = vld [vmem:[%s10 + $0x18] sm:$0xff]
    %v6073 = vld [vmem:[%s10 + $0x20] sm:$0xff]
    %v6074 = vld [vmem:[%s10 + $0x28] sm:$0xff]
    %v6075 = vld [vmem:[%s10 + $0x30] sm:$0xff]
    %v6076 = vld [vmem:[%s10 + $0x38] sm:$0xff]
    %v6077 = vld [vmem:[%s10 + $0x40] sm:$0xff]
    %v6078 = vld [vmem:[%s10 + $0x48] sm:$0xff]
    %v6079 = vld [vmem:[%s10 + $0x50] sm:$0xff]
    %v6080 = vld [vmem:[%s10 + $0x58] sm:$0xff]
    %v6081 = vld [vmem:[%s10 + $0x60] sm:$0x1]
    %v6082 = vld [vmem:[#allocation5 + $0x1] sm:$0xff]
    %v6083 = vld [vmem:[#allocation5 + $0x9] sm:$0x3f]
    %s6084 = scalar_lea.vmem %s10, 104
    %v6085 = vld [vmem:[%s6084] sm:$0xff]
    %v6086 = vld [vmem:[%s6084 + $0x8] sm:$0xff]
    %v6087 = vld [vmem:[%s6084 + $0x10] sm:$0xff]
    %v6088 = vld [vmem:[%s6084 + $0x18] sm:$0xff]
    %v6089 = vld [vmem:[%s6084 + $0x20] sm:$0xff]
    %v6090 = vld [vmem:[%s6084 + $0x28] sm:$0xff]
    %v6091 = vld [vmem:[%s6084 + $0x30] sm:$0xff]
    %v6092 = vld [vmem:[%s6084 + $0x38] sm:$0xff]
    %v6093 = vld [vmem:[%s6084 + $0x40] sm:$0xff]
    %v6094 = vld [vmem:[%s6084 + $0x48] sm:$0xff]
    %v6095 = vld [vmem:[%s6084 + $0x50] sm:$0xff]
    %v6096 = vld [vmem:[%s6084 + $0x58] sm:$0xff]
    %v6097 = vld [vmem:[%s6084 + $0x60] sm:$0x1]
    %v6099 = vsel %vm170, %v6082, 0
    %v6102 = vsel %vm170, %v6083, 0
    %v6105 = vsel %vm382, %v6097, 0
    %6107 = vmatpush.msra.mxu0 0.0
    %6108 = vmatpush.msra.mxu0 0.0
    %6109 = vmatpush.msra.mxu0 0.0
    %6110 = vmatpush.msra.mxu0 %v6105
    %6111 = vmatpush.msra.mxu0 %v6096
    %6112 = vmatpush.msra.mxu0 %v6095
    %6113 = vmatpush.msra.mxu0 %v6094
    %6114 = vmatpush.msra.mxu0 %v6093
    %6115 = vmatpush.msra.mxu0 %v6092
    %6116 = vmatpush.msra.mxu0 %v6091
    %6117 = vmatpush.msra.mxu0 %v6090
    %6118 = vmatpush.msra.mxu0 %v6089
    %6119 = vmatpush.msra.mxu0 %v6088
    %6120 = vmatpush.msra.mxu0 %v6087
    %6121 = vmatpush.msra.mxu0 %v6086
    %6122 = vmatpush.msra.mxu0 %v6085
    %6123 = vmatmul.f32.gmra.mxu0 %v6099
    %v6124 = vpop.f32.mrf.mxu0
    %v6125 = vadd.f32 0.0, %v6124
    %6126 = vmatmul.f32.gmra.mxu0 %v6102
    %v6127 = vpop.f32.mrf.mxu0
    %v6128 = vadd.f32 0.0, %v6127
    %6129 = vdwg.mxu0
    %v6131 = vsel %vm170, %v6067, 0
    %v6134 = vsel %vm170, %v6068, 0
    %v6137 = vsel %vm382, %v6081, 0
    %6139 = vmatpush.msra.mxu0 0.0
    %6140 = vmatpush.msra.mxu0 0.0
    %6141 = vmatpush.msra.mxu0 0.0
    %6142 = vmatpush.msra.mxu0 %v6137
    %6143 = vmatpush.msra.mxu0 %v6080
    %6144 = vmatpush.msra.mxu0 %v6079
    %6145 = vmatpush.msra.mxu0 %v6078
    %6146 = vmatpush.msra.mxu0 %v6077
    %6147 = vmatpush.msra.mxu0 %v6076
    %6148 = vmatpush.msra.mxu0 %v6075
    %6149 = vmatpush.msra.mxu0 %v6074
    %6150 = vmatpush.msra.mxu0 %v6073
    %6151 = vmatpush.msra.mxu0 %v6072
    %6152 = vmatpush.msra.mxu0 %v6071
    %6153 = vmatpush.msra.mxu0 %v6070
    %6154 = vmatpush.msra.mxu0 %v6069
    %6155 = vmatmul.f32.gmra.mxu0 %v6131
    %v6156 = vpop.f32.mrf.mxu0
    %v6157 = vadd.f32 %v6125, %v6156
    %6158 = vmatmul.f32.gmra.mxu0 %v6134
    %v6159 = vpop.f32.mrf.mxu0
    %v6160 = vadd.f32 %v6128, %v6159
    %6161 = vdwg.mxu0
    %v6162 = vld [vmem:[#allocation5 + $0x2] sm:$0xff]
    %v6163 = vld [vmem:[#allocation5 + $0xa] sm:$0x3f]
    %s6164 = scalar_lea.vmem %s10, 208
    %v6165 = vld [vmem:[%s6164] sm:$0xff]
    %v6166 = vld [vmem:[%s6164 + $0x8] sm:$0xff]
    %v6167 = vld [vmem:[%s6164 + $0x10] sm:$0xff]
    %v6168 = vld [vmem:[%s6164 + $0x18] sm:$0xff]
    %v6169 = vld [vmem:[%s6164 + $0x20] sm:$0xff]
    %v6170 = vld [vmem:[%s6164 + $0x28] sm:$0xff]
    %v6171 = vld [vmem:[%s6164 + $0x30] sm:$0xff]
    %v6172 = vld [vmem:[%s6164 + $0x38] sm:$0xff]
    %v6173 = vld [vmem:[%s6164 + $0x40] sm:$0xff]
    %v6174 = vld [vmem:[%s6164 + $0x48] sm:$0xff]
    %v6175 = vld [vmem:[%s6164 + $0x50] sm:$0xff]
    %v6176 = vld [vmem:[%s6164 + $0x58] sm:$0xff]
    %v6177 = vld [vmem:[%s6164 + $0x60] sm:$0x1]
    %v6179 = vsel %vm170, %v6162, 0
    %v6182 = vsel %vm170, %v6163, 0
    %v6185 = vsel %vm382, %v6177, 0
    %6187 = vmatpush.msra.mxu0 0.0
    %6188 = vmatpush.msra.mxu0 0.0
    %6189 = vmatpush.msra.mxu0 0.0
    %6190 = vmatpush.msra.mxu0 %v6185
    %6191 = vmatpush.msra.mxu0 %v6176
    %6192 = vmatpush.msra.mxu0 %v6175
    %6193 = vmatpush.msra.mxu0 %v6174
    %6194 = vmatpush.msra.mxu0 %v6173
    %6195 = vmatpush.msra.mxu0 %v6172
    %6196 = vmatpush.msra.mxu0 %v6171
    %6197 = vmatpush.msra.mxu0 %v6170
    %6198 = vmatpush.msra.mxu0 %v6169
    %6199 = vmatpush.msra.mxu0 %v6168
    %6200 = vmatpush.msra.mxu0 %v6167
    %6201 = vmatpush.msra.mxu0 %v6166
    %6202 = vmatpush.msra.mxu0 %v6165
    %6203 = vmatmul.f32.gmra.mxu0 %v6179
    %v6204 = vpop.f32.mrf.mxu0
    %v6205 = vadd.f32 0.0, %v6204
    %6206 = vmatmul.f32.gmra.mxu0 %v6182
    %v6207 = vpop.f32.mrf.mxu0
    %v6208 = vadd.f32 0.0, %v6207
    %6209 = vdwg.mxu0
    %v6210 = vadd.f32 %v6157, %v6205
    %v6211 = vadd.f32 %v6160, %v6208
    %v6212 = vld [vmem:[#allocation5 + $0x3] sm:$0xff]
    %v6213 = vld [vmem:[#allocation5 + $0xb] sm:$0x3f]
    %s6214 = scalar_lea.vmem %s10, 312
    %v6215 = vld [vmem:[%s6214] sm:$0xff]
    %v6216 = vld [vmem:[%s6214 + $0x8] sm:$0xff]
    %v6217 = vld [vmem:[%s6214 + $0x10] sm:$0xff]
    %v6218 = vld [vmem:[%s6214 + $0x18] sm:$0xff]
    %v6219 = vld [vmem:[%s6214 + $0x20] sm:$0xff]
    %v6220 = vld [vmem:[%s6214 + $0x28] sm:$0xff]
    %v6221 = vld [vmem:[%s6214 + $0x30] sm:$0xff]
    %v6222 = vld [vmem:[%s6214 + $0x38] sm:$0xff]
    %v6223 = vld [vmem:[%s6214 + $0x40] sm:$0xff]
    %v6224 = vld [vmem:[%s6214 + $0x48] sm:$0xff]
    %v6225 = vld [vmem:[%s6214 + $0x50] sm:$0xff]
    %v6226 = vld [vmem:[%s6214 + $0x58] sm:$0xff]
    %v6227 = vld [vmem:[%s6214 + $0x60] sm:$0x1]
    %v6229 = vsel %vm170, %v6212, 0
    %v6232 = vsel %vm170, %v6213, 0
    %v6235 = vsel %vm382, %v6227, 0
    %6237 = vmatpush.msra.mxu0 0.0
    %6238 = vmatpush.msra.mxu0 0.0
    %6239 = vmatpush.msra.mxu0 0.0
    %6240 = vmatpush.msra.mxu0 %v6235
    %6241 = vmatpush.msra.mxu0 %v6226
    %6242 = vmatpush.msra.mxu0 %v6225
    %6243 = vmatpush.msra.mxu0 %v6224
    %6244 = vmatpush.msra.mxu0 %v6223
    %6245 = vmatpush.msra.mxu0 %v6222
    %6246 = vmatpush.msra.mxu0 %v6221
    %6247 = vmatpush.msra.mxu0 %v6220
    %6248 = vmatpush.msra.mxu0 %v6219
    %6249 = vmatpush.msra.mxu0 %v6218
    %6250 = vmatpush.msra.mxu0 %v6217
    %6251 = vmatpush.msra.mxu0 %v6216
    %6252 = vmatpush.msra.mxu0 %v6215
    %6253 = vmatmul.f32.gmra.mxu0 %v6229
    %v6254 = vpop.f32.mrf.mxu0
    %v6255 = vadd.f32 0.0, %v6254
    %6256 = vmatmul.f32.gmra.mxu0 %v6232
    %v6257 = vpop.f32.mrf.mxu0
    %v6258 = vadd.f32 0.0, %v6257
    %6259 = vdwg.mxu0
    %v6260 = vadd.f32 %v6210, %v6255
    %v6261 = vadd.f32 %v6211, %v6258
    %v6262 = vld [vmem:[#allocation5 + $0x4] sm:$0xff]
    %v6263 = vld [vmem:[#allocation5 + $0xc] sm:$0x3f]
    %s6264 = scalar_lea.vmem %s10, 416
    %v6265 = vld [vmem:[%s6264] sm:$0xff]
    %v6266 = vld [vmem:[%s6264 + $0x8] sm:$0xff]
    %v6267 = vld [vmem:[%s6264 + $0x10] sm:$0xff]
    %v6268 = vld [vmem:[%s6264 + $0x18] sm:$0xff]
    %v6269 = vld [vmem:[%s6264 + $0x20] sm:$0xff]
    %v6270 = vld [vmem:[%s6264 + $0x28] sm:$0xff]
    %v6271 = vld [vmem:[%s6264 + $0x30] sm:$0xff]
    %v6272 = vld [vmem:[%s6264 + $0x38] sm:$0xff]
    %v6273 = vld [vmem:[%s6264 + $0x40] sm:$0xff]
    %v6274 = vld [vmem:[%s6264 + $0x48] sm:$0xff]
    %v6275 = vld [vmem:[%s6264 + $0x50] sm:$0xff]
    %v6276 = vld [vmem:[%s6264 + $0x58] sm:$0xff]
    %v6277 = vld [vmem:[%s6264 + $0x60] sm:$0x1]
    %v6279 = vsel %vm170, %v6262, 0
    %v6282 = vsel %vm170, %v6263, 0
    %v6285 = vsel %vm382, %v6277, 0
    %6287 = vmatpush.msra.mxu0 0.0
    %6288 = vmatpush.msra.mxu0 0.0
    %6289 = vmatpush.msra.mxu0 0.0
    %6290 = vmatpush.msra.mxu0 %v6285
    %6291 = vmatpush.msra.mxu0 %v6276
    %6292 = vmatpush.msra.mxu0 %v6275
    %6293 = vmatpush.msra.mxu0 %v6274
    %6294 = vmatpush.msra.mxu0 %v6273
    %6295 = vmatpush.msra.mxu0 %v6272
    %6296 = vmatpush.msra.mxu0 %v6271
    %6297 = vmatpush.msra.mxu0 %v6270
    %6298 = vmatpush.msra.mxu0 %v6269
    %6299 = vmatpush.msra.mxu0 %v6268
    %6300 = vmatpush.msra.mxu0 %v6267
    %6301 = vmatpush.msra.mxu0 %v6266
    %6302 = vmatpush.msra.mxu0 %v6265
    %6303 = vmatmul.f32.gmra.mxu0 %v6279
    %v6304 = vpop.f32.mrf.mxu0
    %v6305 = vadd.f32 0.0, %v6304
    %6306 = vmatmul.f32.gmra.mxu0 %v6282
    %v6307 = vpop.f32.mrf.mxu0
    %v6308 = vadd.f32 0.0, %v6307
    %6309 = vdwg.mxu0
    %v6310 = vadd.f32 %v6260, %v6305
    %v6311 = vadd.f32 %v6261, %v6308
    %v6312 = vld [vmem:[#allocation5 + $0x5] sm:$0xff]
    %v6313 = vld [vmem:[#allocation5 + $0xd] sm:$0x3f]
    %s6314 = scalar_lea.vmem %s10, 520
    %v6315 = vld [vmem:[%s6314] sm:$0xff]
    %v6316 = vld [vmem:[%s6314 + $0x8] sm:$0xff]
    %v6317 = vld [vmem:[%s6314 + $0x10] sm:$0xff]
    %v6318 = vld [vmem:[%s6314 + $0x18] sm:$0xff]
    %v6319 = vld [vmem:[%s6314 + $0x20] sm:$0xff]
    %v6320 = vld [vmem:[%s6314 + $0x28] sm:$0xff]
    %v6321 = vld [vmem:[%s6314 + $0x30] sm:$0xff]
    %v6322 = vld [vmem:[%s6314 + $0x38] sm:$0xff]
    %v6323 = vld [vmem:[%s6314 + $0x40] sm:$0xff]
    %v6324 = vld [vmem:[%s6314 + $0x48] sm:$0xff]
    %v6325 = vld [vmem:[%s6314 + $0x50] sm:$0xff]
    %v6326 = vld [vmem:[%s6314 + $0x58] sm:$0xff]
    %v6327 = vld [vmem:[%s6314 + $0x60] sm:$0x1]
    %v6329 = vsel %vm170, %v6312, 0
    %v6332 = vsel %vm170, %v6313, 0
    %v6335 = vsel %vm382, %v6327, 0
    %6337 = vmatpush.msra.mxu0 0.0
    %6338 = vmatpush.msra.mxu0 0.0
    %6339 = vmatpush.msra.mxu0 0.0
    %6340 = vmatpush.msra.mxu0 %v6335
    %6341 = vmatpush.msra.mxu0 %v6326
    %6342 = vmatpush.msra.mxu0 %v6325
    %6343 = vmatpush.msra.mxu0 %v6324
    %6344 = vmatpush.msra.mxu0 %v6323
    %6345 = vmatpush.msra.mxu0 %v6322
    %6346 = vmatpush.msra.mxu0 %v6321
    %6347 = vmatpush.msra.mxu0 %v6320
    %6348 = vmatpush.msra.mxu0 %v6319
    %6349 = vmatpush.msra.mxu0 %v6318
    %6350 = vmatpush.msra.mxu0 %v6317
    %6351 = vmatpush.msra.mxu0 %v6316
    %6352 = vmatpush.msra.mxu0 %v6315
    %6353 = vmatmul.f32.gmra.mxu0 %v6329
    %v6354 = vpop.f32.mrf.mxu0
    %v6355 = vadd.f32 0.0, %v6354
    %6356 = vmatmul.f32.gmra.mxu0 %v6332
    %v6357 = vpop.f32.mrf.mxu0
    %v6358 = vadd.f32 0.0, %v6357
    %6359 = vdwg.mxu0
    %v6360 = vadd.f32 %v6310, %v6355
    %v6361 = vadd.f32 %v6311, %v6358
    %v6362 = vld [vmem:[#allocation5 + $0x6] sm:$0xff]
    %v6363 = vld [vmem:[#allocation5 + $0xe] sm:$0x3f]
    %s6364 = scalar_lea.vmem %s10, 624
    %v6365 = vld [vmem:[%s6364] sm:$0xff]
    %v6366 = vld [vmem:[%s6364 + $0x8] sm:$0xff]
    %v6367 = vld [vmem:[%s6364 + $0x10] sm:$0xff]
    %v6368 = vld [vmem:[%s6364 + $0x18] sm:$0xff]
    %v6369 = vld [vmem:[%s6364 + $0x20] sm:$0xff]
    %v6370 = vld [vmem:[%s6364 + $0x28] sm:$0xff]
    %v6371 = vld [vmem:[%s6364 + $0x30] sm:$0xff]
    %v6372 = vld [vmem:[%s6364 + $0x38] sm:$0xff]
    %v6373 = vld [vmem:[%s6364 + $0x40] sm:$0xff]
    %v6374 = vld [vmem:[%s6364 + $0x48] sm:$0xff]
    %v6375 = vld [vmem:[%s6364 + $0x50] sm:$0xff]
    %v6376 = vld [vmem:[%s6364 + $0x58] sm:$0xff]
    %v6377 = vld [vmem:[%s6364 + $0x60] sm:$0x1]
    %v6379 = vsel %vm170, %v6362, 0
    %v6382 = vsel %vm170, %v6363, 0
    %v6385 = vsel %vm382, %v6377, 0
    %6387 = vmatpush.msra.mxu0 0.0
    %6388 = vmatpush.msra.mxu0 0.0
    %6389 = vmatpush.msra.mxu0 0.0
    %6390 = vmatpush.msra.mxu0 %v6385
    %6391 = vmatpush.msra.mxu0 %v6376
    %6392 = vmatpush.msra.mxu0 %v6375
    %6393 = vmatpush.msra.mxu0 %v6374
    %6394 = vmatpush.msra.mxu0 %v6373
    %6395 = vmatpush.msra.mxu0 %v6372
    %6396 = vmatpush.msra.mxu0 %v6371
    %6397 = vmatpush.msra.mxu0 %v6370
    %6398 = vmatpush.msra.mxu0 %v6369
    %6399 = vmatpush.msra.mxu0 %v6368
    %6400 = vmatpush.msra.mxu0 %v6367
    %6401 = vmatpush.msra.mxu0 %v6366
    %6402 = vmatpush.msra.mxu0 %v6365
    %6403 = vmatmul.f32.gmra.mxu0 %v6379
    %v6404 = vpop.f32.mrf.mxu0
    %v6405 = vadd.f32 0.0, %v6404
    %6406 = vmatmul.f32.gmra.mxu0 %v6382
    %v6407 = vpop.f32.mrf.mxu0
    %v6408 = vadd.f32 0.0, %v6407
    %6409 = vdwg.mxu0
    %v6410 = vadd.f32 %v6360, %v6405
    %v6411 = vadd.f32 %v6361, %v6408
    %v6412 = vld [vmem:[%s11] sm:$0x1]
    %v6414 = vperm.slane %v6412, 0
    %v6416 = vadd.f32 %v6410, %v6414
    %v6417 = vadd.f32 %v6411, %v6414
    %v6418 = vmax.f32 %v6416, 0.0
    %v6419 = vmax.f32 %v6417, 0.0
    %v6420 = vld [vmem:[%s12] sm:$0x1]
    %v6422 = vperm.slane %v6420, 0
    %v6424 = vadd.f32 %v6418, %v6422
    %v6425 = vadd.f32 %v6419, %v6422
    %v6426 = vld [vmem:[%s6064] sm:$0xff]
    %v6427 = vld [vmem:[%s6064 + $0x8] sm:$0x3f]
    %v6428 = vld [vmem:[%s6064 + $0x1] sm:$0xff]
    %v6429 = vld [vmem:[%s6064 + $0x9] sm:$0x3f]
    %v6431 = vsel %vm170, %v6428, 0
    %v6434 = vsel %vm170, %v6429, 0
    %6436 = vmatpush.msra.mxu0 0.0
    %6437 = vmatpush.msra.mxu0 0.0
    %6438 = vmatpush.msra.mxu0 0.0
    %6439 = vmatpush.msra.mxu0 %v6105
    %6440 = vmatpush.msra.mxu0 %v6096
    %6441 = vmatpush.msra.mxu0 %v6095
    %6442 = vmatpush.msra.mxu0 %v6094
    %6443 = vmatpush.msra.mxu0 %v6093
    %6444 = vmatpush.msra.mxu0 %v6092
    %6445 = vmatpush.msra.mxu0 %v6091
    %6446 = vmatpush.msra.mxu0 %v6090
    %6447 = vmatpush.msra.mxu0 %v6089
    %6448 = vmatpush.msra.mxu0 %v6088
    %6449 = vmatpush.msra.mxu0 %v6087
    %6450 = vmatpush.msra.mxu0 %v6086
    %6451 = vmatpush.msra.mxu0 %v6085
    %6452 = vmatmul.f32.gmra.mxu0 %v6431
    %v6453 = vpop.f32.mrf.mxu0
    %v6454 = vadd.f32 0.0, %v6453
    %6455 = vmatmul.f32.gmra.mxu0 %v6434
    %v6456 = vpop.f32.mrf.mxu0
    %v6457 = vadd.f32 0.0, %v6456
    %6458 = vdwg.mxu0
    %v6460 = vsel %vm170, %v6426, 0
    %v6463 = vsel %vm170, %v6427, 0
    %6465 = vmatpush.msra.mxu0 0.0
    %6466 = vmatpush.msra.mxu0 0.0
    %6467 = vmatpush.msra.mxu0 0.0
    %6468 = vmatpush.msra.mxu0 %v6137
    %6469 = vmatpush.msra.mxu0 %v6080
    %6470 = vmatpush.msra.mxu0 %v6079
    %6471 = vmatpush.msra.mxu0 %v6078
    %6472 = vmatpush.msra.mxu0 %v6077
    %6473 = vmatpush.msra.mxu0 %v6076
    %6474 = vmatpush.msra.mxu0 %v6075
    %6475 = vmatpush.msra.mxu0 %v6074
    %6476 = vmatpush.msra.mxu0 %v6073
    %6477 = vmatpush.msra.mxu0 %v6072
    %6478 = vmatpush.msra.mxu0 %v6071
    %6479 = vmatpush.msra.mxu0 %v6070
    %6480 = vmatpush.msra.mxu0 %v6069
    %6481 = vmatmul.f32.gmra.mxu0 %v6460
    %v6482 = vpop.f32.mrf.mxu0
    %v6483 = vadd.f32 %v6454, %v6482
    %6484 = vmatmul.f32.gmra.mxu0 %v6463
    %v6485 = vpop.f32.mrf.mxu0
    %v6486 = vadd.f32 %v6457, %v6485
    %6487 = vdwg.mxu0
    %v6488 = vld [vmem:[%s6064 + $0x2] sm:$0xff]
    %v6489 = vld [vmem:[%s6064 + $0xa] sm:$0x3f]
    %v6491 = vsel %vm170, %v6488, 0
    %v6494 = vsel %vm170, %v6489, 0
    %6496 = vmatpush.msra.mxu0 0.0
    %6497 = vmatpush.msra.mxu0 0.0
    %6498 = vmatpush.msra.mxu0 0.0
    %6499 = vmatpush.msra.mxu0 %v6185
    %6500 = vmatpush.msra.mxu0 %v6176
    %6501 = vmatpush.msra.mxu0 %v6175
    %6502 = vmatpush.msra.mxu0 %v6174
    %6503 = vmatpush.msra.mxu0 %v6173
    %6504 = vmatpush.msra.mxu0 %v6172
    %6505 = vmatpush.msra.mxu0 %v6171
    %6506 = vmatpush.msra.mxu0 %v6170
    %6507 = vmatpush.msra.mxu0 %v6169
    %6508 = vmatpush.msra.mxu0 %v6168
    %6509 = vmatpush.msra.mxu0 %v6167
    %6510 = vmatpush.msra.mxu0 %v6166
    %6511 = vmatpush.msra.mxu0 %v6165
    %6512 = vmatmul.f32.gmra.mxu0 %v6491
    %v6513 = vpop.f32.mrf.mxu0
    %v6514 = vadd.f32 0.0, %v6513
    %6515 = vmatmul.f32.gmra.mxu0 %v6494
    %v6516 = vpop.f32.mrf.mxu0
    %v6517 = vadd.f32 0.0, %v6516
    %6518 = vdwg.mxu0
    %v6519 = vadd.f32 %v6483, %v6514
    %v6520 = vadd.f32 %v6486, %v6517
    %v6521 = vld [vmem:[%s6064 + $0x3] sm:$0xff]
    %v6522 = vld [vmem:[%s6064 + $0xb] sm:$0x3f]
    %v6524 = vsel %vm170, %v6521, 0
    %v6527 = vsel %vm170, %v6522, 0
    %6529 = vmatpush.msra.mxu0 0.0
    %6530 = vmatpush.msra.mxu0 0.0
    %6531 = vmatpush.msra.mxu0 0.0
    %6532 = vmatpush.msra.mxu0 %v6235
    %6533 = vmatpush.msra.mxu0 %v6226
    %6534 = vmatpush.msra.mxu0 %v6225
    %6535 = vmatpush.msra.mxu0 %v6224
    %6536 = vmatpush.msra.mxu0 %v6223
    %6537 = vmatpush.msra.mxu0 %v6222
    %6538 = vmatpush.msra.mxu0 %v6221
    %6539 = vmatpush.msra.mxu0 %v6220
    %6540 = vmatpush.msra.mxu0 %v6219
    %6541 = vmatpush.msra.mxu0 %v6218
    %6542 = vmatpush.msra.mxu0 %v6217
    %6543 = vmatpush.msra.mxu0 %v6216
    %6544 = vmatpush.msra.mxu0 %v6215
    %6545 = vmatmul.f32.gmra.mxu0 %v6524
    %v6546 = vpop.f32.mrf.mxu0
    %v6547 = vadd.f32 0.0, %v6546
    %6548 = vmatmul.f32.gmra.mxu0 %v6527
    %v6549 = vpop.f32.mrf.mxu0
    %v6550 = vadd.f32 0.0, %v6549
    %6551 = vdwg.mxu0
    %v6552 = vadd.f32 %v6519, %v6547
    %v6553 = vadd.f32 %v6520, %v6550
    %v6554 = vld [vmem:[%s6064 + $0x4] sm:$0xff]
    %v6555 = vld [vmem:[%s6064 + $0xc] sm:$0x3f]
    %v6557 = vsel %vm170, %v6554, 0
    %v6560 = vsel %vm170, %v6555, 0
    %6562 = vmatpush.msra.mxu0 0.0
    %6563 = vmatpush.msra.mxu0 0.0
    %6564 = vmatpush.msra.mxu0 0.0
    %6565 = vmatpush.msra.mxu0 %v6285
    %6566 = vmatpush.msra.mxu0 %v6276
    %6567 = vmatpush.msra.mxu0 %v6275
    %6568 = vmatpush.msra.mxu0 %v6274
    %6569 = vmatpush.msra.mxu0 %v6273
    %6570 = vmatpush.msra.mxu0 %v6272
    %6571 = vmatpush.msra.mxu0 %v6271
    %6572 = vmatpush.msra.mxu0 %v6270
    %6573 = vmatpush.msra.mxu0 %v6269
    %6574 = vmatpush.msra.mxu0 %v6268
    %6575 = vmatpush.msra.mxu0 %v6267
    %6576 = vmatpush.msra.mxu0 %v6266
    %6577 = vmatpush.msra.mxu0 %v6265
    %6578 = vmatmul.f32.gmra.mxu0 %v6557
    %v6579 = vpop.f32.mrf.mxu0
    %v6580 = vadd.f32 0.0, %v6579
    %6581 = vmatmul.f32.gmra.mxu0 %v6560
    %v6582 = vpop.f32.mrf.mxu0
    %v6583 = vadd.f32 0.0, %v6582
    %6584 = vdwg.mxu0
    %v6585 = vadd.f32 %v6552, %v6580
    %v6586 = vadd.f32 %v6553, %v6583
    %v6587 = vld [vmem:[%s6064 + $0x5] sm:$0xff]
    %v6588 = vld [vmem:[%s6064 + $0xd] sm:$0x3f]
    %v6590 = vsel %vm170, %v6587, 0
    %v6593 = vsel %vm170, %v6588, 0
    %6595 = vmatpush.msra.mxu0 0.0
    %6596 = vmatpush.msra.mxu0 0.0
    %6597 = vmatpush.msra.mxu0 0.0
    %6598 = vmatpush.msra.mxu0 %v6335
    %6599 = vmatpush.msra.mxu0 %v6326
    %6600 = vmatpush.msra.mxu0 %v6325
    %6601 = vmatpush.msra.mxu0 %v6324
    %6602 = vmatpush.msra.mxu0 %v6323
    %6603 = vmatpush.msra.mxu0 %v6322
    %6604 = vmatpush.msra.mxu0 %v6321
    %6605 = vmatpush.msra.mxu0 %v6320
    %6606 = vmatpush.msra.mxu0 %v6319
    %6607 = vmatpush.msra.mxu0 %v6318
    %6608 = vmatpush.msra.mxu0 %v6317
    %6609 = vmatpush.msra.mxu0 %v6316
    %6610 = vmatpush.msra.mxu0 %v6315
    %6611 = vmatmul.f32.gmra.mxu0 %v6590
    %v6612 = vpop.f32.mrf.mxu0
    %v6613 = vadd.f32 0.0, %v6612
    %6614 = vmatmul.f32.gmra.mxu0 %v6593
    %v6615 = vpop.f32.mrf.mxu0
    %v6616 = vadd.f32 0.0, %v6615
    %6617 = vdwg.mxu0
    %v6618 = vadd.f32 %v6585, %v6613
    %v6619 = vadd.f32 %v6586, %v6616
    %v6620 = vld [vmem:[%s6064 + $0x6] sm:$0xff]
    %v6621 = vld [vmem:[%s6064 + $0xe] sm:$0x3f]
    %v6623 = vsel %vm170, %v6620, 0
    %v6626 = vsel %vm170, %v6621, 0
    %6628 = vmatpush.msra.mxu0 0.0
    %6629 = vmatpush.msra.mxu0 0.0
    %6630 = vmatpush.msra.mxu0 0.0
    %6631 = vmatpush.msra.mxu0 %v6385
    %6632 = vmatpush.msra.mxu0 %v6376
    %6633 = vmatpush.msra.mxu0 %v6375
    %6634 = vmatpush.msra.mxu0 %v6374
    %6635 = vmatpush.msra.mxu0 %v6373
    %6636 = vmatpush.msra.mxu0 %v6372
    %6637 = vmatpush.msra.mxu0 %v6371
    %6638 = vmatpush.msra.mxu0 %v6370
    %6639 = vmatpush.msra.mxu0 %v6369
    %6640 = vmatpush.msra.mxu0 %v6368
    %6641 = vmatpush.msra.mxu0 %v6367
    %6642 = vmatpush.msra.mxu0 %v6366
    %6643 = vmatpush.msra.mxu0 %v6365
    %6644 = vmatmul.f32.gmra.mxu0 %v6623
    %v6645 = vpop.f32.mrf.mxu0
    %v6646 = vadd.f32 0.0, %v6645
    %6647 = vmatmul.f32.gmra.mxu0 %v6626
    %v6648 = vpop.f32.mrf.mxu0
    %v6649 = vadd.f32 0.0, %v6648
    %6650 = vdwg.mxu0
    %v6651 = vadd.f32 %v6618, %v6646
    %v6652 = vadd.f32 %v6619, %v6649
    %v6653 = vadd.f32 %v6651, %v6414
    %v6654 = vadd.f32 %v6652, %v6414
    %v6655 = vmax.f32 %v6653, 0.0
    %v6656 = vmax.f32 %v6654, 0.0
    %v6657 = vadd.f32 %v6655, %v6422
    %v6658 = vadd.f32 %v6656, %v6422
    %6659 = vst.msk [vmem:[#allocation6 + $0x1] sm:$0xff] %vm178, %v6424
    %vm6660 = vcmask 701440
    %6661 = vst.msk [vmem:[#allocation6 + $0x9] sm:$0x3f] %vm6660, %v6425
    %s6662 = scalar_lea.vmem [#allocation6], 16
    %6663 = vst.msk [vmem:[%s6662 + $0x1] sm:$0xff] %vm178, %v6657
    %6664 = vst.msk [vmem:[%s6662 + $0x9] sm:$0x3f] %vm6660, %v6658
    %v6665 = vld [vmem:[#allocation6] sm:$0xff]
    %v6666 = vld [vmem:[#allocation6 + $0x8] sm:$0x3]
    %v6667 = vld [vmem:[%s13] sm:$0xff]
    %v6668 = vld [vmem:[%s13 + $0x8] sm:$0xff]
    %v6669 = vld [vmem:[%s13 + $0x10] sm:$0xff]
    %v6670 = vld [vmem:[%s13 + $0x18] sm:$0xff]
    %v6671 = vld [vmem:[%s13 + $0x20] sm:$0xff]
    %v6672 = vld [vmem:[%s13 + $0x28] sm:$0xff]
    %v6673 = vld [vmem:[%s13 + $0x30] sm:$0xff]
    %v6674 = vld [vmem:[%s13 + $0x38] sm:$0xff]
    %v6675 = vld [vmem:[%s13 + $0x40] sm:$0xff]
    %v6676 = vld [vmem:[%s13 + $0x48] sm:$0xff]
    %v6677 = vld [vmem:[%s13 + $0x50] sm:$0x3f]
    %v6678 = vld [vmem:[#allocation6 + $0x1] sm:$0xff]
    %v6679 = vld [vmem:[#allocation6 + $0x9] sm:$0x3]
    %s6680 = scalar_lea.vmem %s13, 88
    %v6681 = vld [vmem:[%s6680] sm:$0xff]
    %v6682 = vld [vmem:[%s6680 + $0x8] sm:$0xff]
    %v6683 = vld [vmem:[%s6680 + $0x10] sm:$0xff]
    %v6684 = vld [vmem:[%s6680 + $0x18] sm:$0xff]
    %v6685 = vld [vmem:[%s6680 + $0x20] sm:$0xff]
    %v6686 = vld [vmem:[%s6680 + $0x28] sm:$0xff]
    %v6687 = vld [vmem:[%s6680 + $0x30] sm:$0xff]
    %v6688 = vld [vmem:[%s6680 + $0x38] sm:$0xff]
    %v6689 = vld [vmem:[%s6680 + $0x40] sm:$0xff]
    %v6690 = vld [vmem:[%s6680 + $0x48] sm:$0xff]
    %v6691 = vld [vmem:[%s6680 + $0x50] sm:$0x3f]
    %v6693 = vsel %vm178, %v6678, 0
    %v6696 = vsel %vm178, %v6679, 0
    %v6699 = vsel %vm3755, %v6691, 0
    %6701 = vmatpush.msra.mxu0 0.0
    %6702 = vmatpush.msra.mxu0 0.0
    %6703 = vmatpush.msra.mxu0 0.0
    %6704 = vmatpush.msra.mxu0 0.0
    %6705 = vmatpush.msra.mxu0 0.0
    %6706 = vmatpush.msra.mxu0 %v6699
    %6707 = vmatpush.msra.mxu0 %v6690
    %6708 = vmatpush.msra.mxu0 %v6689
    %6709 = vmatpush.msra.mxu0 %v6688
    %6710 = vmatpush.msra.mxu0 %v6687
    %6711 = vmatpush.msra.mxu0 %v6686
    %6712 = vmatpush.msra.mxu0 %v6685
    %6713 = vmatpush.msra.mxu0 %v6684
    %6714 = vmatpush.msra.mxu0 %v6683
    %6715 = vmatpush.msra.mxu0 %v6682
    %6716 = vmatpush.msra.mxu0 %v6681
    %6717 = vmatmul.f32.gmra.mxu0 %v6693
    %v6718 = vpop.f32.mrf.mxu0
    %v6719 = vadd.f32 0.0, %v6718
    %6720 = vmatmul.f32.gmra.mxu0 %v6696
    %v6721 = vpop.f32.mrf.mxu0
    %v6722 = vadd.f32 0.0, %v6721
    %6723 = vdwg.mxu0
    %v6725 = vsel %vm178, %v6665, 0
    %v6728 = vsel %vm178, %v6666, 0
    %v6731 = vsel %vm3755, %v6677, 0
    %6733 = vmatpush.msra.mxu0 0.0
    %6734 = vmatpush.msra.mxu0 0.0
    %6735 = vmatpush.msra.mxu0 0.0
    %6736 = vmatpush.msra.mxu0 0.0
    %6737 = vmatpush.msra.mxu0 0.0
    %6738 = vmatpush.msra.mxu0 %v6731
    %6739 = vmatpush.msra.mxu0 %v6676
    %6740 = vmatpush.msra.mxu0 %v6675
    %6741 = vmatpush.msra.mxu0 %v6674
    %6742 = vmatpush.msra.mxu0 %v6673
    %6743 = vmatpush.msra.mxu0 %v6672
    %6744 = vmatpush.msra.mxu0 %v6671
    %6745 = vmatpush.msra.mxu0 %v6670
    %6746 = vmatpush.msra.mxu0 %v6669
    %6747 = vmatpush.msra.mxu0 %v6668
    %6748 = vmatpush.msra.mxu0 %v6667
    %6749 = vmatmul.f32.gmra.mxu0 %v6725
    %v6750 = vpop.f32.mrf.mxu0
    %v6751 = vadd.f32 %v6719, %v6750
    %6752 = vmatmul.f32.gmra.mxu0 %v6728
    %v6753 = vpop.f32.mrf.mxu0
    %v6754 = vadd.f32 %v6722, %v6753
    %6755 = vdwg.mxu0
    %v6756 = vld [vmem:[#allocation6 + $0x2] sm:$0xff]
    %v6757 = vld [vmem:[#allocation6 + $0xa] sm:$0x3]
    %s6758 = scalar_lea.vmem %s13, 176
    %v6759 = vld [vmem:[%s6758] sm:$0xff]
    %v6760 = vld [vmem:[%s6758 + $0x8] sm:$0xff]
    %v6761 = vld [vmem:[%s6758 + $0x10] sm:$0xff]
    %v6762 = vld [vmem:[%s6758 + $0x18] sm:$0xff]
    %v6763 = vld [vmem:[%s6758 + $0x20] sm:$0xff]
    %v6764 = vld [vmem:[%s6758 + $0x28] sm:$0xff]
    %v6765 = vld [vmem:[%s6758 + $0x30] sm:$0xff]
    %v6766 = vld [vmem:[%s6758 + $0x38] sm:$0xff]
    %v6767 = vld [vmem:[%s6758 + $0x40] sm:$0xff]
    %v6768 = vld [vmem:[%s6758 + $0x48] sm:$0xff]
    %v6769 = vld [vmem:[%s6758 + $0x50] sm:$0x3f]
    %v6771 = vsel %vm178, %v6756, 0
    %v6774 = vsel %vm178, %v6757, 0
    %v6777 = vsel %vm3755, %v6769, 0
    %6779 = vmatpush.msra.mxu0 0.0
    %6780 = vmatpush.msra.mxu0 0.0
    %6781 = vmatpush.msra.mxu0 0.0
    %6782 = vmatpush.msra.mxu0 0.0
    %6783 = vmatpush.msra.mxu0 0.0
    %6784 = vmatpush.msra.mxu0 %v6777
    %6785 = vmatpush.msra.mxu0 %v6768
    %6786 = vmatpush.msra.mxu0 %v6767
    %6787 = vmatpush.msra.mxu0 %v6766
    %6788 = vmatpush.msra.mxu0 %v6765
    %6789 = vmatpush.msra.mxu0 %v6764
    %6790 = vmatpush.msra.mxu0 %v6763
    %6791 = vmatpush.msra.mxu0 %v6762
    %6792 = vmatpush.msra.mxu0 %v6761
    %6793 = vmatpush.msra.mxu0 %v6760
    %6794 = vmatpush.msra.mxu0 %v6759
    %6795 = vmatmul.f32.gmra.mxu0 %v6771
    %v6796 = vpop.f32.mrf.mxu0
    %v6797 = vadd.f32 0.0, %v6796
    %6798 = vmatmul.f32.gmra.mxu0 %v6774
    %v6799 = vpop.f32.mrf.mxu0
    %v6800 = vadd.f32 0.0, %v6799
    %6801 = vdwg.mxu0
    %v6802 = vadd.f32 %v6751, %v6797
    %v6803 = vadd.f32 %v6754, %v6800
    %v6804 = vld [vmem:[#allocation6 + $0x3] sm:$0xff]
    %v6805 = vld [vmem:[#allocation6 + $0xb] sm:$0x3]
    %s6806 = scalar_lea.vmem %s13, 264
    %v6807 = vld [vmem:[%s6806] sm:$0xff]
    %v6808 = vld [vmem:[%s6806 + $0x8] sm:$0xff]
    %v6809 = vld [vmem:[%s6806 + $0x10] sm:$0xff]
    %v6810 = vld [vmem:[%s6806 + $0x18] sm:$0xff]
    %v6811 = vld [vmem:[%s6806 + $0x20] sm:$0xff]
    %v6812 = vld [vmem:[%s6806 + $0x28] sm:$0xff]
    %v6813 = vld [vmem:[%s6806 + $0x30] sm:$0xff]
    %v6814 = vld [vmem:[%s6806 + $0x38] sm:$0xff]
    %v6815 = vld [vmem:[%s6806 + $0x40] sm:$0xff]
    %v6816 = vld [vmem:[%s6806 + $0x48] sm:$0xff]
    %v6817 = vld [vmem:[%s6806 + $0x50] sm:$0x3f]
    %v6819 = vsel %vm178, %v6804, 0
    %v6822 = vsel %vm178, %v6805, 0
    %v6825 = vsel %vm3755, %v6817, 0
    %6827 = vmatpush.msra.mxu0 0.0
    %6828 = vmatpush.msra.mxu0 0.0
    %6829 = vmatpush.msra.mxu0 0.0
    %6830 = vmatpush.msra.mxu0 0.0
    %6831 = vmatpush.msra.mxu0 0.0
    %6832 = vmatpush.msra.mxu0 %v6825
    %6833 = vmatpush.msra.mxu0 %v6816
    %6834 = vmatpush.msra.mxu0 %v6815
    %6835 = vmatpush.msra.mxu0 %v6814
    %6836 = vmatpush.msra.mxu0 %v6813
    %6837 = vmatpush.msra.mxu0 %v6812
    %6838 = vmatpush.msra.mxu0 %v6811
    %6839 = vmatpush.msra.mxu0 %v6810
    %6840 = vmatpush.msra.mxu0 %v6809
    %6841 = vmatpush.msra.mxu0 %v6808
    %6842 = vmatpush.msra.mxu0 %v6807
    %6843 = vmatmul.f32.gmra.mxu0 %v6819
    %v6844 = vpop.f32.mrf.mxu0
    %v6845 = vadd.f32 0.0, %v6844
    %6846 = vmatmul.f32.gmra.mxu0 %v6822
    %v6847 = vpop.f32.mrf.mxu0
    %v6848 = vadd.f32 0.0, %v6847
    %6849 = vdwg.mxu0
    %v6850 = vadd.f32 %v6802, %v6845
    %v6851 = vadd.f32 %v6803, %v6848
    %v6852 = vld [vmem:[#allocation6 + $0x4] sm:$0xff]
    %v6853 = vld [vmem:[#allocation6 + $0xc] sm:$0x3]
    %s6854 = scalar_lea.vmem %s13, 352
    %v6855 = vld [vmem:[%s6854] sm:$0xff]
    %v6856 = vld [vmem:[%s6854 + $0x8] sm:$0xff]
    %v6857 = vld [vmem:[%s6854 + $0x10] sm:$0xff]
    %v6858 = vld [vmem:[%s6854 + $0x18] sm:$0xff]
    %v6859 = vld [vmem:[%s6854 + $0x20] sm:$0xff]
    %v6860 = vld [vmem:[%s6854 + $0x28] sm:$0xff]
    %v6861 = vld [vmem:[%s6854 + $0x30] sm:$0xff]
    %v6862 = vld [vmem:[%s6854 + $0x38] sm:$0xff]
    %v6863 = vld [vmem:[%s6854 + $0x40] sm:$0xff]
    %v6864 = vld [vmem:[%s6854 + $0x48] sm:$0xff]
    %v6865 = vld [vmem:[%s6854 + $0x50] sm:$0x3f]
    %v6867 = vsel %vm178, %v6852, 0
    %v6870 = vsel %vm178, %v6853, 0
    %v6873 = vsel %vm3755, %v6865, 0
    %6875 = vmatpush.msra.mxu0 0.0
    %6876 = vmatpush.msra.mxu0 0.0
    %6877 = vmatpush.msra.mxu0 0.0
    %6878 = vmatpush.msra.mxu0 0.0
    %6879 = vmatpush.msra.mxu0 0.0
    %6880 = vmatpush.msra.mxu0 %v6873
    %6881 = vmatpush.msra.mxu0 %v6864
    %6882 = vmatpush.msra.mxu0 %v6863
    %6883 = vmatpush.msra.mxu0 %v6862
    %6884 = vmatpush.msra.mxu0 %v6861
    %6885 = vmatpush.msra.mxu0 %v6860
    %6886 = vmatpush.msra.mxu0 %v6859
    %6887 = vmatpush.msra.mxu0 %v6858
    %6888 = vmatpush.msra.mxu0 %v6857
    %6889 = vmatpush.msra.mxu0 %v6856
    %6890 = vmatpush.msra.mxu0 %v6855
    %6891 = vmatmul.f32.gmra.mxu0 %v6867
    %v6892 = vpop.f32.mrf.mxu0
    %v6893 = vadd.f32 0.0, %v6892
    %6894 = vmatmul.f32.gmra.mxu0 %v6870
    %v6895 = vpop.f32.mrf.mxu0
    %v6896 = vadd.f32 0.0, %v6895
    %6897 = vdwg.mxu0
    %v6898 = vadd.f32 %v6850, %v6893
    %v6899 = vadd.f32 %v6851, %v6896
    %v6900 = vld [vmem:[#allocation6 + $0x5] sm:$0xff]
    %v6901 = vld [vmem:[#allocation6 + $0xd] sm:$0x3]
    %s6902 = scalar_lea.vmem %s13, 440
    %v6903 = vld [vmem:[%s6902] sm:$0xff]
    %v6904 = vld [vmem:[%s6902 + $0x8] sm:$0xff]
    %v6905 = vld [vmem:[%s6902 + $0x10] sm:$0xff]
    %v6906 = vld [vmem:[%s6902 + $0x18] sm:$0xff]
    %v6907 = vld [vmem:[%s6902 + $0x20] sm:$0xff]
    %v6908 = vld [vmem:[%s6902 + $0x28] sm:$0xff]
    %v6909 = vld [vmem:[%s6902 + $0x30] sm:$0xff]
    %v6910 = vld [vmem:[%s6902 + $0x38] sm:$0xff]
    %v6911 = vld [vmem:[%s6902 + $0x40] sm:$0xff]
    %v6912 = vld [vmem:[%s6902 + $0x48] sm:$0xff]
    %v6913 = vld [vmem:[%s6902 + $0x50] sm:$0x3f]
    %v6915 = vsel %vm178, %v6900, 0
    %v6918 = vsel %vm178, %v6901, 0
    %v6921 = vsel %vm3755, %v6913, 0
    %6923 = vmatpush.msra.mxu0 0.0
    %6924 = vmatpush.msra.mxu0 0.0
    %6925 = vmatpush.msra.mxu0 0.0
    %6926 = vmatpush.msra.mxu0 0.0
    %6927 = vmatpush.msra.mxu0 0.0
    %6928 = vmatpush.msra.mxu0 %v6921
    %6929 = vmatpush.msra.mxu0 %v6912
    %6930 = vmatpush.msra.mxu0 %v6911
    %6931 = vmatpush.msra.mxu0 %v6910
    %6932 = vmatpush.msra.mxu0 %v6909
    %6933 = vmatpush.msra.mxu0 %v6908
    %6934 = vmatpush.msra.mxu0 %v6907
    %6935 = vmatpush.msra.mxu0 %v6906
    %6936 = vmatpush.msra.mxu0 %v6905
    %6937 = vmatpush.msra.mxu0 %v6904
    %6938 = vmatpush.msra.mxu0 %v6903
    %6939 = vmatmul.f32.gmra.mxu0 %v6915
    %v6940 = vpop.f32.mrf.mxu0
    %v6941 = vadd.f32 0.0, %v6940
    %6942 = vmatmul.f32.gmra.mxu0 %v6918
    %v6943 = vpop.f32.mrf.mxu0
    %v6944 = vadd.f32 0.0, %v6943
    %6945 = vdwg.mxu0
    %v6946 = vadd.f32 %v6898, %v6941
    %v6947 = vadd.f32 %v6899, %v6944
    %v6948 = vld [vmem:[#allocation6 + $0x6] sm:$0xff]
    %v6949 = vld [vmem:[#allocation6 + $0xe] sm:$0x3]
    %s6950 = scalar_lea.vmem %s13, 528
    %v6951 = vld [vmem:[%s6950] sm:$0xff]
    %v6952 = vld [vmem:[%s6950 + $0x8] sm:$0xff]
    %v6953 = vld [vmem:[%s6950 + $0x10] sm:$0xff]
    %v6954 = vld [vmem:[%s6950 + $0x18] sm:$0xff]
    %v6955 = vld [vmem:[%s6950 + $0x20] sm:$0xff]
    %v6956 = vld [vmem:[%s6950 + $0x28] sm:$0xff]
    %v6957 = vld [vmem:[%s6950 + $0x30] sm:$0xff]
    %v6958 = vld [vmem:[%s6950 + $0x38] sm:$0xff]
    %v6959 = vld [vmem:[%s6950 + $0x40] sm:$0xff]
    %v6960 = vld [vmem:[%s6950 + $0x48] sm:$0xff]
    %v6961 = vld [vmem:[%s6950 + $0x50] sm:$0x3f]
    %v6963 = vsel %vm178, %v6948, 0
    %v6966 = vsel %vm178, %v6949, 0
    %v6969 = vsel %vm3755, %v6961, 0
    %6971 = vmatpush.msra.mxu0 0.0
    %6972 = vmatpush.msra.mxu0 0.0
    %6973 = vmatpush.msra.mxu0 0.0
    %6974 = vmatpush.msra.mxu0 0.0
    %6975 = vmatpush.msra.mxu0 0.0
    %6976 = vmatpush.msra.mxu0 %v6969
    %6977 = vmatpush.msra.mxu0 %v6960
    %6978 = vmatpush.msra.mxu0 %v6959
    %6979 = vmatpush.msra.mxu0 %v6958
    %6980 = vmatpush.msra.mxu0 %v6957
    %6981 = vmatpush.msra.mxu0 %v6956
    %6982 = vmatpush.msra.mxu0 %v6955
    %6983 = vmatpush.msra.mxu0 %v6954
    %6984 = vmatpush.msra.mxu0 %v6953
    %6985 = vmatpush.msra.mxu0 %v6952
    %6986 = vmatpush.msra.mxu0 %v6951
    %6987 = vmatmul.f32.gmra.mxu0 %v6963
    %v6988 = vpop.f32.mrf.mxu0
    %v6989 = vadd.f32 0.0, %v6988
    %6990 = vmatmul.f32.gmra.mxu0 %v6966
    %v6991 = vpop.f32.mrf.mxu0
    %v6992 = vadd.f32 0.0, %v6991
    %6993 = vdwg.mxu0
    %v6994 = vadd.f32 %v6946, %v6989
    %v6995 = vadd.f32 %v6947, %v6992
    %v6996 = vld [vmem:[%s14] sm:$0x1]
    %v6998 = vperm.slane %v6996, 0
    %v7000 = vadd.f32 %v6994, %v6998
    %v7001 = vadd.f32 %v6995, %v6998
    %v7002 = vmax.f32 %v7000, 0.0
    %v7003 = vmax.f32 %v7001, 0.0
    %v7004 = vld [vmem:[%s15] sm:$0x1]
    %v7006 = vperm.slane %v7004, 0
    %v7008 = vadd.f32 %v7002, %v7006
    %v7009 = vadd.f32 %v7003, %v7006
    %v7010 = vld [vmem:[%s6662] sm:$0xff]
    %v7011 = vld [vmem:[%s6662 + $0x8] sm:$0x3]
    %v7012 = vld [vmem:[%s6662 + $0x1] sm:$0xff]
    %v7013 = vld [vmem:[%s6662 + $0x9] sm:$0x3]
    %v7015 = vsel %vm178, %v7012, 0
    %v7018 = vsel %vm178, %v7013, 0
    %7020 = vmatpush.msra.mxu0 0.0
    %7021 = vmatpush.msra.mxu0 0.0
    %7022 = vmatpush.msra.mxu0 0.0
    %7023 = vmatpush.msra.mxu0 0.0
    %7024 = vmatpush.msra.mxu0 0.0
    %7025 = vmatpush.msra.mxu0 %v6699
    %7026 = vmatpush.msra.mxu0 %v6690
    %7027 = vmatpush.msra.mxu0 %v6689
    %7028 = vmatpush.msra.mxu0 %v6688
    %7029 = vmatpush.msra.mxu0 %v6687
    %7030 = vmatpush.msra.mxu0 %v6686
    %7031 = vmatpush.msra.mxu0 %v6685
    %7032 = vmatpush.msra.mxu0 %v6684
    %7033 = vmatpush.msra.mxu0 %v6683
    %7034 = vmatpush.msra.mxu0 %v6682
    %7035 = vmatpush.msra.mxu0 %v6681
    %7036 = vmatmul.f32.gmra.mxu0 %v7015
    %v7037 = vpop.f32.mrf.mxu0
    %v7038 = vadd.f32 0.0, %v7037
    %7039 = vmatmul.f32.gmra.mxu0 %v7018
    %v7040 = vpop.f32.mrf.mxu0
    %v7041 = vadd.f32 0.0, %v7040
    %7042 = vdwg.mxu0
    %v7044 = vsel %vm178, %v7010, 0
    %v7047 = vsel %vm178, %v7011, 0
    %7049 = vmatpush.msra.mxu0 0.0
    %7050 = vmatpush.msra.mxu0 0.0
    %7051 = vmatpush.msra.mxu0 0.0
    %7052 = vmatpush.msra.mxu0 0.0
    %7053 = vmatpush.msra.mxu0 0.0
    %7054 = vmatpush.msra.mxu0 %v6731
    %7055 = vmatpush.msra.mxu0 %v6676
    %7056 = vmatpush.msra.mxu0 %v6675
    %7057 = vmatpush.msra.mxu0 %v6674
    %7058 = vmatpush.msra.mxu0 %v6673
    %7059 = vmatpush.msra.mxu0 %v6672
    %7060 = vmatpush.msra.mxu0 %v6671
    %7061 = vmatpush.msra.mxu0 %v6670
    %7062 = vmatpush.msra.mxu0 %v6669
    %7063 = vmatpush.msra.mxu0 %v6668
    %7064 = vmatpush.msra.mxu0 %v6667
    %7065 = vmatmul.f32.gmra.mxu0 %v7044
    %v7066 = vpop.f32.mrf.mxu0
    %v7067 = vadd.f32 %v7038, %v7066
    %7068 = vmatmul.f32.gmra.mxu0 %v7047
    %v7069 = vpop.f32.mrf.mxu0
    %v7070 = vadd.f32 %v7041, %v7069
    %7071 = vdwg.mxu0
    %v7072 = vld [vmem:[%s6662 + $0x2] sm:$0xff]
    %v7073 = vld [vmem:[%s6662 + $0xa] sm:$0x3]
    %v7075 = vsel %vm178, %v7072, 0
    %v7078 = vsel %vm178, %v7073, 0
    %7080 = vmatpush.msra.mxu0 0.0
    %7081 = vmatpush.msra.mxu0 0.0
    %7082 = vmatpush.msra.mxu0 0.0
    %7083 = vmatpush.msra.mxu0 0.0
    %7084 = vmatpush.msra.mxu0 0.0
    %7085 = vmatpush.msra.mxu0 %v6777
    %7086 = vmatpush.msra.mxu0 %v6768
    %7087 = vmatpush.msra.mxu0 %v6767
    %7088 = vmatpush.msra.mxu0 %v6766
    %7089 = vmatpush.msra.mxu0 %v6765
    %7090 = vmatpush.msra.mxu0 %v6764
    %7091 = vmatpush.msra.mxu0 %v6763
    %7092 = vmatpush.msra.mxu0 %v6762
    %7093 = vmatpush.msra.mxu0 %v6761
    %7094 = vmatpush.msra.mxu0 %v6760
    %7095 = vmatpush.msra.mxu0 %v6759
    %7096 = vmatmul.f32.gmra.mxu0 %v7075
    %v7097 = vpop.f32.mrf.mxu0
    %v7098 = vadd.f32 0.0, %v7097
    %7099 = vmatmul.f32.gmra.mxu0 %v7078
    %v7100 = vpop.f32.mrf.mxu0
    %v7101 = vadd.f32 0.0, %v7100
    %7102 = vdwg.mxu0
    %v7103 = vadd.f32 %v7067, %v7098
    %v7104 = vadd.f32 %v7070, %v7101
    %v7105 = vld [vmem:[%s6662 + $0x3] sm:$0xff]
    %v7106 = vld [vmem:[%s6662 + $0xb] sm:$0x3]
    %v7108 = vsel %vm178, %v7105, 0
    %v7111 = vsel %vm178, %v7106, 0
    %7113 = vmatpush.msra.mxu0 0.0
    %7114 = vmatpush.msra.mxu0 0.0
    %7115 = vmatpush.msra.mxu0 0.0
    %7116 = vmatpush.msra.mxu0 0.0
    %7117 = vmatpush.msra.mxu0 0.0
    %7118 = vmatpush.msra.mxu0 %v6825
    %7119 = vmatpush.msra.mxu0 %v6816
    %7120 = vmatpush.msra.mxu0 %v6815
    %7121 = vmatpush.msra.mxu0 %v6814
    %7122 = vmatpush.msra.mxu0 %v6813
    %7123 = vmatpush.msra.mxu0 %v6812
    %7124 = vmatpush.msra.mxu0 %v6811
    %7125 = vmatpush.msra.mxu0 %v6810
    %7126 = vmatpush.msra.mxu0 %v6809
    %7127 = vmatpush.msra.mxu0 %v6808
    %7128 = vmatpush.msra.mxu0 %v6807
    %7129 = vmatmul.f32.gmra.mxu0 %v7108
    %v7130 = vpop.f32.mrf.mxu0
    %v7131 = vadd.f32 0.0, %v7130
    %7132 = vmatmul.f32.gmra.mxu0 %v7111
    %v7133 = vpop.f32.mrf.mxu0
    %v7134 = vadd.f32 0.0, %v7133
    %7135 = vdwg.mxu0
    %v7136 = vadd.f32 %v7103, %v7131
    %v7137 = vadd.f32 %v7104, %v7134
    %v7138 = vld [vmem:[%s6662 + $0x4] sm:$0xff]
    %v7139 = vld [vmem:[%s6662 + $0xc] sm:$0x3]
    %v7141 = vsel %vm178, %v7138, 0
    %v7144 = vsel %vm178, %v7139, 0
    %7146 = vmatpush.msra.mxu0 0.0
    %7147 = vmatpush.msra.mxu0 0.0
    %7148 = vmatpush.msra.mxu0 0.0
    %7149 = vmatpush.msra.mxu0 0.0
    %7150 = vmatpush.msra.mxu0 0.0
    %7151 = vmatpush.msra.mxu0 %v6873
    %7152 = vmatpush.msra.mxu0 %v6864
    %7153 = vmatpush.msra.mxu0 %v6863
    %7154 = vmatpush.msra.mxu0 %v6862
    %7155 = vmatpush.msra.mxu0 %v6861
    %7156 = vmatpush.msra.mxu0 %v6860
    %7157 = vmatpush.msra.mxu0 %v6859
    %7158 = vmatpush.msra.mxu0 %v6858
    %7159 = vmatpush.msra.mxu0 %v6857
    %7160 = vmatpush.msra.mxu0 %v6856
    %7161 = vmatpush.msra.mxu0 %v6855
    %7162 = vmatmul.f32.gmra.mxu0 %v7141
    %v7163 = vpop.f32.mrf.mxu0
    %v7164 = vadd.f32 0.0, %v7163
    %7165 = vmatmul.f32.gmra.mxu0 %v7144
    %v7166 = vpop.f32.mrf.mxu0
    %v7167 = vadd.f32 0.0, %v7166
    %7168 = vdwg.mxu0
    %v7169 = vadd.f32 %v7136, %v7164
    %v7170 = vadd.f32 %v7137, %v7167
    %v7171 = vld [vmem:[%s6662 + $0x5] sm:$0xff]
    %v7172 = vld [vmem:[%s6662 + $0xd] sm:$0x3]
    %v7174 = vsel %vm178, %v7171, 0
    %v7177 = vsel %vm178, %v7172, 0
    %7179 = vmatpush.msra.mxu0 0.0
    %7180 = vmatpush.msra.mxu0 0.0
    %7181 = vmatpush.msra.mxu0 0.0
    %7182 = vmatpush.msra.mxu0 0.0
    %7183 = vmatpush.msra.mxu0 0.0
    %7184 = vmatpush.msra.mxu0 %v6921
    %7185 = vmatpush.msra.mxu0 %v6912
    %7186 = vmatpush.msra.mxu0 %v6911
    %7187 = vmatpush.msra.mxu0 %v6910
    %7188 = vmatpush.msra.mxu0 %v6909
    %7189 = vmatpush.msra.mxu0 %v6908
    %7190 = vmatpush.msra.mxu0 %v6907
    %7191 = vmatpush.msra.mxu0 %v6906
    %7192 = vmatpush.msra.mxu0 %v6905
    %7193 = vmatpush.msra.mxu0 %v6904
    %7194 = vmatpush.msra.mxu0 %v6903
    %7195 = vmatmul.f32.gmra.mxu0 %v7174
    %v7196 = vpop.f32.mrf.mxu0
    %v7197 = vadd.f32 0.0, %v7196
    %7198 = vmatmul.f32.gmra.mxu0 %v7177
    %v7199 = vpop.f32.mrf.mxu0
    %v7200 = vadd.f32 0.0, %v7199
    %7201 = vdwg.mxu0
    %v7202 = vadd.f32 %v7169, %v7197
    %v7203 = vadd.f32 %v7170, %v7200
    %v7204 = vld [vmem:[%s6662 + $0x6] sm:$0xff]
    %v7205 = vld [vmem:[%s6662 + $0xe] sm:$0x3]
    %v7207 = vsel %vm178, %v7204, 0
    %v7210 = vsel %vm178, %v7205, 0
    %7212 = vmatpush.msra.mxu0 0.0
    %7213 = vmatpush.msra.mxu0 0.0
    %7214 = vmatpush.msra.mxu0 0.0
    %7215 = vmatpush.msra.mxu0 0.0
    %7216 = vmatpush.msra.mxu0 0.0
    %7217 = vmatpush.msra.mxu0 %v6969
    %7218 = vmatpush.msra.mxu0 %v6960
    %7219 = vmatpush.msra.mxu0 %v6959
    %7220 = vmatpush.msra.mxu0 %v6958
    %7221 = vmatpush.msra.mxu0 %v6957
    %7222 = vmatpush.msra.mxu0 %v6956
    %7223 = vmatpush.msra.mxu0 %v6955
    %7224 = vmatpush.msra.mxu0 %v6954
    %7225 = vmatpush.msra.mxu0 %v6953
    %7226 = vmatpush.msra.mxu0 %v6952
    %7227 = vmatpush.msra.mxu0 %v6951
    %7228 = vmatmul.f32.gmra.mxu0 %v7207
    %v7229 = vpop.f32.mrf.mxu0
    %v7230 = vadd.f32 0.0, %v7229
    %7231 = vmatmul.f32.gmra.mxu0 %v7210
    %v7232 = vpop.f32.mrf.mxu0
    %v7233 = vadd.f32 0.0, %v7232
    %7234 = vdwg.mxu0
    %v7235 = vadd.f32 %v7202, %v7230
    %v7236 = vadd.f32 %v7203, %v7233
    %v7237 = vadd.f32 %v7235, %v6998
    %v7238 = vadd.f32 %v7236, %v6998
    %v7239 = vmax.f32 %v7237, 0.0
    %v7240 = vmax.f32 %v7238, 0.0
    %v7241 = vadd.f32 %v7239, %v7006
    %v7242 = vadd.f32 %v7240, %v7006
    %7243 = vst.msk [vmem:[#allocation7 + $0x3] sm:$0xff] %vm183, %v7008
    %vm7244 = vcmask 902144
    %7245 = vst.msk [vmem:[#allocation7 + $0xb] sm:$0x3] %vm7244, %v7009
    %s7246 = scalar_lea.vmem [#allocation7], 16
    %7247 = vst.msk [vmem:[%s7246 + $0x3] sm:$0xff] %vm183, %v7241
    %7248 = vst.msk [vmem:[%s7246 + $0xb] sm:$0x3] %vm7244, %v7242
    %v7249 = vld [vmem:[#allocation7] sm:$0xff]
    %v7250 = vld [vmem:[#allocation7 + $0x8] sm:$0x1f]
    %v7251 = vld [vmem:[%s16] sm:$0xff]
    %v7252 = vld [vmem:[%s16 + $0x8] sm:$0xff]
    %v7253 = vld [vmem:[%s16 + $0x10] sm:$0xff]
    %v7254 = vld [vmem:[%s16 + $0x18] sm:$0xff]
    %v7255 = vld [vmem:[%s16 + $0x20] sm:$0xff]
    %v7256 = vld [vmem:[%s16 + $0x28] sm:$0xff]
    %v7257 = vld [vmem:[%s16 + $0x30] sm:$0xff]
    %v7258 = vld [vmem:[%s16 + $0x38] sm:$0xff]
    %v7259 = vld [vmem:[%s16 + $0x40] sm:$0xff]
    %v7260 = vld [vmem:[%s16 + $0x48] sm:$0xff]
    %v7261 = vld [vmem:[%s16 + $0x50] sm:$0xff]
    %v7262 = vld [vmem:[%s16 + $0x58] sm:$0xff]
    %v7263 = vld [vmem:[%s16 + $0x60] sm:$0xff]
    %v7264 = vld [vmem:[%s16 + $0x68] sm:$0x7f]
    %v7265 = vld [vmem:[#allocation7 + $0x1] sm:$0xff]
    %v7266 = vld [vmem:[#allocation7 + $0x9] sm:$0x1f]
    %s7267 = scalar_lea.vmem %s16, 112
    %v7268 = vld [vmem:[%s7267] sm:$0xff]
    %v7269 = vld [vmem:[%s7267 + $0x8] sm:$0xff]
    %v7270 = vld [vmem:[%s7267 + $0x10] sm:$0xff]
    %v7271 = vld [vmem:[%s7267 + $0x18] sm:$0xff]
    %v7272 = vld [vmem:[%s7267 + $0x20] sm:$0xff]
    %v7273 = vld [vmem:[%s7267 + $0x28] sm:$0xff]
    %v7274 = vld [vmem:[%s7267 + $0x30] sm:$0xff]
    %v7275 = vld [vmem:[%s7267 + $0x38] sm:$0xff]
    %v7276 = vld [vmem:[%s7267 + $0x40] sm:$0xff]
    %v7277 = vld [vmem:[%s7267 + $0x48] sm:$0xff]
    %v7278 = vld [vmem:[%s7267 + $0x50] sm:$0xff]
    %v7279 = vld [vmem:[%s7267 + $0x58] sm:$0xff]
    %v7280 = vld [vmem:[%s7267 + $0x60] sm:$0xff]
    %v7281 = vld [vmem:[%s7267 + $0x68] sm:$0x7f]
    %v7283 = vsel %vm183, %v7265, 0
    %v7286 = vsel %vm183, %v7266, 0
    %v7289 = vsel %vm3465, %v7281, 0
    %7291 = vmatpush.msra.mxu0 0.0
    %7292 = vmatpush.msra.mxu0 0.0
    %7293 = vmatpush.msra.mxu0 %v7289
    %7294 = vmatpush.msra.mxu0 %v7280
    %7295 = vmatpush.msra.mxu0 %v7279
    %7296 = vmatpush.msra.mxu0 %v7278
    %7297 = vmatpush.msra.mxu0 %v7277
    %7298 = vmatpush.msra.mxu0 %v7276
    %7299 = vmatpush.msra.mxu0 %v7275
    %7300 = vmatpush.msra.mxu0 %v7274
    %7301 = vmatpush.msra.mxu0 %v7273
    %7302 = vmatpush.msra.mxu0 %v7272
    %7303 = vmatpush.msra.mxu0 %v7271
    %7304 = vmatpush.msra.mxu0 %v7270
    %7305 = vmatpush.msra.mxu0 %v7269
    %7306 = vmatpush.msra.mxu0 %v7268
    %7307 = vmatmul.f32.gmra.mxu0 %v7283
    %v7308 = vpop.f32.mrf.mxu0
    %v7309 = vadd.f32 0.0, %v7308
    %7310 = vmatmul.f32.gmra.mxu0 %v7286
    %v7311 = vpop.f32.mrf.mxu0
    %v7312 = vadd.f32 0.0, %v7311
    %7313 = vdwg.mxu0
    %v7315 = vsel %vm183, %v7249, 0
    %v7318 = vsel %vm183, %v7250, 0
    %v7321 = vsel %vm3465, %v7264, 0
    %7323 = vmatpush.msra.mxu0 0.0
    %7324 = vmatpush.msra.mxu0 0.0
    %7325 = vmatpush.msra.mxu0 %v7321
    %7326 = vmatpush.msra.mxu0 %v7263
    %7327 = vmatpush.msra.mxu0 %v7262
    %7328 = vmatpush.msra.mxu0 %v7261
    %7329 = vmatpush.msra.mxu0 %v7260
    %7330 = vmatpush.msra.mxu0 %v7259
    %7331 = vmatpush.msra.mxu0 %v7258
    %7332 = vmatpush.msra.mxu0 %v7257
    %7333 = vmatpush.msra.mxu0 %v7256
    %7334 = vmatpush.msra.mxu0 %v7255
    %7335 = vmatpush.msra.mxu0 %v7254
    %7336 = vmatpush.msra.mxu0 %v7253
    %7337 = vmatpush.msra.mxu0 %v7252
    %7338 = vmatpush.msra.mxu0 %v7251
    %7339 = vmatmul.f32.gmra.mxu0 %v7315
    %v7340 = vpop.f32.mrf.mxu0
    %v7341 = vadd.f32 %v7309, %v7340
    %7342 = vmatmul.f32.gmra.mxu0 %v7318
    %v7343 = vpop.f32.mrf.mxu0
    %v7344 = vadd.f32 %v7312, %v7343
    %7345 = vdwg.mxu0
    %v7346 = vld [vmem:[#allocation7 + $0x2] sm:$0xff]
    %v7347 = vld [vmem:[#allocation7 + $0xa] sm:$0x1f]
    %s7348 = scalar_lea.vmem %s16, 224
    %v7349 = vld [vmem:[%s7348] sm:$0xff]
    %v7350 = vld [vmem:[%s7348 + $0x8] sm:$0xff]
    %v7351 = vld [vmem:[%s7348 + $0x10] sm:$0xff]
    %v7352 = vld [vmem:[%s7348 + $0x18] sm:$0xff]
    %v7353 = vld [vmem:[%s7348 + $0x20] sm:$0xff]
    %v7354 = vld [vmem:[%s7348 + $0x28] sm:$0xff]
    %v7355 = vld [vmem:[%s7348 + $0x30] sm:$0xff]
    %v7356 = vld [vmem:[%s7348 + $0x38] sm:$0xff]
    %v7357 = vld [vmem:[%s7348 + $0x40] sm:$0xff]
    %v7358 = vld [vmem:[%s7348 + $0x48] sm:$0xff]
    %v7359 = vld [vmem:[%s7348 + $0x50] sm:$0xff]
    %v7360 = vld [vmem:[%s7348 + $0x58] sm:$0xff]
    %v7361 = vld [vmem:[%s7348 + $0x60] sm:$0xff]
    %v7362 = vld [vmem:[%s7348 + $0x68] sm:$0x7f]
    %v7364 = vsel %vm183, %v7346, 0
    %v7367 = vsel %vm183, %v7347, 0
    %v7370 = vsel %vm3465, %v7362, 0
    %7372 = vmatpush.msra.mxu0 0.0
    %7373 = vmatpush.msra.mxu0 0.0
    %7374 = vmatpush.msra.mxu0 %v7370
    %7375 = vmatpush.msra.mxu0 %v7361
    %7376 = vmatpush.msra.mxu0 %v7360
    %7377 = vmatpush.msra.mxu0 %v7359
    %7378 = vmatpush.msra.mxu0 %v7358
    %7379 = vmatpush.msra.mxu0 %v7357
    %7380 = vmatpush.msra.mxu0 %v7356
    %7381 = vmatpush.msra.mxu0 %v7355
    %7382 = vmatpush.msra.mxu0 %v7354
    %7383 = vmatpush.msra.mxu0 %v7353
    %7384 = vmatpush.msra.mxu0 %v7352
    %7385 = vmatpush.msra.mxu0 %v7351
    %7386 = vmatpush.msra.mxu0 %v7350
    %7387 = vmatpush.msra.mxu0 %v7349
    %7388 = vmatmul.f32.gmra.mxu0 %v7364
    %v7389 = vpop.f32.mrf.mxu0
    %v7390 = vadd.f32 0.0, %v7389
    %7391 = vmatmul.f32.gmra.mxu0 %v7367
    %v7392 = vpop.f32.mrf.mxu0
    %v7393 = vadd.f32 0.0, %v7392
    %7394 = vdwg.mxu0
    %v7395 = vadd.f32 %v7341, %v7390
    %v7396 = vadd.f32 %v7344, %v7393
    %v7397 = vld [vmem:[#allocation7 + $0x3] sm:$0xff]
    %v7398 = vld [vmem:[#allocation7 + $0xb] sm:$0x1f]
    %s7399 = scalar_lea.vmem %s16, 336
    %v7400 = vld [vmem:[%s7399] sm:$0xff]
    %v7401 = vld [vmem:[%s7399 + $0x8] sm:$0xff]
    %v7402 = vld [vmem:[%s7399 + $0x10] sm:$0xff]
    %v7403 = vld [vmem:[%s7399 + $0x18] sm:$0xff]
    %v7404 = vld [vmem:[%s7399 + $0x20] sm:$0xff]
    %v7405 = vld [vmem:[%s7399 + $0x28] sm:$0xff]
    %v7406 = vld [vmem:[%s7399 + $0x30] sm:$0xff]
    %v7407 = vld [vmem:[%s7399 + $0x38] sm:$0xff]
    %v7408 = vld [vmem:[%s7399 + $0x40] sm:$0xff]
    %v7409 = vld [vmem:[%s7399 + $0x48] sm:$0xff]
    %v7410 = vld [vmem:[%s7399 + $0x50] sm:$0xff]
    %v7411 = vld [vmem:[%s7399 + $0x58] sm:$0xff]
    %v7412 = vld [vmem:[%s7399 + $0x60] sm:$0xff]
    %v7413 = vld [vmem:[%s7399 + $0x68] sm:$0x7f]
    %v7415 = vsel %vm183, %v7397, 0
    %v7418 = vsel %vm183, %v7398, 0
    %v7421 = vsel %vm3465, %v7413, 0
    %7423 = vmatpush.msra.mxu0 0.0
    %7424 = vmatpush.msra.mxu0 0.0
    %7425 = vmatpush.msra.mxu0 %v7421
    %7426 = vmatpush.msra.mxu0 %v7412
    %7427 = vmatpush.msra.mxu0 %v7411
    %7428 = vmatpush.msra.mxu0 %v7410
    %7429 = vmatpush.msra.mxu0 %v7409
    %7430 = vmatpush.msra.mxu0 %v7408
    %7431 = vmatpush.msra.mxu0 %v7407
    %7432 = vmatpush.msra.mxu0 %v7406
    %7433 = vmatpush.msra.mxu0 %v7405
    %7434 = vmatpush.msra.mxu0 %v7404
    %7435 = vmatpush.msra.mxu0 %v7403
    %7436 = vmatpush.msra.mxu0 %v7402
    %7437 = vmatpush.msra.mxu0 %v7401
    %7438 = vmatpush.msra.mxu0 %v7400
    %7439 = vmatmul.f32.gmra.mxu0 %v7415
    %v7440 = vpop.f32.mrf.mxu0
    %v7441 = vadd.f32 0.0, %v7440
    %7442 = vmatmul.f32.gmra.mxu0 %v7418
    %v7443 = vpop.f32.mrf.mxu0
    %v7444 = vadd.f32 0.0, %v7443
    %7445 = vdwg.mxu0
    %v7446 = vadd.f32 %v7395, %v7441
    %v7447 = vadd.f32 %v7396, %v7444
    %v7448 = vld [vmem:[%s17] sm:$0x1]
    %v7450 = vperm.slane %v7448, 0
    %vm7452 = vcmask 105472
    %v7453 = vsel %vm7452, %v285, 0
    %v7456 = vsel %vm1682, %v7447, 0
    %7458 = vmatpush.msra.mxu0 0.0
    %7459 = vmatpush.msra.mxu0 0.0
    %7460 = vmatpush.msra.mxu0 0.0
    %7461 = vmatpush.msra.mxu0 0.0
    %7462 = vmatpush.msra.mxu0 0.0
    %7463 = vmatpush.msra.mxu0 0.0
    %7464 = vmatpush.msra.mxu0 0.0
    %7465 = vmatpush.msra.mxu0 0.0
    %7466 = vmatpush.msra.mxu0 0.0
    %7467 = vmatpush.msra.mxu0 0.0
    %7468 = vmatpush.msra.mxu0 0.0
    %7469 = vmatpush.msra.mxu0 0.0
    %7470 = vmatpush.msra.mxu0 0.0
    %7471 = vmatpush.msra.mxu0 0.0
    %7472 = vmatpush.msra.mxu0 %v7456
    %7473 = vmatpush.msra.mxu0 %v7446
    %7474 = vmatmul.f32.gmra.mxu0 %v7453
    %v7475 = vpop.f32.mrf.mxu0
    %v7476 = vadd.f32 %v7450, %v7475
    %7477 = vdwg.mxu0
    %v7478 = vmax.f32 %v7476, 0.0
    %v7479 = vld [vmem:[%s18] sm:$0x1]
    %v7481 = vperm.slane %v7479, 0
    %v7483 = vadd.f32 %v7478, %v7481
    %v7484 = vld [vmem:[%s7246] sm:$0xff]
    %v7485 = vld [vmem:[%s7246 + $0x8] sm:$0x1f]
    %v7486 = vld [vmem:[%s7246 + $0x1] sm:$0xff]
    %v7487 = vld [vmem:[%s7246 + $0x9] sm:$0x1f]
    %v7489 = vsel %vm183, %v7486, 0
    %v7492 = vsel %vm183, %v7487, 0
    %7494 = vmatpush.msra.mxu0 0.0
    %7495 = vmatpush.msra.mxu0 0.0
    %7496 = vmatpush.msra.mxu0 %v7289
    %7497 = vmatpush.msra.mxu0 %v7280
    %7498 = vmatpush.msra.mxu0 %v7279
    %7499 = vmatpush.msra.mxu0 %v7278
    %7500 = vmatpush.msra.mxu0 %v7277
    %7501 = vmatpush.msra.mxu0 %v7276
    %7502 = vmatpush.msra.mxu0 %v7275
    %7503 = vmatpush.msra.mxu0 %v7274
    %7504 = vmatpush.msra.mxu0 %v7273
    %7505 = vmatpush.msra.mxu0 %v7272
    %7506 = vmatpush.msra.mxu0 %v7271
    %7507 = vmatpush.msra.mxu0 %v7270
    %7508 = vmatpush.msra.mxu0 %v7269
    %7509 = vmatpush.msra.mxu0 %v7268
    %7510 = vmatmul.f32.gmra.mxu0 %v7489
    %v7511 = vpop.f32.mrf.mxu0
    %v7512 = vadd.f32 0.0, %v7511
    %7513 = vmatmul.f32.gmra.mxu0 %v7492
    %v7514 = vpop.f32.mrf.mxu0
    %v7515 = vadd.f32 0.0, %v7514
    %7516 = vdwg.mxu0
    %v7518 = vsel %vm183, %v7484, 0
    %v7521 = vsel %vm183, %v7485, 0
    %7523 = vmatpush.msra.mxu0 0.0
    %7524 = vmatpush.msra.mxu0 0.0
    %7525 = vmatpush.msra.mxu0 %v7321
    %7526 = vmatpush.msra.mxu0 %v7263
    %7527 = vmatpush.msra.mxu0 %v7262
    %7528 = vmatpush.msra.mxu0 %v7261
    %7529 = vmatpush.msra.mxu0 %v7260
    %7530 = vmatpush.msra.mxu0 %v7259
    %7531 = vmatpush.msra.mxu0 %v7258
    %7532 = vmatpush.msra.mxu0 %v7257
    %7533 = vmatpush.msra.mxu0 %v7256
    %7534 = vmatpush.msra.mxu0 %v7255
    %7535 = vmatpush.msra.mxu0 %v7254
    %7536 = vmatpush.msra.mxu0 %v7253
    %7537 = vmatpush.msra.mxu0 %v7252
    %7538 = vmatpush.msra.mxu0 %v7251
    %7539 = vmatmul.f32.gmra.mxu0 %v7518
    %v7540 = vpop.f32.mrf.mxu0
    %v7541 = vadd.f32 %v7512, %v7540
    %7542 = vmatmul.f32.gmra.mxu0 %v7521
    %v7543 = vpop.f32.mrf.mxu0
    %v7544 = vadd.f32 %v7515, %v7543
    %7545 = vdwg.mxu0
    %v7546 = vld [vmem:[%s7246 + $0x2] sm:$0xff]
    %v7547 = vld [vmem:[%s7246 + $0xa] sm:$0x1f]
    %v7549 = vsel %vm183, %v7546, 0
    %v7552 = vsel %vm183, %v7547, 0
    %7554 = vmatpush.msra.mxu0 0.0
    %7555 = vmatpush.msra.mxu0 0.0
    %7556 = vmatpush.msra.mxu0 %v7370
    %7557 = vmatpush.msra.mxu0 %v7361
    %7558 = vmatpush.msra.mxu0 %v7360
    %7559 = vmatpush.msra.mxu0 %v7359
    %7560 = vmatpush.msra.mxu0 %v7358
    %7561 = vmatpush.msra.mxu0 %v7357
    %7562 = vmatpush.msra.mxu0 %v7356
    %7563 = vmatpush.msra.mxu0 %v7355
    %7564 = vmatpush.msra.mxu0 %v7354
    %7565 = vmatpush.msra.mxu0 %v7353
    %7566 = vmatpush.msra.mxu0 %v7352
    %7567 = vmatpush.msra.mxu0 %v7351
    %7568 = vmatpush.msra.mxu0 %v7350
    %7569 = vmatpush.msra.mxu0 %v7349
    %7570 = vmatmul.f32.gmra.mxu0 %v7549
    %v7571 = vpop.f32.mrf.mxu0
    %v7572 = vadd.f32 0.0, %v7571
    %7573 = vmatmul.f32.gmra.mxu0 %v7552
    %v7574 = vpop.f32.mrf.mxu0
    %v7575 = vadd.f32 0.0, %v7574
    %7576 = vdwg.mxu0
    %v7577 = vadd.f32 %v7541, %v7572
    %v7578 = vadd.f32 %v7544, %v7575
    %v7579 = vld [vmem:[%s7246 + $0x3] sm:$0xff]
    %v7580 = vld [vmem:[%s7246 + $0xb] sm:$0x1f]
    %v7582 = vsel %vm183, %v7579, 0
    %v7585 = vsel %vm183, %v7580, 0
    %7587 = vmatpush.msra.mxu0 0.0
    %7588 = vmatpush.msra.mxu0 0.0
    %7589 = vmatpush.msra.mxu0 %v7421
    %7590 = vmatpush.msra.mxu0 %v7412
    %7591 = vmatpush.msra.mxu0 %v7411
    %7592 = vmatpush.msra.mxu0 %v7410
    %7593 = vmatpush.msra.mxu0 %v7409
    %7594 = vmatpush.msra.mxu0 %v7408
    %7595 = vmatpush.msra.mxu0 %v7407
    %7596 = vmatpush.msra.mxu0 %v7406
    %7597 = vmatpush.msra.mxu0 %v7405
    %7598 = vmatpush.msra.mxu0 %v7404
    %7599 = vmatpush.msra.mxu0 %v7403
    %7600 = vmatpush.msra.mxu0 %v7402
    %7601 = vmatpush.msra.mxu0 %v7401
    %7602 = vmatpush.msra.mxu0 %v7400
    %7603 = vmatmul.f32.gmra.mxu0 %v7582
    %v7604 = vpop.f32.mrf.mxu0
    %v7605 = vadd.f32 0.0, %v7604
    %7606 = vmatmul.f32.gmra.mxu0 %v7585
    %v7607 = vpop.f32.mrf.mxu0
    %v7608 = vadd.f32 0.0, %v7607
    %7609 = vdwg.mxu0
    %v7610 = vadd.f32 %v7577, %v7605
    %v7611 = vadd.f32 %v7578, %v7608
    %v7613 = vsel %vm1682, %v7611, 0
    %7615 = vmatpush.msra.mxu0 0.0
    %7616 = vmatpush.msra.mxu0 0.0
    %7617 = vmatpush.msra.mxu0 0.0
    %7618 = vmatpush.msra.mxu0 0.0
    %7619 = vmatpush.msra.mxu0 0.0
    %7620 = vmatpush.msra.mxu0 0.0
    %7621 = vmatpush.msra.mxu0 0.0
    %7622 = vmatpush.msra.mxu0 0.0
    %7623 = vmatpush.msra.mxu0 0.0
    %7624 = vmatpush.msra.mxu0 0.0
    %7625 = vmatpush.msra.mxu0 0.0
    %7626 = vmatpush.msra.mxu0 0.0
    %7627 = vmatpush.msra.mxu0 0.0
    %7628 = vmatpush.msra.mxu0 0.0
    %7629 = vmatpush.msra.mxu0 %v7613
    %7630 = vmatpush.msra.mxu0 %v7610
    %7631 = vmatmul.f32.gmra.mxu0 %v7453
    %v7632 = vpop.f32.mrf.mxu0
    %v7633 = vadd.f32 %v7450, %v7632
    %7634 = vdwg.mxu0
    %v7635 = vmax.f32 %v7633, 0.0
    %v7636 = vadd.f32 %v7635, %v7481
    %vm7637 = vcmask 915456
    %7638 = vst.msk [vmem:[#allocation8 + $0x1] sm:$0x7f] %vm7637, %v7483
    %s7639 = scalar_lea.vmem [#allocation8], 16
    %7640 = vst.msk [vmem:[%s7639 + $0x1] sm:$0x7f] %vm7637, %v7636
    %v7641 = vld [vmem:[#allocation8] sm:$0x7]
    %v7642 = vld [vmem:[%s19] sm:$0xff]
    %v7643 = vld [vmem:[%s19 + $0x8] sm:$0xff]
    %v7644 = vld [vmem:[%s19 + $0x10] sm:$0xff]
    %v7645 = vld [vmem:[%s19 + $0x18] sm:$0xff]
    %v7646 = vld [vmem:[%s19 + $0x20] sm:$0xff]
    %v7647 = vld [vmem:[%s19 + $0x28] sm:$0xff]
    %v7648 = vld [vmem:[%s19 + $0x30] sm:$0xff]
    %v7649 = vld [vmem:[%s19 + $0x38] sm:$0xff]
    %v7650 = vld [vmem:[%s19 + $0x40] sm:$0xff]
    %v7651 = vld [vmem:[%s19 + $0x48] sm:$0xff]
    %v7652 = vld [vmem:[%s19 + $0x50] sm:$0xff]
    %v7653 = vld [vmem:[%s19 + $0x58] sm:$0xff]
    %v7654 = vld [vmem:[%s19 + $0x60] sm:$0xff]
    %v7655 = vld [vmem:[%s19 + $0x68] sm:$0xff]
    %v7656 = vld [vmem:[#allocation8 + $0x1] sm:$0x7]
    %s7657 = scalar_lea.vmem %s19, 112
    %v7658 = vld [vmem:[%s7657] sm:$0xff]
    %v7659 = vld [vmem:[%s7657 + $0x8] sm:$0xff]
    %v7660 = vld [vmem:[%s7657 + $0x10] sm:$0xff]
    %v7661 = vld [vmem:[%s7657 + $0x18] sm:$0xff]
    %v7662 = vld [vmem:[%s7657 + $0x20] sm:$0xff]
    %v7663 = vld [vmem:[%s7657 + $0x28] sm:$0xff]
    %v7664 = vld [vmem:[%s7657 + $0x30] sm:$0xff]
    %v7665 = vld [vmem:[%s7657 + $0x38] sm:$0xff]
    %v7666 = vld [vmem:[%s7657 + $0x40] sm:$0xff]
    %v7667 = vld [vmem:[%s7657 + $0x48] sm:$0xff]
    %v7668 = vld [vmem:[%s7657 + $0x50] sm:$0xff]
    %v7669 = vld [vmem:[%s7657 + $0x58] sm:$0xff]
    %v7670 = vld [vmem:[%s7657 + $0x60] sm:$0xff]
    %v7671 = vld [vmem:[%s7657 + $0x68] sm:$0xff]
    %v7673 = vsel %vm188, %v7656, 0
    %7675 = vmatpush.msra.mxu0 0.0
    %7676 = vmatpush.msra.mxu0 0.0
    %7677 = vmatpush.msra.mxu0 %v7671
    %7678 = vmatpush.msra.mxu0 %v7670
    %7679 = vmatpush.msra.mxu0 %v7669
    %7680 = vmatpush.msra.mxu0 %v7668
    %7681 = vmatpush.msra.mxu0 %v7667
    %7682 = vmatpush.msra.mxu0 %v7666
    %7683 = vmatpush.msra.mxu0 %v7665
    %7684 = vmatpush.msra.mxu0 %v7664
    %7685 = vmatpush.msra.mxu0 %v7663
    %7686 = vmatpush.msra.mxu0 %v7662
    %7687 = vmatpush.msra.mxu0 %v7661
    %7688 = vmatpush.msra.mxu0 %v7660
    %7689 = vmatpush.msra.mxu0 %v7659
    %7690 = vmatpush.msra.mxu0 %v7658
    %7691 = vmatmul.f32.gmra.mxu0 %v7673
    %v7692 = vpop.f32.mrf.mxu0
    %v7693 = vadd.f32 0.0, %v7692
    %7694 = vdwg.mxu0
    %v7696 = vsel %vm188, %v7641, 0
    %7698 = vmatpush.msra.mxu0 0.0
    %7699 = vmatpush.msra.mxu0 0.0
    %7700 = vmatpush.msra.mxu0 %v7655
    %7701 = vmatpush.msra.mxu0 %v7654
    %7702 = vmatpush.msra.mxu0 %v7653
    %7703 = vmatpush.msra.mxu0 %v7652
    %7704 = vmatpush.msra.mxu0 %v7651
    %7705 = vmatpush.msra.mxu0 %v7650
    %7706 = vmatpush.msra.mxu0 %v7649
    %7707 = vmatpush.msra.mxu0 %v7648
    %7708 = vmatpush.msra.mxu0 %v7647
    %7709 = vmatpush.msra.mxu0 %v7646
    %7710 = vmatpush.msra.mxu0 %v7645
    %7711 = vmatpush.msra.mxu0 %v7644
    %7712 = vmatpush.msra.mxu0 %v7643
    %7713 = vmatpush.msra.mxu0 %v7642
    %7714 = vmatmul.f32.gmra.mxu0 %v7696
    %v7715 = vpop.f32.mrf.mxu0
    %v7716 = vadd.f32 %v7693, %v7715
    %7717 = vdwg.mxu0
    %v7718 = vld [vmem:[#allocation8 + $0x2] sm:$0x7]
    %s7719 = scalar_lea.vmem %s19, 224
    %v7720 = vld [vmem:[%s7719] sm:$0xff]
    %v7721 = vld [vmem:[%s7719 + $0x8] sm:$0xff]
    %v7722 = vld [vmem:[%s7719 + $0x10] sm:$0xff]
    %v7723 = vld [vmem:[%s7719 + $0x18] sm:$0xff]
    %v7724 = vld [vmem:[%s7719 + $0x20] sm:$0xff]
    %v7725 = vld [vmem:[%s7719 + $0x28] sm:$0xff]
    %v7726 = vld [vmem:[%s7719 + $0x30] sm:$0xff]
    %v7727 = vld [vmem:[%s7719 + $0x38] sm:$0xff]
    %v7728 = vld [vmem:[%s7719 + $0x40] sm:$0xff]
    %v7729 = vld [vmem:[%s7719 + $0x48] sm:$0xff]
    %v7730 = vld [vmem:[%s7719 + $0x50] sm:$0xff]
    %v7731 = vld [vmem:[%s7719 + $0x58] sm:$0xff]
    %v7732 = vld [vmem:[%s7719 + $0x60] sm:$0xff]
    %v7733 = vld [vmem:[%s7719 + $0x68] sm:$0xff]
    %v7735 = vsel %vm188, %v7718, 0
    %7737 = vmatpush.msra.mxu0 0.0
    %7738 = vmatpush.msra.mxu0 0.0
    %7739 = vmatpush.msra.mxu0 %v7733
    %7740 = vmatpush.msra.mxu0 %v7732
    %7741 = vmatpush.msra.mxu0 %v7731
    %7742 = vmatpush.msra.mxu0 %v7730
    %7743 = vmatpush.msra.mxu0 %v7729
    %7744 = vmatpush.msra.mxu0 %v7728
    %7745 = vmatpush.msra.mxu0 %v7727
    %7746 = vmatpush.msra.mxu0 %v7726
    %7747 = vmatpush.msra.mxu0 %v7725
    %7748 = vmatpush.msra.mxu0 %v7724
    %7749 = vmatpush.msra.mxu0 %v7723
    %7750 = vmatpush.msra.mxu0 %v7722
    %7751 = vmatpush.msra.mxu0 %v7721
    %7752 = vmatpush.msra.mxu0 %v7720
    %7753 = vmatmul.f32.gmra.mxu0 %v7735
    %v7754 = vpop.f32.mrf.mxu0
    %v7755 = vadd.f32 0.0, %v7754
    %7756 = vdwg.mxu0
    %v7757 = vadd.f32 %v7716, %v7755
    %v7758 = vld [vmem:[#allocation8 + $0x3] sm:$0x7]
    %s7759 = scalar_lea.vmem %s19, 336
    %v7760 = vld [vmem:[%s7759] sm:$0xff]
    %v7761 = vld [vmem:[%s7759 + $0x8] sm:$0xff]
    %v7762 = vld [vmem:[%s7759 + $0x10] sm:$0xff]
    %v7763 = vld [vmem:[%s7759 + $0x18] sm:$0xff]
    %v7764 = vld [vmem:[%s7759 + $0x20] sm:$0xff]
    %v7765 = vld [vmem:[%s7759 + $0x28] sm:$0xff]
    %v7766 = vld [vmem:[%s7759 + $0x30] sm:$0xff]
    %v7767 = vld [vmem:[%s7759 + $0x38] sm:$0xff]
    %v7768 = vld [vmem:[%s7759 + $0x40] sm:$0xff]
    %v7769 = vld [vmem:[%s7759 + $0x48] sm:$0xff]
    %v7770 = vld [vmem:[%s7759 + $0x50] sm:$0xff]
    %v7771 = vld [vmem:[%s7759 + $0x58] sm:$0xff]
    %v7772 = vld [vmem:[%s7759 + $0x60] sm:$0xff]
    %v7773 = vld [vmem:[%s7759 + $0x68] sm:$0xff]
    %v7775 = vsel %vm188, %v7758, 0
    %7777 = vmatpush.msra.mxu0 0.0
    %7778 = vmatpush.msra.mxu0 0.0
    %7779 = vmatpush.msra.mxu0 %v7773
    %7780 = vmatpush.msra.mxu0 %v7772
    %7781 = vmatpush.msra.mxu0 %v7771
    %7782 = vmatpush.msra.mxu0 %v7770
    %7783 = vmatpush.msra.mxu0 %v7769
    %7784 = vmatpush.msra.mxu0 %v7768
    %7785 = vmatpush.msra.mxu0 %v7767
    %7786 = vmatpush.msra.mxu0 %v7766
    %7787 = vmatpush.msra.mxu0 %v7765
    %7788 = vmatpush.msra.mxu0 %v7764
    %7789 = vmatpush.msra.mxu0 %v7763
    %7790 = vmatpush.msra.mxu0 %v7762
    %7791 = vmatpush.msra.mxu0 %v7761
    %7792 = vmatpush.msra.mxu0 %v7760
    %7793 = vmatmul.f32.gmra.mxu0 %v7775
    %v7794 = vpop.f32.mrf.mxu0
    %v7795 = vadd.f32 0.0, %v7794
    %7796 = vdwg.mxu0
    %v7797 = vadd.f32 %v7757, %v7795
    %v7798 = vld [vmem:[#allocation8 + $0x4] sm:$0x7]
    %s7799 = scalar_lea.vmem %s19, 448
    %v7800 = vld [vmem:[%s7799] sm:$0xff]
    %v7801 = vld [vmem:[%s7799 + $0x8] sm:$0xff]
    %v7802 = vld [vmem:[%s7799 + $0x10] sm:$0xff]
    %v7803 = vld [vmem:[%s7799 + $0x18] sm:$0xff]
    %v7804 = vld [vmem:[%s7799 + $0x20] sm:$0xff]
    %v7805 = vld [vmem:[%s7799 + $0x28] sm:$0xff]
    %v7806 = vld [vmem:[%s7799 + $0x30] sm:$0xff]
    %v7807 = vld [vmem:[%s7799 + $0x38] sm:$0xff]
    %v7808 = vld [vmem:[%s7799 + $0x40] sm:$0xff]
    %v7809 = vld [vmem:[%s7799 + $0x48] sm:$0xff]
    %v7810 = vld [vmem:[%s7799 + $0x50] sm:$0xff]
    %v7811 = vld [vmem:[%s7799 + $0x58] sm:$0xff]
    %v7812 = vld [vmem:[%s7799 + $0x60] sm:$0xff]
    %v7813 = vld [vmem:[%s7799 + $0x68] sm:$0xff]
    %v7815 = vsel %vm188, %v7798, 0
    %7817 = vmatpush.msra.mxu0 0.0
    %7818 = vmatpush.msra.mxu0 0.0
    %7819 = vmatpush.msra.mxu0 %v7813
    %7820 = vmatpush.msra.mxu0 %v7812
    %7821 = vmatpush.msra.mxu0 %v7811
    %7822 = vmatpush.msra.mxu0 %v7810
    %7823 = vmatpush.msra.mxu0 %v7809
    %7824 = vmatpush.msra.mxu0 %v7808
    %7825 = vmatpush.msra.mxu0 %v7807
    %7826 = vmatpush.msra.mxu0 %v7806
    %7827 = vmatpush.msra.mxu0 %v7805
    %7828 = vmatpush.msra.mxu0 %v7804
    %7829 = vmatpush.msra.mxu0 %v7803
    %7830 = vmatpush.msra.mxu0 %v7802
    %7831 = vmatpush.msra.mxu0 %v7801
    %7832 = vmatpush.msra.mxu0 %v7800
    %7833 = vmatmul.f32.gmra.mxu0 %v7815
    %v7834 = vpop.f32.mrf.mxu0
    %v7835 = vadd.f32 0.0, %v7834
    %7836 = vdwg.mxu0
    %v7837 = vadd.f32 %v7797, %v7835
    %v7838 = vld [vmem:[#allocation8 + $0x5] sm:$0x7]
    %s7839 = scalar_lea.vmem %s19, 560
    %v7840 = vld [vmem:[%s7839] sm:$0xff]
    %v7841 = vld [vmem:[%s7839 + $0x8] sm:$0xff]
    %v7842 = vld [vmem:[%s7839 + $0x10] sm:$0xff]
    %v7843 = vld [vmem:[%s7839 + $0x18] sm:$0xff]
    %v7844 = vld [vmem:[%s7839 + $0x20] sm:$0xff]
    %v7845 = vld [vmem:[%s7839 + $0x28] sm:$0xff]
    %v7846 = vld [vmem:[%s7839 + $0x30] sm:$0xff]
    %v7847 = vld [vmem:[%s7839 + $0x38] sm:$0xff]
    %v7848 = vld [vmem:[%s7839 + $0x40] sm:$0xff]
    %v7849 = vld [vmem:[%s7839 + $0x48] sm:$0xff]
    %v7850 = vld [vmem:[%s7839 + $0x50] sm:$0xff]
    %v7851 = vld [vmem:[%s7839 + $0x58] sm:$0xff]
    %v7852 = vld [vmem:[%s7839 + $0x60] sm:$0xff]
    %v7853 = vld [vmem:[%s7839 + $0x68] sm:$0xff]
    %v7855 = vsel %vm188, %v7838, 0
    %7857 = vmatpush.msra.mxu0 0.0
    %7858 = vmatpush.msra.mxu0 0.0
    %7859 = vmatpush.msra.mxu0 %v7853
    %7860 = vmatpush.msra.mxu0 %v7852
    %7861 = vmatpush.msra.mxu0 %v7851
    %7862 = vmatpush.msra.mxu0 %v7850
    %7863 = vmatpush.msra.mxu0 %v7849
    %7864 = vmatpush.msra.mxu0 %v7848
    %7865 = vmatpush.msra.mxu0 %v7847
    %7866 = vmatpush.msra.mxu0 %v7846
    %7867 = vmatpush.msra.mxu0 %v7845
    %7868 = vmatpush.msra.mxu0 %v7844
    %7869 = vmatpush.msra.mxu0 %v7843
    %7870 = vmatpush.msra.mxu0 %v7842
    %7871 = vmatpush.msra.mxu0 %v7841
    %7872 = vmatpush.msra.mxu0 %v7840
    %7873 = vmatmul.f32.gmra.mxu0 %v7855
    %v7874 = vpop.f32.mrf.mxu0
    %v7875 = vadd.f32 0.0, %v7874
    %7876 = vdwg.mxu0
    %v7877 = vadd.f32 %v7837, %v7875
    %v7878 = vld [vmem:[#allocation8 + $0x6] sm:$0x7]
    %s7879 = scalar_lea.vmem %s19, 672
    %v7880 = vld [vmem:[%s7879] sm:$0xff]
    %v7881 = vld [vmem:[%s7879 + $0x8] sm:$0xff]
    %v7882 = vld [vmem:[%s7879 + $0x10] sm:$0xff]
    %v7883 = vld [vmem:[%s7879 + $0x18] sm:$0xff]
    %v7884 = vld [vmem:[%s7879 + $0x20] sm:$0xff]
    %v7885 = vld [vmem:[%s7879 + $0x28] sm:$0xff]
    %v7886 = vld [vmem:[%s7879 + $0x30] sm:$0xff]
    %v7887 = vld [vmem:[%s7879 + $0x38] sm:$0xff]
    %v7888 = vld [vmem:[%s7879 + $0x40] sm:$0xff]
    %v7889 = vld [vmem:[%s7879 + $0x48] sm:$0xff]
    %v7890 = vld [vmem:[%s7879 + $0x50] sm:$0xff]
    %v7891 = vld [vmem:[%s7879 + $0x58] sm:$0xff]
    %v7892 = vld [vmem:[%s7879 + $0x60] sm:$0xff]
    %v7893 = vld [vmem:[%s7879 + $0x68] sm:$0xff]
    %v7895 = vsel %vm188, %v7878, 0
    %7897 = vmatpush.msra.mxu0 0.0
    %7898 = vmatpush.msra.mxu0 0.0
    %7899 = vmatpush.msra.mxu0 %v7893
    %7900 = vmatpush.msra.mxu0 %v7892
    %7901 = vmatpush.msra.mxu0 %v7891
    %7902 = vmatpush.msra.mxu0 %v7890
    %7903 = vmatpush.msra.mxu0 %v7889
    %7904 = vmatpush.msra.mxu0 %v7888
    %7905 = vmatpush.msra.mxu0 %v7887
    %7906 = vmatpush.msra.mxu0 %v7886
    %7907 = vmatpush.msra.mxu0 %v7885
    %7908 = vmatpush.msra.mxu0 %v7884
    %7909 = vmatpush.msra.mxu0 %v7883
    %7910 = vmatpush.msra.mxu0 %v7882
    %7911 = vmatpush.msra.mxu0 %v7881
    %7912 = vmatpush.msra.mxu0 %v7880
    %7913 = vmatmul.f32.gmra.mxu0 %v7895
    %v7914 = vpop.f32.mrf.mxu0
    %v7915 = vadd.f32 0.0, %v7914
    %7916 = vdwg.mxu0
    %v7917 = vadd.f32 %v7877, %v7915
    %v7918 = vld [vmem:[%s20] sm:$0x1]
    %v7920 = vperm.slane %v7918, 0
    %v7922 = vadd.f32 %v7917, %v7920
    %v7923 = vmax.f32 %v7922, 0.0
    %v7924 = vld [vmem:[%s21] sm:$0x1]
    %v7926 = vperm.slane %v7924, 0
    %v7928 = vadd.f32 %v7923, %v7926
    %v7929 = vld [vmem:[%s7639] sm:$0x7]
    %v7930 = vld [vmem:[%s7639 + $0x1] sm:$0x7]
    %v7932 = vsel %vm188, %v7930, 0
    %7934 = vmatpush.msra.mxu0 0.0
    %7935 = vmatpush.msra.mxu0 0.0
    %7936 = vmatpush.msra.mxu0 %v7671
    %7937 = vmatpush.msra.mxu0 %v7670
    %7938 = vmatpush.msra.mxu0 %v7669
    %7939 = vmatpush.msra.mxu0 %v7668
    %7940 = vmatpush.msra.mxu0 %v7667
    %7941 = vmatpush.msra.mxu0 %v7666
    %7942 = vmatpush.msra.mxu0 %v7665
    %7943 = vmatpush.msra.mxu0 %v7664
    %7944 = vmatpush.msra.mxu0 %v7663
    %7945 = vmatpush.msra.mxu0 %v7662
    %7946 = vmatpush.msra.mxu0 %v7661
    %7947 = vmatpush.msra.mxu0 %v7660
    %7948 = vmatpush.msra.mxu0 %v7659
    %7949 = vmatpush.msra.mxu0 %v7658
    %7950 = vmatmul.f32.gmra.mxu0 %v7932
    %v7951 = vpop.f32.mrf.mxu0
    %v7952 = vadd.f32 0.0, %v7951
    %7953 = vdwg.mxu0
    %v7955 = vsel %vm188, %v7929, 0
    %7957 = vmatpush.msra.mxu0 0.0
    %7958 = vmatpush.msra.mxu0 0.0
    %7959 = vmatpush.msra.mxu0 %v7655
    %7960 = vmatpush.msra.mxu0 %v7654
    %7961 = vmatpush.msra.mxu0 %v7653
    %7962 = vmatpush.msra.mxu0 %v7652
    %7963 = vmatpush.msra.mxu0 %v7651
    %7964 = vmatpush.msra.mxu0 %v7650
    %7965 = vmatpush.msra.mxu0 %v7649
    %7966 = vmatpush.msra.mxu0 %v7648
    %7967 = vmatpush.msra.mxu0 %v7647
    %7968 = vmatpush.msra.mxu0 %v7646
    %7969 = vmatpush.msra.mxu0 %v7645
    %7970 = vmatpush.msra.mxu0 %v7644
    %7971 = vmatpush.msra.mxu0 %v7643
    %7972 = vmatpush.msra.mxu0 %v7642
    %7973 = vmatmul.f32.gmra.mxu0 %v7955
    %v7974 = vpop.f32.mrf.mxu0
    %v7975 = vadd.f32 %v7952, %v7974
    %7976 = vdwg.mxu0
    %v7977 = vld [vmem:[%s7639 + $0x2] sm:$0x7]
    %v7979 = vsel %vm188, %v7977, 0
    %7981 = vmatpush.msra.mxu0 0.0
    %7982 = vmatpush.msra.mxu0 0.0
    %7983 = vmatpush.msra.mxu0 %v7733
    %7984 = vmatpush.msra.mxu0 %v7732
    %7985 = vmatpush.msra.mxu0 %v7731
    %7986 = vmatpush.msra.mxu0 %v7730
    %7987 = vmatpush.msra.mxu0 %v7729
    %7988 = vmatpush.msra.mxu0 %v7728
    %7989 = vmatpush.msra.mxu0 %v7727
    %7990 = vmatpush.msra.mxu0 %v7726
    %7991 = vmatpush.msra.mxu0 %v7725
    %7992 = vmatpush.msra.mxu0 %v7724
    %7993 = vmatpush.msra.mxu0 %v7723
    %7994 = vmatpush.msra.mxu0 %v7722
    %7995 = vmatpush.msra.mxu0 %v7721
    %7996 = vmatpush.msra.mxu0 %v7720
    %7997 = vmatmul.f32.gmra.mxu0 %v7979
    %v7998 = vpop.f32.mrf.mxu0
    %v7999 = vadd.f32 0.0, %v7998
    %8000 = vdwg.mxu0
    %v8001 = vadd.f32 %v7975, %v7999
    %v8002 = vld [vmem:[%s7639 + $0x3] sm:$0x7]
    %v8004 = vsel %vm188, %v8002, 0
    %8006 = vmatpush.msra.mxu0 0.0
    %8007 = vmatpush.msra.mxu0 0.0
    %8008 = vmatpush.msra.mxu0 %v7773
    %8009 = vmatpush.msra.mxu0 %v7772
    %8010 = vmatpush.msra.mxu0 %v7771
    %8011 = vmatpush.msra.mxu0 %v7770
    %8012 = vmatpush.msra.mxu0 %v7769
    %8013 = vmatpush.msra.mxu0 %v7768
    %8014 = vmatpush.msra.mxu0 %v7767
    %8015 = vmatpush.msra.mxu0 %v7766
    %8016 = vmatpush.msra.mxu0 %v7765
    %8017 = vmatpush.msra.mxu0 %v7764
    %8018 = vmatpush.msra.mxu0 %v7763
    %8019 = vmatpush.msra.mxu0 %v7762
    %8020 = vmatpush.msra.mxu0 %v7761
    %8021 = vmatpush.msra.mxu0 %v7760
    %8022 = vmatmul.f32.gmra.mxu0 %v8004
    %v8023 = vpop.f32.mrf.mxu0
    %v8024 = vadd.f32 0.0, %v8023
    %8025 = vdwg.mxu0
    %v8026 = vadd.f32 %v8001, %v8024
    %v8027 = vld [vmem:[%s7639 + $0x4] sm:$0x7]
    %v8029 = vsel %vm188, %v8027, 0
    %8031 = vmatpush.msra.mxu0 0.0
    %8032 = vmatpush.msra.mxu0 0.0
    %8033 = vmatpush.msra.mxu0 %v7813
    %8034 = vmatpush.msra.mxu0 %v7812
    %8035 = vmatpush.msra.mxu0 %v7811
    %8036 = vmatpush.msra.mxu0 %v7810
    %8037 = vmatpush.msra.mxu0 %v7809
    %8038 = vmatpush.msra.mxu0 %v7808
    %8039 = vmatpush.msra.mxu0 %v7807
    %8040 = vmatpush.msra.mxu0 %v7806
    %8041 = vmatpush.msra.mxu0 %v7805
    %8042 = vmatpush.msra.mxu0 %v7804
    %8043 = vmatpush.msra.mxu0 %v7803
    %8044 = vmatpush.msra.mxu0 %v7802
    %8045 = vmatpush.msra.mxu0 %v7801
    %8046 = vmatpush.msra.mxu0 %v7800
    %8047 = vmatmul.f32.gmra.mxu0 %v8029
    %v8048 = vpop.f32.mrf.mxu0
    %v8049 = vadd.f32 0.0, %v8048
    %8050 = vdwg.mxu0
    %v8051 = vadd.f32 %v8026, %v8049
    %v8052 = vld [vmem:[%s7639 + $0x5] sm:$0x7]
    %v8054 = vsel %vm188, %v8052, 0
    %8056 = vmatpush.msra.mxu0 0.0
    %8057 = vmatpush.msra.mxu0 0.0
    %8058 = vmatpush.msra.mxu0 %v7853
    %8059 = vmatpush.msra.mxu0 %v7852
    %8060 = vmatpush.msra.mxu0 %v7851
    %8061 = vmatpush.msra.mxu0 %v7850
    %8062 = vmatpush.msra.mxu0 %v7849
    %8063 = vmatpush.msra.mxu0 %v7848
    %8064 = vmatpush.msra.mxu0 %v7847
    %8065 = vmatpush.msra.mxu0 %v7846
    %8066 = vmatpush.msra.mxu0 %v7845
    %8067 = vmatpush.msra.mxu0 %v7844
    %8068 = vmatpush.msra.mxu0 %v7843
    %8069 = vmatpush.msra.mxu0 %v7842
    %8070 = vmatpush.msra.mxu0 %v7841
    %8071 = vmatpush.msra.mxu0 %v7840
    %8072 = vmatmul.f32.gmra.mxu0 %v8054
    %v8073 = vpop.f32.mrf.mxu0
    %v8074 = vadd.f32 0.0, %v8073
    %8075 = vdwg.mxu0
    %v8076 = vadd.f32 %v8051, %v8074
    %v8077 = vld [vmem:[%s7639 + $0x6] sm:$0x7]
    %v8079 = vsel %vm188, %v8077, 0
    %8081 = vmatpush.msra.mxu0 0.0
    %8082 = vmatpush.msra.mxu0 0.0
    %8083 = vmatpush.msra.mxu0 %v7893
    %8084 = vmatpush.msra.mxu0 %v7892
    %8085 = vmatpush.msra.mxu0 %v7891
    %8086 = vmatpush.msra.mxu0 %v7890
    %8087 = vmatpush.msra.mxu0 %v7889
    %8088 = vmatpush.msra.mxu0 %v7888
    %8089 = vmatpush.msra.mxu0 %v7887
    %8090 = vmatpush.msra.mxu0 %v7886
    %8091 = vmatpush.msra.mxu0 %v7885
    %8092 = vmatpush.msra.mxu0 %v7884
    %8093 = vmatpush.msra.mxu0 %v7883
    %8094 = vmatpush.msra.mxu0 %v7882
    %8095 = vmatpush.msra.mxu0 %v7881
    %8096 = vmatpush.msra.mxu0 %v7880
    %8097 = vmatmul.f32.gmra.mxu0 %v8079
    %v8098 = vpop.f32.mrf.mxu0
    %v8099 = vadd.f32 0.0, %v8098
    %8100 = vdwg.mxu0
    %v8101 = vadd.f32 %v8076, %v8099
    %v8102 = vadd.f32 %v8101, %v7920
    %v8103 = vmax.f32 %v8102, 0.0
    %v8104 = vadd.f32 %v8103, %v7926
    %v8105 = vld [vmem:[%s23] sm:$0x3]
    %v8106 = vld [vmem:[%s22] sm:$0xff]
    %v8107 = vld [vmem:[%s22 + $0x8] sm:$0xff]
    %v8108 = vld [vmem:[%s22 + $0x10] sm:$0xff]
    %v8109 = vld [vmem:[%s22 + $0x18] sm:$0xff]
    %v8110 = vld [vmem:[%s22 + $0x20] sm:$0x3]
    %v8111 = vld [vmem:[%s22 + $0x28] sm:$0x3]
    %vm8112 = vcmask 146432
    %v8114 = vsel %vm8112, %v7928, 0
    %vm8116 = vcmask 1041408
    %v8118 = vsel %vm8116, %v8110, 0
    %v8121 = vsel %vm8116, %v8111, 0
    %8123 = vmatpush.msra.mxu0 0.0
    %8124 = vmatpush.msra.mxu0 0.0
    %8125 = vmatpush.msra.mxu0 0.0
    %8126 = vmatpush.msra.mxu0 0.0
    %8127 = vmatpush.msra.mxu0 0.0
    %8128 = vmatpush.msra.mxu0 0.0
    %8129 = vmatpush.msra.mxu0 0.0
    %8130 = vmatpush.msra.mxu0 0.0
    %8131 = vmatpush.msra.mxu0 0.0
    %8132 = vmatpush.msra.mxu0 0.0
    %8133 = vmatpush.msra.mxu0 0.0
    %8134 = vmatpush.msra.mxu0 0.0
    %8135 = vmatpush.msra.mxu0 0.0
    %8136 = vmatpush.msra.mxu0 %v8118
    %8137 = vmatpush.msra.mxu0 %v8108
    %8138 = vmatpush.msra.mxu0 %v8106
    %8139 = vmatmul.f32.gmra.mxu0 %v8114
    %v8140 = vpop.f32.mrf.mxu0
    %v8141 = vadd.f32 0.0, %v8140
    %8142 = vdwg.mxu0
    %8143 = vmatpush.msra.mxu0 0.0
    %8144 = vmatpush.msra.mxu0 0.0
    %8145 = vmatpush.msra.mxu0 0.0
    %8146 = vmatpush.msra.mxu0 0.0
    %8147 = vmatpush.msra.mxu0 0.0
    %8148 = vmatpush.msra.mxu0 0.0
    %8149 = vmatpush.msra.mxu0 0.0
    %8150 = vmatpush.msra.mxu0 0.0
    %8151 = vmatpush.msra.mxu0 0.0
    %8152 = vmatpush.msra.mxu0 0.0
    %8153 = vmatpush.msra.mxu0 0.0
    %8154 = vmatpush.msra.mxu0 0.0
    %8155 = vmatpush.msra.mxu0 0.0
    %8156 = vmatpush.msra.mxu0 %v8121
    %8157 = vmatpush.msra.mxu0 %v8109
    %8158 = vmatpush.msra.mxu0 %v8107
    %8159 = vmatmul.f32.gmra.mxu0 %v8114
    %v8160 = vpop.f32.mrf.mxu0
    %v8161 = vadd.f32 0.0, %v8160
    %8162 = vdwg.mxu0
    %v8165 = vrot.slane %v8161, 7
    %v8166 = vsel %vm382, %v8141, %v8165
    %v8168 = vadd.f32 %v8105, %v8166
    %s8169 = scalar_lea.vmem %s22, 48
    %v8170 = vld [vmem:[%s8169] sm:$0xff]
    %v8171 = vld [vmem:[%s8169 + $0x8] sm:$0xff]
    %v8172 = vld [vmem:[%s8169 + $0x10] sm:$0xff]
    %v8173 = vld [vmem:[%s8169 + $0x18] sm:$0xff]
    %v8174 = vld [vmem:[%s8169 + $0x20] sm:$0x3]
    %v8175 = vld [vmem:[%s8169 + $0x28] sm:$0x3]
    %v8176 = vrot.slane %v7928, 1
    %v8177 = vsel %vm8112, %v8176, 0
    %v8180 = vsel %vm8116, %v8174, 0
    %v8183 = vsel %vm8116, %v8175, 0
    %8185 = vmatpush.msra.mxu0 0.0
    %8186 = vmatpush.msra.mxu0 0.0
    %8187 = vmatpush.msra.mxu0 0.0
    %8188 = vmatpush.msra.mxu0 0.0
    %8189 = vmatpush.msra.mxu0 0.0
    %8190 = vmatpush.msra.mxu0 0.0
    %8191 = vmatpush.msra.mxu0 0.0
    %8192 = vmatpush.msra.mxu0 0.0
    %8193 = vmatpush.msra.mxu0 0.0
    %8194 = vmatpush.msra.mxu0 0.0
    %8195 = vmatpush.msra.mxu0 0.0
    %8196 = vmatpush.msra.mxu0 0.0
    %8197 = vmatpush.msra.mxu0 0.0
    %8198 = vmatpush.msra.mxu0 %v8180
    %8199 = vmatpush.msra.mxu0 %v8172
    %8200 = vmatpush.msra.mxu0 %v8170
    %8201 = vmatmul.f32.gmra.mxu0 %v8177
    %v8202 = vpop.f32.mrf.mxu0
    %v8203 = vadd.f32 0.0, %v8202
    %8204 = vdwg.mxu0
    %8205 = vmatpush.msra.mxu0 0.0
    %8206 = vmatpush.msra.mxu0 0.0
    %8207 = vmatpush.msra.mxu0 0.0
    %8208 = vmatpush.msra.mxu0 0.0
    %8209 = vmatpush.msra.mxu0 0.0
    %8210 = vmatpush.msra.mxu0 0.0
    %8211 = vmatpush.msra.mxu0 0.0
    %8212 = vmatpush.msra.mxu0 0.0
    %8213 = vmatpush.msra.mxu0 0.0
    %8214 = vmatpush.msra.mxu0 0.0
    %8215 = vmatpush.msra.mxu0 0.0
    %8216 = vmatpush.msra.mxu0 0.0
    %8217 = vmatpush.msra.mxu0 0.0
    %8218 = vmatpush.msra.mxu0 %v8183
    %8219 = vmatpush.msra.mxu0 %v8173
    %8220 = vmatpush.msra.mxu0 %v8171
    %8221 = vmatmul.f32.gmra.mxu0 %v8177
    %v8222 = vpop.f32.mrf.mxu0
    %v8223 = vadd.f32 0.0, %v8222
    %8224 = vdwg.mxu0
    %v8227 = vrot.slane %v8223, 7
    %v8228 = vsel %vm382, %v8203, %v8227
    %v8230 = vadd.f32 %v8168, %v8228
    %s8231 = scalar_lea.vmem %s22, 96
    %v8232 = vld [vmem:[%s8231] sm:$0xff]
    %v8233 = vld [vmem:[%s8231 + $0x8] sm:$0xff]
    %v8234 = vld [vmem:[%s8231 + $0x10] sm:$0xff]
    %v8235 = vld [vmem:[%s8231 + $0x18] sm:$0xff]
    %v8236 = vld [vmem:[%s8231 + $0x20] sm:$0x3]
    %v8237 = vld [vmem:[%s8231 + $0x28] sm:$0x3]
    %v8238 = vrot.slane %v7928, 2
    %v8239 = vsel %vm8112, %v8238, 0
    %v8242 = vsel %vm8116, %v8236, 0
    %v8245 = vsel %vm8116, %v8237, 0
    %8247 = vmatpush.msra.mxu0 0.0
    %8248 = vmatpush.msra.mxu0 0.0
    %8249 = vmatpush.msra.mxu0 0.0
    %8250 = vmatpush.msra.mxu0 0.0
    %8251 = vmatpush.msra.mxu0 0.0
    %8252 = vmatpush.msra.mxu0 0.0
    %8253 = vmatpush.msra.mxu0 0.0
    %8254 = vmatpush.msra.mxu0 0.0
    %8255 = vmatpush.msra.mxu0 0.0
    %8256 = vmatpush.msra.mxu0 0.0
    %8257 = vmatpush.msra.mxu0 0.0
    %8258 = vmatpush.msra.mxu0 0.0
    %8259 = vmatpush.msra.mxu0 0.0
    %8260 = vmatpush.msra.mxu0 %v8242
    %8261 = vmatpush.msra.mxu0 %v8234
    %8262 = vmatpush.msra.mxu0 %v8232
    %8263 = vmatmul.f32.gmra.mxu0 %v8239
    %v8264 = vpop.f32.mrf.mxu0
    %v8265 = vadd.f32 0.0, %v8264
    %8266 = vdwg.mxu0
    %8267 = vmatpush.msra.mxu0 0.0
    %8268 = vmatpush.msra.mxu0 0.0
    %8269 = vmatpush.msra.mxu0 0.0
    %8270 = vmatpush.msra.mxu0 0.0
    %8271 = vmatpush.msra.mxu0 0.0
    %8272 = vmatpush.msra.mxu0 0.0
    %8273 = vmatpush.msra.mxu0 0.0
    %8274 = vmatpush.msra.mxu0 0.0
    %8275 = vmatpush.msra.mxu0 0.0
    %8276 = vmatpush.msra.mxu0 0.0
    %8277 = vmatpush.msra.mxu0 0.0
    %8278 = vmatpush.msra.mxu0 0.0
    %8279 = vmatpush.msra.mxu0 0.0
    %8280 = vmatpush.msra.mxu0 %v8245
    %8281 = vmatpush.msra.mxu0 %v8235
    %8282 = vmatpush.msra.mxu0 %v8233
    %8283 = vmatmul.f32.gmra.mxu0 %v8239
    %v8284 = vpop.f32.mrf.mxu0
    %v8285 = vadd.f32 0.0, %v8284
    %8286 = vdwg.mxu0
    %v8289 = vrot.slane %v8285, 7
    %v8290 = vsel %vm382, %v8265, %v8289
    %v8292 = vadd.f32 %v8230, %v8290
    %v8293 = vmax.f32 %v8292, 0.0
    %v8294 = vld [vmem:[%s24] sm:$0xff]
    %v8295 = vld [vmem:[%s24 + $0x8] sm:$0xff]
    %v8296 = vld [vmem:[%s24 + $0x10] sm:$0xff]
    %v8297 = vld [vmem:[%s24 + $0x18] sm:$0xff]
    %v8298 = vld [vmem:[%s24 + $0x20] sm:$0xff]
    %v8299 = vld [vmem:[%s24 + $0x28] sm:$0xff]
    %v8300 = vld [vmem:[%s24 + $0x30] sm:$0xff]
    %v8301 = vld [vmem:[%s24 + $0x38] sm:$0xff]
    %v8302 = vld [vmem:[%s24 + $0x40] sm:$0xff]
    %v8303 = vld [vmem:[%s24 + $0x48] sm:$0xff]
    %v8304 = vld [vmem:[%s24 + $0x50] sm:$0xff]
    %v8305 = vld [vmem:[%s24 + $0x58] sm:$0xff]
    %v8306 = vld [vmem:[%s24 + $0x60] sm:$0xff]
    %v8307 = vld [vmem:[%s24 + $0x68] sm:$0xff]
    %v8308 = vld [vmem:[%s24 + $0x70] sm:$0xff]
    %v8309 = vld [vmem:[%s24 + $0x78] sm:$0xff]
    %v8310 = vld [vmem:[%s24 + $0x80] sm:$0xff]
    %v8311 = vld [vmem:[%s24 + $0x88] sm:$0xff]
    %v8312 = vld [vmem:[%s24 + $0x90] sm:$0xff]
    %v8313 = vld [vmem:[%s24 + $0x98] sm:$0xff]
    %v8314 = vld [vmem:[%s24 + $0xa0] sm:$0xff]
    %v8315 = vld [vmem:[%s24 + $0xa8] sm:$0xff]
    %v8316 = vld [vmem:[%s24 + $0xb0] sm:$0xff]
    %v8317 = vld [vmem:[%s24 + $0xb8] sm:$0xff]
    %v8318 = vld [vmem:[%s24 + $0xc0] sm:$0xff]
    %v8319 = vld [vmem:[%s24 + $0xc8] sm:$0xff]
    %v8320 = vld [vmem:[%s24 + $0xd0] sm:$0xff]
    %v8321 = vld [vmem:[%s25] sm:$0x1]
    %v8323 = vperm.slane %v8293, 0
    %v8324 = vperm.slane %v8293, 1
    %vm8326 = vcmask 719872
    %v8327 = vsel %vm8326, %v8324, 0
    %8329 = vmatpush.msra.mxu0 %v8309
    %8330 = vmatpush.msra.mxu0 %v8308
    %8331 = vmatpush.msra.mxu0 %v8307
    %8332 = vmatpush.msra.mxu0 %v8306
    %8333 = vmatpush.msra.mxu0 %v8305
    %8334 = vmatpush.msra.mxu0 %v8304
    %8335 = vmatpush.msra.mxu0 %v8303
    %8336 = vmatpush.msra.mxu0 %v8302
    %8337 = vmatpush.msra.mxu0 %v8301
    %8338 = vmatpush.msra.mxu0 %v8300
    %8339 = vmatpush.msra.mxu0 %v8299
    %8340 = vmatpush.msra.mxu0 %v8298
    %8341 = vmatpush.msra.mxu0 %v8297
    %8342 = vmatpush.msra.mxu0 %v8296
    %8343 = vmatpush.msra.mxu0 %v8295
    %8344 = vmatpush.msra.mxu0 %v8294
    %8345 = vmatmul.f32.gmra.mxu0 %v8323
    %v8346 = vpop.f32.mrf.mxu0
    %v8347 = vadd.f32 %v8321, %v8346
    %8348 = vdwg.mxu0
    %8349 = vmatpush.msra.mxu0 0.0
    %8350 = vmatpush.msra.mxu0 0.0
    %8351 = vmatpush.msra.mxu0 0.0
    %8352 = vmatpush.msra.mxu0 0.0
    %8353 = vmatpush.msra.mxu0 0.0
    %8354 = vmatpush.msra.mxu0 %v8320
    %8355 = vmatpush.msra.mxu0 %v8319
    %8356 = vmatpush.msra.mxu0 %v8318
    %8357 = vmatpush.msra.mxu0 %v8317
    %8358 = vmatpush.msra.mxu0 %v8316
    %8359 = vmatpush.msra.mxu0 %v8315
    %8360 = vmatpush.msra.mxu0 %v8314
    %8361 = vmatpush.msra.mxu0 %v8313
    %8362 = vmatpush.msra.mxu0 %v8312
    %8363 = vmatpush.msra.mxu0 %v8311
    %8364 = vmatpush.msra.mxu0 %v8310
    %8365 = vmatmul.f32.gmra.mxu0 %v8327
    %v8366 = vpop.f32.mrf.mxu0
    %v8367 = vadd.f32 %v8347, %v8366
    %8368 = vdwg.mxu0
    %vm8369 = vcmask 131072
    %8370 = vst.msk [vmem:[#allocation9] sm:$0x1] %vm8369, %v8367
    %v8371 = vld [vmem:[%s23] sm:$0x3]
    %v8372 = vld [vmem:[%s22] sm:$0xff]
    %v8373 = vld [vmem:[%s22 + $0x8] sm:$0xff]
    %v8374 = vld [vmem:[%s22 + $0x10] sm:$0xff]
    %v8375 = vld [vmem:[%s22 + $0x18] sm:$0xff]
    %v8376 = vld [vmem:[%s22 + $0x20] sm:$0x3]
    %v8377 = vld [vmem:[%s22 + $0x28] sm:$0x3]
    %v8379 = vsel %vm8112, %v8104, 0
    %v8382 = vsel %vm8116, %v8376, 0
    %v8385 = vsel %vm8116, %v8377, 0
    %8387 = vmatpush.msra.mxu0 0.0
    %8388 = vmatpush.msra.mxu0 0.0
    %8389 = vmatpush.msra.mxu0 0.0
    %8390 = vmatpush.msra.mxu0 0.0
    %8391 = vmatpush.msra.mxu0 0.0
    %8392 = vmatpush.msra.mxu0 0.0
    %8393 = vmatpush.msra.mxu0 0.0
    %8394 = vmatpush.msra.mxu0 0.0
    %8395 = vmatpush.msra.mxu0 0.0
    %8396 = vmatpush.msra.mxu0 0.0
    %8397 = vmatpush.msra.mxu0 0.0
    %8398 = vmatpush.msra.mxu0 0.0
    %8399 = vmatpush.msra.mxu0 0.0
    %8400 = vmatpush.msra.mxu0 %v8382
    %8401 = vmatpush.msra.mxu0 %v8374
    %8402 = vmatpush.msra.mxu0 %v8372
    %8403 = vmatmul.f32.gmra.mxu0 %v8379
    %v8404 = vpop.f32.mrf.mxu0
    %v8405 = vadd.f32 0.0, %v8404
    %8406 = vdwg.mxu0
    %8407 = vmatpush.msra.mxu0 0.0
    %8408 = vmatpush.msra.mxu0 0.0
    %8409 = vmatpush.msra.mxu0 0.0
    %8410 = vmatpush.msra.mxu0 0.0
    %8411 = vmatpush.msra.mxu0 0.0
    %8412 = vmatpush.msra.mxu0 0.0
    %8413 = vmatpush.msra.mxu0 0.0
    %8414 = vmatpush.msra.mxu0 0.0
    %8415 = vmatpush.msra.mxu0 0.0
    %8416 = vmatpush.msra.mxu0 0.0
    %8417 = vmatpush.msra.mxu0 0.0
    %8418 = vmatpush.msra.mxu0 0.0
    %8419 = vmatpush.msra.mxu0 0.0
    %8420 = vmatpush.msra.mxu0 %v8385
    %8421 = vmatpush.msra.mxu0 %v8375
    %8422 = vmatpush.msra.mxu0 %v8373
    %8423 = vmatmul.f32.gmra.mxu0 %v8379
    %v8424 = vpop.f32.mrf.mxu0
    %v8425 = vadd.f32 0.0, %v8424
    %8426 = vdwg.mxu0
    %v8429 = vrot.slane %v8425, 7
    %v8430 = vsel %vm382, %v8405, %v8429
    %v8432 = vadd.f32 %v8371, %v8430
    %v8433 = vld [vmem:[%s8169] sm:$0xff]
    %v8434 = vld [vmem:[%s8169 + $0x8] sm:$0xff]
    %v8435 = vld [vmem:[%s8169 + $0x10] sm:$0xff]
    %v8436 = vld [vmem:[%s8169 + $0x18] sm:$0xff]
    %v8437 = vld [vmem:[%s8169 + $0x20] sm:$0x3]
    %v8438 = vld [vmem:[%s8169 + $0x28] sm:$0x3]
    %v8439 = vrot.slane %v8104, 1
    %v8440 = vsel %vm8112, %v8439, 0
    %v8443 = vsel %vm8116, %v8437, 0
    %v8446 = vsel %vm8116, %v8438, 0
    %8448 = vmatpush.msra.mxu0 0.0
    %8449 = vmatpush.msra.mxu0 0.0
    %8450 = vmatpush.msra.mxu0 0.0
    %8451 = vmatpush.msra.mxu0 0.0
    %8452 = vmatpush.msra.mxu0 0.0
    %8453 = vmatpush.msra.mxu0 0.0
    %8454 = vmatpush.msra.mxu0 0.0
    %8455 = vmatpush.msra.mxu0 0.0
    %8456 = vmatpush.msra.mxu0 0.0
    %8457 = vmatpush.msra.mxu0 0.0
    %8458 = vmatpush.msra.mxu0 0.0
    %8459 = vmatpush.msra.mxu0 0.0
    %8460 = vmatpush.msra.mxu0 0.0
    %8461 = vmatpush.msra.mxu0 %v8443
    %8462 = vmatpush.msra.mxu0 %v8435
    %8463 = vmatpush.msra.mxu0 %v8433
    %8464 = vmatmul.f32.gmra.mxu0 %v8440
    %v8465 = vpop.f32.mrf.mxu0
    %v8466 = vadd.f32 0.0, %v8465
    %8467 = vdwg.mxu0
    %8468 = vmatpush.msra.mxu0 0.0
    %8469 = vmatpush.msra.mxu0 0.0
    %8470 = vmatpush.msra.mxu0 0.0
    %8471 = vmatpush.msra.mxu0 0.0
    %8472 = vmatpush.msra.mxu0 0.0
    %8473 = vmatpush.msra.mxu0 0.0
    %8474 = vmatpush.msra.mxu0 0.0
    %8475 = vmatpush.msra.mxu0 0.0
    %8476 = vmatpush.msra.mxu0 0.0
    %8477 = vmatpush.msra.mxu0 0.0
    %8478 = vmatpush.msra.mxu0 0.0
    %8479 = vmatpush.msra.mxu0 0.0
    %8480 = vmatpush.msra.mxu0 0.0
    %8481 = vmatpush.msra.mxu0 %v8446
    %8482 = vmatpush.msra.mxu0 %v8436
    %8483 = vmatpush.msra.mxu0 %v8434
    %8484 = vmatmul.f32.gmra.mxu0 %v8440
    %v8485 = vpop.f32.mrf.mxu0
    %v8486 = vadd.f32 0.0, %v8485
    %8487 = vdwg.mxu0
    %v8490 = vrot.slane %v8486, 7
    %v8491 = vsel %vm382, %v8466, %v8490
    %v8493 = vadd.f32 %v8432, %v8491
    %v8494 = vld [vmem:[%s8231] sm:$0xff]
    %v8495 = vld [vmem:[%s8231 + $0x8] sm:$0xff]
    %v8496 = vld [vmem:[%s8231 + $0x10] sm:$0xff]
    %v8497 = vld [vmem:[%s8231 + $0x18] sm:$0xff]
    %v8498 = vld [vmem:[%s8231 + $0x20] sm:$0x3]
    %v8499 = vld [vmem:[%s8231 + $0x28] sm:$0x3]
    %v8500 = vrot.slane %v8104, 2
    %v8501 = vsel %vm8112, %v8500, 0
    %v8504 = vsel %vm8116, %v8498, 0
    %v8507 = vsel %vm8116, %v8499, 0
    %8509 = vmatpush.msra.mxu0 0.0
    %8510 = vmatpush.msra.mxu0 0.0
    %8511 = vmatpush.msra.mxu0 0.0
    %8512 = vmatpush.msra.mxu0 0.0
    %8513 = vmatpush.msra.mxu0 0.0
    %8514 = vmatpush.msra.mxu0 0.0
    %8515 = vmatpush.msra.mxu0 0.0
    %8516 = vmatpush.msra.mxu0 0.0
    %8517 = vmatpush.msra.mxu0 0.0
    %8518 = vmatpush.msra.mxu0 0.0
    %8519 = vmatpush.msra.mxu0 0.0
    %8520 = vmatpush.msra.mxu0 0.0
    %8521 = vmatpush.msra.mxu0 0.0
    %8522 = vmatpush.msra.mxu0 %v8504
    %8523 = vmatpush.msra.mxu0 %v8496
    %8524 = vmatpush.msra.mxu0 %v8494
    %8525 = vmatmul.f32.gmra.mxu0 %v8501
    %v8526 = vpop.f32.mrf.mxu0
    %v8527 = vadd.f32 0.0, %v8526
    %8528 = vdwg.mxu0
    %8529 = vmatpush.msra.mxu0 0.0
    %8530 = vmatpush.msra.mxu0 0.0
    %8531 = vmatpush.msra.mxu0 0.0
    %8532 = vmatpush.msra.mxu0 0.0
    %8533 = vmatpush.msra.mxu0 0.0
    %8534 = vmatpush.msra.mxu0 0.0
    %8535 = vmatpush.msra.mxu0 0.0
    %8536 = vmatpush.msra.mxu0 0.0
    %8537 = vmatpush.msra.mxu0 0.0
    %8538 = vmatpush.msra.mxu0 0.0
    %8539 = vmatpush.msra.mxu0 0.0
    %8540 = vmatpush.msra.mxu0 0.0
    %8541 = vmatpush.msra.mxu0 0.0
    %8542 = vmatpush.msra.mxu0 %v8507
    %8543 = vmatpush.msra.mxu0 %v8497
    %8544 = vmatpush.msra.mxu0 %v8495
    %8545 = vmatmul.f32.gmra.mxu0 %v8501
    %v8546 = vpop.f32.mrf.mxu0
    %v8547 = vadd.f32 0.0, %v8546
    %8548 = vdwg.mxu0
    %v8551 = vrot.slane %v8547, 7
    %v8552 = vsel %vm382, %v8527, %v8551
    %v8554 = vadd.f32 %v8493, %v8552
    %v8555 = vmax.f32 %v8554, 0.0
    %v8556 = vld [vmem:[%s24] sm:$0xff]
    %v8557 = vld [vmem:[%s24 + $0x8] sm:$0xff]
    %v8558 = vld [vmem:[%s24 + $0x10] sm:$0xff]
    %v8559 = vld [vmem:[%s24 + $0x18] sm:$0xff]
    %v8560 = vld [vmem:[%s24 + $0x20] sm:$0xff]
    %v8561 = vld [vmem:[%s24 + $0x28] sm:$0xff]
    %v8562 = vld [vmem:[%s24 + $0x30] sm:$0xff]
    %v8563 = vld [vmem:[%s24 + $0x38] sm:$0xff]
    %v8564 = vld [vmem:[%s24 + $0x40] sm:$0xff]
    %v8565 = vld [vmem:[%s24 + $0x48] sm:$0xff]
    %v8566 = vld [vmem:[%s24 + $0x50] sm:$0xff]
    %v8567 = vld [vmem:[%s24 + $0x58] sm:$0xff]
    %v8568 = vld [vmem:[%s24 + $0x60] sm:$0xff]
    %v8569 = vld [vmem:[%s24 + $0x68] sm:$0xff]
    %v8570 = vld [vmem:[%s24 + $0x70] sm:$0xff]
    %v8571 = vld [vmem:[%s24 + $0x78] sm:$0xff]
    %v8572 = vld [vmem:[%s24 + $0x80] sm:$0xff]
    %v8573 = vld [vmem:[%s24 + $0x88] sm:$0xff]
    %v8574 = vld [vmem:[%s24 + $0x90] sm:$0xff]
    %v8575 = vld [vmem:[%s24 + $0x98] sm:$0xff]
    %v8576 = vld [vmem:[%s24 + $0xa0] sm:$0xff]
    %v8577 = vld [vmem:[%s24 + $0xa8] sm:$0xff]
    %v8578 = vld [vmem:[%s24 + $0xb0] sm:$0xff]
    %v8579 = vld [vmem:[%s24 + $0xb8] sm:$0xff]
    %v8580 = vld [vmem:[%s24 + $0xc0] sm:$0xff]
    %v8581 = vld [vmem:[%s24 + $0xc8] sm:$0xff]
    %v8582 = vld [vmem:[%s24 + $0xd0] sm:$0xff]
    %v8583 = vld [vmem:[%s25] sm:$0x1]
    %v8585 = vperm.slane %v8555, 0
    %v8586 = vperm.slane %v8555, 1
    %v8588 = vsel %vm8326, %v8586, 0
    %8590 = vmatpush.msra.mxu0 %v8571
    %8591 = vmatpush.msra.mxu0 %v8570
    %8592 = vmatpush.msra.mxu0 %v8569
    %8593 = vmatpush.msra.mxu0 %v8568
    %8594 = vmatpush.msra.mxu0 %v8567
    %8595 = vmatpush.msra.mxu0 %v8566
    %8596 = vmatpush.msra.mxu0 %v8565
    %8597 = vmatpush.msra.mxu0 %v8564
    %8598 = vmatpush.msra.mxu0 %v8563
    %8599 = vmatpush.msra.mxu0 %v8562
    %8600 = vmatpush.msra.mxu0 %v8561
    %8601 = vmatpush.msra.mxu0 %v8560
    %8602 = vmatpush.msra.mxu0 %v8559
    %8603 = vmatpush.msra.mxu0 %v8558
    %8604 = vmatpush.msra.mxu0 %v8557
    %8605 = vmatpush.msra.mxu0 %v8556
    %8606 = vmatmul.f32.gmra.mxu0 %v8585
    %v8607 = vpop.f32.mrf.mxu0
    %v8608 = vadd.f32 %v8583, %v8607
    %8609 = vdwg.mxu0
    %8610 = vmatpush.msra.mxu0 0.0
    %8611 = vmatpush.msra.mxu0 0.0
    %8612 = vmatpush.msra.mxu0 0.0
    %8613 = vmatpush.msra.mxu0 0.0
    %8614 = vmatpush.msra.mxu0 0.0
    %8615 = vmatpush.msra.mxu0 %v8582
    %8616 = vmatpush.msra.mxu0 %v8581
    %8617 = vmatpush.msra.mxu0 %v8580
    %8618 = vmatpush.msra.mxu0 %v8579
    %8619 = vmatpush.msra.mxu0 %v8578
    %8620 = vmatpush.msra.mxu0 %v8577
    %8621 = vmatpush.msra.mxu0 %v8576
    %8622 = vmatpush.msra.mxu0 %v8575
    %8623 = vmatpush.msra.mxu0 %v8574
    %8624 = vmatpush.msra.mxu0 %v8573
    %8625 = vmatpush.msra.mxu0 %v8572
    %8626 = vmatmul.f32.gmra.mxu0 %v8588
    %v8627 = vpop.f32.mrf.mxu0
    %v8628 = vadd.f32 %v8608, %v8627
    %8629 = vdwg.mxu0
    %8630 = vst.msk [vmem:[#allocation9 + $0x1] sm:$0x1] %vm8369, %v8628
    // Predicated region
    $region106: #{forward.1} parent=1 // pred_check
      _
    $region107: #{forward.1} parent=1 // pred_check_branch
      %8632 = sbr.rel (0) target = $region109
    $region108: #{forward.1} parent=1 // pred_region
      %8634 = vsyncadd [#allocation10], 0
      %s8636 = sshll.u32 [#allocation9], 4
      %s8637 = int_to_ptr.vmem [resolvable:$true] %s8636
      %s8638 = sshll.u32 %s26, 4
      %s8639 = int_to_ptr.hbm [resolvable:$true] %s8638
      %8641 = dma.vmem_to_hbm [thread:$0]  %s8637, 32, %s8639, [#allocation10]
    $region109: #{forward.1} parent=1 // pred_fallthru
      _
    // Predicated region
    $region110: #{forward.1} parent=1 // pred_check
      _
    $region111: #{forward.1} parent=1 // pred_check_branch
      %8643 = sbr.rel (0) target = $region113
    $region112: #{forward.1} parent=1 // pred_region
      %8645 = dma.done [#allocation10], 32
    $region113: #{forward.1} parent=1 // pred_fallthru
      _
    %8646 = vsyncpa [#allocation10], 1

</llo_original>
